<compile_context>
chip_gen: v7x
topology: tpu7x:2x2x1
jax: 0.10.0
libtpu: 0.0.40
codegen_flags: <defaults>
</compile_context>

<pallas_src>
import jax
import jax.numpy as jnp
from jax import lax
from jax.experimental import pallas as pl
from jax.experimental.pallas import tpu as pltpu

_EPS = 1e-5


def _vmem_limit_bytes():
    """Generation-aware scoped-VMEM limit (~85% of physical capacity)."""
    cap = None
    try:
        info = pltpu.get_tpu_info()
        for name in ("vmem_capacity_bytes", "vmem_bytes", "vmem_size_bytes"):
            val = getattr(info, name, None)
            if val:
                cap = int(val)
                break
    except Exception:
        cap = None
    if cap is None:
        cap = 64 * 1024 * 1024        # conservative fallback (v7x physical)
    return int(cap * 0.85)


def encoder_forward(x_nchw, params):
    """encoder(in_channels, out_channels): MaxPool2d(2) -> Conv_residual."""
    N, Cin, H2, W2 = x_nchw.shape
    H, W = H2 // 2, W2 // 2
    Cout = params["w1"].shape[-1]
    Cmid = Cout + Cin
    NHW = N * H * W
    Hp = H + 2
    Wp = max(8, ((W + 2 + 7) // 8) * 8)       # padded width, sublane-aligned

    # NCHW -> NHWC, then a cost-free reshape exposing the 2x2 pooling window:
    # (N, 2H, 2W, Cin) -> (N*H, 2, W, 2*Cin).  The max itself runs in-kernel.
    x = jnp.transpose(x_nchw, (0, 2, 3, 1)).astype(jnp.float32)
    x_view = x.reshape(N * H, 2, W, 2 * Cin)

    # Weights laid out per 3x3 tap for the shifted-dot convolutions; bf16 MXU
    # operands with f32 accumulation.  conv2 and shortcut weights fused on K.
    w1 = params["w1"].reshape(9, Cin, Cout).astype(jnp.bfloat16)
    wf = jnp.concatenate([params["w2"], params["ws"]], axis=2)   # (3,3,Cmid,Cout)
    wf = wf.reshape(9, Cmid, Cout).astype(jnp.bfloat16)
    cbf = params["cb2"] + params["cbs"]                          # fused output bias

    def kernel(x_ref, g1_ref, b1_ref, w1_ref, cb1_ref,
               g2_ref, b2_ref, wf_ref, cbf_ref,
               gs_ref, bs_ref, out_ref, h1_ref):
        bf16 = jnp.bfloat16

        # ---- MaxPool2d(2) from the (N*H, 2, W, 2*Cin) view ----
        xv = x_ref[...]
        row_max = jnp.maximum(xv[:, 0:1, :, :], xv[:, 1:2, :, :])
        pooled = jnp.maximum(row_max[..., :Cin], row_max[..., Cin:2 * Cin])
        p4 = pooled.reshape(N, H, W, Cin)        # free: only leading dims split

        # ---- shared BN batch stats (single sweep: sum & sum-of-squares) ----
        def reduce_nhw(t):
            s = jnp.sum(t, axis=(0, 1), keepdims=True)
            return jnp.sum(s, axis=2, keepdims=True)        # (1,1,1,C)

        inv_n = 1.0 / NHW
        m = reduce_nhw(p4) * inv_n
        v = reduce_nhw(p4 * p4) * inv_n - m * m
        xn = (p4 - m) * lax.rsqrt(v + _EPS)

        def affine_relu(g_ref, b_ref):
            g = g_ref[...].reshape(1, 1, 1, Cin)
            b = b_ref[...].reshape(1, 1, 1, Cin)
            return jnp.maximum(xn * g + b, 0.0)

        a1 = affine_relu(g1_ref, b1_ref)         # double_conv branch input
        a_sc = affine_relu(gs_ref, bs_ref)       # shortcut branch input

        def zero_border(pad, c):
            # Only the halo (1 px + sublane-rounding columns) is zeroed; the
            # interior is fully overwritten by the activation store.
            pad[:, 0:1, :, :] = jnp.zeros((N, 1, Wp, c), bf16)
            pad[:, H + 1:H + 2, :, :] = jnp.zeros((N, 1, Wp, c), bf16)
            pad[:, :, 0:1, :] = jnp.zeros((N, Hp, 1, c), bf16)
            pad[:, :, W + 1:Wp, :] = jnp.zeros((N, Hp, Wp - W - 1, c), bf16)

        def conv3x3(pad, w_ref, cin, bias):
            # 9 shifted accumulating dots (bf16 x bf16 -> f32 accumulator).
            acc = jnp.zeros((NHW, Cout), jnp.float32)
            for dy in range(3):
                for dx in range(3):
                    patch = pad[:, dy:dy + H, dx:dx + W, :].reshape(NHW, cin)
                    acc = acc + jnp.dot(patch, w_ref[dy * 3 + dx],
                                        preferred_element_type=jnp.float32)
            return acc + bias

        # ---- conv1 (3x3, pad 1) ----
        def scope1(pad1):
            zero_border(pad1, Cin)
            pad1[:, 1:H + 1, 1:W + 1, :] = a1.astype(bf16)
            h1_ref[...] = conv3x3(pad1, w1_ref, Cin, cb1_ref[...])

        pl.run_scoped(scope1, pltpu.VMEM((N, Hp, Wp, Cin), bf16))

        # ---- BN(h1) + ReLU ----
        h1 = h1_ref[...]
        m2 = jnp.sum(h1, axis=0, keepdims=True) * inv_n
        v2 = jnp.sum(h1 * h1, axis=0, keepdims=True) * inv_n - m2 * m2
        a2 = jnp.maximum((h1 - m2) * lax.rsqrt(v2 + _EPS) * g2_ref[...]
                         + b2_ref[...], 0.0)

        # ---- conv2 + shortcut conv fused (channels [a2 | a_sc], K = Cmid) ----
        def scope2(pad2):
            zero_border(pad2, Cmid)
            pad2[:, 1:H + 1, 1:W + 1, 0:Cout] = \
                a2.reshape(N, H, W, Cout).astype(bf16)
            pad2[:, 1:H + 1, 1:W + 1, Cout:Cmid] = a_sc.astype(bf16)
            out_ref[...] = conv3x3(pad2, wf_ref, Cmid, cbf_ref[...])

        pl.run_scoped(scope2, pltpu.VMEM((N, Hp, Wp, Cmid), bf16))

    vmem = pl.BlockSpec(memory_space=pltpu.MemorySpace.VMEM)
    args = (x_view, params["g1"], params["b1"], w1, params["cb1"],
            params["g2"], params["b2"], wf, cbf,
            params["gs"], params["bs"])

    out2d = pl.pallas_call(
        kernel,
        out_shape=jax.ShapeDtypeStruct((NHW, Cout), jnp.float32),
        in_specs=[vmem] * len(args),
        out_specs=vmem,
        scratch_shapes=[pltpu.VMEM((NHW, Cout), jnp.float32)],   # h1 intermediate
        compiler_params=pltpu.CompilerParams(
            vmem_limit_bytes=_vmem_limit_bytes()),
    )(*args)

    # Wrapper-side relayout to the module's NCHW interface.
    return jnp.transpose(out2d.reshape(N, H, W, Cout), (0, 3, 1, 2))


def init_params(key, in_channels, out_channels):
    ks = jax.random.split(key, 12)

    def nrm(k, shape, s=0.1):
        return s * jax.random.normal(k, shape, jnp.float32)

    return dict(
        # double_conv: BN(in), ReLU, Conv(in->out), BN(out), ReLU, Conv(out->out)
        g1=1.0 + nrm(ks[0], (1, in_channels)), b1=nrm(ks[1], (1, in_channels)),
        w1=nrm(ks[2], (3, 3, in_channels, out_channels)), cb1=nrm(ks[3], (1, out_channels)),
        g2=1.0 + nrm(ks[4], (1, out_channels)), b2=nrm(ks[5], (1, out_channels)),
        w2=nrm(ks[6], (3, 3, out_channels, out_channels)), cb2=nrm(ks[7], (1, out_channels)),
        # shortcut: BN(in), ReLU, Conv(in->out)
        gs=1.0 + nrm(ks[8], (1, in_channels)), bs=nrm(ks[9], (1, in_channels)),
        ws=nrm(ks[10], (3, 3, in_channels, out_channels)), cbs=nrm(ks[11], (1, out_channels)),
    )


def _ref_forward(x_nchw, p):
    """Pure-JAX reference of the PyTorch forward (training-mode BN)."""
    x = jnp.transpose(x_nchw, (0, 2, 3, 1)).astype(jnp.float32)
    pooled = jnp.maximum(jnp.maximum(x[:, 0::2, 0::2, :], x[:, 0::2, 1::2, :]),
                         jnp.maximum(x[:, 1::2, 0::2, :], x[:, 1::2, 1::2, :]))

    def bn_relu(h, g, b):
        m = jnp.mean(h, axis=(0, 1, 2), keepdims=True)
        v = jnp.mean((h - m) ** 2, axis=(0, 1, 2), keepdims=True)
        return jnp.maximum((h - m) * lax.rsqrt(v + _EPS) * g + b, 0.0)

    def conv(h, w, b):
        y = lax.conv_general_dilated(h, w, (1, 1), ((1, 1), (1, 1)),
                                     dimension_numbers=("NHWC", "HWIO", "NHWC"))
        return y + b

    a1 = bn_relu(pooled, p["g1"], p["b1"])
    h1 = conv(a1, p["w1"], p["cb1"])
    a2 = bn_relu(h1, p["g2"], p["b2"])
    h2 = conv(a2, p["w2"], p["cb2"])
    a_sc = bn_relu(pooled, p["gs"], p["bs"])
    hsc = conv(a_sc, p["ws"], p["cbs"])
    return jnp.transpose(h2 + hsc, (0, 3, 1, 2))


if __name__ == "__main__":
    key = jax.random.PRNGKey(0)
    k_x, k_p = jax.random.split(key)

    in_channels, out_channels = 4, 8
    x = jax.random.normal(k_x, (2, in_channels, 16, 16), jnp.float32)   # NCHW
    params = init_params(k_p, in_channels, out_channels)

    out = jax.block_until_ready(encoder_forward(x, params))
    ref = jax.block_until_ready(_ref_forward(x, params))

    assert out.shape == (2, out_channels, 8, 8), out.shape
    err = float(jnp.max(jnp.abs(out - ref)))
    # bf16 MXU operands with f32 accumulation; tolerance sized accordingly.
    assert jnp.allclose(out, ref, atol=5e-2, rtol=5e-2), f"max abs err={err}"
    # TODO(synk): BatchNorm running-stat updates (a training-mode side effect)
    # are not modeled; they do not affect the forward output.
    print("KERNEL_OK")
</pallas_src>

<mosaic_0001>
module attributes {stable_mosaic.version = 11 : i64} {
  func.func @kernel(%arg0: memref<16x2x8x8xf32, #tpu.memory_space<vmem>>, %arg1: memref<1x4xf32, #tpu.memory_space<vmem>>, %arg2: memref<1x4xf32, #tpu.memory_space<vmem>>, %arg3: memref<9x4x8xbf16, #tpu.memory_space<vmem>>, %arg4: memref<1x8xf32, #tpu.memory_space<vmem>>, %arg5: memref<1x8xf32, #tpu.memory_space<vmem>>, %arg6: memref<1x8xf32, #tpu.memory_space<vmem>>, %arg7: memref<9x12x8xbf16, #tpu.memory_space<vmem>>, %arg8: memref<1x8xf32, #tpu.memory_space<vmem>>, %arg9: memref<1x4xf32, #tpu.memory_space<vmem>>, %arg10: memref<1x4xf32, #tpu.memory_space<vmem>>, %arg11: memref<128x8xf32, #tpu.memory_space<vmem>>, %arg12: memref<128x8xf32, #tpu.memory_space<vmem>>) attributes {dimension_semantics = [], scalar_prefetch = 0 : i64, scratch_operands = 1 : i64, tpu.core_type = #tpu.core_type<tc>} {
    %c0 = arith.constant 0 : index
    %c0_0 = arith.constant 0 : index
    %c0_1 = arith.constant 0 : index
    %c0_2 = arith.constant 0 : index
    %0 = vector.load %arg0[%c0, %c0_0, %c0_1, %c0_2] : memref<16x2x8x8xf32, #tpu.memory_space<vmem>>, vector<16x2x8x8xf32>
    %1 = vector.extract_strided_slice %0 {offsets = [0, 0, 0, 0], sizes = [16, 1, 8, 8], strides = [1, 1, 1, 1]} : vector<16x2x8x8xf32> to vector<16x1x8x8xf32>
    %2 = vector.extract_strided_slice %0 {offsets = [0, 1, 0, 0], sizes = [16, 1, 8, 8], strides = [1, 1, 1, 1]} : vector<16x2x8x8xf32> to vector<16x1x8x8xf32>
    %3 = arith.maximumf %1, %2 : vector<16x1x8x8xf32>
    %4 = vector.extract_strided_slice %3 {offsets = [0, 0, 0, 0], sizes = [16, 1, 8, 4], strides = [1, 1, 1, 1]} : vector<16x1x8x8xf32> to vector<16x1x8x4xf32>
    %5 = vector.extract_strided_slice %3 {offsets = [0, 0, 0, 4], sizes = [16, 1, 8, 4], strides = [1, 1, 1, 1]} : vector<16x1x8x8xf32> to vector<16x1x8x4xf32>
    %6 = arith.maximumf %4, %5 : vector<16x1x8x4xf32>
    %7 = vector.shape_cast %6 : vector<16x1x8x4xf32> to vector<2x8x8x4xf32>
    %cst = arith.constant dense<0.000000e+00> : vector<8x4xf32>
    %8 = vector.multi_reduction <add>, %7, %cst [0, 1] : vector<2x8x8x4xf32> to vector<8x4xf32>
    %9 = vector.shape_cast %8 : vector<8x4xf32> to vector<1x1x8x4xf32>
    %cst_3 = arith.constant dense<0.000000e+00> : vector<1x1x4xf32>
    %10 = vector.multi_reduction <add>, %9, %cst_3 [2] : vector<1x1x8x4xf32> to vector<1x1x4xf32>
    %11 = vector.shape_cast %10 : vector<1x1x4xf32> to vector<1x1x1x4xf32>
    %cst_4 = arith.constant 7.812500e-03 : f32
    %12 = vector.broadcast %cst_4 : f32 to vector<1x1x1x4xf32>
    %13 = arith.mulf %11, %12 : vector<1x1x1x4xf32>
    %14 = arith.mulf %7, %7 : vector<2x8x8x4xf32>
    %cst_5 = arith.constant dense<0.000000e+00> : vector<8x4xf32>
    %15 = vector.multi_reduction <add>, %14, %cst_5 [0, 1] : vector<2x8x8x4xf32> to vector<8x4xf32>
    %16 = vector.shape_cast %15 : vector<8x4xf32> to vector<1x1x8x4xf32>
    %cst_6 = arith.constant dense<0.000000e+00> : vector<1x1x4xf32>
    %17 = vector.multi_reduction <add>, %16, %cst_6 [2] : vector<1x1x8x4xf32> to vector<1x1x4xf32>
    %18 = vector.shape_cast %17 : vector<1x1x4xf32> to vector<1x1x1x4xf32>
    %cst_7 = arith.constant 7.812500e-03 : f32
    %19 = vector.broadcast %cst_7 : f32 to vector<1x1x1x4xf32>
    %20 = arith.mulf %18, %19 : vector<1x1x1x4xf32>
    %21 = arith.mulf %13, %13 : vector<1x1x1x4xf32>
    %22 = arith.subf %20, %21 : vector<1x1x1x4xf32>
    %23 = vector.broadcast %13 : vector<1x1x1x4xf32> to vector<2x8x8x4xf32>
    %24 = arith.subf %7, %23 : vector<2x8x8x4xf32>
    %cst_8 = arith.constant 9.99999974E-6 : f32
    %25 = vector.broadcast %cst_8 : f32 to vector<1x1x1x4xf32>
    %26 = arith.addf %22, %25 : vector<1x1x1x4xf32>
    %27 = math.rsqrt %26 : vector<1x1x1x4xf32>
    %28 = vector.broadcast %27 : vector<1x1x1x4xf32> to vector<2x8x8x4xf32>
    %29 = arith.mulf %24, %28 : vector<2x8x8x4xf32>
    %c0_9 = arith.constant 0 : index
    %c0_10 = arith.constant 0 : index
    %30 = vector.load %arg1[%c0_9, %c0_10] : memref<1x4xf32, #tpu.memory_space<vmem>>, vector<1x4xf32>
    %31 = vector.shape_cast %30 : vector<1x4xf32> to vector<1x1x1x4xf32>
    %c0_11 = arith.constant 0 : index
    %c0_12 = arith.constant 0 : index
    %32 = vector.load %arg2[%c0_11, %c0_12] : memref<1x4xf32, #tpu.memory_space<vmem>>, vector<1x4xf32>
    %33 = vector.shape_cast %32 : vector<1x4xf32> to vector<1x1x1x4xf32>
    %34 = vector.broadcast %31 : vector<1x1x1x4xf32> to vector<2x8x8x4xf32>
    %35 = arith.mulf %29, %34 : vector<2x8x8x4xf32>
    %36 = vector.broadcast %33 : vector<1x1x1x4xf32> to vector<2x8x8x4xf32>
    %37 = arith.addf %35, %36 : vector<2x8x8x4xf32>
    %cst_13 = arith.constant 0.000000e+00 : f32
    %38 = vector.broadcast %cst_13 : f32 to vector<2x8x8x4xf32>
    %39 = arith.maximumf %37, %38 : vector<2x8x8x4xf32>
    %c0_14 = arith.constant 0 : index
    %c0_15 = arith.constant 0 : index
    %40 = vector.load %arg9[%c0_14, %c0_15] : memref<1x4xf32, #tpu.memory_space<vmem>>, vector<1x4xf32>
    %41 = vector.shape_cast %40 : vector<1x4xf32> to vector<1x1x1x4xf32>
    %c0_16 = arith.constant 0 : index
    %c0_17 = arith.constant 0 : index
    %42 = vector.load %arg10[%c0_16, %c0_17] : memref<1x4xf32, #tpu.memory_space<vmem>>, vector<1x4xf32>
    %43 = vector.shape_cast %42 : vector<1x4xf32> to vector<1x1x1x4xf32>
    %44 = vector.broadcast %41 : vector<1x1x1x4xf32> to vector<2x8x8x4xf32>
    %45 = arith.mulf %29, %44 : vector<2x8x8x4xf32>
    %46 = vector.broadcast %43 : vector<1x1x1x4xf32> to vector<2x8x8x4xf32>
    %47 = arith.addf %45, %46 : vector<2x8x8x4xf32>
    %cst_18 = arith.constant 0.000000e+00 : f32
    %48 = vector.broadcast %cst_18 : f32 to vector<2x8x8x4xf32>
    %49 = arith.maximumf %47, %48 : vector<2x8x8x4xf32>
    "tpu.region"() ({
      %alloca = memref.alloca() : memref<2x10x16x4xbf16, #tpu.memory_space<vmem>>
      %cst_31 = arith.constant 0.000000e+00 : bf16
      %77 = vector.broadcast %cst_31 : bf16 to vector<2x1x16x4xbf16>
      %c0_32 = arith.constant 0 : index
      %c0_33 = arith.constant 0 : index
      %c0_34 = arith.constant 0 : index
      %c0_35 = arith.constant 0 : index
      %78 = vector.load %alloca[%c0_32, %c0_33, %c0_34, %c0_35] : memref<2x10x16x4xbf16, #tpu.memory_space<vmem>>, vector<2x1x16x4xbf16>
      tpu.vector_store %alloca[%c0_32, %c0_33, %c0_34, %c0_35], %77 {strides = array<i32>} : memref<2x10x16x4xbf16, #tpu.memory_space<vmem>>, vector<2x1x16x4xbf16>,
      %cst_36 = arith.constant 0.000000e+00 : bf16
      %79 = vector.broadcast %cst_36 : bf16 to vector<2x1x16x4xbf16>
      %c0_37 = arith.constant 0 : index
      %c9 = arith.constant 9 : index
      %c0_38 = arith.constant 0 : index
      %c0_39 = arith.constant 0 : index
      %80 = vector.load %alloca[%c0_37, %c9, %c0_38, %c0_39] : memref<2x10x16x4xbf16, #tpu.memory_space<vmem>>, vector<2x1x16x4xbf16>
      tpu.vector_store %alloca[%c0_37, %c9, %c0_38, %c0_39], %79 {strides = array<i32>} : memref<2x10x16x4xbf16, #tpu.memory_space<vmem>>, vector<2x1x16x4xbf16>,
      %cst_40 = arith.constant 0.000000e+00 : bf16
      %81 = vector.broadcast %cst_40 : bf16 to vector<2x10x1x4xbf16>
      %c0_41 = arith.constant 0 : index
      %c0_42 = arith.constant 0 : index
      %c0_43 = arith.constant 0 : index
      %c0_44 = arith.constant 0 : index
      %82 = vector.load %alloca[%c0_41, %c0_42, %c0_43, %c0_44] : memref<2x10x16x4xbf16, #tpu.memory_space<vmem>>, vector<2x10x1x4xbf16>
      tpu.vector_store %alloca[%c0_41, %c0_42, %c0_43, %c0_44], %81 {strides = array<i32>} : memref<2x10x16x4xbf16, #tpu.memory_space<vmem>>, vector<2x10x1x4xbf16>,
      %cst_45 = arith.constant 0.000000e+00 : bf16
      %83 = vector.broadcast %cst_45 : bf16 to vector<2x10x7x4xbf16>
      %c0_46 = arith.constant 0 : index
      %c0_47 = arith.constant 0 : index
      %c9_48 = arith.constant 9 : index
      %c0_49 = arith.constant 0 : index
      %84 = vector.load %alloca[%c0_46, %c0_47, %c9_48, %c0_49] : memref<2x10x16x4xbf16, #tpu.memory_space<vmem>>, vector<2x10x7x4xbf16>
      tpu.vector_store %alloca[%c0_46, %c0_47, %c9_48, %c0_49], %83 {strides = array<i32>} : memref<2x10x16x4xbf16, #tpu.memory_space<vmem>>, vector<2x10x7x4xbf16>,
      %85 = arith.truncf %39 : vector<2x8x8x4xf32> to vector<2x8x8x4xbf16>
      %c0_50 = arith.constant 0 : index
      %c1 = arith.constant 1 : index
      %c1_51 = arith.constant 1 : index
      %c0_52 = arith.constant 0 : index
      %86 = vector.load %alloca[%c0_50, %c1, %c1_51, %c0_52] : memref<2x10x16x4xbf16, #tpu.memory_space<vmem>>, vector<2x8x8x4xbf16>
      tpu.vector_store %alloca[%c0_50, %c1, %c1_51, %c0_52], %85 {strides = array<i32>} : memref<2x10x16x4xbf16, #tpu.memory_space<vmem>>, vector<2x8x8x4xbf16>,
      %c0_53 = arith.constant 0 : index
      %c0_54 = arith.constant 0 : index
      %87 = vector.load %arg4[%c0_53, %c0_54] : memref<1x8xf32, #tpu.memory_space<vmem>>, vector<1x8xf32>
      %cst_55 = arith.constant 0.000000e+00 : f32
      %88 = vector.broadcast %cst_55 : f32 to vector<128x8xf32>
      %c0_56 = arith.constant 0 : index
      %c0_57 = arith.constant 0 : index
      %c0_58 = arith.constant 0 : index
      %c0_59 = arith.constant 0 : index
      %89 = vector.load %alloca[%c0_56, %c0_57, %c0_58, %c0_59] : memref<2x10x16x4xbf16, #tpu.memory_space<vmem>>, vector<2x8x8x4xbf16>
      %90 = vector.shape_cast %89 : vector<2x8x8x4xbf16> to vector<128x4xbf16>
      %c0_60 = arith.constant 0 : index
      %c0_61 = arith.constant 0 : index
      %c0_62 = arith.constant 0 : index
      %91 = vector.load %arg3[%c0_60, %c0_61, %c0_62] : memref<9x4x8xbf16, #tpu.memory_space<vmem>>, vector<1x4x8xbf16>
      %92 = vector.shape_cast %91 : vector<1x4x8xbf16> to vector<4x8xbf16>
      %cst_63 = arith.constant dense<0.000000e+00> : vector<128x8xf32>
      %93 = tpu.matmul %90, %92, %cst_63 {dimension_numbers = #tpu.dot_dimension_numbers<[1], [0], [0], [1], [0, 0, 1, 1], [], []>} : vector<128x4xbf16>, vector<4x8xbf16>, vector<128x8xf32> -> vector<128x8xf32>
      %94 = arith.addf %88, %93 : vector<128x8xf32>
      %c0_64 = arith.constant 0 : index
      %c0_65 = arith.constant 0 : index
      %c1_66 = arith.constant 1 : index
      %c0_67 = arith.constant 0 : index
      %95 = vector.load %alloca[%c0_64, %c0_65, %c1_66, %c0_67] : memref<2x10x16x4xbf16, #tpu.memory_space<vmem>>, vector<2x8x8x4xbf16>
      %96 = vector.shape_cast %95 : vector<2x8x8x4xbf16> to vector<128x4xbf16>
      %c1_68 = arith.constant 1 : index
      %c0_69 = arith.constant 0 : index
      %c0_70 = arith.constant 0 : index
      %97 = vector.load %arg3[%c1_68, %c0_69, %c0_70] : memref<9x4x8xbf16, #tpu.memory_space<vmem>>, vector<1x4x8xbf16>
      %98 = vector.shape_cast %97 : vector<1x4x8xbf16> to vector<4x8xbf16>
      %cst_71 = arith.constant dense<0.000000e+00> : vector<128x8xf32>
      %99 = tpu.matmul %96, %98, %cst_71 {dimension_numbers = #tpu.dot_dimension_numbers<[1], [0], [0], [1], [0, 0, 1, 1], [], []>} : vector<128x4xbf16>, vector<4x8xbf16>, vector<128x8xf32> -> vector<128x8xf32>
      %100 = arith.addf %94, %99 : vector<128x8xf32>
      %c0_72 = arith.constant 0 : index
      %c0_73 = arith.constant 0 : index
      %c2 = arith.constant 2 : index
      %c0_74 = arith.constant 0 : index
      %101 = vector.load %alloca[%c0_72, %c0_73, %c2, %c0_74] : memref<2x10x16x4xbf16, #tpu.memory_space<vmem>>, vector<2x8x8x4xbf16>
      %102 = vector.shape_cast %101 : vector<2x8x8x4xbf16> to vector<128x4xbf16>
      %c2_75 = arith.constant 2 : index
      %c0_76 = arith.constant 0 : index
      %c0_77 = arith.constant 0 : index
      %103 = vector.load %arg3[%c2_75, %c0_76, %c0_77] : memref<9x4x8xbf16, #tpu.memory_space<vmem>>, vector<1x4x8xbf16>
      %104 = vector.shape_cast %103 : vector<1x4x8xbf16> to vector<4x8xbf16>
      %cst_78 = arith.constant dense<0.000000e+00> : vector<128x8xf32>
      %105 = tpu.matmul %102, %104, %cst_78 {dimension_numbers = #tpu.dot_dimension_numbers<[1], [0], [0], [1], [0, 0, 1, 1], [], []>} : vector<128x4xbf16>, vector<4x8xbf16>, vector<128x8xf32> -> vector<128x8xf32>
      %106 = arith.addf %100, %105 : vector<128x8xf32>
      %c0_79 = arith.constant 0 : index
      %c1_80 = arith.constant 1 : index
      %c0_81 = arith.constant 0 : index
      %c0_82 = arith.constant 0 : index
      %107 = vector.load %alloca[%c0_79, %c1_80, %c0_81, %c0_82] : memref<2x10x16x4xbf16, #tpu.memory_space<vmem>>, vector<2x8x8x4xbf16>
      %108 = vector.shape_cast %107 : vector<2x8x8x4xbf16> to vector<128x4xbf16>
      %c3 = arith.constant 3 : index
      %c0_83 = arith.constant 0 : index
      %c0_84 = arith.constant 0 : index
      %109 = vector.load %arg3[%c3, %c0_83, %c0_84] : memref<9x4x8xbf16, #tpu.memory_space<vmem>>, vector<1x4x8xbf16>
      %110 = vector.shape_cast %109 : vector<1x4x8xbf16> to vector<4x8xbf16>
      %cst_85 = arith.constant dense<0.000000e+00> : vector<128x8xf32>
      %111 = tpu.matmul %108, %110, %cst_85 {dimension_numbers = #tpu.dot_dimension_numbers<[1], [0], [0], [1], [0, 0, 1, 1], [], []>} : vector<128x4xbf16>, vector<4x8xbf16>, vector<128x8xf32> -> vector<128x8xf32>
      %112 = arith.addf %106, %111 : vector<128x8xf32>
      %c0_86 = arith.constant 0 : index
      %c1_87 = arith.constant 1 : index
      %c1_88 = arith.constant 1 : index
      %c0_89 = arith.constant 0 : index
      %113 = vector.load %alloca[%c0_86, %c1_87, %c1_88, %c0_89] : memref<2x10x16x4xbf16, #tpu.memory_space<vmem>>, vector<2x8x8x4xbf16>
      %114 = vector.shape_cast %113 : vector<2x8x8x4xbf16> to vector<128x4xbf16>
      %c4 = arith.constant 4 : index
      %c0_90 = arith.constant 0 : index
      %c0_91 = arith.constant 0 : index
      %115 = vector.load %arg3[%c4, %c0_90, %c0_91] : memref<9x4x8xbf16, #tpu.memory_space<vmem>>, vector<1x4x8xbf16>
      %116 = vector.shape_cast %115 : vector<1x4x8xbf16> to vector<4x8xbf16>
      %cst_92 = arith.constant dense<0.000000e+00> : vector<128x8xf32>
      %117 = tpu.matmul %114, %116, %cst_92 {dimension_numbers = #tpu.dot_dimension_numbers<[1], [0], [0], [1], [0, 0, 1, 1], [], []>} : vector<128x4xbf16>, vector<4x8xbf16>, vector<128x8xf32> -> vector<128x8xf32>
      %118 = arith.addf %112, %117 : vector<128x8xf32>
      %c0_93 = arith.constant 0 : index
      %c1_94 = arith.constant 1 : index
      %c2_95 = arith.constant 2 : index
      %c0_96 = arith.constant 0 : index
      %119 = vector.load %alloca[%c0_93, %c1_94, %c2_95, %c0_96] : memref<2x10x16x4xbf16, #tpu.memory_space<vmem>>, vector<2x8x8x4xbf16>
      %120 = vector.shape_cast %119 : vector<2x8x8x4xbf16> to vector<128x4xbf16>
      %c5 = arith.constant 5 : index
      %c0_97 = arith.constant 0 : index
      %c0_98 = arith.constant 0 : index
      %121 = vector.load %arg3[%c5, %c0_97, %c0_98] : memref<9x4x8xbf16, #tpu.memory_space<vmem>>, vector<1x4x8xbf16>
      %122 = vector.shape_cast %121 : vector<1x4x8xbf16> to vector<4x8xbf16>
      %cst_99 = arith.constant dense<0.000000e+00> : vector<128x8xf32>
      %123 = tpu.matmul %120, %122, %cst_99 {dimension_numbers = #tpu.dot_dimension_numbers<[1], [0], [0], [1], [0, 0, 1, 1], [], []>} : vector<128x4xbf16>, vector<4x8xbf16>, vector<128x8xf32> -> vector<128x8xf32>
      %124 = arith.addf %118, %123 : vector<128x8xf32>
      %c0_100 = arith.constant 0 : index
      %c2_101 = arith.constant 2 : index
      %c0_102 = arith.constant 0 : index
      %c0_103 = arith.constant 0 : index
      %125 = vector.load %alloca[%c0_100, %c2_101, %c0_102, %c0_103] : memref<2x10x16x4xbf16, #tpu.memory_space<vmem>>, vector<2x8x8x4xbf16>
      %126 = vector.shape_cast %125 : vector<2x8x8x4xbf16> to vector<128x4xbf16>
      %c6 = arith.constant 6 : index
      %c0_104 = arith.constant 0 : index
      %c0_105 = arith.constant 0 : index
      %127 = vector.load %arg3[%c6, %c0_104, %c0_105] : memref<9x4x8xbf16, #tpu.memory_space<vmem>>, vector<1x4x8xbf16>
      %128 = vector.shape_cast %127 : vector<1x4x8xbf16> to vector<4x8xbf16>
      %cst_106 = arith.constant dense<0.000000e+00> : vector<128x8xf32>
      %129 = tpu.matmul %126, %128, %cst_106 {dimension_numbers = #tpu.dot_dimension_numbers<[1], [0], [0], [1], [0, 0, 1, 1], [], []>} : vector<128x4xbf16>, vector<4x8xbf16>, vector<128x8xf32> -> vector<128x8xf32>
      %130 = arith.addf %124, %129 : vector<128x8xf32>
      %c0_107 = arith.constant 0 : index
      %c2_108 = arith.constant 2 : index
      %c1_109 = arith.constant 1 : index
      %c0_110 = arith.constant 0 : index
      %131 = vector.load %alloca[%c0_107, %c2_108, %c1_109, %c0_110] : memref<2x10x16x4xbf16, #tpu.memory_space<vmem>>, vector<2x8x8x4xbf16>
      %132 = vector.shape_cast %131 : vector<2x8x8x4xbf16> to vector<128x4xbf16>
      %c7 = arith.constant 7 : index
      %c0_111 = arith.constant 0 : index
      %c0_112 = arith.constant 0 : index
      %133 = vector.load %arg3[%c7, %c0_111, %c0_112] : memref<9x4x8xbf16, #tpu.memory_space<vmem>>, vector<1x4x8xbf16>
      %134 = vector.shape_cast %133 : vector<1x4x8xbf16> to vector<4x8xbf16>
      %cst_113 = arith.constant dense<0.000000e+00> : vector<128x8xf32>
      %135 = tpu.matmul %132, %134, %cst_113 {dimension_numbers = #tpu.dot_dimension_numbers<[1], [0], [0], [1], [0, 0, 1, 1], [], []>} : vector<128x4xbf16>, vector<4x8xbf16>, vector<128x8xf32> -> vector<128x8xf32>
      %136 = arith.addf %130, %135 : vector<128x8xf32>
      %c0_114 = arith.constant 0 : index
      %c2_115 = arith.constant 2 : index
      %c2_116 = arith.constant 2 : index
      %c0_117 = arith.constant 0 : index
      %137 = vector.load %alloca[%c0_114, %c2_115, %c2_116, %c0_117] : memref<2x10x16x4xbf16, #tpu.memory_space<vmem>>, vector<2x8x8x4xbf16>
      %138 = vector.shape_cast %137 : vector<2x8x8x4xbf16> to vector<128x4xbf16>
      %c8 = arith.constant 8 : index
      %c0_118 = arith.constant 0 : index
      %c0_119 = arith.constant 0 : index
      %139 = vector.load %arg3[%c8, %c0_118, %c0_119] : memref<9x4x8xbf16, #tpu.memory_space<vmem>>, vector<1x4x8xbf16>
      %140 = vector.shape_cast %139 : vector<1x4x8xbf16> to vector<4x8xbf16>
      %cst_120 = arith.constant dense<0.000000e+00> : vector<128x8xf32>
      %141 = tpu.matmul %138, %140, %cst_120 {dimension_numbers = #tpu.dot_dimension_numbers<[1], [0], [0], [1], [0, 0, 1, 1], [], []>} : vector<128x4xbf16>, vector<4x8xbf16>, vector<128x8xf32> -> vector<128x8xf32>
      %142 = arith.addf %136, %141 : vector<128x8xf32>
      %143 = vector.broadcast %87 : vector<1x8xf32> to vector<128x8xf32>
      %144 = arith.addf %142, %143 : vector<128x8xf32>
      %c0_121 = arith.constant 0 : index
      %c0_122 = arith.constant 0 : index
      %145 = vector.load %arg12[%c0_121, %c0_122] : memref<128x8xf32, #tpu.memory_space<vmem>>, vector<128x8xf32>
      tpu.vector_store %arg12[%c0_121, %c0_122], %144 {strides = array<i32>} : memref<128x8xf32, #tpu.memory_space<vmem>>, vector<128x8xf32>,
      tpu.yield
    }) : () -> ()
    %c0_19 = arith.constant 0 : index
    %c0_20 = arith.constant 0 : index
    %50 = vector.load %arg12[%c0_19, %c0_20] : memref<128x8xf32, #tpu.memory_space<vmem>>, vector<128x8xf32>
    %cst_21 = arith.constant dense<0.000000e+00> : vector<8xf32>
    %51 = vector.multi_reduction <add>, %50, %cst_21 [0] : vector<128x8xf32> to vector<8xf32>
    %52 = vector.shape_cast %51 : vector<8xf32> to vector<1x8xf32>
    %cst_22 = arith.constant 7.812500e-03 : f32
    %53 = vector.broadcast %cst_22 : f32 to vector<1x8xf32>
    %54 = arith.mulf %52, %53 : vector<1x8xf32>
    %55 = arith.mulf %50, %50 : vector<128x8xf32>
    %cst_23 = arith.constant dense<0.000000e+00> : vector<8xf32>
    %56 = vector.multi_reduction <add>, %55, %cst_23 [0] : vector<128x8xf32> to vector<8xf32>
    %57 = vector.shape_cast %56 : vector<8xf32> to vector<1x8xf32>
    %cst_24 = arith.constant 7.812500e-03 : f32
    %58 = vector.broadcast %cst_24 : f32 to vector<1x8xf32>
    %59 = arith.mulf %57, %58 : vector<1x8xf32>
    %60 = arith.mulf %54, %54 : vector<1x8xf32>
    %61 = arith.subf %59, %60 : vector<1x8xf32>
    %62 = vector.broadcast %54 : vector<1x8xf32> to vector<128x8xf32>
    %63 = arith.subf %50, %62 : vector<128x8xf32>
    %cst_25 = arith.constant 9.99999974E-6 : f32
    %64 = vector.broadcast %cst_25 : f32 to vector<1x8xf32>
    %65 = arith.addf %61, %64 : vector<1x8xf32>
    %66 = math.rsqrt %65 : vector<1x8xf32>
    %67 = vector.broadcast %66 : vector<1x8xf32> to vector<128x8xf32>
    %68 = arith.mulf %63, %67 : vector<128x8xf32>
    %c0_26 = arith.constant 0 : index
    %c0_27 = arith.constant 0 : index
    %69 = vector.load %arg5[%c0_26, %c0_27] : memref<1x8xf32, #tpu.memory_space<vmem>>, vector<1x8xf32>
    %70 = vector.broadcast %69 : vector<1x8xf32> to vector<128x8xf32>
    %71 = arith.mulf %68, %70 : vector<128x8xf32>
    %c0_28 = arith.constant 0 : index
    %c0_29 = arith.constant 0 : index
    %72 = vector.load %arg6[%c0_28, %c0_29] : memref<1x8xf32, #tpu.memory_space<vmem>>, vector<1x8xf32>
    %73 = vector.broadcast %72 : vector<1x8xf32> to vector<128x8xf32>
    %74 = arith.addf %71, %73 : vector<128x8xf32>
    %cst_30 = arith.constant 0.000000e+00 : f32
    %75 = vector.broadcast %cst_30 : f32 to vector<128x8xf32>
    %76 = arith.maximumf %74, %75 : vector<128x8xf32>
    "tpu.region"() ({
      %alloca = memref.alloca() : memref<2x10x16x12xbf16, #tpu.memory_space<vmem>>
      %cst_31 = arith.constant 0.000000e+00 : bf16
      %77 = vector.broadcast %cst_31 : bf16 to vector<2x1x16x12xbf16>
      %c0_32 = arith.constant 0 : index
      %c0_33 = arith.constant 0 : index
      %c0_34 = arith.constant 0 : index
      %c0_35 = arith.constant 0 : index
      %78 = vector.load %alloca[%c0_32, %c0_33, %c0_34, %c0_35] : memref<2x10x16x12xbf16, #tpu.memory_space<vmem>>, vector<2x1x16x12xbf16>
      tpu.vector_store %alloca[%c0_32, %c0_33, %c0_34, %c0_35], %77 {strides = array<i32>} : memref<2x10x16x12xbf16, #tpu.memory_space<vmem>>, vector<2x1x16x12xbf16>,
      %cst_36 = arith.constant 0.000000e+00 : bf16
      %79 = vector.broadcast %cst_36 : bf16 to vector<2x1x16x12xbf16>
      %c0_37 = arith.constant 0 : index
      %c9 = arith.constant 9 : index
      %c0_38 = arith.constant 0 : index
      %c0_39 = arith.constant 0 : index
      %80 = vector.load %alloca[%c0_37, %c9, %c0_38, %c0_39] : memref<2x10x16x12xbf16, #tpu.memory_space<vmem>>, vector<2x1x16x12xbf16>
      tpu.vector_store %alloca[%c0_37, %c9, %c0_38, %c0_39], %79 {strides = array<i32>} : memref<2x10x16x12xbf16, #tpu.memory_space<vmem>>, vector<2x1x16x12xbf16>,
      %cst_40 = arith.constant 0.000000e+00 : bf16
      %81 = vector.broadcast %cst_40 : bf16 to vector<2x10x1x12xbf16>
      %c0_41 = arith.constant 0 : index
      %c0_42 = arith.constant 0 : index
      %c0_43 = arith.constant 0 : index
      %c0_44 = arith.constant 0 : index
      %82 = vector.load %alloca[%c0_41, %c0_42, %c0_43, %c0_44] : memref<2x10x16x12xbf16, #tpu.memory_space<vmem>>, vector<2x10x1x12xbf16>
      tpu.vector_store %alloca[%c0_41, %c0_42, %c0_43, %c0_44], %81 {strides = array<i32>} : memref<2x10x16x12xbf16, #tpu.memory_space<vmem>>, vector<2x10x1x12xbf16>,
      %cst_45 = arith.constant 0.000000e+00 : bf16
      %83 = vector.broadcast %cst_45 : bf16 to vector<2x10x7x12xbf16>
      %c0_46 = arith.constant 0 : index
      %c0_47 = arith.constant 0 : index
      %c9_48 = arith.constant 9 : index
      %c0_49 = arith.constant 0 : index
      %84 = vector.load %alloca[%c0_46, %c0_47, %c9_48, %c0_49] : memref<2x10x16x12xbf16, #tpu.memory_space<vmem>>, vector<2x10x7x12xbf16>
      tpu.vector_store %alloca[%c0_46, %c0_47, %c9_48, %c0_49], %83 {strides = array<i32>} : memref<2x10x16x12xbf16, #tpu.memory_space<vmem>>, vector<2x10x7x12xbf16>,
      %85 = vector.shape_cast %76 : vector<128x8xf32> to vector<2x8x8x8xf32>
      %86 = arith.truncf %85 : vector<2x8x8x8xf32> to vector<2x8x8x8xbf16>
      %c0_50 = arith.constant 0 : index
      %c1 = arith.constant 1 : index
      %c1_51 = arith.constant 1 : index
      %c0_52 = arith.constant 0 : index
      %87 = vector.load %alloca[%c0_50, %c1, %c1_51, %c0_52] : memref<2x10x16x12xbf16, #tpu.memory_space<vmem>>, vector<2x8x8x8xbf16>
      tpu.vector_store %alloca[%c0_50, %c1, %c1_51, %c0_52], %86 {strides = array<i32>} : memref<2x10x16x12xbf16, #tpu.memory_space<vmem>>, vector<2x8x8x8xbf16>,
      %88 = arith.truncf %49 : vector<2x8x8x4xf32> to vector<2x8x8x4xbf16>
      %c0_53 = arith.constant 0 : index
      %c1_54 = arith.constant 1 : index
      %c1_55 = arith.constant 1 : index
      %c8 = arith.constant 8 : index
      %89 = vector.load %alloca[%c0_53, %c1_54, %c1_55, %c8] : memref<2x10x16x12xbf16, #tpu.memory_space<vmem>>, vector<2x8x8x4xbf16>
      tpu.vector_store %alloca[%c0_53, %c1_54, %c1_55, %c8], %88 {strides = array<i32>} : memref<2x10x16x12xbf16, #tpu.memory_space<vmem>>, vector<2x8x8x4xbf16>,
      %c0_56 = arith.constant 0 : index
      %c0_57 = arith.constant 0 : index
      %90 = vector.load %arg8[%c0_56, %c0_57] : memref<1x8xf32, #tpu.memory_space<vmem>>, vector<1x8xf32>
      %cst_58 = arith.constant 0.000000e+00 : f32
      %91 = vector.broadcast %cst_58 : f32 to vector<128x8xf32>
      %c0_59 = arith.constant 0 : index
      %c0_60 = arith.constant 0 : index
      %c0_61 = arith.constant 0 : index
      %c0_62 = arith.constant 0 : index
      %92 = vector.load %alloca[%c0_59, %c0_60, %c0_61, %c0_62] : memref<2x10x16x12xbf16, #tpu.memory_space<vmem>>, vector<2x8x8x12xbf16>
      %93 = vector.shape_cast %92 : vector<2x8x8x12xbf16> to vector<128x12xbf16>
      %c0_63 = arith.constant 0 : index
      %c0_64 = arith.constant 0 : index
      %c0_65 = arith.constant 0 : index
      %94 = vector.load %arg7[%c0_63, %c0_64, %c0_65] : memref<9x12x8xbf16, #tpu.memory_space<vmem>>, vector<1x12x8xbf16>
      %95 = vector.shape_cast %94 : vector<1x12x8xbf16> to vector<12x8xbf16>
      %cst_66 = arith.constant dense<0.000000e+00> : vector<128x8xf32>
      %96 = tpu.matmul %93, %95, %cst_66 {dimension_numbers = #tpu.dot_dimension_numbers<[1], [0], [0], [1], [0, 0, 1, 1], [], []>} : vector<128x12xbf16>, vector<12x8xbf16>, vector<128x8xf32> -> vector<128x8xf32>
      %97 = arith.addf %91, %96 : vector<128x8xf32>
      %c0_67 = arith.constant 0 : index
      %c0_68 = arith.constant 0 : index
      %c1_69 = arith.constant 1 : index
      %c0_70 = arith.constant 0 : index
      %98 = vector.load %alloca[%c0_67, %c0_68, %c1_69, %c0_70] : memref<2x10x16x12xbf16, #tpu.memory_space<vmem>>, vector<2x8x8x12xbf16>
      %99 = vector.shape_cast %98 : vector<2x8x8x12xbf16> to vector<128x12xbf16>
      %c1_71 = arith.constant 1 : index
      %c0_72 = arith.constant 0 : index
      %c0_73 = arith.constant 0 : index
      %100 = vector.load %arg7[%c1_71, %c0_72, %c0_73] : memref<9x12x8xbf16, #tpu.memory_space<vmem>>, vector<1x12x8xbf16>
      %101 = vector.shape_cast %100 : vector<1x12x8xbf16> to vector<12x8xbf16>
      %cst_74 = arith.constant dense<0.000000e+00> : vector<128x8xf32>
      %102 = tpu.matmul %99, %101, %cst_74 {dimension_numbers = #tpu.dot_dimension_numbers<[1], [0], [0], [1], [0, 0, 1, 1], [], []>} : vector<128x12xbf16>, vector<12x8xbf16>, vector<128x8xf32> -> vector<128x8xf32>
      %103 = arith.addf %97, %102 : vector<128x8xf32>
      %c0_75 = arith.constant 0 : index
      %c0_76 = arith.constant 0 : index
      %c2 = arith.constant 2 : index
      %c0_77 = arith.constant 0 : index
      %104 = vector.load %alloca[%c0_75, %c0_76, %c2, %c0_77] : memref<2x10x16x12xbf16, #tpu.memory_space<vmem>>, vector<2x8x8x12xbf16>
      %105 = vector.shape_cast %104 : vector<2x8x8x12xbf16> to vector<128x12xbf16>
      %c2_78 = arith.constant 2 : index
      %c0_79 = arith.constant 0 : index
      %c0_80 = arith.constant 0 : index
      %106 = vector.load %arg7[%c2_78, %c0_79, %c0_80] : memref<9x12x8xbf16, #tpu.memory_space<vmem>>, vector<1x12x8xbf16>
      %107 = vector.shape_cast %106 : vector<1x12x8xbf16> to vector<12x8xbf16>
      %cst_81 = arith.constant dense<0.000000e+00> : vector<128x8xf32>
      %108 = tpu.matmul %105, %107, %cst_81 {dimension_numbers = #tpu.dot_dimension_numbers<[1], [0], [0], [1], [0, 0, 1, 1], [], []>} : vector<128x12xbf16>, vector<12x8xbf16>, vector<128x8xf32> -> vector<128x8xf32>
      %109 = arith.addf %103, %108 : vector<128x8xf32>
      %c0_82 = arith.constant 0 : index
      %c1_83 = arith.constant 1 : index
      %c0_84 = arith.constant 0 : index
      %c0_85 = arith.constant 0 : index
      %110 = vector.load %alloca[%c0_82, %c1_83, %c0_84, %c0_85] : memref<2x10x16x12xbf16, #tpu.memory_space<vmem>>, vector<2x8x8x12xbf16>
      %111 = vector.shape_cast %110 : vector<2x8x8x12xbf16> to vector<128x12xbf16>
      %c3 = arith.constant 3 : index
      %c0_86 = arith.constant 0 : index
      %c0_87 = arith.constant 0 : index
      %112 = vector.load %arg7[%c3, %c0_86, %c0_87] : memref<9x12x8xbf16, #tpu.memory_space<vmem>>, vector<1x12x8xbf16>
      %113 = vector.shape_cast %112 : vector<1x12x8xbf16> to vector<12x8xbf16>
      %cst_88 = arith.constant dense<0.000000e+00> : vector<128x8xf32>
      %114 = tpu.matmul %111, %113, %cst_88 {dimension_numbers = #tpu.dot_dimension_numbers<[1], [0], [0], [1], [0, 0, 1, 1], [], []>} : vector<128x12xbf16>, vector<12x8xbf16>, vector<128x8xf32> -> vector<128x8xf32>
      %115 = arith.addf %109, %114 : vector<128x8xf32>
      %c0_89 = arith.constant 0 : index
      %c1_90 = arith.constant 1 : index
      %c1_91 = arith.constant 1 : index
      %c0_92 = arith.constant 0 : index
      %116 = vector.load %alloca[%c0_89, %c1_90, %c1_91, %c0_92] : memref<2x10x16x12xbf16, #tpu.memory_space<vmem>>, vector<2x8x8x12xbf16>
      %117 = vector.shape_cast %116 : vector<2x8x8x12xbf16> to vector<128x12xbf16>
      %c4 = arith.constant 4 : index
      %c0_93 = arith.constant 0 : index
      %c0_94 = arith.constant 0 : index
      %118 = vector.load %arg7[%c4, %c0_93, %c0_94] : memref<9x12x8xbf16, #tpu.memory_space<vmem>>, vector<1x12x8xbf16>
      %119 = vector.shape_cast %118 : vector<1x12x8xbf16> to vector<12x8xbf16>
      %cst_95 = arith.constant dense<0.000000e+00> : vector<128x8xf32>
      %120 = tpu.matmul %117, %119, %cst_95 {dimension_numbers = #tpu.dot_dimension_numbers<[1], [0], [0], [1], [0, 0, 1, 1], [], []>} : vector<128x12xbf16>, vector<12x8xbf16>, vector<128x8xf32> -> vector<128x8xf32>
      %121 = arith.addf %115, %120 : vector<128x8xf32>
      %c0_96 = arith.constant 0 : index
      %c1_97 = arith.constant 1 : index
      %c2_98 = arith.constant 2 : index
      %c0_99 = arith.constant 0 : index
      %122 = vector.load %alloca[%c0_96, %c1_97, %c2_98, %c0_99] : memref<2x10x16x12xbf16, #tpu.memory_space<vmem>>, vector<2x8x8x12xbf16>
      %123 = vector.shape_cast %122 : vector<2x8x8x12xbf16> to vector<128x12xbf16>
      %c5 = arith.constant 5 : index
      %c0_100 = arith.constant 0 : index
      %c0_101 = arith.constant 0 : index
      %124 = vector.load %arg7[%c5, %c0_100, %c0_101] : memref<9x12x8xbf16, #tpu.memory_space<vmem>>, vector<1x12x8xbf16>
      %125 = vector.shape_cast %124 : vector<1x12x8xbf16> to vector<12x8xbf16>
      %cst_102 = arith.constant dense<0.000000e+00> : vector<128x8xf32>
      %126 = tpu.matmul %123, %125, %cst_102 {dimension_numbers = #tpu.dot_dimension_numbers<[1], [0], [0], [1], [0, 0, 1, 1], [], []>} : vector<128x12xbf16>, vector<12x8xbf16>, vector<128x8xf32> -> vector<128x8xf32>
      %127 = arith.addf %121, %126 : vector<128x8xf32>
      %c0_103 = arith.constant 0 : index
      %c2_104 = arith.constant 2 : index
      %c0_105 = arith.constant 0 : index
      %c0_106 = arith.constant 0 : index
      %128 = vector.load %alloca[%c0_103, %c2_104, %c0_105, %c0_106] : memref<2x10x16x12xbf16, #tpu.memory_space<vmem>>, vector<2x8x8x12xbf16>
      %129 = vector.shape_cast %128 : vector<2x8x8x12xbf16> to vector<128x12xbf16>
      %c6 = arith.constant 6 : index
      %c0_107 = arith.constant 0 : index
      %c0_108 = arith.constant 0 : index
      %130 = vector.load %arg7[%c6, %c0_107, %c0_108] : memref<9x12x8xbf16, #tpu.memory_space<vmem>>, vector<1x12x8xbf16>
      %131 = vector.shape_cast %130 : vector<1x12x8xbf16> to vector<12x8xbf16>
      %cst_109 = arith.constant dense<0.000000e+00> : vector<128x8xf32>
      %132 = tpu.matmul %129, %131, %cst_109 {dimension_numbers = #tpu.dot_dimension_numbers<[1], [0], [0], [1], [0, 0, 1, 1], [], []>} : vector<128x12xbf16>, vector<12x8xbf16>, vector<128x8xf32> -> vector<128x8xf32>
      %133 = arith.addf %127, %132 : vector<128x8xf32>
      %c0_110 = arith.constant 0 : index
      %c2_111 = arith.constant 2 : index
      %c1_112 = arith.constant 1 : index
      %c0_113 = arith.constant 0 : index
      %134 = vector.load %alloca[%c0_110, %c2_111, %c1_112, %c0_113] : memref<2x10x16x12xbf16, #tpu.memory_space<vmem>>, vector<2x8x8x12xbf16>
      %135 = vector.shape_cast %134 : vector<2x8x8x12xbf16> to vector<128x12xbf16>
      %c7 = arith.constant 7 : index
      %c0_114 = arith.constant 0 : index
      %c0_115 = arith.constant 0 : index
      %136 = vector.load %arg7[%c7, %c0_114, %c0_115] : memref<9x12x8xbf16, #tpu.memory_space<vmem>>, vector<1x12x8xbf16>
      %137 = vector.shape_cast %136 : vector<1x12x8xbf16> to vector<12x8xbf16>
      %cst_116 = arith.constant dense<0.000000e+00> : vector<128x8xf32>
      %138 = tpu.matmul %135, %137, %cst_116 {dimension_numbers = #tpu.dot_dimension_numbers<[1], [0], [0], [1], [0, 0, 1, 1], [], []>} : vector<128x12xbf16>, vector<12x8xbf16>, vector<128x8xf32> -> vector<128x8xf32>
      %139 = arith.addf %133, %138 : vector<128x8xf32>
      %c0_117 = arith.constant 0 : index
      %c2_118 = arith.constant 2 : index
      %c2_119 = arith.constant 2 : index
      %c0_120 = arith.constant 0 : index
      %140 = vector.load %alloca[%c0_117, %c2_118, %c2_119, %c0_120] : memref<2x10x16x12xbf16, #tpu.memory_space<vmem>>, vector<2x8x8x12xbf16>
      %141 = vector.shape_cast %140 : vector<2x8x8x12xbf16> to vector<128x12xbf16>
      %c8_121 = arith.constant 8 : index
      %c0_122 = arith.constant 0 : index
      %c0_123 = arith.constant 0 : index
      %142 = vector.load %arg7[%c8_121, %c0_122, %c0_123] : memref<9x12x8xbf16, #tpu.memory_space<vmem>>, vector<1x12x8xbf16>
      %143 = vector.shape_cast %142 : vector<1x12x8xbf16> to vector<12x8xbf16>
      %cst_124 = arith.constant dense<0.000000e+00> : vector<128x8xf32>
      %144 = tpu.matmul %141, %143, %cst_124 {dimension_numbers = #tpu.dot_dimension_numbers<[1], [0], [0], [1], [0, 0, 1, 1], [], []>} : vector<128x12xbf16>, vector<12x8xbf16>, vector<128x8xf32> -> vector<128x8xf32>
      %145 = arith.addf %139, %144 : vector<128x8xf32>
      %146 = vector.broadcast %90 : vector<1x8xf32> to vector<128x8xf32>
      %147 = arith.addf %145, %146 : vector<128x8xf32>
      %c0_125 = arith.constant 0 : index
      %c0_126 = arith.constant 0 : index
      %148 = vector.load %arg11[%c0_125, %c0_126] : memref<128x8xf32, #tpu.memory_space<vmem>>, vector<128x8xf32>
      tpu.vector_store %arg11[%c0_125, %c0_126], %147 {strides = array<i32>} : memref<128x8xf32, #tpu.memory_space<vmem>>, vector<128x8xf32>,
      tpu.yield
    }) : () -> ()
    return
  }
}

</mosaic_0001>

<llo_original>
// kernel: tpu_custom_call.1
$region0: #{tpu_custom_call.1}
  #allocation0 [shape = 'u32[]', space=smem, size = 0x4, offset = 0x4, fixed_abs, tag = 'smem constant byte address 0x4 - core index']
  #allocation1 [shape = 'u32[144,128]{1,0:T(1,128)}', space=vmem, size = 0x12000, scoped, tag = 'internal scratch']
  #allocation2 [shape = 'f32[128,8]{1,0:T(8,128)}', space=vmem, size = 0x10000, scoped, tag = 'scratch operand']
  %s0 = inlined_call_operand.vmem [shape: f32[16,2,8,8], index: 0, kind: input, shape index: {}]
  %s1 = inlined_call_operand.vmem [shape: f32[1,4], index: 1, kind: input, shape index: {}]
  %s2 = inlined_call_operand.vmem [shape: f32[1,4], index: 2, kind: input, shape index: {}]
  %s3 = inlined_call_operand.vmem [shape: bf16[9,4,8], index: 3, kind: input, shape index: {}]
  %s4 = inlined_call_operand.vmem [shape: f32[1,8], index: 4, kind: input, shape index: {}]
  %s5 = inlined_call_operand.vmem [shape: f32[1,8], index: 5, kind: input, shape index: {}]
  %s6 = inlined_call_operand.vmem [shape: f32[1,8], index: 6, kind: input, shape index: {}]
  %s7 = inlined_call_operand.vmem [shape: bf16[9,12,8], index: 7, kind: input, shape index: {}]
  %s8 = inlined_call_operand.vmem [shape: f32[1,8], index: 8, kind: input, shape index: {}]
  %s9 = inlined_call_operand.vmem [shape: f32[1,4], index: 9, kind: input, shape index: {}]
  %s10 = inlined_call_operand.vmem [shape: f32[1,4], index: 10, kind: input, shape index: {}]
  %s11 = inlined_call_operand.vmem [shape: f32[128,8], index: 11, kind: output, shape index: {}]
  %s12 = sld [smem:[#allocation0]]
  $region56: #{tpu_custom_call.1} parent=0
    _
  %s14 = ssub.s32 1, %s12
  %s15 = scalar_select 0, %s14, %s12
  // Predicated region
  $region2: #{tpu_custom_call.1} parent=0 // pred_check
    _
  $region3: #{tpu_custom_call.1} parent=0 // pred_check_branch
    %17 = sbr.rel (0) target = $region5
  $region4: #{tpu_custom_call.1} parent=0 // pred_region
    _
  $region5: #{tpu_custom_call.1} parent=0 // pred_fallthru
    _
  // Predicated region
  $region6: #{tpu_custom_call.1} parent=0 // pred_check
    _
  $region7: #{tpu_custom_call.1} parent=0 // pred_check_branch
    %19 = sbr.rel (0) target = $region9
  $region8: #{tpu_custom_call.1} parent=0 // pred_region
    _
  $region9: #{tpu_custom_call.1} parent=0 // pred_fallthru
    _
  // Predicated region
  $region10: #{tpu_custom_call.1} parent=0 // pred_check
    _
  $region11: #{tpu_custom_call.1} parent=0 // pred_check_branch
    %21 = sbr.rel (0) target = $region13
  $region12: #{tpu_custom_call.1} parent=0 // pred_region
    _
  $region13: #{tpu_custom_call.1} parent=0 // pred_fallthru
    _
  // Predicated region
  $region14: #{tpu_custom_call.1} parent=0 // pred_check
    _
  $region15: #{tpu_custom_call.1} parent=0 // pred_check_branch
    %23 = sbr.rel (0) target = $region17
  $region16: #{tpu_custom_call.1} parent=0 // pred_region
    _
  $region17: #{tpu_custom_call.1} parent=0 // pred_fallthru
    _
  // Predicated region
  $region18: #{tpu_custom_call.1} parent=0 // pred_check
    _
  $region19: #{tpu_custom_call.1} parent=0 // pred_check_branch
    %25 = sbr.rel (0) target = $region21
  $region20: #{tpu_custom_call.1} parent=0 // pred_region
    _
  $region21: #{tpu_custom_call.1} parent=0 // pred_fallthru
    _
  // Predicated region
  $region22: #{tpu_custom_call.1} parent=0 // pred_check
    _
  $region23: #{tpu_custom_call.1} parent=0 // pred_check_branch
    %27 = sbr.rel (0) target = $region25
  $region24: #{tpu_custom_call.1} parent=0 // pred_region
    _
  $region25: #{tpu_custom_call.1} parent=0 // pred_fallthru
    _
  // Predicated region
  $region26: #{tpu_custom_call.1} parent=0 // pred_check
    _
  $region27: #{tpu_custom_call.1} parent=0 // pred_check_branch
    %29 = sbr.rel (0) target = $region29
  $region28: #{tpu_custom_call.1} parent=0 // pred_region
    _
  $region29: #{tpu_custom_call.1} parent=0 // pred_fallthru
    _
  // Predicated region
  $region30: #{tpu_custom_call.1} parent=0 // pred_check
    _
  $region31: #{tpu_custom_call.1} parent=0 // pred_check_branch
    %31 = sbr.rel (0) target = $region33
  $region32: #{tpu_custom_call.1} parent=0 // pred_region
    _
  $region33: #{tpu_custom_call.1} parent=0 // pred_fallthru
    _
  // Predicated region
  $region34: #{tpu_custom_call.1} parent=0 // pred_check
    _
  $region35: #{tpu_custom_call.1} parent=0 // pred_check_branch
    %33 = sbr.rel (0) target = $region37
  $region36: #{tpu_custom_call.1} parent=0 // pred_region
    _
  $region37: #{tpu_custom_call.1} parent=0 // pred_fallthru
    _
  // Predicated region
  $region38: #{tpu_custom_call.1} parent=0 // pred_check
    _
  $region39: #{tpu_custom_call.1} parent=0 // pred_check_branch
    %35 = sbr.rel (0) target = $region41
  $region40: #{tpu_custom_call.1} parent=0 // pred_region
    _
  $region41: #{tpu_custom_call.1} parent=0 // pred_fallthru
    _
  // Predicated region
  $region42: #{tpu_custom_call.1} parent=0 // pred_check
    _
  $region43: #{tpu_custom_call.1} parent=0 // pred_check_branch
    %37 = sbr.rel (0) target = $region45
  $region44: #{tpu_custom_call.1} parent=0 // pred_region
    _
  $region45: #{tpu_custom_call.1} parent=0 // pred_fallthru
    _
  %v39 = vld [vmem:[%s0] sm:$0xff]
  %v40 = vld [vmem:[%s0 + $0x8] sm:$0xff]
  %v41 = vld [vmem:[%s0 + $0x10] sm:$0xff]
  %v42 = vld [vmem:[%s0 + $0x18] sm:$0xff]
  %v43 = vld [vmem:[%s0 + $0x20] sm:$0xff]
  %v44 = vld [vmem:[%s0 + $0x28] sm:$0xff]
  %v45 = vld [vmem:[%s0 + $0x30] sm:$0xff]
  %v46 = vld [vmem:[%s0 + $0x38] sm:$0xff]
  %v47 = vld [vmem:[%s0 + $0x40] sm:$0xff]
  %v48 = vld [vmem:[%s0 + $0x48] sm:$0xff]
  %v49 = vld [vmem:[%s0 + $0x50] sm:$0xff]
  %v50 = vld [vmem:[%s0 + $0x58] sm:$0xff]
  %v51 = vld [vmem:[%s0 + $0x60] sm:$0xff]
  %v52 = vld [vmem:[%s0 + $0x68] sm:$0xff]
  %v53 = vld [vmem:[%s0 + $0x70] sm:$0xff]
  %v54 = vld [vmem:[%s0 + $0x78] sm:$0xff]
  %v55 = vld [vmem:[%s0 + $0x80] sm:$0xff]
  %v56 = vld [vmem:[%s0 + $0x88] sm:$0xff]
  %v57 = vld [vmem:[%s0 + $0x90] sm:$0xff]
  %v58 = vld [vmem:[%s0 + $0x98] sm:$0xff]
  %v59 = vld [vmem:[%s0 + $0xa0] sm:$0xff]
  %v60 = vld [vmem:[%s0 + $0xa8] sm:$0xff]
  %v61 = vld [vmem:[%s0 + $0xb0] sm:$0xff]
  %v62 = vld [vmem:[%s0 + $0xb8] sm:$0xff]
  %v63 = vld [vmem:[%s0 + $0xc0] sm:$0xff]
  %v64 = vld [vmem:[%s0 + $0xc8] sm:$0xff]
  %v65 = vld [vmem:[%s0 + $0xd0] sm:$0xff]
  %v66 = vld [vmem:[%s0 + $0xd8] sm:$0xff]
  %v67 = vld [vmem:[%s0 + $0xe0] sm:$0xff]
  %v68 = vld [vmem:[%s0 + $0xe8] sm:$0xff]
  %v69 = vld [vmem:[%s0 + $0xf0] sm:$0xff]
  %v70 = vld [vmem:[%s0 + $0xf8] sm:$0xff]
  %v71 = vmax.f32 %v39, %v40
  %v72 = vmax.f32 %v41, %v42
  %v73 = vmax.f32 %v43, %v44
  %v74 = vmax.f32 %v45, %v46
  %v75 = vmax.f32 %v47, %v48
  %v76 = vmax.f32 %v49, %v50
  %v77 = vmax.f32 %v51, %v52
  %v78 = vmax.f32 %v53, %v54
  %v79 = vmax.f32 %v55, %v56
  %v80 = vmax.f32 %v57, %v58
  %v81 = vmax.f32 %v59, %v60
  %v82 = vmax.f32 %v61, %v62
  %v83 = vmax.f32 %v63, %v64
  %v84 = vmax.f32 %v65, %v66
  %v85 = vmax.f32 %v67, %v68
  %v86 = vmax.f32 %v69, %v70
  %103 = vrot.lane.b32.xlu0 %v71, 124
  %v104 = vpop.permute.xlu0 %103
  %105 = vrot.lane.b32.xlu0 %v72, 124
  %v106 = vpop.permute.xlu0 %105
  %107 = vrot.lane.b32.xlu0 %v73, 124
  %v108 = vpop.permute.xlu0 %107
  %109 = vrot.lane.b32.xlu0 %v74, 124
  %v110 = vpop.permute.xlu0 %109
  %111 = vrot.lane.b32.xlu0 %v75, 124
  %v112 = vpop.permute.xlu0 %111
  %113 = vrot.lane.b32.xlu0 %v76, 124
  %v114 = vpop.permute.xlu0 %113
  %115 = vrot.lane.b32.xlu0 %v77, 124
  %v116 = vpop.permute.xlu0 %115
  %117 = vrot.lane.b32.xlu0 %v78, 124
  %v118 = vpop.permute.xlu0 %117
  %119 = vrot.lane.b32.xlu0 %v79, 124
  %v120 = vpop.permute.xlu0 %119
  %121 = vrot.lane.b32.xlu0 %v80, 124
  %v122 = vpop.permute.xlu0 %121
  %123 = vrot.lane.b32.xlu0 %v81, 124
  %v124 = vpop.permute.xlu0 %123
  %125 = vrot.lane.b32.xlu0 %v82, 124
  %v126 = vpop.permute.xlu0 %125
  %127 = vrot.lane.b32.xlu0 %v83, 124
  %v128 = vpop.permute.xlu0 %127
  %129 = vrot.lane.b32.xlu0 %v84, 124
  %v130 = vpop.permute.xlu0 %129
  %131 = vrot.lane.b32.xlu0 %v85, 124
  %v132 = vpop.permute.xlu0 %131
  %133 = vrot.lane.b32.xlu0 %v86, 124
  %v134 = vpop.permute.xlu0 %133
  %v151 = vmax.f32 %v71, %v104
  %v152 = vmax.f32 %v72, %v106
  %v153 = vmax.f32 %v73, %v108
  %v154 = vmax.f32 %v74, %v110
  %v155 = vmax.f32 %v75, %v112
  %v156 = vmax.f32 %v76, %v114
  %v157 = vmax.f32 %v77, %v116
  %v158 = vmax.f32 %v78, %v118
  %v159 = vmax.f32 %v79, %v120
  %v160 = vmax.f32 %v80, %v122
  %v161 = vmax.f32 %v81, %v124
  %v162 = vmax.f32 %v82, %v126
  %v163 = vmax.f32 %v83, %v128
  %v164 = vmax.f32 %v84, %v130
  %v165 = vmax.f32 %v85, %v132
  %v166 = vmax.f32 %v86, %v134
  %vm167 = vcmask 31744
  %v168 = vsel %vm167, %v151, 0.0
  %v169 = vsel %vm167, %v152, 0.0
  %v170 = vadd.f32 %v168, %v169
  %v171 = vsel %vm167, %v153, 0.0
  %v172 = vadd.f32 %v170, %v171
  %v173 = vsel %vm167, %v154, 0.0
  %v174 = vadd.f32 %v172, %v173
  %v175 = vsel %vm167, %v155, 0.0
  %v176 = vadd.f32 %v174, %v175
  %v177 = vsel %vm167, %v156, 0.0
  %v178 = vadd.f32 %v176, %v177
  %v179 = vsel %vm167, %v157, 0.0
  %v180 = vadd.f32 %v178, %v179
  %v181 = vsel %vm167, %v158, 0.0
  %v182 = vadd.f32 %v180, %v181
  %v183 = vsel %vm167, %v159, 0.0
  %v184 = vadd.f32 %v182, %v183
  %v185 = vsel %vm167, %v160, 0.0
  %v186 = vadd.f32 %v184, %v185
  %v187 = vsel %vm167, %v161, 0.0
  %v188 = vadd.f32 %v186, %v187
  %v189 = vsel %vm167, %v162, 0.0
  %v190 = vadd.f32 %v188, %v189
  %v191 = vsel %vm167, %v163, 0.0
  %v192 = vadd.f32 %v190, %v191
  %v193 = vsel %vm167, %v164, 0.0
  %v194 = vadd.f32 %v192, %v193
  %v195 = vsel %vm167, %v165, 0.0
  %v196 = vadd.f32 %v194, %v195
  %v197 = vsel %vm167, %v166, 0.0
  %v198 = vadd.f32 %v196, %v197
  %v199 = vsel %vm167, %v198, 0.0
  %v200 = vrot.slane %v199, 4
  %v201 = vadd.f32 %v199, %v200
  %v202 = vrot.slane %v201, 2
  %v203 = vadd.f32 %v201, %v202
  %v204 = vrot.slane %v203, 1
  %v205 = vadd.f32 %v203, %v204
  %v206 = vmul.f32 %v205, 0.0078125
  %v207 = vmul.f32 %v151, %v151
  %v208 = vmul.f32 %v152, %v152
  %v209 = vmul.f32 %v153, %v153
  %v210 = vmul.f32 %v154, %v154
  %v211 = vmul.f32 %v155, %v155
  %v212 = vmul.f32 %v156, %v156
  %v213 = vmul.f32 %v157, %v157
  %v214 = vmul.f32 %v158, %v158
  %v215 = vmul.f32 %v159, %v159
  %v216 = vmul.f32 %v160, %v160
  %v217 = vmul.f32 %v161, %v161
  %v218 = vmul.f32 %v162, %v162
  %v219 = vmul.f32 %v163, %v163
  %v220 = vmul.f32 %v164, %v164
  %v221 = vmul.f32 %v165, %v165
  %v222 = vmul.f32 %v166, %v166
  %v223 = vsel %vm167, %v207, 0.0
  %v224 = vsel %vm167, %v208, 0.0
  %v225 = vadd.f32 %v223, %v224
  %v226 = vsel %vm167, %v209, 0.0
  %v227 = vadd.f32 %v225, %v226
  %v228 = vsel %vm167, %v210, 0.0
  %v229 = vadd.f32 %v227, %v228
  %v230 = vsel %vm167, %v211, 0.0
  %v231 = vadd.f32 %v229, %v230
  %v232 = vsel %vm167, %v212, 0.0
  %v233 = vadd.f32 %v231, %v232
  %v234 = vsel %vm167, %v213, 0.0
  %v235 = vadd.f32 %v233, %v234
  %v236 = vsel %vm167, %v214, 0.0
  %v237 = vadd.f32 %v235, %v236
  %v238 = vsel %vm167, %v215, 0.0
  %v239 = vadd.f32 %v237, %v238
  %v240 = vsel %vm167, %v216, 0.0
  %v241 = vadd.f32 %v239, %v240
  %v242 = vsel %vm167, %v217, 0.0
  %v243 = vadd.f32 %v241, %v242
  %v244 = vsel %vm167, %v218, 0.0
  %v245 = vadd.f32 %v243, %v244
  %v246 = vsel %vm167, %v219, 0.0
  %v247 = vadd.f32 %v245, %v246
  %v248 = vsel %vm167, %v220, 0.0
  %v249 = vadd.f32 %v247, %v248
  %v250 = vsel %vm167, %v221, 0.0
  %v251 = vadd.f32 %v249, %v250
  %v252 = vsel %vm167, %v222, 0.0
  %v253 = vadd.f32 %v251, %v252
  %v254 = vsel %vm167, %v253, 0.0
  %v255 = vrot.slane %v254, 4
  %v256 = vadd.f32 %v254, %v255
  %v257 = vrot.slane %v256, 2
  %v258 = vadd.f32 %v256, %v257
  %v259 = vrot.slane %v258, 1
  %v260 = vadd.f32 %v258, %v259
  %v261 = vmul.f32 %v260, 0.0078125
  %v262 = vmul.f32 %v206, %v206
  %v263 = vsub.f32 %v261, %v262
  %v264 = vsub.f32 %v151, %v206
  %v265 = vsub.f32 %v152, %v206
  %v266 = vsub.f32 %v153, %v206
  %v267 = vsub.f32 %v154, %v206
  %v268 = vsub.f32 %v155, %v206
  %v269 = vsub.f32 %v156, %v206
  %v270 = vsub.f32 %v157, %v206
  %v271 = vsub.f32 %v158, %v206
  %v272 = vsub.f32 %v159, %v206
  %v273 = vsub.f32 %v160, %v206
  %v274 = vsub.f32 %v161, %v206
  %v275 = vsub.f32 %v162, %v206
  %v276 = vsub.f32 %v163, %v206
  %v277 = vsub.f32 %v164, %v206
  %v278 = vsub.f32 %v165, %v206
  %v279 = vsub.f32 %v166, %v206
  %v280 = vadd.f32 %v263, 1e-05
  %v281 = vrsqrt.pop %v280
  %v282 = vmul.f32 %v264, %v281
  %v283 = vmul.f32 %v265, %v281
  %v284 = vmul.f32 %v266, %v281
  %v285 = vmul.f32 %v267, %v281
  %v286 = vmul.f32 %v268, %v281
  %v287 = vmul.f32 %v269, %v281
  %v288 = vmul.f32 %v270, %v281
  %v289 = vmul.f32 %v271, %v281
  %v290 = vmul.f32 %v272, %v281
  %v291 = vmul.f32 %v273, %v281
  %v292 = vmul.f32 %v274, %v281
  %v293 = vmul.f32 %v275, %v281
  %v294 = vmul.f32 %v276, %v281
  %v295 = vmul.f32 %v277, %v281
  %v296 = vmul.f32 %v278, %v281
  %v297 = vmul.f32 %v279, %v281
  %v298 = vld [vmem:[%s1] sm:$0x1]
  %v299 = vld [vmem:[%s2] sm:$0x1]
  %v301 = vlaneseq
  %v302 = vshrl.u32 %v301, 7
  %v303 = vsub.s32 0, %v302
  %v304 = vrot.slane %v298, %v303
  %v306 = vmul.f32 %v282, %v304
  %v307 = vmul.f32 %v283, %v304
  %v308 = vmul.f32 %v284, %v304
  %v309 = vmul.f32 %v285, %v304
  %v310 = vmul.f32 %v286, %v304
  %v311 = vmul.f32 %v287, %v304
  %v312 = vmul.f32 %v288, %v304
  %v313 = vmul.f32 %v289, %v304
  %v314 = vmul.f32 %v290, %v304
  %v315 = vmul.f32 %v291, %v304
  %v316 = vmul.f32 %v292, %v304
  %v317 = vmul.f32 %v293, %v304
  %v318 = vmul.f32 %v294, %v304
  %v319 = vmul.f32 %v295, %v304
  %v320 = vmul.f32 %v296, %v304
  %v321 = vmul.f32 %v297, %v304
  %v323 = vlaneseq
  %v324 = vshrl.u32 %v323, 7
  %v325 = vsub.s32 0, %v324
  %v326 = vrot.slane %v299, %v325
  %v328 = vadd.f32 %v306, %v326
  %v329 = vadd.f32 %v307, %v326
  %v330 = vadd.f32 %v308, %v326
  %v331 = vadd.f32 %v309, %v326
  %v332 = vadd.f32 %v310, %v326
  %v333 = vadd.f32 %v311, %v326
  %v334 = vadd.f32 %v312, %v326
  %v335 = vadd.f32 %v313, %v326
  %v336 = vadd.f32 %v314, %v326
  %v337 = vadd.f32 %v315, %v326
  %v338 = vadd.f32 %v316, %v326
  %v339 = vadd.f32 %v317, %v326
  %v340 = vadd.f32 %v318, %v326
  %v341 = vadd.f32 %v319, %v326
  %v342 = vadd.f32 %v320, %v326
  %v343 = vadd.f32 %v321, %v326
  %v344 = vmax.f32 %v328, 0.0
  %v345 = vmax.f32 %v329, 0.0
  %v346 = vmax.f32 %v330, 0.0
  %v347 = vmax.f32 %v331, 0.0
  %v348 = vmax.f32 %v332, 0.0
  %v349 = vmax.f32 %v333, 0.0
  %v350 = vmax.f32 %v334, 0.0
  %v351 = vmax.f32 %v335, 0.0
  %v352 = vmax.f32 %v336, 0.0
  %v353 = vmax.f32 %v337, 0.0
  %v354 = vmax.f32 %v338, 0.0
  %v355 = vmax.f32 %v339, 0.0
  %v356 = vmax.f32 %v340, 0.0
  %v357 = vmax.f32 %v341, 0.0
  %v358 = vmax.f32 %v342, 0.0
  %v359 = vmax.f32 %v343, 0.0
  %v360 = vld [vmem:[%s9] sm:$0x1]
  %v361 = vld [vmem:[%s10] sm:$0x1]
  %v363 = vlaneseq
  %v364 = vshrl.u32 %v363, 7
  %v365 = vsub.s32 0, %v364
  %v366 = vrot.slane %v360, %v365
  %v368 = vmul.f32 %v282, %v366
  %v369 = vmul.f32 %v283, %v366
  %v370 = vmul.f32 %v284, %v366
  %v371 = vmul.f32 %v285, %v366
  %v372 = vmul.f32 %v286, %v366
  %v373 = vmul.f32 %v287, %v366
  %v374 = vmul.f32 %v288, %v366
  %v375 = vmul.f32 %v289, %v366
  %v376 = vmul.f32 %v290, %v366
  %v377 = vmul.f32 %v291, %v366
  %v378 = vmul.f32 %v292, %v366
  %v379 = vmul.f32 %v293, %v366
  %v380 = vmul.f32 %v294, %v366
  %v381 = vmul.f32 %v295, %v366
  %v382 = vmul.f32 %v296, %v366
  %v383 = vmul.f32 %v297, %v366
  %v385 = vlaneseq
  %v386 = vshrl.u32 %v385, 7
  %v387 = vsub.s32 0, %v386
  %v388 = vrot.slane %v361, %v387
  %v390 = vadd.f32 %v368, %v388
  %v391 = vadd.f32 %v369, %v388
  %v392 = vadd.f32 %v370, %v388
  %v393 = vadd.f32 %v371, %v388
  %v394 = vadd.f32 %v372, %v388
  %v395 = vadd.f32 %v373, %v388
  %v396 = vadd.f32 %v374, %v388
  %v397 = vadd.f32 %v375, %v388
  %v398 = vadd.f32 %v376, %v388
  %v399 = vadd.f32 %v377, %v388
  %v400 = vadd.f32 %v378, %v388
  %v401 = vadd.f32 %v379, %v388
  %v402 = vadd.f32 %v380, %v388
  %v403 = vadd.f32 %v381, %v388
  %v404 = vadd.f32 %v382, %v388
  %v405 = vadd.f32 %v383, %v388
  %v406 = vmax.f32 %v390, 0.0
  %v407 = vmax.f32 %v391, 0.0
  %v408 = vmax.f32 %v392, 0.0
  %v409 = vmax.f32 %v393, 0.0
  %v410 = vmax.f32 %v394, 0.0
  %v411 = vmax.f32 %v395, 0.0
  %v412 = vmax.f32 %v396, 0.0
  %v413 = vmax.f32 %v397, 0.0
  %v414 = vmax.f32 %v398, 0.0
  %v415 = vmax.f32 %v399, 0.0
  %v416 = vmax.f32 %v400, 0.0
  %v417 = vmax.f32 %v401, 0.0
  %v418 = vmax.f32 %v402, 0.0
  %v419 = vmax.f32 %v403, 0.0
  %v420 = vmax.f32 %v404, 0.0
  %v421 = vmax.f32 %v405, 0.0
  $region46: #{tpu_custom_call.1} parent=0
    #allocation3 [shape = 'u8[81920]{0}', space=vmem, size = 0x14000, scoped, tag = 'scoped memory for tpu_custom_call.1']
    %422 = vst.msk [vmem:[#allocation3] sm:$0xff] %vm167, 0
    %423 = vst.msk [vmem:[#allocation3 + $0x50] sm:$0xff] %vm167, 0
    %s424 = scalar_lea.vmem [#allocation3], 72
    %425 = vst.msk [vmem:[%s424] sm:$0xff] %vm167, 0
    %426 = vst.msk [vmem:[%s424 + $0x50] sm:$0xff] %vm167, 0
    %vm427 = vcmask 24576
    %vm428 = vsmask.f32 256
    %vm429 = vmand %vm427, %vm428
    %v430 = vld [vmem:[#allocation3] sm:$0x1]
    %v431 = vsel %vm429, 0, %v430
    %432 = vst [vmem:[#allocation3] sm:$0x1] %v431
    %v433 = vld [vmem:[#allocation3 + $0x8] sm:$0x1]
    %v434 = vsel %vm429, 0, %v433
    %435 = vst [vmem:[#allocation3 + $0x8] sm:$0x1] %v434
    %v436 = vld [vmem:[#allocation3 + $0x10] sm:$0x1]
    %v437 = vsel %vm429, 0, %v436
    %438 = vst [vmem:[#allocation3 + $0x10] sm:$0x1] %v437
    %v439 = vld [vmem:[#allocation3 + $0x18] sm:$0x1]
    %v440 = vsel %vm429, 0, %v439
    %441 = vst [vmem:[#allocation3 + $0x18] sm:$0x1] %v440
    %v442 = vld [vmem:[#allocation3 + $0x20] sm:$0x1]
    %v443 = vsel %vm429, 0, %v442
    %444 = vst [vmem:[#allocation3 + $0x20] sm:$0x1] %v443
    %v445 = vld [vmem:[#allocation3 + $0x28] sm:$0x1]
    %v446 = vsel %vm429, 0, %v445
    %447 = vst [vmem:[#allocation3 + $0x28] sm:$0x1] %v446
    %v448 = vld [vmem:[#allocation3 + $0x30] sm:$0x1]
    %v449 = vsel %vm429, 0, %v448
    %450 = vst [vmem:[#allocation3 + $0x30] sm:$0x1] %v449
    %v451 = vld [vmem:[#allocation3 + $0x38] sm:$0x1]
    %v452 = vsel %vm429, 0, %v451
    %453 = vst [vmem:[#allocation3 + $0x38] sm:$0x1] %v452
    %v454 = vld [vmem:[#allocation3 + $0x40] sm:$0x1]
    %v455 = vsel %vm429, 0, %v454
    %456 = vst [vmem:[#allocation3 + $0x40] sm:$0x1] %v455
    %v457 = vld [vmem:[#allocation3 + $0x48] sm:$0x1]
    %v458 = vsel %vm429, 0, %v457
    %459 = vst [vmem:[#allocation3 + $0x48] sm:$0x1] %v458
    %v460 = vld [vmem:[#allocation3 + $0x50] sm:$0x1]
    %v461 = vsel %vm429, 0, %v460
    %462 = vst [vmem:[#allocation3 + $0x50] sm:$0x1] %v461
    %v463 = vld [vmem:[#allocation3 + $0x58] sm:$0x1]
    %v464 = vsel %vm429, 0, %v463
    %465 = vst [vmem:[#allocation3 + $0x58] sm:$0x1] %v464
    %v466 = vld [vmem:[#allocation3 + $0x60] sm:$0x1]
    %v467 = vsel %vm429, 0, %v466
    %468 = vst [vmem:[#allocation3 + $0x60] sm:$0x1] %v467
    %v469 = vld [vmem:[#allocation3 + $0x68] sm:$0x1]
    %v470 = vsel %vm429, 0, %v469
    %471 = vst [vmem:[#allocation3 + $0x68] sm:$0x1] %v470
    %v472 = vld [vmem:[#allocation3 + $0x70] sm:$0x1]
    %v473 = vsel %vm429, 0, %v472
    %474 = vst [vmem:[#allocation3 + $0x70] sm:$0x1] %v473
    %v475 = vld [vmem:[#allocation3 + $0x78] sm:$0x1]
    %v476 = vsel %vm429, 0, %v475
    %477 = vst [vmem:[#allocation3 + $0x78] sm:$0x1] %v476
    %v478 = vld [vmem:[#allocation3 + $0x80] sm:$0x1]
    %v479 = vsel %vm429, 0, %v478
    %480 = vst [vmem:[#allocation3 + $0x80] sm:$0x1] %v479
    %v481 = vld [vmem:[#allocation3 + $0x88] sm:$0x1]
    %v482 = vsel %vm429, 0, %v481
    %483 = vst [vmem:[#allocation3 + $0x88] sm:$0x1] %v482
    %v484 = vld [vmem:[#allocation3 + $0x90] sm:$0x1]
    %v485 = vsel %vm429, 0, %v484
    %486 = vst [vmem:[#allocation3 + $0x90] sm:$0x1] %v485
    %v487 = vld [vmem:[#allocation3 + $0x98] sm:$0x1]
    %v488 = vsel %vm429, 0, %v487
    %489 = vst [vmem:[#allocation3 + $0x98] sm:$0x1] %v488
    %vm490 = vcmask 31748
    %vm491 = vsmask.f32 7954
    %vm492 = vmand %vm490, %vm491
    %v493 = vld [vmem:[#allocation3] sm:$0xf0]
    %v494 = vsel %vm492, 0, %v493
    %495 = vst [vmem:[#allocation3] sm:$0xf0] %v494
    %v496 = vld [vmem:[#allocation3 + $0x8] sm:$0xf0]
    %v497 = vsel %vm492, 0, %v496
    %498 = vst [vmem:[#allocation3 + $0x8] sm:$0xf0] %v497
    %v499 = vld [vmem:[#allocation3 + $0x10] sm:$0xf0]
    %v500 = vsel %vm492, 0, %v499
    %501 = vst [vmem:[#allocation3 + $0x10] sm:$0xf0] %v500
    %v502 = vld [vmem:[#allocation3 + $0x18] sm:$0xf0]
    %v503 = vsel %vm492, 0, %v502
    %504 = vst [vmem:[#allocation3 + $0x18] sm:$0xf0] %v503
    %v505 = vld [vmem:[#allocation3 + $0x20] sm:$0xf0]
    %v506 = vsel %vm492, 0, %v505
    %507 = vst [vmem:[#allocation3 + $0x20] sm:$0xf0] %v506
    %v508 = vld [vmem:[#allocation3 + $0x28] sm:$0xf0]
    %v509 = vsel %vm492, 0, %v508
    %510 = vst [vmem:[#allocation3 + $0x28] sm:$0xf0] %v509
    %v511 = vld [vmem:[#allocation3 + $0x30] sm:$0xf0]
    %v512 = vsel %vm492, 0, %v511
    %513 = vst [vmem:[#allocation3 + $0x30] sm:$0xf0] %v512
    %v514 = vld [vmem:[#allocation3 + $0x38] sm:$0xf0]
    %v515 = vsel %vm492, 0, %v514
    %516 = vst [vmem:[#allocation3 + $0x38] sm:$0xf0] %v515
    %v517 = vld [vmem:[#allocation3 + $0x40] sm:$0xf0]
    %v518 = vsel %vm492, 0, %v517
    %519 = vst [vmem:[#allocation3 + $0x40] sm:$0xf0] %v518
    %v520 = vld [vmem:[#allocation3 + $0x48] sm:$0xf0]
    %v521 = vsel %vm492, 0, %v520
    %522 = vst [vmem:[#allocation3 + $0x48] sm:$0xf0] %v521
    %v523 = vld [vmem:[#allocation3 + $0x50] sm:$0xf0]
    %v524 = vsel %vm492, 0, %v523
    %525 = vst [vmem:[#allocation3 + $0x50] sm:$0xf0] %v524
    %v526 = vld [vmem:[#allocation3 + $0x58] sm:$0xf0]
    %v527 = vsel %vm492, 0, %v526
    %528 = vst [vmem:[#allocation3 + $0x58] sm:$0xf0] %v527
    %v529 = vld [vmem:[#allocation3 + $0x60] sm:$0xf0]
    %v530 = vsel %vm492, 0, %v529
    %531 = vst [vmem:[#allocation3 + $0x60] sm:$0xf0] %v530
    %v532 = vld [vmem:[#allocation3 + $0x68] sm:$0xf0]
    %v533 = vsel %vm492, 0, %v532
    %534 = vst [vmem:[#allocation3 + $0x68] sm:$0xf0] %v533
    %v535 = vld [vmem:[#allocation3 + $0x70] sm:$0xf0]
    %v536 = vsel %vm492, 0, %v535
    %537 = vst [vmem:[#allocation3 + $0x70] sm:$0xf0] %v536
    %v538 = vld [vmem:[#allocation3 + $0x78] sm:$0xf0]
    %v539 = vsel %vm492, 0, %v538
    %540 = vst [vmem:[#allocation3 + $0x78] sm:$0xf0] %v539
    %v541 = vld [vmem:[#allocation3 + $0x80] sm:$0xf0]
    %v542 = vsel %vm492, 0, %v541
    %543 = vst [vmem:[#allocation3 + $0x80] sm:$0xf0] %v542
    %v544 = vld [vmem:[#allocation3 + $0x88] sm:$0xf0]
    %v545 = vsel %vm492, 0, %v544
    %546 = vst [vmem:[#allocation3 + $0x88] sm:$0xf0] %v545
    %v547 = vld [vmem:[#allocation3 + $0x90] sm:$0xf0]
    %v548 = vsel %vm492, 0, %v547
    %549 = vst [vmem:[#allocation3 + $0x90] sm:$0xf0] %v548
    %v550 = vld [vmem:[#allocation3 + $0x98] sm:$0xf0]
    %v551 = vsel %vm492, 0, %v550
    %552 = vst [vmem:[#allocation3 + $0x98] sm:$0xf0] %v551
    %v553 = vpack.c.bf16 %v344, %v344
    %v554 = vpack.c.bf16 %v345, %v345
    %v555 = vpack.c.bf16 %v346, %v346
    %v556 = vpack.c.bf16 %v347, %v347
    %v557 = vpack.c.bf16 %v348, %v348
    %v558 = vpack.c.bf16 %v349, %v349
    %v559 = vpack.c.bf16 %v350, %v350
    %v560 = vpack.c.bf16 %v351, %v351
    %v561 = vpack.c.bf16 %v352, %v352
    %v562 = vpack.c.bf16 %v353, %v353
    %v563 = vpack.c.bf16 %v354, %v354
    %v564 = vpack.c.bf16 %v355, %v355
    %v565 = vpack.c.bf16 %v356, %v356
    %v566 = vpack.c.bf16 %v357, %v357
    %v567 = vpack.c.bf16 %v358, %v358
    %v568 = vpack.c.bf16 %v359, %v359
    %v570 = vshrl.u32 %v553, 16
    %v572 = vrot.slane %v570, 7
    %v573 = vshll.u32 %v553, 16
    %v575 = vor.u32 %v572, %v573
    %v577 = vshrl.u32 %v554, 16
    %v579 = vrot.slane %v577, 7
    %v580 = vshll.u32 %v554, 16
    %v582 = vor.u32 %v579, %v580
    %v584 = vshrl.u32 %v555, 16
    %v586 = vrot.slane %v584, 7
    %v587 = vshll.u32 %v555, 16
    %v589 = vor.u32 %v586, %v587
    %v591 = vshrl.u32 %v556, 16
    %v593 = vrot.slane %v591, 7
    %v594 = vshll.u32 %v556, 16
    %v596 = vor.u32 %v593, %v594
    %v598 = vshrl.u32 %v557, 16
    %v600 = vrot.slane %v598, 7
    %v601 = vshll.u32 %v557, 16
    %v603 = vor.u32 %v600, %v601
    %v605 = vshrl.u32 %v558, 16
    %v607 = vrot.slane %v605, 7
    %v608 = vshll.u32 %v558, 16
    %v610 = vor.u32 %v607, %v608
    %v612 = vshrl.u32 %v559, 16
    %v614 = vrot.slane %v612, 7
    %v615 = vshll.u32 %v559, 16
    %v617 = vor.u32 %v614, %v615
    %v619 = vshrl.u32 %v560, 16
    %v621 = vrot.slane %v619, 7
    %v622 = vshll.u32 %v560, 16
    %v624 = vor.u32 %v621, %v622
    %v626 = vshrl.u32 %v561, 16
    %v628 = vrot.slane %v626, 7
    %v629 = vshll.u32 %v561, 16
    %v631 = vor.u32 %v628, %v629
    %v633 = vshrl.u32 %v562, 16
    %v635 = vrot.slane %v633, 7
    %v636 = vshll.u32 %v562, 16
    %v638 = vor.u32 %v635, %v636
    %v640 = vshrl.u32 %v563, 16
    %v642 = vrot.slane %v640, 7
    %v643 = vshll.u32 %v563, 16
    %v645 = vor.u32 %v642, %v643
    %v647 = vshrl.u32 %v564, 16
    %v649 = vrot.slane %v647, 7
    %v650 = vshll.u32 %v564, 16
    %v652 = vor.u32 %v649, %v650
    %v654 = vshrl.u32 %v565, 16
    %v656 = vrot.slane %v654, 7
    %v657 = vshll.u32 %v565, 16
    %v659 = vor.u32 %v656, %v657
    %v661 = vshrl.u32 %v566, 16
    %v663 = vrot.slane %v661, 7
    %v664 = vshll.u32 %v566, 16
    %v666 = vor.u32 %v663, %v664
    %v668 = vshrl.u32 %v567, 16
    %v670 = vrot.slane %v668, 7
    %v671 = vshll.u32 %v567, 16
    %v673 = vor.u32 %v670, %v671
    %v675 = vshrl.u32 %v568, 16
    %v677 = vrot.slane %v675, 7
    %v678 = vshll.u32 %v568, 16
    %v680 = vor.u32 %v677, %v678
    %s697 = scalar_lea.vmem [#allocation3], 8
    %vm698 = vcmask 28672
    %vm699 = vsmask.f32 4354
    %vm700 = vmand %vm698, %vm699
    %v701 = vld [vmem:[%s697] sm:$0x1f]
    %v702 = vsel %vm700, %v575, %v701
    %703 = vst [vmem:[%s697] sm:$0x1f] %v702
    %v704 = vld [vmem:[%s697 + $0x8] sm:$0x1f]
    %v705 = vsel %vm700, %v582, %v704
    %706 = vst [vmem:[%s697 + $0x8] sm:$0x1f] %v705
    %v707 = vld [vmem:[%s697 + $0x10] sm:$0x1f]
    %v708 = vsel %vm700, %v589, %v707
    %709 = vst [vmem:[%s697 + $0x10] sm:$0x1f] %v708
    %v710 = vld [vmem:[%s697 + $0x18] sm:$0x1f]
    %v711 = vsel %vm700, %v596, %v710
    %712 = vst [vmem:[%s697 + $0x18] sm:$0x1f] %v711
    %v713 = vld [vmem:[%s697 + $0x20] sm:$0x1f]
    %v714 = vsel %vm700, %v603, %v713
    %715 = vst [vmem:[%s697 + $0x20] sm:$0x1f] %v714
    %v716 = vld [vmem:[%s697 + $0x28] sm:$0x1f]
    %v717 = vsel %vm700, %v610, %v716
    %718 = vst [vmem:[%s697 + $0x28] sm:$0x1f] %v717
    %v719 = vld [vmem:[%s697 + $0x30] sm:$0x1f]
    %v720 = vsel %vm700, %v617, %v719
    %721 = vst [vmem:[%s697 + $0x30] sm:$0x1f] %v720
    %v722 = vld [vmem:[%s697 + $0x38] sm:$0x1f]
    %v723 = vsel %vm700, %v624, %v722
    %724 = vst [vmem:[%s697 + $0x38] sm:$0x1f] %v723
    %v725 = vld [vmem:[%s697 + $0x50] sm:$0x1f]
    %v726 = vsel %vm700, %v631, %v725
    %727 = vst [vmem:[%s697 + $0x50] sm:$0x1f] %v726
    %v728 = vld [vmem:[%s697 + $0x58] sm:$0x1f]
    %v729 = vsel %vm700, %v638, %v728
    %730 = vst [vmem:[%s697 + $0x58] sm:$0x1f] %v729
    %v731 = vld [vmem:[%s697 + $0x60] sm:$0x1f]
    %v732 = vsel %vm700, %v645, %v731
    %733 = vst [vmem:[%s697 + $0x60] sm:$0x1f] %v732
    %v734 = vld [vmem:[%s697 + $0x68] sm:$0x1f]
    %v735 = vsel %vm700, %v652, %v734
    %736 = vst [vmem:[%s697 + $0x68] sm:$0x1f] %v735
    %v737 = vld [vmem:[%s697 + $0x70] sm:$0x1f]
    %v738 = vsel %vm700, %v659, %v737
    %739 = vst [vmem:[%s697 + $0x70] sm:$0x1f] %v738
    %v740 = vld [vmem:[%s697 + $0x78] sm:$0x1f]
    %v741 = vsel %vm700, %v666, %v740
    %742 = vst [vmem:[%s697 + $0x78] sm:$0x1f] %v741
    %v743 = vld [vmem:[%s697 + $0x80] sm:$0x1f]
    %v744 = vsel %vm700, %v673, %v743
    %745 = vst [vmem:[%s697 + $0x80] sm:$0x1f] %v744
    %v746 = vld [vmem:[%s697 + $0x88] sm:$0x1f]
    %v747 = vsel %vm700, %v680, %v746
    %748 = vst [vmem:[%s697 + $0x88] sm:$0x1f] %v747
    %v749 = vld [vmem:[%s4] sm:$0x1]
    %v750 = vld [vmem:[#allocation3] sm:$0xf]
    %v751 = vld [vmem:[#allocation3 + $0x8] sm:$0xf]
    %v752 = vld [vmem:[#allocation3 + $0x10] sm:$0xf]
    %v753 = vld [vmem:[#allocation3 + $0x18] sm:$0xf]
    %v754 = vld [vmem:[#allocation3 + $0x20] sm:$0xf]
    %v755 = vld [vmem:[#allocation3 + $0x28] sm:$0xf]
    %v756 = vld [vmem:[#allocation3 + $0x30] sm:$0xf]
    %v757 = vld [vmem:[#allocation3 + $0x38] sm:$0xf]
    %v758 = vld [vmem:[#allocation3 + $0x50] sm:$0xf]
    %v759 = vld [vmem:[#allocation3 + $0x58] sm:$0xf]
    %v760 = vld [vmem:[#allocation3 + $0x60] sm:$0xf]
    %v761 = vld [vmem:[#allocation3 + $0x68] sm:$0xf]
    %v762 = vld [vmem:[#allocation3 + $0x70] sm:$0xf]
    %v763 = vld [vmem:[#allocation3 + $0x78] sm:$0xf]
    %v764 = vld [vmem:[#allocation3 + $0x80] sm:$0xf]
    %v765 = vld [vmem:[#allocation3 + $0x88] sm:$0xf]
    %v766 = vld [vmem:[%s3] sm:$0x3]
    %v767 = vld [vmem:[#allocation3] sm:$0x1f]
    %v768 = vld [vmem:[#allocation3 + $0x8] sm:$0x1f]
    %v769 = vld [vmem:[#allocation3 + $0x10] sm:$0x1f]
    %v770 = vld [vmem:[#allocation3 + $0x18] sm:$0x1f]
    %v771 = vld [vmem:[#allocation3 + $0x20] sm:$0x1f]
    %v772 = vld [vmem:[#allocation3 + $0x28] sm:$0x1f]
    %v773 = vld [vmem:[#allocation3 + $0x30] sm:$0x1f]
    %v774 = vld [vmem:[#allocation3 + $0x38] sm:$0x1f]
    %v775 = vld [vmem:[#allocation3 + $0x50] sm:$0x1f]
    %v776 = vld [vmem:[#allocation3 + $0x58] sm:$0x1f]
    %v777 = vld [vmem:[#allocation3 + $0x60] sm:$0x1f]
    %v778 = vld [vmem:[#allocation3 + $0x68] sm:$0x1f]
    %v779 = vld [vmem:[#allocation3 + $0x70] sm:$0x1f]
    %v780 = vld [vmem:[#allocation3 + $0x78] sm:$0x1f]
    %v781 = vld [vmem:[#allocation3 + $0x80] sm:$0x1f]
    %v782 = vld [vmem:[#allocation3 + $0x88] sm:$0x1f]
    %v799 = vunpack.c.l.b16 %v767
    %v800 = vunpack.c.h.b16 %v767
    %v801 = vunpack.c.l.b16 %v768
    %v802 = vunpack.c.h.b16 %v768
    %v803 = vunpack.c.l.b16 %v769
    %v804 = vunpack.c.h.b16 %v769
    %v805 = vunpack.c.l.b16 %v770
    %v806 = vunpack.c.h.b16 %v770
    %v807 = vunpack.c.l.b16 %v771
    %v808 = vunpack.c.h.b16 %v771
    %v809 = vunpack.c.l.b16 %v772
    %v810 = vunpack.c.h.b16 %v772
    %v811 = vunpack.c.l.b16 %v773
    %v812 = vunpack.c.h.b16 %v773
    %v813 = vunpack.c.l.b16 %v774
    %v814 = vunpack.c.h.b16 %v774
    %v815 = vunpack.c.l.b16 %v775
    %v816 = vunpack.c.h.b16 %v775
    %v817 = vunpack.c.l.b16 %v776
    %v818 = vunpack.c.h.b16 %v776
    %v819 = vunpack.c.l.b16 %v777
    %v820 = vunpack.c.h.b16 %v777
    %v821 = vunpack.c.l.b16 %v778
    %v822 = vunpack.c.h.b16 %v778
    %v823 = vunpack.c.l.b16 %v779
    %v824 = vunpack.c.h.b16 %v779
    %v825 = vunpack.c.l.b16 %v780
    %v826 = vunpack.c.h.b16 %v780
    %v827 = vunpack.c.l.b16 %v781
    %v828 = vunpack.c.h.b16 %v781
    %v829 = vunpack.c.l.b16 %v782
    %v830 = vunpack.c.h.b16 %v782
    %v831 = vpack.c.b16 %v799, %v799
    %v832 = vpack.c.b16 %v800, %v800
    %v833 = vpack.c.b16 %v801, %v801
    %v834 = vpack.c.b16 %v802, %v802
    %v835 = vpack.c.b16 %v803, %v803
    %v836 = vpack.c.b16 %v804, %v804
    %v837 = vpack.c.b16 %v805, %v805
    %v838 = vpack.c.b16 %v806, %v806
    %v839 = vpack.c.b16 %v807, %v807
    %v840 = vpack.c.b16 %v808, %v808
    %v841 = vpack.c.b16 %v809, %v809
    %v842 = vpack.c.b16 %v810, %v810
    %v843 = vpack.c.b16 %v811, %v811
    %v844 = vpack.c.b16 %v812, %v812
    %v845 = vpack.c.b16 %v813, %v813
    %v846 = vpack.c.b16 %v814, %v814
    %v847 = vpack.c.b16 %v815, %v815
    %v848 = vpack.c.b16 %v816, %v816
    %v849 = vpack.c.b16 %v817, %v817
    %v850 = vpack.c.b16 %v818, %v818
    %v851 = vpack.c.b16 %v819, %v819
    %v852 = vpack.c.b16 %v820, %v820
    %v853 = vpack.c.b16 %v821, %v821
    %v854 = vpack.c.b16 %v822, %v822
    %v855 = vpack.c.b16 %v823, %v823
    %v856 = vpack.c.b16 %v824, %v824
    %v857 = vpack.c.b16 %v825, %v825
    %v858 = vpack.c.b16 %v826, %v826
    %v859 = vpack.c.b16 %v827, %v827
    %v860 = vpack.c.b16 %v828, %v828
    %v861 = vpack.c.b16 %v829, %v829
    %v862 = vpack.c.b16 %v830, %v830
    %vm863 = vsmask.f32 3328
    %vm864 = vsmask.f32 7440
    %vm865 = vmor %vm863, %vm864
    %v867 = vshrl.u32 %v831, 16
    %v869 = vrot.slane %v867, 4
    %v870 = vshll.u32 %v831, 16
    %v872 = vrot.slane %v870, 5
    %v873 = vor.u32 %v869, %v872
    %v874 = vrot.slane %v873, 4
    %v876 = vshll.u32 %v832, 16
    %v878 = vrot.slane %v876, 5
    %v879 = vsel %vm865, %v874, %v878
    %v881 = vshrl.u32 %v833, 16
    %v883 = vrot.slane %v881, 4
    %v884 = vshll.u32 %v833, 16
    %v886 = vrot.slane %v884, 5
    %v887 = vor.u32 %v883, %v886
    %v888 = vrot.slane %v887, 4
    %v890 = vshll.u32 %v834, 16
    %v892 = vrot.slane %v890, 5
    %v893 = vsel %vm865, %v888, %v892
    %v895 = vshrl.u32 %v835, 16
    %v897 = vrot.slane %v895, 4
    %v898 = vshll.u32 %v835, 16
    %v900 = vrot.slane %v898, 5
    %v901 = vor.u32 %v897, %v900
    %v902 = vrot.slane %v901, 4
    %v904 = vshll.u32 %v836, 16
    %v906 = vrot.slane %v904, 5
    %v907 = vsel %vm865, %v902, %v906
    %v909 = vshrl.u32 %v837, 16
    %v911 = vrot.slane %v909, 4
    %v912 = vshll.u32 %v837, 16
    %v914 = vrot.slane %v912, 5
    %v915 = vor.u32 %v911, %v914
    %v916 = vrot.slane %v915, 4
    %v918 = vshll.u32 %v838, 16
    %v920 = vrot.slane %v918, 5
    %v921 = vsel %vm865, %v916, %v920
    %v923 = vshrl.u32 %v839, 16
    %v925 = vrot.slane %v923, 4
    %v926 = vshll.u32 %v839, 16
    %v928 = vrot.slane %v926, 5
    %v929 = vor.u32 %v925, %v928
    %v930 = vrot.slane %v929, 4
    %v932 = vshll.u32 %v840, 16
    %v934 = vrot.slane %v932, 5
    %v935 = vsel %vm865, %v930, %v934
    %v937 = vshrl.u32 %v841, 16
    %v939 = vrot.slane %v937, 4
    %v940 = vshll.u32 %v841, 16
    %v942 = vrot.slane %v940, 5
    %v943 = vor.u32 %v939, %v942
    %v944 = vrot.slane %v943, 4
    %v946 = vshll.u32 %v842, 16
    %v948 = vrot.slane %v946, 5
    %v949 = vsel %vm865, %v944, %v948
    %v951 = vshrl.u32 %v843, 16
    %v953 = vrot.slane %v951, 4
    %v954 = vshll.u32 %v843, 16
    %v956 = vrot.slane %v954, 5
    %v957 = vor.u32 %v953, %v956
    %v958 = vrot.slane %v957, 4
    %v960 = vshll.u32 %v844, 16
    %v962 = vrot.slane %v960, 5
    %v963 = vsel %vm865, %v958, %v962
    %v965 = vshrl.u32 %v845, 16
    %v967 = vrot.slane %v965, 4
    %v968 = vshll.u32 %v845, 16
    %v970 = vrot.slane %v968, 5
    %v971 = vor.u32 %v967, %v970
    %v972 = vrot.slane %v971, 4
    %v974 = vshll.u32 %v846, 16
    %v976 = vrot.slane %v974, 5
    %v977 = vsel %vm865, %v972, %v976
    %v979 = vshrl.u32 %v847, 16
    %v981 = vrot.slane %v979, 4
    %v982 = vshll.u32 %v847, 16
    %v984 = vrot.slane %v982, 5
    %v985 = vor.u32 %v981, %v984
    %v986 = vrot.slane %v985, 4
    %v988 = vshll.u32 %v848, 16
    %v990 = vrot.slane %v988, 5
    %v991 = vsel %vm865, %v986, %v990
    %v993 = vshrl.u32 %v849, 16
    %v995 = vrot.slane %v993, 4
    %v996 = vshll.u32 %v849, 16
    %v998 = vrot.slane %v996, 5
    %v999 = vor.u32 %v995, %v998
    %v1000 = vrot.slane %v999, 4
    %v1002 = vshll.u32 %v850, 16
    %v1004 = vrot.slane %v1002, 5
    %v1005 = vsel %vm865, %v1000, %v1004
    %v1007 = vshrl.u32 %v851, 16
    %v1009 = vrot.slane %v1007, 4
    %v1010 = vshll.u32 %v851, 16
    %v1012 = vrot.slane %v1010, 5
    %v1013 = vor.u32 %v1009, %v1012
    %v1014 = vrot.slane %v1013, 4
    %v1016 = vshll.u32 %v852, 16
    %v1018 = vrot.slane %v1016, 5
    %v1019 = vsel %vm865, %v1014, %v1018
    %v1021 = vshrl.u32 %v853, 16
    %v1023 = vrot.slane %v1021, 4
    %v1024 = vshll.u32 %v853, 16
    %v1026 = vrot.slane %v1024, 5
    %v1027 = vor.u32 %v1023, %v1026
    %v1028 = vrot.slane %v1027, 4
    %v1030 = vshll.u32 %v854, 16
    %v1032 = vrot.slane %v1030, 5
    %v1033 = vsel %vm865, %v1028, %v1032
    %v1035 = vshrl.u32 %v855, 16
    %v1037 = vrot.slane %v1035, 4
    %v1038 = vshll.u32 %v855, 16
    %v1040 = vrot.slane %v1038, 5
    %v1041 = vor.u32 %v1037, %v1040
    %v1042 = vrot.slane %v1041, 4
    %v1044 = vshll.u32 %v856, 16
    %v1046 = vrot.slane %v1044, 5
    %v1047 = vsel %vm865, %v1042, %v1046
    %v1049 = vshrl.u32 %v857, 16
    %v1051 = vrot.slane %v1049, 4
    %v1052 = vshll.u32 %v857, 16
    %v1054 = vrot.slane %v1052, 5
    %v1055 = vor.u32 %v1051, %v1054
    %v1056 = vrot.slane %v1055, 4
    %v1058 = vshll.u32 %v858, 16
    %v1060 = vrot.slane %v1058, 5
    %v1061 = vsel %vm865, %v1056, %v1060
    %v1063 = vshrl.u32 %v859, 16
    %v1065 = vrot.slane %v1063, 4
    %v1066 = vshll.u32 %v859, 16
    %v1068 = vrot.slane %v1066, 5
    %v1069 = vor.u32 %v1065, %v1068
    %v1070 = vrot.slane %v1069, 4
    %v1072 = vshll.u32 %v860, 16
    %v1074 = vrot.slane %v1072, 5
    %v1075 = vsel %vm865, %v1070, %v1074
    %v1077 = vshrl.u32 %v861, 16
    %v1079 = vrot.slane %v1077, 4
    %v1080 = vshll.u32 %v861, 16
    %v1082 = vrot.slane %v1080, 5
    %v1083 = vor.u32 %v1079, %v1082
    %v1084 = vrot.slane %v1083, 4
    %v1086 = vshll.u32 %v862, 16
    %v1088 = vrot.slane %v1086, 5
    %v1089 = vsel %vm865, %v1084, %v1088
    %s1090 = scalar_lea.vmem %s3, 2
    %v1091 = vld [vmem:[%s1090] sm:$0x3]
    %v1092 = vunpack.c.l.b16 %v879
    %v1093 = vunpack.c.l.b16 %v893
    %v1094 = vunpack.c.l.b16 %v907
    %v1095 = vunpack.c.l.b16 %v921
    %v1096 = vunpack.c.l.b16 %v935
    %v1097 = vunpack.c.l.b16 %v949
    %v1098 = vunpack.c.l.b16 %v963
    %v1099 = vunpack.c.l.b16 %v977
    %v1100 = vunpack.c.l.b16 %v991
    %v1101 = vunpack.c.l.b16 %v1005
    %v1102 = vunpack.c.l.b16 %v1019
    %v1103 = vunpack.c.l.b16 %v1033
    %v1104 = vunpack.c.l.b16 %v1047
    %v1105 = vunpack.c.l.b16 %v1061
    %v1106 = vunpack.c.l.b16 %v1075
    %v1107 = vunpack.c.l.b16 %v1089
    %v1108 = vpack.c.b16 %v1093, %v1092
    %v1109 = vpack.c.b16 %v1095, %v1094
    %v1110 = vpack.c.b16 %v1097, %v1096
    %v1111 = vpack.c.b16 %v1099, %v1098
    %v1112 = vpack.c.b16 %v1101, %v1100
    %v1113 = vpack.c.b16 %v1103, %v1102
    %v1114 = vpack.c.b16 %v1105, %v1104
    %v1115 = vpack.c.b16 %v1107, %v1106
    %v1117 = vsel %vm167, %v1108, 0
    %v1120 = vsel %vm167, %v1109, 0
    %v1123 = vsel %vm167, %v1110, 0
    %v1126 = vsel %vm167, %v1111, 0
    %v1129 = vsel %vm167, %v1112, 0
    %v1132 = vsel %vm167, %v1113, 0
    %v1135 = vsel %vm167, %v1114, 0
    %v1138 = vsel %vm167, %v1115, 0
    %vm1140 = vcmask 1041408
    %v1142 = vsel %vm1140, %v1091, 0
    %1144 = vmatprep.subr.bf16.mxu0 0
    %1145 = vmatpush1.bf16.msra.mxu0 %v1142
    %1146 = vmatprep.subr.bf16.mxu0 0
    %1147 = vmatpush1.bf16.msra.mxu0 0
    %1148 = vmatprep.subr.bf16.mxu0 0
    %1149 = vmatpush1.bf16.msra.mxu0 0
    %1150 = vmatprep.subr.bf16.mxu0 0
    %1151 = vmatpush1.bf16.msra.mxu0 0
    %1152 = vmatprep.subr.bf16.mxu0 0
    %1153 = vmatpush1.bf16.msra.mxu0 0
    %1154 = vmatprep.subr.bf16.mxu0 0
    %1155 = vmatpush1.bf16.msra.mxu0 0
    %1156 = vmatprep.subr.bf16.mxu0 0
    %1157 = vmatpush1.bf16.msra.mxu0 0
    %1158 = vmatprep.subr.bf16.mxu0 0
    %1159 = vmatpush1.bf16.msra.mxu0 0
    %1160 = vmatprep.subr.bf16.mxu0 0
    %1161 = vmatpush1.bf16.msra.mxu0 0
    %1162 = vmatprep.subr.bf16.mxu0 0
    %1163 = vmatpush1.bf16.msra.mxu0 0
    %1164 = vmatprep.subr.bf16.mxu0 0
    %1165 = vmatpush1.bf16.msra.mxu0 0
    %1166 = vmatprep.subr.bf16.mxu0 0
    %1167 = vmatpush1.bf16.msra.mxu0 0
    %1168 = vmatprep.subr.bf16.mxu0 0
    %1169 = vmatpush1.bf16.msra.mxu0 0
    %1170 = vmatprep.subr.bf16.mxu0 0
    %1171 = vmatpush1.bf16.msra.mxu0 0
    %1172 = vmatprep.subr.bf16.mxu0 0
    %1173 = vmatpush1.bf16.msra.mxu0 0
    %1174 = vmatprep.subr.bf16.mxu0 0
    %1175 = vmatpush1.bf16.msra.mxu0 0
    %1176 = vmatprep.mubr.bf16.mxu0 0
    %1177 = vmatmul.mubr.bf16.gmra.mrb[0].mxu0 %v1117
    %v1178 = vpop.f32.mrb[0].mxu0
    %v1179 = vadd.f32 0.0, %v1178
    %v1180 = vpop.f32.mrb[0].mxu0
    %v1181 = vpop.f32.mrb[0].mxu0
    %v1182 = vadd.f32 0.0, %v1181
    %v1183 = vpop.f32.mrb[0].mxu0
    %1184 = vmatprep.mubr.bf16.mxu0 0
    %1185 = vmatmul.mubr.bf16.gmra.mrb[0].mxu0 %v1120
    %v1186 = vpop.f32.mrb[0].mxu0
    %v1187 = vadd.f32 0.0, %v1186
    %v1188 = vpop.f32.mrb[0].mxu0
    %v1189 = vpop.f32.mrb[0].mxu0
    %v1190 = vadd.f32 0.0, %v1189
    %v1191 = vpop.f32.mrb[0].mxu0
    %1192 = vmatprep.mubr.bf16.mxu0 0
    %1193 = vmatmul.mubr.bf16.gmra.mrb[0].mxu0 %v1123
    %v1194 = vpop.f32.mrb[0].mxu0
    %v1195 = vadd.f32 0.0, %v1194
    %v1196 = vpop.f32.mrb[0].mxu0
    %v1197 = vpop.f32.mrb[0].mxu0
    %v1198 = vadd.f32 0.0, %v1197
    %v1199 = vpop.f32.mrb[0].mxu0
    %1200 = vmatprep.mubr.bf16.mxu0 0
    %1201 = vmatmul.mubr.bf16.gmra.mrb[0].mxu0 %v1126
    %v1202 = vpop.f32.mrb[0].mxu0
    %v1203 = vadd.f32 0.0, %v1202
    %v1204 = vpop.f32.mrb[0].mxu0
    %v1205 = vpop.f32.mrb[0].mxu0
    %v1206 = vadd.f32 0.0, %v1205
    %v1207 = vpop.f32.mrb[0].mxu0
    %1208 = vmatprep.mubr.bf16.mxu0 0
    %1209 = vmatmul.mubr.bf16.gmra.mrb[0].mxu0 %v1129
    %v1210 = vpop.f32.mrb[0].mxu0
    %v1211 = vadd.f32 0.0, %v1210
    %v1212 = vpop.f32.mrb[0].mxu0
    %v1213 = vpop.f32.mrb[0].mxu0
    %v1214 = vadd.f32 0.0, %v1213
    %v1215 = vpop.f32.mrb[0].mxu0
    %1216 = vmatprep.mubr.bf16.mxu0 0
    %1217 = vmatmul.mubr.bf16.gmra.mrb[0].mxu0 %v1132
    %v1218 = vpop.f32.mrb[0].mxu0
    %v1219 = vadd.f32 0.0, %v1218
    %v1220 = vpop.f32.mrb[0].mxu0
    %v1221 = vpop.f32.mrb[0].mxu0
    %v1222 = vadd.f32 0.0, %v1221
    %v1223 = vpop.f32.mrb[0].mxu0
    %1224 = vmatprep.mubr.bf16.mxu0 0
    %1225 = vmatmul.mubr.bf16.gmra.mrb[0].mxu0 %v1135
    %v1226 = vpop.f32.mrb[0].mxu0
    %v1227 = vadd.f32 0.0, %v1226
    %v1228 = vpop.f32.mrb[0].mxu0
    %v1229 = vpop.f32.mrb[0].mxu0
    %v1230 = vadd.f32 0.0, %v1229
    %v1231 = vpop.f32.mrb[0].mxu0
    %1232 = vmatprep.mubr.bf16.mxu0 0
    %1233 = vmatmul.mubr.bf16.gmra.mrb[0].mxu0 %v1138
    %v1234 = vpop.f32.mrb[0].mxu0
    %v1235 = vadd.f32 0.0, %v1234
    %v1236 = vpop.f32.mrb[0].mxu0
    %v1237 = vpop.f32.mrb[0].mxu0
    %v1238 = vadd.f32 0.0, %v1237
    %v1239 = vpop.f32.mrb[0].mxu0
    %1240 = vdwg.mxu0
    %v1257 = vunpack.c.l.b16 %v750
    %v1258 = vunpack.c.l.b16 %v751
    %v1259 = vunpack.c.l.b16 %v752
    %v1260 = vunpack.c.l.b16 %v753
    %v1261 = vunpack.c.l.b16 %v754
    %v1262 = vunpack.c.l.b16 %v755
    %v1263 = vunpack.c.l.b16 %v756
    %v1264 = vunpack.c.l.b16 %v757
    %v1265 = vunpack.c.l.b16 %v758
    %v1266 = vunpack.c.l.b16 %v759
    %v1267 = vunpack.c.l.b16 %v760
    %v1268 = vunpack.c.l.b16 %v761
    %v1269 = vunpack.c.l.b16 %v762
    %v1270 = vunpack.c.l.b16 %v763
    %v1271 = vunpack.c.l.b16 %v764
    %v1272 = vunpack.c.l.b16 %v765
    %v1273 = vpack.c.b16 %v1258, %v1257
    %v1274 = vpack.c.b16 %v1260, %v1259
    %v1275 = vpack.c.b16 %v1262, %v1261
    %v1276 = vpack.c.b16 %v1264, %v1263
    %v1277 = vpack.c.b16 %v1266, %v1265
    %v1278 = vpack.c.b16 %v1268, %v1267
    %v1279 = vpack.c.b16 %v1270, %v1269
    %v1280 = vpack.c.b16 %v1272, %v1271
    %v1282 = vsel %vm167, %v1273, 0
    %v1285 = vsel %vm167, %v1274, 0
    %v1288 = vsel %vm167, %v1275, 0
    %v1291 = vsel %vm167, %v1276, 0
    %v1294 = vsel %vm167, %v1277, 0
    %v1297 = vsel %vm167, %v1278, 0
    %v1300 = vsel %vm167, %v1279, 0
    %v1303 = vsel %vm167, %v1280, 0
    %v1306 = vsel %vm1140, %v766, 0
    %1308 = vmatprep.subr.bf16.mxu0 0
    %1309 = vmatpush1.bf16.msra.mxu0 %v1306
    %1310 = vmatprep.subr.bf16.mxu0 0
    %1311 = vmatpush1.bf16.msra.mxu0 0
    %1312 = vmatprep.subr.bf16.mxu0 0
    %1313 = vmatpush1.bf16.msra.mxu0 0
    %1314 = vmatprep.subr.bf16.mxu0 0
    %1315 = vmatpush1.bf16.msra.mxu0 0
    %1316 = vmatprep.subr.bf16.mxu0 0
    %1317 = vmatpush1.bf16.msra.mxu0 0
    %1318 = vmatprep.subr.bf16.mxu0 0
    %1319 = vmatpush1.bf16.msra.mxu0 0
    %1320 = vmatprep.subr.bf16.mxu0 0
    %1321 = vmatpush1.bf16.msra.mxu0 0
    %1322 = vmatprep.subr.bf16.mxu0 0
    %1323 = vmatpush1.bf16.msra.mxu0 0
    %1324 = vmatprep.subr.bf16.mxu0 0
    %1325 = vmatpush1.bf16.msra.mxu0 0
    %1326 = vmatprep.subr.bf16.mxu0 0
    %1327 = vmatpush1.bf16.msra.mxu0 0
    %1328 = vmatprep.subr.bf16.mxu0 0
    %1329 = vmatpush1.bf16.msra.mxu0 0
    %1330 = vmatprep.subr.bf16.mxu0 0
    %1331 = vmatpush1.bf16.msra.mxu0 0
    %1332 = vmatprep.subr.bf16.mxu0 0
    %1333 = vmatpush1.bf16.msra.mxu0 0
    %1334 = vmatprep.subr.bf16.mxu0 0
    %1335 = vmatpush1.bf16.msra.mxu0 0
    %1336 = vmatprep.subr.bf16.mxu0 0
    %1337 = vmatpush1.bf16.msra.mxu0 0
    %1338 = vmatprep.subr.bf16.mxu0 0
    %1339 = vmatpush1.bf16.msra.mxu0 0
    %1340 = vmatprep.mubr.bf16.mxu0 0
    %1341 = vmatmul.mubr.bf16.gmra.mrb[0].mxu0 %v1282
    %v1342 = vpop.f32.mrb[0].mxu0
    %v1343 = vadd.f32 %v1179, %v1342
    %v1344 = vpop.f32.mrb[0].mxu0
    %v1345 = vpop.f32.mrb[0].mxu0
    %v1346 = vadd.f32 %v1182, %v1345
    %v1347 = vpop.f32.mrb[0].mxu0
    %1348 = vmatprep.mubr.bf16.mxu0 0
    %1349 = vmatmul.mubr.bf16.gmra.mrb[0].mxu0 %v1285
    %v1350 = vpop.f32.mrb[0].mxu0
    %v1351 = vadd.f32 %v1187, %v1350
    %v1352 = vpop.f32.mrb[0].mxu0
    %v1353 = vpop.f32.mrb[0].mxu0
    %v1354 = vadd.f32 %v1190, %v1353
    %v1355 = vpop.f32.mrb[0].mxu0
    %1356 = vmatprep.mubr.bf16.mxu0 0
    %1357 = vmatmul.mubr.bf16.gmra.mrb[0].mxu0 %v1288
    %v1358 = vpop.f32.mrb[0].mxu0
    %v1359 = vadd.f32 %v1195, %v1358
    %v1360 = vpop.f32.mrb[0].mxu0
    %v1361 = vpop.f32.mrb[0].mxu0
    %v1362 = vadd.f32 %v1198, %v1361
    %v1363 = vpop.f32.mrb[0].mxu0
    %1364 = vmatprep.mubr.bf16.mxu0 0
    %1365 = vmatmul.mubr.bf16.gmra.mrb[0].mxu0 %v1291
    %v1366 = vpop.f32.mrb[0].mxu0
    %v1367 = vadd.f32 %v1203, %v1366
    %v1368 = vpop.f32.mrb[0].mxu0
    %v1369 = vpop.f32.mrb[0].mxu0
    %v1370 = vadd.f32 %v1206, %v1369
    %v1371 = vpop.f32.mrb[0].mxu0
    %1372 = vmatprep.mubr.bf16.mxu0 0
    %1373 = vmatmul.mubr.bf16.gmra.mrb[0].mxu0 %v1294
    %v1374 = vpop.f32.mrb[0].mxu0
    %v1375 = vadd.f32 %v1211, %v1374
    %v1376 = vpop.f32.mrb[0].mxu0
    %v1377 = vpop.f32.mrb[0].mxu0
    %v1378 = vadd.f32 %v1214, %v1377
    %v1379 = vpop.f32.mrb[0].mxu0
    %1380 = vmatprep.mubr.bf16.mxu0 0
    %1381 = vmatmul.mubr.bf16.gmra.mrb[0].mxu0 %v1297
    %v1382 = vpop.f32.mrb[0].mxu0
    %v1383 = vadd.f32 %v1219, %v1382
    %v1384 = vpop.f32.mrb[0].mxu0
    %v1385 = vpop.f32.mrb[0].mxu0
    %v1386 = vadd.f32 %v1222, %v1385
    %v1387 = vpop.f32.mrb[0].mxu0
    %1388 = vmatprep.mubr.bf16.mxu0 0
    %1389 = vmatmul.mubr.bf16.gmra.mrb[0].mxu0 %v1300
    %v1390 = vpop.f32.mrb[0].mxu0
    %v1391 = vadd.f32 %v1227, %v1390
    %v1392 = vpop.f32.mrb[0].mxu0
    %v1393 = vpop.f32.mrb[0].mxu0
    %v1394 = vadd.f32 %v1230, %v1393
    %v1395 = vpop.f32.mrb[0].mxu0
    %1396 = vmatprep.mubr.bf16.mxu0 0
    %1397 = vmatmul.mubr.bf16.gmra.mrb[0].mxu0 %v1303
    %v1398 = vpop.f32.mrb[0].mxu0
    %v1399 = vadd.f32 %v1235, %v1398
    %v1400 = vpop.f32.mrb[0].mxu0
    %v1401 = vpop.f32.mrb[0].mxu0
    %v1402 = vadd.f32 %v1238, %v1401
    %v1403 = vpop.f32.mrb[0].mxu0
    %1404 = vdwg.mxu0
    %v1405 = vld [vmem:[#allocation3] sm:$0x1e]
    %v1406 = vld [vmem:[#allocation3 + $0x8] sm:$0x1e]
    %v1407 = vld [vmem:[#allocation3 + $0x10] sm:$0x1e]
    %v1408 = vld [vmem:[#allocation3 + $0x18] sm:$0x1e]
    %v1409 = vld [vmem:[#allocation3 + $0x20] sm:$0x1e]
    %v1410 = vld [vmem:[#allocation3 + $0x28] sm:$0x1e]
    %v1411 = vld [vmem:[#allocation3 + $0x30] sm:$0x1e]
    %v1412 = vld [vmem:[#allocation3 + $0x38] sm:$0x1e]
    %v1413 = vld [vmem:[#allocation3 + $0x50] sm:$0x1e]
    %v1414 = vld [vmem:[#allocation3 + $0x58] sm:$0x1e]
    %v1415 = vld [vmem:[#allocation3 + $0x60] sm:$0x1e]
    %v1416 = vld [vmem:[#allocation3 + $0x68] sm:$0x1e]
    %v1417 = vld [vmem:[#allocation3 + $0x70] sm:$0x1e]
    %v1418 = vld [vmem:[#allocation3 + $0x78] sm:$0x1e]
    %v1419 = vld [vmem:[#allocation3 + $0x80] sm:$0x1e]
    %v1420 = vld [vmem:[#allocation3 + $0x88] sm:$0x1e]
    %v1437 = vunpack.c.l.b16 %v1405
    %v1438 = vunpack.c.h.b16 %v1405
    %v1439 = vunpack.c.l.b16 %v1406
    %v1440 = vunpack.c.h.b16 %v1406
    %v1441 = vunpack.c.l.b16 %v1407
    %v1442 = vunpack.c.h.b16 %v1407
    %v1443 = vunpack.c.l.b16 %v1408
    %v1444 = vunpack.c.h.b16 %v1408
    %v1445 = vunpack.c.l.b16 %v1409
    %v1446 = vunpack.c.h.b16 %v1409
    %v1447 = vunpack.c.l.b16 %v1410
    %v1448 = vunpack.c.h.b16 %v1410
    %v1449 = vunpack.c.l.b16 %v1411
    %v1450 = vunpack.c.h.b16 %v1411
    %v1451 = vunpack.c.l.b16 %v1412
    %v1452 = vunpack.c.h.b16 %v1412
    %v1453 = vunpack.c.l.b16 %v1413
    %v1454 = vunpack.c.h.b16 %v1413
    %v1455 = vunpack.c.l.b16 %v1414
    %v1456 = vunpack.c.h.b16 %v1414
    %v1457 = vunpack.c.l.b16 %v1415
    %v1458 = vunpack.c.h.b16 %v1415
    %v1459 = vunpack.c.l.b16 %v1416
    %v1460 = vunpack.c.h.b16 %v1416
    %v1461 = vunpack.c.l.b16 %v1417
    %v1462 = vunpack.c.h.b16 %v1417
    %v1463 = vunpack.c.l.b16 %v1418
    %v1464 = vunpack.c.h.b16 %v1418
    %v1465 = vunpack.c.l.b16 %v1419
    %v1466 = vunpack.c.h.b16 %v1419
    %v1467 = vunpack.c.l.b16 %v1420
    %v1468 = vunpack.c.h.b16 %v1420
    %v1469 = vpack.c.b16 %v1437, %v1437
    %v1470 = vpack.c.b16 %v1438, %v1438
    %v1471 = vpack.c.b16 %v1439, %v1439
    %v1472 = vpack.c.b16 %v1440, %v1440
    %v1473 = vpack.c.b16 %v1441, %v1441
    %v1474 = vpack.c.b16 %v1442, %v1442
    %v1475 = vpack.c.b16 %v1443, %v1443
    %v1476 = vpack.c.b16 %v1444, %v1444
    %v1477 = vpack.c.b16 %v1445, %v1445
    %v1478 = vpack.c.b16 %v1446, %v1446
    %v1479 = vpack.c.b16 %v1447, %v1447
    %v1480 = vpack.c.b16 %v1448, %v1448
    %v1481 = vpack.c.b16 %v1449, %v1449
    %v1482 = vpack.c.b16 %v1450, %v1450
    %v1483 = vpack.c.b16 %v1451, %v1451
    %v1484 = vpack.c.b16 %v1452, %v1452
    %v1485 = vpack.c.b16 %v1453, %v1453
    %v1486 = vpack.c.b16 %v1454, %v1454
    %v1487 = vpack.c.b16 %v1455, %v1455
    %v1488 = vpack.c.b16 %v1456, %v1456
    %v1489 = vpack.c.b16 %v1457, %v1457
    %v1490 = vpack.c.b16 %v1458, %v1458
    %v1491 = vpack.c.b16 %v1459, %v1459
    %v1492 = vpack.c.b16 %v1460, %v1460
    %v1493 = vpack.c.b16 %v1461, %v1461
    %v1494 = vpack.c.b16 %v1462, %v1462
    %v1495 = vpack.c.b16 %v1463, %v1463
    %v1496 = vpack.c.b16 %v1464, %v1464
    %v1497 = vpack.c.b16 %v1465, %v1465
    %v1498 = vpack.c.b16 %v1466, %v1466
    %v1499 = vpack.c.b16 %v1467, %v1467
    %v1500 = vpack.c.b16 %v1468, %v1468
    %vm1501 = vcmask 1042432
    %vm1502 = vcmask 1046532
    %vm1503 = vmor %vm1501, %vm1502
    %v1504 = vrot.slane %v1469, 5
    %v1505 = vrot.slane %v1504, 4
    %v1506 = vrot.slane %v1470, 5
    %v1507 = vsel %vm1503, %v1505, %v1506
    %v1508 = vrot.slane %v1471, 5
    %v1509 = vrot.slane %v1508, 4
    %v1510 = vrot.slane %v1472, 5
    %v1511 = vsel %vm1503, %v1509, %v1510
    %v1512 = vrot.slane %v1473, 5
    %v1513 = vrot.slane %v1512, 4
    %v1514 = vrot.slane %v1474, 5
    %v1515 = vsel %vm1503, %v1513, %v1514
    %v1516 = vrot.slane %v1475, 5
    %v1517 = vrot.slane %v1516, 4
    %v1518 = vrot.slane %v1476, 5
    %v1519 = vsel %vm1503, %v1517, %v1518
    %v1520 = vrot.slane %v1477, 5
    %v1521 = vrot.slane %v1520, 4
    %v1522 = vrot.slane %v1478, 5
    %v1523 = vsel %vm1503, %v1521, %v1522
    %v1524 = vrot.slane %v1479, 5
    %v1525 = vrot.slane %v1524, 4
    %v1526 = vrot.slane %v1480, 5
    %v1527 = vsel %vm1503, %v1525, %v1526
    %v1528 = vrot.slane %v1481, 5
    %v1529 = vrot.slane %v1528, 4
    %v1530 = vrot.slane %v1482, 5
    %v1531 = vsel %vm1503, %v1529, %v1530
    %v1532 = vrot.slane %v1483, 5
    %v1533 = vrot.slane %v1532, 4
    %v1534 = vrot.slane %v1484, 5
    %v1535 = vsel %vm1503, %v1533, %v1534
    %v1536 = vrot.slane %v1485, 5
    %v1537 = vrot.slane %v1536, 4
    %v1538 = vrot.slane %v1486, 5
    %v1539 = vsel %vm1503, %v1537, %v1538
    %v1540 = vrot.slane %v1487, 5
    %v1541 = vrot.slane %v1540, 4
    %v1542 = vrot.slane %v1488, 5
    %v1543 = vsel %vm1503, %v1541, %v1542
    %v1544 = vrot.slane %v1489, 5
    %v1545 = vrot.slane %v1544, 4
    %v1546 = vrot.slane %v1490, 5
    %v1547 = vsel %vm1503, %v1545, %v1546
    %v1548 = vrot.slane %v1491, 5
    %v1549 = vrot.slane %v1548, 4
    %v1550 = vrot.slane %v1492, 5
    %v1551 = vsel %vm1503, %v1549, %v1550
    %v1552 = vrot.slane %v1493, 5
    %v1553 = vrot.slane %v1552, 4
    %v1554 = vrot.slane %v1494, 5
    %v1555 = vsel %vm1503, %v1553, %v1554
    %v1556 = vrot.slane %v1495, 5
    %v1557 = vrot.slane %v1556, 4
    %v1558 = vrot.slane %v1496, 5
    %v1559 = vsel %vm1503, %v1557, %v1558
    %v1560 = vrot.slane %v1497, 5
    %v1561 = vrot.slane %v1560, 4
    %v1562 = vrot.slane %v1498, 5
    %v1563 = vsel %vm1503, %v1561, %v1562
    %v1564 = vrot.slane %v1499, 5
    %v1565 = vrot.slane %v1564, 4
    %v1566 = vrot.slane %v1500, 5
    %v1567 = vsel %vm1503, %v1565, %v1566
    %s1568 = scalar_lea.vmem %s3, 4
    %v1569 = vld [vmem:[%s1568] sm:$0x3]
    %v1570 = vunpack.c.l.b16 %v1507
    %v1571 = vunpack.c.l.b16 %v1511
    %v1572 = vunpack.c.l.b16 %v1515
    %v1573 = vunpack.c.l.b16 %v1519
    %v1574 = vunpack.c.l.b16 %v1523
    %v1575 = vunpack.c.l.b16 %v1527
    %v1576 = vunpack.c.l.b16 %v1531
    %v1577 = vunpack.c.l.b16 %v1535
    %v1578 = vunpack.c.l.b16 %v1539
    %v1579 = vunpack.c.l.b16 %v1543
    %v1580 = vunpack.c.l.b16 %v1547
    %v1581 = vunpack.c.l.b16 %v1551
    %v1582 = vunpack.c.l.b16 %v1555
    %v1583 = vunpack.c.l.b16 %v1559
    %v1584 = vunpack.c.l.b16 %v1563
    %v1585 = vunpack.c.l.b16 %v1567
    %v1586 = vpack.c.b16 %v1571, %v1570
    %v1587 = vpack.c.b16 %v1573, %v1572
    %v1588 = vpack.c.b16 %v1575, %v1574
    %v1589 = vpack.c.b16 %v1577, %v1576
    %v1590 = vpack.c.b16 %v1579, %v1578
    %v1591 = vpack.c.b16 %v1581, %v1580
    %v1592 = vpack.c.b16 %v1583, %v1582
    %v1593 = vpack.c.b16 %v1585, %v1584
    %v1595 = vsel %vm167, %v1586, 0
    %v1598 = vsel %vm167, %v1587, 0
    %v1601 = vsel %vm167, %v1588, 0
    %v1604 = vsel %vm167, %v1589, 0
    %v1607 = vsel %vm167, %v1590, 0
    %v1610 = vsel %vm167, %v1591, 0
    %v1613 = vsel %vm167, %v1592, 0
    %v1616 = vsel %vm167, %v1593, 0
    %v1619 = vsel %vm1140, %v1569, 0
    %1621 = vmatprep.subr.bf16.mxu0 0
    %1622 = vmatpush1.bf16.msra.mxu0 %v1619
    %1623 = vmatprep.subr.bf16.mxu0 0
    %1624 = vmatpush1.bf16.msra.mxu0 0
    %1625 = vmatprep.subr.bf16.mxu0 0
    %1626 = vmatpush1.bf16.msra.mxu0 0
    %1627 = vmatprep.subr.bf16.mxu0 0
    %1628 = vmatpush1.bf16.msra.mxu0 0
    %1629 = vmatprep.subr.bf16.mxu0 0
    %1630 = vmatpush1.bf16.msra.mxu0 0
    %1631 = vmatprep.subr.bf16.mxu0 0
    %1632 = vmatpush1.bf16.msra.mxu0 0
    %1633 = vmatprep.subr.bf16.mxu0 0
    %1634 = vmatpush1.bf16.msra.mxu0 0
    %1635 = vmatprep.subr.bf16.mxu0 0
    %1636 = vmatpush1.bf16.msra.mxu0 0
    %1637 = vmatprep.subr.bf16.mxu0 0
    %1638 = vmatpush1.bf16.msra.mxu0 0
    %1639 = vmatprep.subr.bf16.mxu0 0
    %1640 = vmatpush1.bf16.msra.mxu0 0
    %1641 = vmatprep.subr.bf16.mxu0 0
    %1642 = vmatpush1.bf16.msra.mxu0 0
    %1643 = vmatprep.subr.bf16.mxu0 0
    %1644 = vmatpush1.bf16.msra.mxu0 0
    %1645 = vmatprep.subr.bf16.mxu0 0
    %1646 = vmatpush1.bf16.msra.mxu0 0
    %1647 = vmatprep.subr.bf16.mxu0 0
    %1648 = vmatpush1.bf16.msra.mxu0 0
    %1649 = vmatprep.subr.bf16.mxu0 0
    %1650 = vmatpush1.bf16.msra.mxu0 0
    %1651 = vmatprep.subr.bf16.mxu0 0
    %1652 = vmatpush1.bf16.msra.mxu0 0
    %1653 = vmatprep.mubr.bf16.mxu0 0
    %1654 = vmatmul.mubr.bf16.gmra.mrb[0].mxu0 %v1595
    %v1655 = vpop.f32.mrb[0].mxu0
    %v1656 = vadd.f32 0.0, %v1655
    %v1657 = vpop.f32.mrb[0].mxu0
    %v1658 = vpop.f32.mrb[0].mxu0
    %v1659 = vadd.f32 0.0, %v1658
    %v1660 = vpop.f32.mrb[0].mxu0
    %1661 = vmatprep.mubr.bf16.mxu0 0
    %1662 = vmatmul.mubr.bf16.gmra.mrb[0].mxu0 %v1598
    %v1663 = vpop.f32.mrb[0].mxu0
    %v1664 = vadd.f32 0.0, %v1663
    %v1665 = vpop.f32.mrb[0].mxu0
    %v1666 = vpop.f32.mrb[0].mxu0
    %v1667 = vadd.f32 0.0, %v1666
    %v1668 = vpop.f32.mrb[0].mxu0
    %1669 = vmatprep.mubr.bf16.mxu0 0
    %1670 = vmatmul.mubr.bf16.gmra.mrb[0].mxu0 %v1601
    %v1671 = vpop.f32.mrb[0].mxu0
    %v1672 = vadd.f32 0.0, %v1671
    %v1673 = vpop.f32.mrb[0].mxu0
    %v1674 = vpop.f32.mrb[0].mxu0
    %v1675 = vadd.f32 0.0, %v1674
    %v1676 = vpop.f32.mrb[0].mxu0
    %1677 = vmatprep.mubr.bf16.mxu0 0
    %1678 = vmatmul.mubr.bf16.gmra.mrb[0].mxu0 %v1604
    %v1679 = vpop.f32.mrb[0].mxu0
    %v1680 = vadd.f32 0.0, %v1679
    %v1681 = vpop.f32.mrb[0].mxu0
    %v1682 = vpop.f32.mrb[0].mxu0
    %v1683 = vadd.f32 0.0, %v1682
    %v1684 = vpop.f32.mrb[0].mxu0
    %1685 = vmatprep.mubr.bf16.mxu0 0
    %1686 = vmatmul.mubr.bf16.gmra.mrb[0].mxu0 %v1607
    %v1687 = vpop.f32.mrb[0].mxu0
    %v1688 = vadd.f32 0.0, %v1687
    %v1689 = vpop.f32.mrb[0].mxu0
    %v1690 = vpop.f32.mrb[0].mxu0
    %v1691 = vadd.f32 0.0, %v1690
    %v1692 = vpop.f32.mrb[0].mxu0
    %1693 = vmatprep.mubr.bf16.mxu0 0
    %1694 = vmatmul.mubr.bf16.gmra.mrb[0].mxu0 %v1610
    %v1695 = vpop.f32.mrb[0].mxu0
    %v1696 = vadd.f32 0.0, %v1695
    %v1697 = vpop.f32.mrb[0].mxu0
    %v1698 = vpop.f32.mrb[0].mxu0
    %v1699 = vadd.f32 0.0, %v1698
    %v1700 = vpop.f32.mrb[0].mxu0
    %1701 = vmatprep.mubr.bf16.mxu0 0
    %1702 = vmatmul.mubr.bf16.gmra.mrb[0].mxu0 %v1613
    %v1703 = vpop.f32.mrb[0].mxu0
    %v1704 = vadd.f32 0.0, %v1703
    %v1705 = vpop.f32.mrb[0].mxu0
    %v1706 = vpop.f32.mrb[0].mxu0
    %v1707 = vadd.f32 0.0, %v1706
    %v1708 = vpop.f32.mrb[0].mxu0
    %1709 = vmatprep.mubr.bf16.mxu0 0
    %1710 = vmatmul.mubr.bf16.gmra.mrb[0].mxu0 %v1616
    %v1711 = vpop.f32.mrb[0].mxu0
    %v1712 = vadd.f32 0.0, %v1711
    %v1713 = vpop.f32.mrb[0].mxu0
    %v1714 = vpop.f32.mrb[0].mxu0
    %v1715 = vadd.f32 0.0, %v1714
    %v1716 = vpop.f32.mrb[0].mxu0
    %1717 = vdwg.mxu0
    %v1718 = vadd.f32 %v1343, %v1656
    %v1719 = vadd.f32 %v1346, %v1659
    %v1720 = vadd.f32 %v1351, %v1664
    %v1721 = vadd.f32 %v1354, %v1667
    %v1722 = vadd.f32 %v1359, %v1672
    %v1723 = vadd.f32 %v1362, %v1675
    %v1724 = vadd.f32 %v1367, %v1680
    %v1725 = vadd.f32 %v1370, %v1683
    %v1726 = vadd.f32 %v1375, %v1688
    %v1727 = vadd.f32 %v1378, %v1691
    %v1728 = vadd.f32 %v1383, %v1696
    %v1729 = vadd.f32 %v1386, %v1699
    %v1730 = vadd.f32 %v1391, %v1704
    %v1731 = vadd.f32 %v1394, %v1707
    %v1732 = vadd.f32 %v1399, %v1712
    %v1733 = vadd.f32 %v1402, %v1715
    %v1734 = vld [vmem:[%s697] sm:$0xf]
    %v1735 = vld [vmem:[%s697 + $0x8] sm:$0xf]
    %v1736 = vld [vmem:[%s697 + $0x10] sm:$0xf]
    %v1737 = vld [vmem:[%s697 + $0x18] sm:$0xf]
    %v1738 = vld [vmem:[%s697 + $0x20] sm:$0xf]
    %v1739 = vld [vmem:[%s697 + $0x28] sm:$0xf]
    %v1740 = vld [vmem:[%s697 + $0x30] sm:$0xf]
    %v1741 = vld [vmem:[%s697 + $0x38] sm:$0xf]
    %v1742 = vld [vmem:[%s697 + $0x50] sm:$0xf]
    %v1743 = vld [vmem:[%s697 + $0x58] sm:$0xf]
    %v1744 = vld [vmem:[%s697 + $0x60] sm:$0xf]
    %v1745 = vld [vmem:[%s697 + $0x68] sm:$0xf]
    %v1746 = vld [vmem:[%s697 + $0x70] sm:$0xf]
    %v1747 = vld [vmem:[%s697 + $0x78] sm:$0xf]
    %v1748 = vld [vmem:[%s697 + $0x80] sm:$0xf]
    %v1749 = vld [vmem:[%s697 + $0x88] sm:$0xf]
    %s1750 = scalar_lea.vmem %s3, 6
    %v1751 = vld [vmem:[%s1750] sm:$0x3]
    %v1768 = vunpack.c.l.b16 %v1734
    %v1769 = vunpack.c.l.b16 %v1735
    %v1770 = vunpack.c.l.b16 %v1736
    %v1771 = vunpack.c.l.b16 %v1737
    %v1772 = vunpack.c.l.b16 %v1738
    %v1773 = vunpack.c.l.b16 %v1739
    %v1774 = vunpack.c.l.b16 %v1740
    %v1775 = vunpack.c.l.b16 %v1741
    %v1776 = vunpack.c.l.b16 %v1742
    %v1777 = vunpack.c.l.b16 %v1743
    %v1778 = vunpack.c.l.b16 %v1744
    %v1779 = vunpack.c.l.b16 %v1745
    %v1780 = vunpack.c.l.b16 %v1746
    %v1781 = vunpack.c.l.b16 %v1747
    %v1782 = vunpack.c.l.b16 %v1748
    %v1783 = vunpack.c.l.b16 %v1749
    %v1784 = vpack.c.b16 %v1769, %v1768
    %v1785 = vpack.c.b16 %v1771, %v1770
    %v1786 = vpack.c.b16 %v1773, %v1772
    %v1787 = vpack.c.b16 %v1775, %v1774
    %v1788 = vpack.c.b16 %v1777, %v1776
    %v1789 = vpack.c.b16 %v1779, %v1778
    %v1790 = vpack.c.b16 %v1781, %v1780
    %v1791 = vpack.c.b16 %v1783, %v1782
    %v1793 = vsel %vm167, %v1784, 0
    %v1796 = vsel %vm167, %v1785, 0
    %v1799 = vsel %vm167, %v1786, 0
    %v1802 = vsel %vm167, %v1787, 0
    %v1805 = vsel %vm167, %v1788, 0
    %v1808 = vsel %vm167, %v1789, 0
    %v1811 = vsel %vm167, %v1790, 0
    %v1814 = vsel %vm167, %v1791, 0
    %v1817 = vsel %vm1140, %v1751, 0
    %1819 = vmatprep.subr.bf16.mxu0 0
    %1820 = vmatpush1.bf16.msra.mxu0 %v1817
    %1821 = vmatprep.subr.bf16.mxu0 0
    %1822 = vmatpush1.bf16.msra.mxu0 0
    %1823 = vmatprep.subr.bf16.mxu0 0
    %1824 = vmatpush1.bf16.msra.mxu0 0
    %1825 = vmatprep.subr.bf16.mxu0 0
    %1826 = vmatpush1.bf16.msra.mxu0 0
    %1827 = vmatprep.subr.bf16.mxu0 0
    %1828 = vmatpush1.bf16.msra.mxu0 0
    %1829 = vmatprep.subr.bf16.mxu0 0
    %1830 = vmatpush1.bf16.msra.mxu0 0
    %1831 = vmatprep.subr.bf16.mxu0 0
    %1832 = vmatpush1.bf16.msra.mxu0 0
    %1833 = vmatprep.subr.bf16.mxu0 0
    %1834 = vmatpush1.bf16.msra.mxu0 0
    %1835 = vmatprep.subr.bf16.mxu0 0
    %1836 = vmatpush1.bf16.msra.mxu0 0
    %1837 = vmatprep.subr.bf16.mxu0 0
    %1838 = vmatpush1.bf16.msra.mxu0 0
    %1839 = vmatprep.subr.bf16.mxu0 0
    %1840 = vmatpush1.bf16.msra.mxu0 0
    %1841 = vmatprep.subr.bf16.mxu0 0
    %1842 = vmatpush1.bf16.msra.mxu0 0
    %1843 = vmatprep.subr.bf16.mxu0 0
    %1844 = vmatpush1.bf16.msra.mxu0 0
    %1845 = vmatprep.subr.bf16.mxu0 0
    %1846 = vmatpush1.bf16.msra.mxu0 0
    %1847 = vmatprep.subr.bf16.mxu0 0
    %1848 = vmatpush1.bf16.msra.mxu0 0
    %1849 = vmatprep.subr.bf16.mxu0 0
    %1850 = vmatpush1.bf16.msra.mxu0 0
    %1851 = vmatprep.mubr.bf16.mxu0 0
    %1852 = vmatmul.mubr.bf16.gmra.mrb[0].mxu0 %v1793
    %v1853 = vpop.f32.mrb[0].mxu0
    %v1854 = vadd.f32 0.0, %v1853
    %v1855 = vpop.f32.mrb[0].mxu0
    %v1856 = vpop.f32.mrb[0].mxu0
    %v1857 = vadd.f32 0.0, %v1856
    %v1858 = vpop.f32.mrb[0].mxu0
    %1859 = vmatprep.mubr.bf16.mxu0 0
    %1860 = vmatmul.mubr.bf16.gmra.mrb[0].mxu0 %v1796
    %v1861 = vpop.f32.mrb[0].mxu0
    %v1862 = vadd.f32 0.0, %v1861
    %v1863 = vpop.f32.mrb[0].mxu0
    %v1864 = vpop.f32.mrb[0].mxu0
    %v1865 = vadd.f32 0.0, %v1864
    %v1866 = vpop.f32.mrb[0].mxu0
    %1867 = vmatprep.mubr.bf16.mxu0 0
    %1868 = vmatmul.mubr.bf16.gmra.mrb[0].mxu0 %v1799
    %v1869 = vpop.f32.mrb[0].mxu0
    %v1870 = vadd.f32 0.0, %v1869
    %v1871 = vpop.f32.mrb[0].mxu0
    %v1872 = vpop.f32.mrb[0].mxu0
    %v1873 = vadd.f32 0.0, %v1872
    %v1874 = vpop.f32.mrb[0].mxu0
    %1875 = vmatprep.mubr.bf16.mxu0 0
    %1876 = vmatmul.mubr.bf16.gmra.mrb[0].mxu0 %v1802
    %v1877 = vpop.f32.mrb[0].mxu0
    %v1878 = vadd.f32 0.0, %v1877
    %v1879 = vpop.f32.mrb[0].mxu0
    %v1880 = vpop.f32.mrb[0].mxu0
    %v1881 = vadd.f32 0.0, %v1880
    %v1882 = vpop.f32.mrb[0].mxu0
    %1883 = vmatprep.mubr.bf16.mxu0 0
    %1884 = vmatmul.mubr.bf16.gmra.mrb[0].mxu0 %v1805
    %v1885 = vpop.f32.mrb[0].mxu0
    %v1886 = vadd.f32 0.0, %v1885
    %v1887 = vpop.f32.mrb[0].mxu0
    %v1888 = vpop.f32.mrb[0].mxu0
    %v1889 = vadd.f32 0.0, %v1888
    %v1890 = vpop.f32.mrb[0].mxu0
    %1891 = vmatprep.mubr.bf16.mxu0 0
    %1892 = vmatmul.mubr.bf16.gmra.mrb[0].mxu0 %v1808
    %v1893 = vpop.f32.mrb[0].mxu0
    %v1894 = vadd.f32 0.0, %v1893
    %v1895 = vpop.f32.mrb[0].mxu0
    %v1896 = vpop.f32.mrb[0].mxu0
    %v1897 = vadd.f32 0.0, %v1896
    %v1898 = vpop.f32.mrb[0].mxu0
    %1899 = vmatprep.mubr.bf16.mxu0 0
    %1900 = vmatmul.mubr.bf16.gmra.mrb[0].mxu0 %v1811
    %v1901 = vpop.f32.mrb[0].mxu0
    %v1902 = vadd.f32 0.0, %v1901
    %v1903 = vpop.f32.mrb[0].mxu0
    %v1904 = vpop.f32.mrb[0].mxu0
    %v1905 = vadd.f32 0.0, %v1904
    %v1906 = vpop.f32.mrb[0].mxu0
    %1907 = vmatprep.mubr.bf16.mxu0 0
    %1908 = vmatmul.mubr.bf16.gmra.mrb[0].mxu0 %v1814
    %v1909 = vpop.f32.mrb[0].mxu0
    %v1910 = vadd.f32 0.0, %v1909
    %v1911 = vpop.f32.mrb[0].mxu0
    %v1912 = vpop.f32.mrb[0].mxu0
    %v1913 = vadd.f32 0.0, %v1912
    %v1914 = vpop.f32.mrb[0].mxu0
    %1915 = vdwg.mxu0
    %v1916 = vadd.f32 %v1718, %v1854
    %v1917 = vadd.f32 %v1719, %v1857
    %v1918 = vadd.f32 %v1720, %v1862
    %v1919 = vadd.f32 %v1721, %v1865
    %v1920 = vadd.f32 %v1722, %v1870
    %v1921 = vadd.f32 %v1723, %v1873
    %v1922 = vadd.f32 %v1724, %v1878
    %v1923 = vadd.f32 %v1725, %v1881
    %v1924 = vadd.f32 %v1726, %v1886
    %v1925 = vadd.f32 %v1727, %v1889
    %v1926 = vadd.f32 %v1728, %v1894
    %v1927 = vadd.f32 %v1729, %v1897
    %v1928 = vadd.f32 %v1730, %v1902
    %v1929 = vadd.f32 %v1731, %v1905
    %v1930 = vadd.f32 %v1732, %v1910
    %v1931 = vadd.f32 %v1733, %v1913
    %v1932 = vld [vmem:[%s697] sm:$0x1f]
    %v1933 = vld [vmem:[%s697 + $0x8] sm:$0x1f]
    %v1934 = vld [vmem:[%s697 + $0x10] sm:$0x1f]
    %v1935 = vld [vmem:[%s697 + $0x18] sm:$0x1f]
    %v1936 = vld [vmem:[%s697 + $0x20] sm:$0x1f]
    %v1937 = vld [vmem:[%s697 + $0x28] sm:$0x1f]
    %v1938 = vld [vmem:[%s697 + $0x30] sm:$0x1f]
    %v1939 = vld [vmem:[%s697 + $0x38] sm:$0x1f]
    %v1940 = vld [vmem:[%s697 + $0x50] sm:$0x1f]
    %v1941 = vld [vmem:[%s697 + $0x58] sm:$0x1f]
    %v1942 = vld [vmem:[%s697 + $0x60] sm:$0x1f]
    %v1943 = vld [vmem:[%s697 + $0x68] sm:$0x1f]
    %v1944 = vld [vmem:[%s697 + $0x70] sm:$0x1f]
    %v1945 = vld [vmem:[%s697 + $0x78] sm:$0x1f]
    %v1946 = vld [vmem:[%s697 + $0x80] sm:$0x1f]
    %v1947 = vld [vmem:[%s697 + $0x88] sm:$0x1f]
    %v1964 = vunpack.c.l.b16 %v1932
    %v1965 = vunpack.c.h.b16 %v1932
    %v1966 = vunpack.c.l.b16 %v1933
    %v1967 = vunpack.c.h.b16 %v1933
    %v1968 = vunpack.c.l.b16 %v1934
    %v1969 = vunpack.c.h.b16 %v1934
    %v1970 = vunpack.c.l.b16 %v1935
    %v1971 = vunpack.c.h.b16 %v1935
    %v1972 = vunpack.c.l.b16 %v1936
    %v1973 = vunpack.c.h.b16 %v1936
    %v1974 = vunpack.c.l.b16 %v1937
    %v1975 = vunpack.c.h.b16 %v1937
    %v1976 = vunpack.c.l.b16 %v1938
    %v1977 = vunpack.c.h.b16 %v1938
    %v1978 = vunpack.c.l.b16 %v1939
    %v1979 = vunpack.c.h.b16 %v1939
    %v1980 = vunpack.c.l.b16 %v1940
    %v1981 = vunpack.c.h.b16 %v1940
    %v1982 = vunpack.c.l.b16 %v1941
    %v1983 = vunpack.c.h.b16 %v1941
    %v1984 = vunpack.c.l.b16 %v1942
    %v1985 = vunpack.c.h.b16 %v1942
    %v1986 = vunpack.c.l.b16 %v1943
    %v1987 = vunpack.c.h.b16 %v1943
    %v1988 = vunpack.c.l.b16 %v1944
    %v1989 = vunpack.c.h.b16 %v1944
    %v1990 = vunpack.c.l.b16 %v1945
    %v1991 = vunpack.c.h.b16 %v1945
    %v1992 = vunpack.c.l.b16 %v1946
    %v1993 = vunpack.c.h.b16 %v1946
    %v1994 = vunpack.c.l.b16 %v1947
    %v1995 = vunpack.c.h.b16 %v1947
    %v1996 = vpack.c.b16 %v1964, %v1964
    %v1997 = vpack.c.b16 %v1965, %v1965
    %v1998 = vpack.c.b16 %v1966, %v1966
    %v1999 = vpack.c.b16 %v1967, %v1967
    %v2000 = vpack.c.b16 %v1968, %v1968
    %v2001 = vpack.c.b16 %v1969, %v1969
    %v2002 = vpack.c.b16 %v1970, %v1970
    %v2003 = vpack.c.b16 %v1971, %v1971
    %v2004 = vpack.c.b16 %v1972, %v1972
    %v2005 = vpack.c.b16 %v1973, %v1973
    %v2006 = vpack.c.b16 %v1974, %v1974
    %v2007 = vpack.c.b16 %v1975, %v1975
    %v2008 = vpack.c.b16 %v1976, %v1976
    %v2009 = vpack.c.b16 %v1977, %v1977
    %v2010 = vpack.c.b16 %v1978, %v1978
    %v2011 = vpack.c.b16 %v1979, %v1979
    %v2012 = vpack.c.b16 %v1980, %v1980
    %v2013 = vpack.c.b16 %v1981, %v1981
    %v2014 = vpack.c.b16 %v1982, %v1982
    %v2015 = vpack.c.b16 %v1983, %v1983
    %v2016 = vpack.c.b16 %v1984, %v1984
    %v2017 = vpack.c.b16 %v1985, %v1985
    %v2018 = vpack.c.b16 %v1986, %v1986
    %v2019 = vpack.c.b16 %v1987, %v1987
    %v2020 = vpack.c.b16 %v1988, %v1988
    %v2021 = vpack.c.b16 %v1989, %v1989
    %v2022 = vpack.c.b16 %v1990, %v1990
    %v2023 = vpack.c.b16 %v1991, %v1991
    %v2024 = vpack.c.b16 %v1992, %v1992
    %v2025 = vpack.c.b16 %v1993, %v1993
    %v2026 = vpack.c.b16 %v1994, %v1994
    %v2027 = vpack.c.b16 %v1995, %v1995
    %v2029 = vshrl.u32 %v1996, 16
    %v2031 = vrot.slane %v2029, 4
    %v2032 = vshll.u32 %v1996, 16
    %v2034 = vrot.slane %v2032, 5
    %v2035 = vor.u32 %v2031, %v2034
    %v2036 = vrot.slane %v2035, 4
    %v2038 = vshll.u32 %v1997, 16
    %v2040 = vrot.slane %v2038, 5
    %v2041 = vsel %vm865, %v2036, %v2040
    %v2043 = vshrl.u32 %v1998, 16
    %v2045 = vrot.slane %v2043, 4
    %v2046 = vshll.u32 %v1998, 16
    %v2048 = vrot.slane %v2046, 5
    %v2049 = vor.u32 %v2045, %v2048
    %v2050 = vrot.slane %v2049, 4
    %v2052 = vshll.u32 %v1999, 16
    %v2054 = vrot.slane %v2052, 5
    %v2055 = vsel %vm865, %v2050, %v2054
    %v2057 = vshrl.u32 %v2000, 16
    %v2059 = vrot.slane %v2057, 4
    %v2060 = vshll.u32 %v2000, 16
    %v2062 = vrot.slane %v2060, 5
    %v2063 = vor.u32 %v2059, %v2062
    %v2064 = vrot.slane %v2063, 4
    %v2066 = vshll.u32 %v2001, 16
    %v2068 = vrot.slane %v2066, 5
    %v2069 = vsel %vm865, %v2064, %v2068
    %v2071 = vshrl.u32 %v2002, 16
    %v2073 = vrot.slane %v2071, 4
    %v2074 = vshll.u32 %v2002, 16
    %v2076 = vrot.slane %v2074, 5
    %v2077 = vor.u32 %v2073, %v2076
    %v2078 = vrot.slane %v2077, 4
    %v2080 = vshll.u32 %v2003, 16
    %v2082 = vrot.slane %v2080, 5
    %v2083 = vsel %vm865, %v2078, %v2082
    %v2085 = vshrl.u32 %v2004, 16
    %v2087 = vrot.slane %v2085, 4
    %v2088 = vshll.u32 %v2004, 16
    %v2090 = vrot.slane %v2088, 5
    %v2091 = vor.u32 %v2087, %v2090
    %v2092 = vrot.slane %v2091, 4
    %v2094 = vshll.u32 %v2005, 16
    %v2096 = vrot.slane %v2094, 5
    %v2097 = vsel %vm865, %v2092, %v2096
    %v2099 = vshrl.u32 %v2006, 16
    %v2101 = vrot.slane %v2099, 4
    %v2102 = vshll.u32 %v2006, 16
    %v2104 = vrot.slane %v2102, 5
    %v2105 = vor.u32 %v2101, %v2104
    %v2106 = vrot.slane %v2105, 4
    %v2108 = vshll.u32 %v2007, 16
    %v2110 = vrot.slane %v2108, 5
    %v2111 = vsel %vm865, %v2106, %v2110
    %v2113 = vshrl.u32 %v2008, 16
    %v2115 = vrot.slane %v2113, 4
    %v2116 = vshll.u32 %v2008, 16
    %v2118 = vrot.slane %v2116, 5
    %v2119 = vor.u32 %v2115, %v2118
    %v2120 = vrot.slane %v2119, 4
    %v2122 = vshll.u32 %v2009, 16
    %v2124 = vrot.slane %v2122, 5
    %v2125 = vsel %vm865, %v2120, %v2124
    %v2127 = vshrl.u32 %v2010, 16
    %v2129 = vrot.slane %v2127, 4
    %v2130 = vshll.u32 %v2010, 16
    %v2132 = vrot.slane %v2130, 5
    %v2133 = vor.u32 %v2129, %v2132
    %v2134 = vrot.slane %v2133, 4
    %v2136 = vshll.u32 %v2011, 16
    %v2138 = vrot.slane %v2136, 5
    %v2139 = vsel %vm865, %v2134, %v2138
    %v2141 = vshrl.u32 %v2012, 16
    %v2143 = vrot.slane %v2141, 4
    %v2144 = vshll.u32 %v2012, 16
    %v2146 = vrot.slane %v2144, 5
    %v2147 = vor.u32 %v2143, %v2146
    %v2148 = vrot.slane %v2147, 4
    %v2150 = vshll.u32 %v2013, 16
    %v2152 = vrot.slane %v2150, 5
    %v2153 = vsel %vm865, %v2148, %v2152
    %v2155 = vshrl.u32 %v2014, 16
    %v2157 = vrot.slane %v2155, 4
    %v2158 = vshll.u32 %v2014, 16
    %v2160 = vrot.slane %v2158, 5
    %v2161 = vor.u32 %v2157, %v2160
    %v2162 = vrot.slane %v2161, 4
    %v2164 = vshll.u32 %v2015, 16
    %v2166 = vrot.slane %v2164, 5
    %v2167 = vsel %vm865, %v2162, %v2166
    %v2169 = vshrl.u32 %v2016, 16
    %v2171 = vrot.slane %v2169, 4
    %v2172 = vshll.u32 %v2016, 16
    %v2174 = vrot.slane %v2172, 5
    %v2175 = vor.u32 %v2171, %v2174
    %v2176 = vrot.slane %v2175, 4
    %v2178 = vshll.u32 %v2017, 16
    %v2180 = vrot.slane %v2178, 5
    %v2181 = vsel %vm865, %v2176, %v2180
    %v2183 = vshrl.u32 %v2018, 16
    %v2185 = vrot.slane %v2183, 4
    %v2186 = vshll.u32 %v2018, 16
    %v2188 = vrot.slane %v2186, 5
    %v2189 = vor.u32 %v2185, %v2188
    %v2190 = vrot.slane %v2189, 4
    %v2192 = vshll.u32 %v2019, 16
    %v2194 = vrot.slane %v2192, 5
    %v2195 = vsel %vm865, %v2190, %v2194
    %v2197 = vshrl.u32 %v2020, 16
    %v2199 = vrot.slane %v2197, 4
    %v2200 = vshll.u32 %v2020, 16
    %v2202 = vrot.slane %v2200, 5
    %v2203 = vor.u32 %v2199, %v2202
    %v2204 = vrot.slane %v2203, 4
    %v2206 = vshll.u32 %v2021, 16
    %v2208 = vrot.slane %v2206, 5
    %v2209 = vsel %vm865, %v2204, %v2208
    %v2211 = vshrl.u32 %v2022, 16
    %v2213 = vrot.slane %v2211, 4
    %v2214 = vshll.u32 %v2022, 16
    %v2216 = vrot.slane %v2214, 5
    %v2217 = vor.u32 %v2213, %v2216
    %v2218 = vrot.slane %v2217, 4
    %v2220 = vshll.u32 %v2023, 16
    %v2222 = vrot.slane %v2220, 5
    %v2223 = vsel %vm865, %v2218, %v2222
    %v2225 = vshrl.u32 %v2024, 16
    %v2227 = vrot.slane %v2225, 4
    %v2228 = vshll.u32 %v2024, 16
    %v2230 = vrot.slane %v2228, 5
    %v2231 = vor.u32 %v2227, %v2230
    %v2232 = vrot.slane %v2231, 4
    %v2234 = vshll.u32 %v2025, 16
    %v2236 = vrot.slane %v2234, 5
    %v2237 = vsel %vm865, %v2232, %v2236
    %v2239 = vshrl.u32 %v2026, 16
    %v2241 = vrot.slane %v2239, 4
    %v2242 = vshll.u32 %v2026, 16
    %v2244 = vrot.slane %v2242, 5
    %v2245 = vor.u32 %v2241, %v2244
    %v2246 = vrot.slane %v2245, 4
    %v2248 = vshll.u32 %v2027, 16
    %v2250 = vrot.slane %v2248, 5
    %v2251 = vsel %vm865, %v2246, %v2250
    %s2252 = scalar_lea.vmem %s3, 8
    %v2253 = vld [vmem:[%s2252] sm:$0x3]
    %v2254 = vunpack.c.l.b16 %v2041
    %v2255 = vunpack.c.l.b16 %v2055
    %v2256 = vunpack.c.l.b16 %v2069
    %v2257 = vunpack.c.l.b16 %v2083
    %v2258 = vunpack.c.l.b16 %v2097
    %v2259 = vunpack.c.l.b16 %v2111
    %v2260 = vunpack.c.l.b16 %v2125
    %v2261 = vunpack.c.l.b16 %v2139
    %v2262 = vunpack.c.l.b16 %v2153
    %v2263 = vunpack.c.l.b16 %v2167
    %v2264 = vunpack.c.l.b16 %v2181
    %v2265 = vunpack.c.l.b16 %v2195
    %v2266 = vunpack.c.l.b16 %v2209
    %v2267 = vunpack.c.l.b16 %v2223
    %v2268 = vunpack.c.l.b16 %v2237
    %v2269 = vunpack.c.l.b16 %v2251
    %v2270 = vpack.c.b16 %v2255, %v2254
    %v2271 = vpack.c.b16 %v2257, %v2256
    %v2272 = vpack.c.b16 %v2259, %v2258
    %v2273 = vpack.c.b16 %v2261, %v2260
    %v2274 = vpack.c.b16 %v2263, %v2262
    %v2275 = vpack.c.b16 %v2265, %v2264
    %v2276 = vpack.c.b16 %v2267, %v2266
    %v2277 = vpack.c.b16 %v2269, %v2268
    %v2279 = vsel %vm167, %v2270, 0
    %v2282 = vsel %vm167, %v2271, 0
    %v2285 = vsel %vm167, %v2272, 0
    %v2288 = vsel %vm167, %v2273, 0
    %v2291 = vsel %vm167, %v2274, 0
    %v2294 = vsel %vm167, %v2275, 0
    %v2297 = vsel %vm167, %v2276, 0
    %v2300 = vsel %vm167, %v2277, 0
    %v2303 = vsel %vm1140, %v2253, 0
    %2305 = vmatprep.subr.bf16.mxu0 0
    %2306 = vmatpush1.bf16.msra.mxu0 %v2303
    %2307 = vmatprep.subr.bf16.mxu0 0
    %2308 = vmatpush1.bf16.msra.mxu0 0
    %2309 = vmatprep.subr.bf16.mxu0 0
    %2310 = vmatpush1.bf16.msra.mxu0 0
    %2311 = vmatprep.subr.bf16.mxu0 0
    %2312 = vmatpush1.bf16.msra.mxu0 0
    %2313 = vmatprep.subr.bf16.mxu0 0
    %2314 = vmatpush1.bf16.msra.mxu0 0
    %2315 = vmatprep.subr.bf16.mxu0 0
    %2316 = vmatpush1.bf16.msra.mxu0 0
    %2317 = vmatprep.subr.bf16.mxu0 0
    %2318 = vmatpush1.bf16.msra.mxu0 0
    %2319 = vmatprep.subr.bf16.mxu0 0
    %2320 = vmatpush1.bf16.msra.mxu0 0
    %2321 = vmatprep.subr.bf16.mxu0 0
    %2322 = vmatpush1.bf16.msra.mxu0 0
    %2323 = vmatprep.subr.bf16.mxu0 0
    %2324 = vmatpush1.bf16.msra.mxu0 0
    %2325 = vmatprep.subr.bf16.mxu0 0
    %2326 = vmatpush1.bf16.msra.mxu0 0
    %2327 = vmatprep.subr.bf16.mxu0 0
    %2328 = vmatpush1.bf16.msra.mxu0 0
    %2329 = vmatprep.subr.bf16.mxu0 0
    %2330 = vmatpush1.bf16.msra.mxu0 0
    %2331 = vmatprep.subr.bf16.mxu0 0
    %2332 = vmatpush1.bf16.msra.mxu0 0
    %2333 = vmatprep.subr.bf16.mxu0 0
    %2334 = vmatpush1.bf16.msra.mxu0 0
    %2335 = vmatprep.subr.bf16.mxu0 0
    %2336 = vmatpush1.bf16.msra.mxu0 0
    %2337 = vmatprep.mubr.bf16.mxu0 0
    %2338 = vmatmul.mubr.bf16.gmra.mrb[0].mxu0 %v2279
    %v2339 = vpop.f32.mrb[0].mxu0
    %v2340 = vadd.f32 0.0, %v2339
    %v2341 = vpop.f32.mrb[0].mxu0
    %v2342 = vpop.f32.mrb[0].mxu0
    %v2343 = vadd.f32 0.0, %v2342
    %v2344 = vpop.f32.mrb[0].mxu0
    %2345 = vmatprep.mubr.bf16.mxu0 0
    %2346 = vmatmul.mubr.bf16.gmra.mrb[0].mxu0 %v2282
    %v2347 = vpop.f32.mrb[0].mxu0
    %v2348 = vadd.f32 0.0, %v2347
    %v2349 = vpop.f32.mrb[0].mxu0
    %v2350 = vpop.f32.mrb[0].mxu0
    %v2351 = vadd.f32 0.0, %v2350
    %v2352 = vpop.f32.mrb[0].mxu0
    %2353 = vmatprep.mubr.bf16.mxu0 0
    %2354 = vmatmul.mubr.bf16.gmra.mrb[0].mxu0 %v2285
    %v2355 = vpop.f32.mrb[0].mxu0
    %v2356 = vadd.f32 0.0, %v2355
    %v2357 = vpop.f32.mrb[0].mxu0
    %v2358 = vpop.f32.mrb[0].mxu0
    %v2359 = vadd.f32 0.0, %v2358
    %v2360 = vpop.f32.mrb[0].mxu0
    %2361 = vmatprep.mubr.bf16.mxu0 0
    %2362 = vmatmul.mubr.bf16.gmra.mrb[0].mxu0 %v2288
    %v2363 = vpop.f32.mrb[0].mxu0
    %v2364 = vadd.f32 0.0, %v2363
    %v2365 = vpop.f32.mrb[0].mxu0
    %v2366 = vpop.f32.mrb[0].mxu0
    %v2367 = vadd.f32 0.0, %v2366
    %v2368 = vpop.f32.mrb[0].mxu0
    %2369 = vmatprep.mubr.bf16.mxu0 0
    %2370 = vmatmul.mubr.bf16.gmra.mrb[0].mxu0 %v2291
    %v2371 = vpop.f32.mrb[0].mxu0
    %v2372 = vadd.f32 0.0, %v2371
    %v2373 = vpop.f32.mrb[0].mxu0
    %v2374 = vpop.f32.mrb[0].mxu0
    %v2375 = vadd.f32 0.0, %v2374
    %v2376 = vpop.f32.mrb[0].mxu0
    %2377 = vmatprep.mubr.bf16.mxu0 0
    %2378 = vmatmul.mubr.bf16.gmra.mrb[0].mxu0 %v2294
    %v2379 = vpop.f32.mrb[0].mxu0
    %v2380 = vadd.f32 0.0, %v2379
    %v2381 = vpop.f32.mrb[0].mxu0
    %v2382 = vpop.f32.mrb[0].mxu0
    %v2383 = vadd.f32 0.0, %v2382
    %v2384 = vpop.f32.mrb[0].mxu0
    %2385 = vmatprep.mubr.bf16.mxu0 0
    %2386 = vmatmul.mubr.bf16.gmra.mrb[0].mxu0 %v2297
    %v2387 = vpop.f32.mrb[0].mxu0
    %v2388 = vadd.f32 0.0, %v2387
    %v2389 = vpop.f32.mrb[0].mxu0
    %v2390 = vpop.f32.mrb[0].mxu0
    %v2391 = vadd.f32 0.0, %v2390
    %v2392 = vpop.f32.mrb[0].mxu0
    %2393 = vmatprep.mubr.bf16.mxu0 0
    %2394 = vmatmul.mubr.bf16.gmra.mrb[0].mxu0 %v2300
    %v2395 = vpop.f32.mrb[0].mxu0
    %v2396 = vadd.f32 0.0, %v2395
    %v2397 = vpop.f32.mrb[0].mxu0
    %v2398 = vpop.f32.mrb[0].mxu0
    %v2399 = vadd.f32 0.0, %v2398
    %v2400 = vpop.f32.mrb[0].mxu0
    %2401 = vdwg.mxu0
    %v2402 = vadd.f32 %v1916, %v2340
    %v2403 = vadd.f32 %v1917, %v2343
    %v2404 = vadd.f32 %v1918, %v2348
    %v2405 = vadd.f32 %v1919, %v2351
    %v2406 = vadd.f32 %v1920, %v2356
    %v2407 = vadd.f32 %v1921, %v2359
    %v2408 = vadd.f32 %v1922, %v2364
    %v2409 = vadd.f32 %v1923, %v2367
    %v2410 = vadd.f32 %v1924, %v2372
    %v2411 = vadd.f32 %v1925, %v2375
    %v2412 = vadd.f32 %v1926, %v2380
    %v2413 = vadd.f32 %v1927, %v2383
    %v2414 = vadd.f32 %v1928, %v2388
    %v2415 = vadd.f32 %v1929, %v2391
    %v2416 = vadd.f32 %v1930, %v2396
    %v2417 = vadd.f32 %v1931, %v2399
    %v2418 = vld [vmem:[%s697] sm:$0x1e]
    %v2419 = vld [vmem:[%s697 + $0x8] sm:$0x1e]
    %v2420 = vld [vmem:[%s697 + $0x10] sm:$0x1e]
    %v2421 = vld [vmem:[%s697 + $0x18] sm:$0x1e]
    %v2422 = vld [vmem:[%s697 + $0x20] sm:$0x1e]
    %v2423 = vld [vmem:[%s697 + $0x28] sm:$0x1e]
    %v2424 = vld [vmem:[%s697 + $0x30] sm:$0x1e]
    %v2425 = vld [vmem:[%s697 + $0x38] sm:$0x1e]
    %v2426 = vld [vmem:[%s697 + $0x50] sm:$0x1e]
    %v2427 = vld [vmem:[%s697 + $0x58] sm:$0x1e]
    %v2428 = vld [vmem:[%s697 + $0x60] sm:$0x1e]
    %v2429 = vld [vmem:[%s697 + $0x68] sm:$0x1e]
    %v2430 = vld [vmem:[%s697 + $0x70] sm:$0x1e]
    %v2431 = vld [vmem:[%s697 + $0x78] sm:$0x1e]
    %v2432 = vld [vmem:[%s697 + $0x80] sm:$0x1e]
    %v2433 = vld [vmem:[%s697 + $0x88] sm:$0x1e]
    %v2450 = vunpack.c.l.b16 %v2418
    %v2451 = vunpack.c.h.b16 %v2418
    %v2452 = vunpack.c.l.b16 %v2419
    %v2453 = vunpack.c.h.b16 %v2419
    %v2454 = vunpack.c.l.b16 %v2420
    %v2455 = vunpack.c.h.b16 %v2420
    %v2456 = vunpack.c.l.b16 %v2421
    %v2457 = vunpack.c.h.b16 %v2421
    %v2458 = vunpack.c.l.b16 %v2422
    %v2459 = vunpack.c.h.b16 %v2422
    %v2460 = vunpack.c.l.b16 %v2423
    %v2461 = vunpack.c.h.b16 %v2423
    %v2462 = vunpack.c.l.b16 %v2424
    %v2463 = vunpack.c.h.b16 %v2424
    %v2464 = vunpack.c.l.b16 %v2425
    %v2465 = vunpack.c.h.b16 %v2425
    %v2466 = vunpack.c.l.b16 %v2426
    %v2467 = vunpack.c.h.b16 %v2426
    %v2468 = vunpack.c.l.b16 %v2427
    %v2469 = vunpack.c.h.b16 %v2427
    %v2470 = vunpack.c.l.b16 %v2428
    %v2471 = vunpack.c.h.b16 %v2428
    %v2472 = vunpack.c.l.b16 %v2429
    %v2473 = vunpack.c.h.b16 %v2429
    %v2474 = vunpack.c.l.b16 %v2430
    %v2475 = vunpack.c.h.b16 %v2430
    %v2476 = vunpack.c.l.b16 %v2431
    %v2477 = vunpack.c.h.b16 %v2431
    %v2478 = vunpack.c.l.b16 %v2432
    %v2479 = vunpack.c.h.b16 %v2432
    %v2480 = vunpack.c.l.b16 %v2433
    %v2481 = vunpack.c.h.b16 %v2433
    %v2482 = vpack.c.b16 %v2450, %v2450
    %v2483 = vpack.c.b16 %v2451, %v2451
    %v2484 = vpack.c.b16 %v2452, %v2452
    %v2485 = vpack.c.b16 %v2453, %v2453
    %v2486 = vpack.c.b16 %v2454, %v2454
    %v2487 = vpack.c.b16 %v2455, %v2455
    %v2488 = vpack.c.b16 %v2456, %v2456
    %v2489 = vpack.c.b16 %v2457, %v2457
    %v2490 = vpack.c.b16 %v2458, %v2458
    %v2491 = vpack.c.b16 %v2459, %v2459
    %v2492 = vpack.c.b16 %v2460, %v2460
    %v2493 = vpack.c.b16 %v2461, %v2461
    %v2494 = vpack.c.b16 %v2462, %v2462
    %v2495 = vpack.c.b16 %v2463, %v2463
    %v2496 = vpack.c.b16 %v2464, %v2464
    %v2497 = vpack.c.b16 %v2465, %v2465
    %v2498 = vpack.c.b16 %v2466, %v2466
    %v2499 = vpack.c.b16 %v2467, %v2467
    %v2500 = vpack.c.b16 %v2468, %v2468
    %v2501 = vpack.c.b16 %v2469, %v2469
    %v2502 = vpack.c.b16 %v2470, %v2470
    %v2503 = vpack.c.b16 %v2471, %v2471
    %v2504 = vpack.c.b16 %v2472, %v2472
    %v2505 = vpack.c.b16 %v2473, %v2473
    %v2506 = vpack.c.b16 %v2474, %v2474
    %v2507 = vpack.c.b16 %v2475, %v2475
    %v2508 = vpack.c.b16 %v2476, %v2476
    %v2509 = vpack.c.b16 %v2477, %v2477
    %v2510 = vpack.c.b16 %v2478, %v2478
    %v2511 = vpack.c.b16 %v2479, %v2479
    %v2512 = vpack.c.b16 %v2480, %v2480
    %v2513 = vpack.c.b16 %v2481, %v2481
    %v2514 = vrot.slane %v2482, 5
    %v2515 = vrot.slane %v2514, 4
    %v2516 = vrot.slane %v2483, 5
    %v2517 = vsel %vm1503, %v2515, %v2516
    %v2518 = vrot.slane %v2484, 5
    %v2519 = vrot.slane %v2518, 4
    %v2520 = vrot.slane %v2485, 5
    %v2521 = vsel %vm1503, %v2519, %v2520
    %v2522 = vrot.slane %v2486, 5
    %v2523 = vrot.slane %v2522, 4
    %v2524 = vrot.slane %v2487, 5
    %v2525 = vsel %vm1503, %v2523, %v2524
    %v2526 = vrot.slane %v2488, 5
    %v2527 = vrot.slane %v2526, 4
    %v2528 = vrot.slane %v2489, 5
    %v2529 = vsel %vm1503, %v2527, %v2528
    %v2530 = vrot.slane %v2490, 5
    %v2531 = vrot.slane %v2530, 4
    %v2532 = vrot.slane %v2491, 5
    %v2533 = vsel %vm1503, %v2531, %v2532
    %v2534 = vrot.slane %v2492, 5
    %v2535 = vrot.slane %v2534, 4
    %v2536 = vrot.slane %v2493, 5
    %v2537 = vsel %vm1503, %v2535, %v2536
    %v2538 = vrot.slane %v2494, 5
    %v2539 = vrot.slane %v2538, 4
    %v2540 = vrot.slane %v2495, 5
    %v2541 = vsel %vm1503, %v2539, %v2540
    %v2542 = vrot.slane %v2496, 5
    %v2543 = vrot.slane %v2542, 4
    %v2544 = vrot.slane %v2497, 5
    %v2545 = vsel %vm1503, %v2543, %v2544
    %v2546 = vrot.slane %v2498, 5
    %v2547 = vrot.slane %v2546, 4
    %v2548 = vrot.slane %v2499, 5
    %v2549 = vsel %vm1503, %v2547, %v2548
    %v2550 = vrot.slane %v2500, 5
    %v2551 = vrot.slane %v2550, 4
    %v2552 = vrot.slane %v2501, 5
    %v2553 = vsel %vm1503, %v2551, %v2552
    %v2554 = vrot.slane %v2502, 5
    %v2555 = vrot.slane %v2554, 4
    %v2556 = vrot.slane %v2503, 5
    %v2557 = vsel %vm1503, %v2555, %v2556
    %v2558 = vrot.slane %v2504, 5
    %v2559 = vrot.slane %v2558, 4
    %v2560 = vrot.slane %v2505, 5
    %v2561 = vsel %vm1503, %v2559, %v2560
    %v2562 = vrot.slane %v2506, 5
    %v2563 = vrot.slane %v2562, 4
    %v2564 = vrot.slane %v2507, 5
    %v2565 = vsel %vm1503, %v2563, %v2564
    %v2566 = vrot.slane %v2508, 5
    %v2567 = vrot.slane %v2566, 4
    %v2568 = vrot.slane %v2509, 5
    %v2569 = vsel %vm1503, %v2567, %v2568
    %v2570 = vrot.slane %v2510, 5
    %v2571 = vrot.slane %v2570, 4
    %v2572 = vrot.slane %v2511, 5
    %v2573 = vsel %vm1503, %v2571, %v2572
    %v2574 = vrot.slane %v2512, 5
    %v2575 = vrot.slane %v2574, 4
    %v2576 = vrot.slane %v2513, 5
    %v2577 = vsel %vm1503, %v2575, %v2576
    %s2578 = scalar_lea.vmem %s3, 10
    %v2579 = vld [vmem:[%s2578] sm:$0x3]
    %v2580 = vunpack.c.l.b16 %v2517
    %v2581 = vunpack.c.l.b16 %v2521
    %v2582 = vunpack.c.l.b16 %v2525
    %v2583 = vunpack.c.l.b16 %v2529
    %v2584 = vunpack.c.l.b16 %v2533
    %v2585 = vunpack.c.l.b16 %v2537
    %v2586 = vunpack.c.l.b16 %v2541
    %v2587 = vunpack.c.l.b16 %v2545
    %v2588 = vunpack.c.l.b16 %v2549
    %v2589 = vunpack.c.l.b16 %v2553
    %v2590 = vunpack.c.l.b16 %v2557
    %v2591 = vunpack.c.l.b16 %v2561
    %v2592 = vunpack.c.l.b16 %v2565
    %v2593 = vunpack.c.l.b16 %v2569
    %v2594 = vunpack.c.l.b16 %v2573
    %v2595 = vunpack.c.l.b16 %v2577
    %v2596 = vpack.c.b16 %v2581, %v2580
    %v2597 = vpack.c.b16 %v2583, %v2582
    %v2598 = vpack.c.b16 %v2585, %v2584
    %v2599 = vpack.c.b16 %v2587, %v2586
    %v2600 = vpack.c.b16 %v2589, %v2588
    %v2601 = vpack.c.b16 %v2591, %v2590
    %v2602 = vpack.c.b16 %v2593, %v2592
    %v2603 = vpack.c.b16 %v2595, %v2594
    %v2605 = vsel %vm167, %v2596, 0
    %v2608 = vsel %vm167, %v2597, 0
    %v2611 = vsel %vm167, %v2598, 0
    %v2614 = vsel %vm167, %v2599, 0
    %v2617 = vsel %vm167, %v2600, 0
    %v2620 = vsel %vm167, %v2601, 0
    %v2623 = vsel %vm167, %v2602, 0
    %v2626 = vsel %vm167, %v2603, 0
    %v2629 = vsel %vm1140, %v2579, 0
    %2631 = vmatprep.subr.bf16.mxu0 0
    %2632 = vmatpush1.bf16.msra.mxu0 %v2629
    %2633 = vmatprep.subr.bf16.mxu0 0
    %2634 = vmatpush1.bf16.msra.mxu0 0
    %2635 = vmatprep.subr.bf16.mxu0 0
    %2636 = vmatpush1.bf16.msra.mxu0 0
    %2637 = vmatprep.subr.bf16.mxu0 0
    %2638 = vmatpush1.bf16.msra.mxu0 0
    %2639 = vmatprep.subr.bf16.mxu0 0
    %2640 = vmatpush1.bf16.msra.mxu0 0
    %2641 = vmatprep.subr.bf16.mxu0 0
    %2642 = vmatpush1.bf16.msra.mxu0 0
    %2643 = vmatprep.subr.bf16.mxu0 0
    %2644 = vmatpush1.bf16.msra.mxu0 0
    %2645 = vmatprep.subr.bf16.mxu0 0
    %2646 = vmatpush1.bf16.msra.mxu0 0
    %2647 = vmatprep.subr.bf16.mxu0 0
    %2648 = vmatpush1.bf16.msra.mxu0 0
    %2649 = vmatprep.subr.bf16.mxu0 0
    %2650 = vmatpush1.bf16.msra.mxu0 0
    %2651 = vmatprep.subr.bf16.mxu0 0
    %2652 = vmatpush1.bf16.msra.mxu0 0
    %2653 = vmatprep.subr.bf16.mxu0 0
    %2654 = vmatpush1.bf16.msra.mxu0 0
    %2655 = vmatprep.subr.bf16.mxu0 0
    %2656 = vmatpush1.bf16.msra.mxu0 0
    %2657 = vmatprep.subr.bf16.mxu0 0
    %2658 = vmatpush1.bf16.msra.mxu0 0
    %2659 = vmatprep.subr.bf16.mxu0 0
    %2660 = vmatpush1.bf16.msra.mxu0 0
    %2661 = vmatprep.subr.bf16.mxu0 0
    %2662 = vmatpush1.bf16.msra.mxu0 0
    %2663 = vmatprep.mubr.bf16.mxu0 0
    %2664 = vmatmul.mubr.bf16.gmra.mrb[0].mxu0 %v2605
    %v2665 = vpop.f32.mrb[0].mxu0
    %v2666 = vadd.f32 0.0, %v2665
    %v2667 = vpop.f32.mrb[0].mxu0
    %v2668 = vpop.f32.mrb[0].mxu0
    %v2669 = vadd.f32 0.0, %v2668
    %v2670 = vpop.f32.mrb[0].mxu0
    %2671 = vmatprep.mubr.bf16.mxu0 0
    %2672 = vmatmul.mubr.bf16.gmra.mrb[0].mxu0 %v2608
    %v2673 = vpop.f32.mrb[0].mxu0
    %v2674 = vadd.f32 0.0, %v2673
    %v2675 = vpop.f32.mrb[0].mxu0
    %v2676 = vpop.f32.mrb[0].mxu0
    %v2677 = vadd.f32 0.0, %v2676
    %v2678 = vpop.f32.mrb[0].mxu0
    %2679 = vmatprep.mubr.bf16.mxu0 0
    %2680 = vmatmul.mubr.bf16.gmra.mrb[0].mxu0 %v2611
    %v2681 = vpop.f32.mrb[0].mxu0
    %v2682 = vadd.f32 0.0, %v2681
    %v2683 = vpop.f32.mrb[0].mxu0
    %v2684 = vpop.f32.mrb[0].mxu0
    %v2685 = vadd.f32 0.0, %v2684
    %v2686 = vpop.f32.mrb[0].mxu0
    %2687 = vmatprep.mubr.bf16.mxu0 0
    %2688 = vmatmul.mubr.bf16.gmra.mrb[0].mxu0 %v2614
    %v2689 = vpop.f32.mrb[0].mxu0
    %v2690 = vadd.f32 0.0, %v2689
    %v2691 = vpop.f32.mrb[0].mxu0
    %v2692 = vpop.f32.mrb[0].mxu0
    %v2693 = vadd.f32 0.0, %v2692
    %v2694 = vpop.f32.mrb[0].mxu0
    %2695 = vmatprep.mubr.bf16.mxu0 0
    %2696 = vmatmul.mubr.bf16.gmra.mrb[0].mxu0 %v2617
    %v2697 = vpop.f32.mrb[0].mxu0
    %v2698 = vadd.f32 0.0, %v2697
    %v2699 = vpop.f32.mrb[0].mxu0
    %v2700 = vpop.f32.mrb[0].mxu0
    %v2701 = vadd.f32 0.0, %v2700
    %v2702 = vpop.f32.mrb[0].mxu0
    %2703 = vmatprep.mubr.bf16.mxu0 0
    %2704 = vmatmul.mubr.bf16.gmra.mrb[0].mxu0 %v2620
    %v2705 = vpop.f32.mrb[0].mxu0
    %v2706 = vadd.f32 0.0, %v2705
    %v2707 = vpop.f32.mrb[0].mxu0
    %v2708 = vpop.f32.mrb[0].mxu0
    %v2709 = vadd.f32 0.0, %v2708
    %v2710 = vpop.f32.mrb[0].mxu0
    %2711 = vmatprep.mubr.bf16.mxu0 0
    %2712 = vmatmul.mubr.bf16.gmra.mrb[0].mxu0 %v2623
    %v2713 = vpop.f32.mrb[0].mxu0
    %v2714 = vadd.f32 0.0, %v2713
    %v2715 = vpop.f32.mrb[0].mxu0
    %v2716 = vpop.f32.mrb[0].mxu0
    %v2717 = vadd.f32 0.0, %v2716
    %v2718 = vpop.f32.mrb[0].mxu0
    %2719 = vmatprep.mubr.bf16.mxu0 0
    %2720 = vmatmul.mubr.bf16.gmra.mrb[0].mxu0 %v2626
    %v2721 = vpop.f32.mrb[0].mxu0
    %v2722 = vadd.f32 0.0, %v2721
    %v2723 = vpop.f32.mrb[0].mxu0
    %v2724 = vpop.f32.mrb[0].mxu0
    %v2725 = vadd.f32 0.0, %v2724
    %v2726 = vpop.f32.mrb[0].mxu0
    %2727 = vdwg.mxu0
    %v2728 = vadd.f32 %v2402, %v2666
    %v2729 = vadd.f32 %v2403, %v2669
    %v2730 = vadd.f32 %v2404, %v2674
    %v2731 = vadd.f32 %v2405, %v2677
    %v2732 = vadd.f32 %v2406, %v2682
    %v2733 = vadd.f32 %v2407, %v2685
    %v2734 = vadd.f32 %v2408, %v2690
    %v2735 = vadd.f32 %v2409, %v2693
    %v2736 = vadd.f32 %v2410, %v2698
    %v2737 = vadd.f32 %v2411, %v2701
    %v2738 = vadd.f32 %v2412, %v2706
    %v2739 = vadd.f32 %v2413, %v2709
    %v2740 = vadd.f32 %v2414, %v2714
    %v2741 = vadd.f32 %v2415, %v2717
    %v2742 = vadd.f32 %v2416, %v2722
    %v2743 = vadd.f32 %v2417, %v2725
    %s2744 = scalar_lea.vmem [#allocation3], 16
    %v2745 = vld [vmem:[%s2744] sm:$0xf]
    %v2746 = vld [vmem:[%s2744 + $0x8] sm:$0xf]
    %v2747 = vld [vmem:[%s2744 + $0x10] sm:$0xf]
    %v2748 = vld [vmem:[%s2744 + $0x18] sm:$0xf]
    %v2749 = vld [vmem:[%s2744 + $0x20] sm:$0xf]
    %v2750 = vld [vmem:[%s2744 + $0x28] sm:$0xf]
    %v2751 = vld [vmem:[%s2744 + $0x30] sm:$0xf]
    %v2752 = vld [vmem:[%s2744 + $0x38] sm:$0xf]
    %v2753 = vld [vmem:[%s2744 + $0x50] sm:$0xf]
    %v2754 = vld [vmem:[%s2744 + $0x58] sm:$0xf]
    %v2755 = vld [vmem:[%s2744 + $0x60] sm:$0xf]
    %v2756 = vld [vmem:[%s2744 + $0x68] sm:$0xf]
    %v2757 = vld [vmem:[%s2744 + $0x70] sm:$0xf]
    %v2758 = vld [vmem:[%s2744 + $0x78] sm:$0xf]
    %v2759 = vld [vmem:[%s2744 + $0x80] sm:$0xf]
    %v2760 = vld [vmem:[%s2744 + $0x88] sm:$0xf]
    %s2761 = scalar_lea.vmem %s3, 12
    %v2762 = vld [vmem:[%s2761] sm:$0x3]
    %v2779 = vunpack.c.l.b16 %v2745
    %v2780 = vunpack.c.l.b16 %v2746
    %v2781 = vunpack.c.l.b16 %v2747
    %v2782 = vunpack.c.l.b16 %v2748
    %v2783 = vunpack.c.l.b16 %v2749
    %v2784 = vunpack.c.l.b16 %v2750
    %v2785 = vunpack.c.l.b16 %v2751
    %v2786 = vunpack.c.l.b16 %v2752
    %v2787 = vunpack.c.l.b16 %v2753
    %v2788 = vunpack.c.l.b16 %v2754
    %v2789 = vunpack.c.l.b16 %v2755
    %v2790 = vunpack.c.l.b16 %v2756
    %v2791 = vunpack.c.l.b16 %v2757
    %v2792 = vunpack.c.l.b16 %v2758
    %v2793 = vunpack.c.l.b16 %v2759
    %v2794 = vunpack.c.l.b16 %v2760
    %v2795 = vpack.c.b16 %v2780, %v2779
    %v2796 = vpack.c.b16 %v2782, %v2781
    %v2797 = vpack.c.b16 %v2784, %v2783
    %v2798 = vpack.c.b16 %v2786, %v2785
    %v2799 = vpack.c.b16 %v2788, %v2787
    %v2800 = vpack.c.b16 %v2790, %v2789
    %v2801 = vpack.c.b16 %v2792, %v2791
    %v2802 = vpack.c.b16 %v2794, %v2793
    %v2804 = vsel %vm167, %v2795, 0
    %v2807 = vsel %vm167, %v2796, 0
    %v2810 = vsel %vm167, %v2797, 0
    %v2813 = vsel %vm167, %v2798, 0
    %v2816 = vsel %vm167, %v2799, 0
    %v2819 = vsel %vm167, %v2800, 0
    %v2822 = vsel %vm167, %v2801, 0
    %v2825 = vsel %vm167, %v2802, 0
    %v2828 = vsel %vm1140, %v2762, 0
    %2830 = vmatprep.subr.bf16.mxu0 0
    %2831 = vmatpush1.bf16.msra.mxu0 %v2828
    %2832 = vmatprep.subr.bf16.mxu0 0
    %2833 = vmatpush1.bf16.msra.mxu0 0
    %2834 = vmatprep.subr.bf16.mxu0 0
    %2835 = vmatpush1.bf16.msra.mxu0 0
    %2836 = vmatprep.subr.bf16.mxu0 0
    %2837 = vmatpush1.bf16.msra.mxu0 0
    %2838 = vmatprep.subr.bf16.mxu0 0
    %2839 = vmatpush1.bf16.msra.mxu0 0
    %2840 = vmatprep.subr.bf16.mxu0 0
    %2841 = vmatpush1.bf16.msra.mxu0 0
    %2842 = vmatprep.subr.bf16.mxu0 0
    %2843 = vmatpush1.bf16.msra.mxu0 0
    %2844 = vmatprep.subr.bf16.mxu0 0
    %2845 = vmatpush1.bf16.msra.mxu0 0
    %2846 = vmatprep.subr.bf16.mxu0 0
    %2847 = vmatpush1.bf16.msra.mxu0 0
    %2848 = vmatprep.subr.bf16.mxu0 0
    %2849 = vmatpush1.bf16.msra.mxu0 0
    %2850 = vmatprep.subr.bf16.mxu0 0
    %2851 = vmatpush1.bf16.msra.mxu0 0
    %2852 = vmatprep.subr.bf16.mxu0 0
    %2853 = vmatpush1.bf16.msra.mxu0 0
    %2854 = vmatprep.subr.bf16.mxu0 0
    %2855 = vmatpush1.bf16.msra.mxu0 0
    %2856 = vmatprep.subr.bf16.mxu0 0
    %2857 = vmatpush1.bf16.msra.mxu0 0
    %2858 = vmatprep.subr.bf16.mxu0 0
    %2859 = vmatpush1.bf16.msra.mxu0 0
    %2860 = vmatprep.subr.bf16.mxu0 0
    %2861 = vmatpush1.bf16.msra.mxu0 0
    %2862 = vmatprep.mubr.bf16.mxu0 0
    %2863 = vmatmul.mubr.bf16.gmra.mrb[0].mxu0 %v2804
    %v2864 = vpop.f32.mrb[0].mxu0
    %v2865 = vadd.f32 0.0, %v2864
    %v2866 = vpop.f32.mrb[0].mxu0
    %v2867 = vpop.f32.mrb[0].mxu0
    %v2868 = vadd.f32 0.0, %v2867
    %v2869 = vpop.f32.mrb[0].mxu0
    %2870 = vmatprep.mubr.bf16.mxu0 0
    %2871 = vmatmul.mubr.bf16.gmra.mrb[0].mxu0 %v2807
    %v2872 = vpop.f32.mrb[0].mxu0
    %v2873 = vadd.f32 0.0, %v2872
    %v2874 = vpop.f32.mrb[0].mxu0
    %v2875 = vpop.f32.mrb[0].mxu0
    %v2876 = vadd.f32 0.0, %v2875
    %v2877 = vpop.f32.mrb[0].mxu0
    %2878 = vmatprep.mubr.bf16.mxu0 0
    %2879 = vmatmul.mubr.bf16.gmra.mrb[0].mxu0 %v2810
    %v2880 = vpop.f32.mrb[0].mxu0
    %v2881 = vadd.f32 0.0, %v2880
    %v2882 = vpop.f32.mrb[0].mxu0
    %v2883 = vpop.f32.mrb[0].mxu0
    %v2884 = vadd.f32 0.0, %v2883
    %v2885 = vpop.f32.mrb[0].mxu0
    %2886 = vmatprep.mubr.bf16.mxu0 0
    %2887 = vmatmul.mubr.bf16.gmra.mrb[0].mxu0 %v2813
    %v2888 = vpop.f32.mrb[0].mxu0
    %v2889 = vadd.f32 0.0, %v2888
    %v2890 = vpop.f32.mrb[0].mxu0
    %v2891 = vpop.f32.mrb[0].mxu0
    %v2892 = vadd.f32 0.0, %v2891
    %v2893 = vpop.f32.mrb[0].mxu0
    %2894 = vmatprep.mubr.bf16.mxu0 0
    %2895 = vmatmul.mubr.bf16.gmra.mrb[0].mxu0 %v2816
    %v2896 = vpop.f32.mrb[0].mxu0
    %v2897 = vadd.f32 0.0, %v2896
    %v2898 = vpop.f32.mrb[0].mxu0
    %v2899 = vpop.f32.mrb[0].mxu0
    %v2900 = vadd.f32 0.0, %v2899
    %v2901 = vpop.f32.mrb[0].mxu0
    %2902 = vmatprep.mubr.bf16.mxu0 0
    %2903 = vmatmul.mubr.bf16.gmra.mrb[0].mxu0 %v2819
    %v2904 = vpop.f32.mrb[0].mxu0
    %v2905 = vadd.f32 0.0, %v2904
    %v2906 = vpop.f32.mrb[0].mxu0
    %v2907 = vpop.f32.mrb[0].mxu0
    %v2908 = vadd.f32 0.0, %v2907
    %v2909 = vpop.f32.mrb[0].mxu0
    %2910 = vmatprep.mubr.bf16.mxu0 0
    %2911 = vmatmul.mubr.bf16.gmra.mrb[0].mxu0 %v2822
    %v2912 = vpop.f32.mrb[0].mxu0
    %v2913 = vadd.f32 0.0, %v2912
    %v2914 = vpop.f32.mrb[0].mxu0
    %v2915 = vpop.f32.mrb[0].mxu0
    %v2916 = vadd.f32 0.0, %v2915
    %v2917 = vpop.f32.mrb[0].mxu0
    %2918 = vmatprep.mubr.bf16.mxu0 0
    %2919 = vmatmul.mubr.bf16.gmra.mrb[0].mxu0 %v2825
    %v2920 = vpop.f32.mrb[0].mxu0
    %v2921 = vadd.f32 0.0, %v2920
    %v2922 = vpop.f32.mrb[0].mxu0
    %v2923 = vpop.f32.mrb[0].mxu0
    %v2924 = vadd.f32 0.0, %v2923
    %v2925 = vpop.f32.mrb[0].mxu0
    %2926 = vdwg.mxu0
    %v2927 = vadd.f32 %v2728, %v2865
    %v2928 = vadd.f32 %v2729, %v2868
    %v2929 = vadd.f32 %v2730, %v2873
    %v2930 = vadd.f32 %v2731, %v2876
    %v2931 = vadd.f32 %v2732, %v2881
    %v2932 = vadd.f32 %v2733, %v2884
    %v2933 = vadd.f32 %v2734, %v2889
    %v2934 = vadd.f32 %v2735, %v2892
    %v2935 = vadd.f32 %v2736, %v2897
    %v2936 = vadd.f32 %v2737, %v2900
    %v2937 = vadd.f32 %v2738, %v2905
    %v2938 = vadd.f32 %v2739, %v2908
    %v2939 = vadd.f32 %v2740, %v2913
    %v2940 = vadd.f32 %v2741, %v2916
    %v2941 = vadd.f32 %v2742, %v2921
    %v2942 = vadd.f32 %v2743, %v2924
    %v2943 = vld [vmem:[%s2744] sm:$0x1f]
    %v2944 = vld [vmem:[%s2744 + $0x8] sm:$0x1f]
    %v2945 = vld [vmem:[%s2744 + $0x10] sm:$0x1f]
    %v2946 = vld [vmem:[%s2744 + $0x18] sm:$0x1f]
    %v2947 = vld [vmem:[%s2744 + $0x20] sm:$0x1f]
    %v2948 = vld [vmem:[%s2744 + $0x28] sm:$0x1f]
    %v2949 = vld [vmem:[%s2744 + $0x30] sm:$0x1f]
    %v2950 = vld [vmem:[%s2744 + $0x38] sm:$0x1f]
    %v2951 = vld [vmem:[%s2744 + $0x50] sm:$0x1f]
    %v2952 = vld [vmem:[%s2744 + $0x58] sm:$0x1f]
    %v2953 = vld [vmem:[%s2744 + $0x60] sm:$0x1f]
    %v2954 = vld [vmem:[%s2744 + $0x68] sm:$0x1f]
    %v2955 = vld [vmem:[%s2744 + $0x70] sm:$0x1f]
    %v2956 = vld [vmem:[%s2744 + $0x78] sm:$0x1f]
    %v2957 = vld [vmem:[%s2744 + $0x80] sm:$0x1f]
    %v2958 = vld [vmem:[%s2744 + $0x88] sm:$0x1f]
    %v2975 = vunpack.c.l.b16 %v2943
    %v2976 = vunpack.c.h.b16 %v2943
    %v2977 = vunpack.c.l.b16 %v2944
    %v2978 = vunpack.c.h.b16 %v2944
    %v2979 = vunpack.c.l.b16 %v2945
    %v2980 = vunpack.c.h.b16 %v2945
    %v2981 = vunpack.c.l.b16 %v2946
    %v2982 = vunpack.c.h.b16 %v2946
    %v2983 = vunpack.c.l.b16 %v2947
    %v2984 = vunpack.c.h.b16 %v2947
    %v2985 = vunpack.c.l.b16 %v2948
    %v2986 = vunpack.c.h.b16 %v2948
    %v2987 = vunpack.c.l.b16 %v2949
    %v2988 = vunpack.c.h.b16 %v2949
    %v2989 = vunpack.c.l.b16 %v2950
    %v2990 = vunpack.c.h.b16 %v2950
    %v2991 = vunpack.c.l.b16 %v2951
    %v2992 = vunpack.c.h.b16 %v2951
    %v2993 = vunpack.c.l.b16 %v2952
    %v2994 = vunpack.c.h.b16 %v2952
    %v2995 = vunpack.c.l.b16 %v2953
    %v2996 = vunpack.c.h.b16 %v2953
    %v2997 = vunpack.c.l.b16 %v2954
    %v2998 = vunpack.c.h.b16 %v2954
    %v2999 = vunpack.c.l.b16 %v2955
    %v3000 = vunpack.c.h.b16 %v2955
    %v3001 = vunpack.c.l.b16 %v2956
    %v3002 = vunpack.c.h.b16 %v2956
    %v3003 = vunpack.c.l.b16 %v2957
    %v3004 = vunpack.c.h.b16 %v2957
    %v3005 = vunpack.c.l.b16 %v2958
    %v3006 = vunpack.c.h.b16 %v2958
    %v3007 = vpack.c.b16 %v2975, %v2975
    %v3008 = vpack.c.b16 %v2976, %v2976
    %v3009 = vpack.c.b16 %v2977, %v2977
    %v3010 = vpack.c.b16 %v2978, %v2978
    %v3011 = vpack.c.b16 %v2979, %v2979
    %v3012 = vpack.c.b16 %v2980, %v2980
    %v3013 = vpack.c.b16 %v2981, %v2981
    %v3014 = vpack.c.b16 %v2982, %v2982
    %v3015 = vpack.c.b16 %v2983, %v2983
    %v3016 = vpack.c.b16 %v2984, %v2984
    %v3017 = vpack.c.b16 %v2985, %v2985
    %v3018 = vpack.c.b16 %v2986, %v2986
    %v3019 = vpack.c.b16 %v2987, %v2987
    %v3020 = vpack.c.b16 %v2988, %v2988
    %v3021 = vpack.c.b16 %v2989, %v2989
    %v3022 = vpack.c.b16 %v2990, %v2990
    %v3023 = vpack.c.b16 %v2991, %v2991
    %v3024 = vpack.c.b16 %v2992, %v2992
    %v3025 = vpack.c.b16 %v2993, %v2993
    %v3026 = vpack.c.b16 %v2994, %v2994
    %v3027 = vpack.c.b16 %v2995, %v2995
    %v3028 = vpack.c.b16 %v2996, %v2996
    %v3029 = vpack.c.b16 %v2997, %v2997
    %v3030 = vpack.c.b16 %v2998, %v2998
    %v3031 = vpack.c.b16 %v2999, %v2999
    %v3032 = vpack.c.b16 %v3000, %v3000
    %v3033 = vpack.c.b16 %v3001, %v3001
    %v3034 = vpack.c.b16 %v3002, %v3002
    %v3035 = vpack.c.b16 %v3003, %v3003
    %v3036 = vpack.c.b16 %v3004, %v3004
    %v3037 = vpack.c.b16 %v3005, %v3005
    %v3038 = vpack.c.b16 %v3006, %v3006
    %v3040 = vshrl.u32 %v3007, 16
    %v3042 = vrot.slane %v3040, 4
    %v3043 = vshll.u32 %v3007, 16
    %v3045 = vrot.slane %v3043, 5
    %v3046 = vor.u32 %v3042, %v3045
    %v3047 = vrot.slane %v3046, 4
    %v3049 = vshll.u32 %v3008, 16
    %v3051 = vrot.slane %v3049, 5
    %v3052 = vsel %vm865, %v3047, %v3051
    %v3054 = vshrl.u32 %v3009, 16
    %v3056 = vrot.slane %v3054, 4
    %v3057 = vshll.u32 %v3009, 16
    %v3059 = vrot.slane %v3057, 5
    %v3060 = vor.u32 %v3056, %v3059
    %v3061 = vrot.slane %v3060, 4
    %v3063 = vshll.u32 %v3010, 16
    %v3065 = vrot.slane %v3063, 5
    %v3066 = vsel %vm865, %v3061, %v3065
    %v3068 = vshrl.u32 %v3011, 16
    %v3070 = vrot.slane %v3068, 4
    %v3071 = vshll.u32 %v3011, 16
    %v3073 = vrot.slane %v3071, 5
    %v3074 = vor.u32 %v3070, %v3073
    %v3075 = vrot.slane %v3074, 4
    %v3077 = vshll.u32 %v3012, 16
    %v3079 = vrot.slane %v3077, 5
    %v3080 = vsel %vm865, %v3075, %v3079
    %v3082 = vshrl.u32 %v3013, 16
    %v3084 = vrot.slane %v3082, 4
    %v3085 = vshll.u32 %v3013, 16
    %v3087 = vrot.slane %v3085, 5
    %v3088 = vor.u32 %v3084, %v3087
    %v3089 = vrot.slane %v3088, 4
    %v3091 = vshll.u32 %v3014, 16
    %v3093 = vrot.slane %v3091, 5
    %v3094 = vsel %vm865, %v3089, %v3093
    %v3096 = vshrl.u32 %v3015, 16
    %v3098 = vrot.slane %v3096, 4
    %v3099 = vshll.u32 %v3015, 16
    %v3101 = vrot.slane %v3099, 5
    %v3102 = vor.u32 %v3098, %v3101
    %v3103 = vrot.slane %v3102, 4
    %v3105 = vshll.u32 %v3016, 16
    %v3107 = vrot.slane %v3105, 5
    %v3108 = vsel %vm865, %v3103, %v3107
    %v3110 = vshrl.u32 %v3017, 16
    %v3112 = vrot.slane %v3110, 4
    %v3113 = vshll.u32 %v3017, 16
    %v3115 = vrot.slane %v3113, 5
    %v3116 = vor.u32 %v3112, %v3115
    %v3117 = vrot.slane %v3116, 4
    %v3119 = vshll.u32 %v3018, 16
    %v3121 = vrot.slane %v3119, 5
    %v3122 = vsel %vm865, %v3117, %v3121
    %v3124 = vshrl.u32 %v3019, 16
    %v3126 = vrot.slane %v3124, 4
    %v3127 = vshll.u32 %v3019, 16
    %v3129 = vrot.slane %v3127, 5
    %v3130 = vor.u32 %v3126, %v3129
    %v3131 = vrot.slane %v3130, 4
    %v3133 = vshll.u32 %v3020, 16
    %v3135 = vrot.slane %v3133, 5
    %v3136 = vsel %vm865, %v3131, %v3135
    %v3138 = vshrl.u32 %v3021, 16
    %v3140 = vrot.slane %v3138, 4
    %v3141 = vshll.u32 %v3021, 16
    %v3143 = vrot.slane %v3141, 5
    %v3144 = vor.u32 %v3140, %v3143
    %v3145 = vrot.slane %v3144, 4
    %v3147 = vshll.u32 %v3022, 16
    %v3149 = vrot.slane %v3147, 5
    %v3150 = vsel %vm865, %v3145, %v3149
    %v3152 = vshrl.u32 %v3023, 16
    %v3154 = vrot.slane %v3152, 4
    %v3155 = vshll.u32 %v3023, 16
    %v3157 = vrot.slane %v3155, 5
    %v3158 = vor.u32 %v3154, %v3157
    %v3159 = vrot.slane %v3158, 4
    %v3161 = vshll.u32 %v3024, 16
    %v3163 = vrot.slane %v3161, 5
    %v3164 = vsel %vm865, %v3159, %v3163
    %v3166 = vshrl.u32 %v3025, 16
    %v3168 = vrot.slane %v3166, 4
    %v3169 = vshll.u32 %v3025, 16
    %v3171 = vrot.slane %v3169, 5
    %v3172 = vor.u32 %v3168, %v3171
    %v3173 = vrot.slane %v3172, 4
    %v3175 = vshll.u32 %v3026, 16
    %v3177 = vrot.slane %v3175, 5
    %v3178 = vsel %vm865, %v3173, %v3177
    %v3180 = vshrl.u32 %v3027, 16
    %v3182 = vrot.slane %v3180, 4
    %v3183 = vshll.u32 %v3027, 16
    %v3185 = vrot.slane %v3183, 5
    %v3186 = vor.u32 %v3182, %v3185
    %v3187 = vrot.slane %v3186, 4
    %v3189 = vshll.u32 %v3028, 16
    %v3191 = vrot.slane %v3189, 5
    %v3192 = vsel %vm865, %v3187, %v3191
    %v3194 = vshrl.u32 %v3029, 16
    %v3196 = vrot.slane %v3194, 4
    %v3197 = vshll.u32 %v3029, 16
    %v3199 = vrot.slane %v3197, 5
    %v3200 = vor.u32 %v3196, %v3199
    %v3201 = vrot.slane %v3200, 4
    %v3203 = vshll.u32 %v3030, 16
    %v3205 = vrot.slane %v3203, 5
    %v3206 = vsel %vm865, %v3201, %v3205
    %v3208 = vshrl.u32 %v3031, 16
    %v3210 = vrot.slane %v3208, 4
    %v3211 = vshll.u32 %v3031, 16
    %v3213 = vrot.slane %v3211, 5
    %v3214 = vor.u32 %v3210, %v3213
    %v3215 = vrot.slane %v3214, 4
    %v3217 = vshll.u32 %v3032, 16
    %v3219 = vrot.slane %v3217, 5
    %v3220 = vsel %vm865, %v3215, %v3219
    %v3222 = vshrl.u32 %v3033, 16
    %v3224 = vrot.slane %v3222, 4
    %v3225 = vshll.u32 %v3033, 16
    %v3227 = vrot.slane %v3225, 5
    %v3228 = vor.u32 %v3224, %v3227
    %v3229 = vrot.slane %v3228, 4
    %v3231 = vshll.u32 %v3034, 16
    %v3233 = vrot.slane %v3231, 5
    %v3234 = vsel %vm865, %v3229, %v3233
    %v3236 = vshrl.u32 %v3035, 16
    %v3238 = vrot.slane %v3236, 4
    %v3239 = vshll.u32 %v3035, 16
    %v3241 = vrot.slane %v3239, 5
    %v3242 = vor.u32 %v3238, %v3241
    %v3243 = vrot.slane %v3242, 4
    %v3245 = vshll.u32 %v3036, 16
    %v3247 = vrot.slane %v3245, 5
    %v3248 = vsel %vm865, %v3243, %v3247
    %v3250 = vshrl.u32 %v3037, 16
    %v3252 = vrot.slane %v3250, 4
    %v3253 = vshll.u32 %v3037, 16
    %v3255 = vrot.slane %v3253, 5
    %v3256 = vor.u32 %v3252, %v3255
    %v3257 = vrot.slane %v3256, 4
    %v3259 = vshll.u32 %v3038, 16
    %v3261 = vrot.slane %v3259, 5
    %v3262 = vsel %vm865, %v3257, %v3261
    %s3263 = scalar_lea.vmem %s3, 14
    %v3264 = vld [vmem:[%s3263] sm:$0x3]
    %v3265 = vunpack.c.l.b16 %v3052
    %v3266 = vunpack.c.l.b16 %v3066
    %v3267 = vunpack.c.l.b16 %v3080
    %v3268 = vunpack.c.l.b16 %v3094
    %v3269 = vunpack.c.l.b16 %v3108
    %v3270 = vunpack.c.l.b16 %v3122
    %v3271 = vunpack.c.l.b16 %v3136
    %v3272 = vunpack.c.l.b16 %v3150
    %v3273 = vunpack.c.l.b16 %v3164
    %v3274 = vunpack.c.l.b16 %v3178
    %v3275 = vunpack.c.l.b16 %v3192
    %v3276 = vunpack.c.l.b16 %v3206
    %v3277 = vunpack.c.l.b16 %v3220
    %v3278 = vunpack.c.l.b16 %v3234
    %v3279 = vunpack.c.l.b16 %v3248
    %v3280 = vunpack.c.l.b16 %v3262
    %v3281 = vpack.c.b16 %v3266, %v3265
    %v3282 = vpack.c.b16 %v3268, %v3267
    %v3283 = vpack.c.b16 %v3270, %v3269
    %v3284 = vpack.c.b16 %v3272, %v3271
    %v3285 = vpack.c.b16 %v3274, %v3273
    %v3286 = vpack.c.b16 %v3276, %v3275
    %v3287 = vpack.c.b16 %v3278, %v3277
    %v3288 = vpack.c.b16 %v3280, %v3279
    %v3290 = vsel %vm167, %v3281, 0
    %v3293 = vsel %vm167, %v3282, 0
    %v3296 = vsel %vm167, %v3283, 0
    %v3299 = vsel %vm167, %v3284, 0
    %v3302 = vsel %vm167, %v3285, 0
    %v3305 = vsel %vm167, %v3286, 0
    %v3308 = vsel %vm167, %v3287, 0
    %v3311 = vsel %vm167, %v3288, 0
    %v3314 = vsel %vm1140, %v3264, 0
    %3316 = vmatprep.subr.bf16.mxu0 0
    %3317 = vmatpush1.bf16.msra.mxu0 %v3314
    %3318 = vmatprep.subr.bf16.mxu0 0
    %3319 = vmatpush1.bf16.msra.mxu0 0
    %3320 = vmatprep.subr.bf16.mxu0 0
    %3321 = vmatpush1.bf16.msra.mxu0 0
    %3322 = vmatprep.subr.bf16.mxu0 0
    %3323 = vmatpush1.bf16.msra.mxu0 0
    %3324 = vmatprep.subr.bf16.mxu0 0
    %3325 = vmatpush1.bf16.msra.mxu0 0
    %3326 = vmatprep.subr.bf16.mxu0 0
    %3327 = vmatpush1.bf16.msra.mxu0 0
    %3328 = vmatprep.subr.bf16.mxu0 0
    %3329 = vmatpush1.bf16.msra.mxu0 0
    %3330 = vmatprep.subr.bf16.mxu0 0
    %3331 = vmatpush1.bf16.msra.mxu0 0
    %3332 = vmatprep.subr.bf16.mxu0 0
    %3333 = vmatpush1.bf16.msra.mxu0 0
    %3334 = vmatprep.subr.bf16.mxu0 0
    %3335 = vmatpush1.bf16.msra.mxu0 0
    %3336 = vmatprep.subr.bf16.mxu0 0
    %3337 = vmatpush1.bf16.msra.mxu0 0
    %3338 = vmatprep.subr.bf16.mxu0 0
    %3339 = vmatpush1.bf16.msra.mxu0 0
    %3340 = vmatprep.subr.bf16.mxu0 0
    %3341 = vmatpush1.bf16.msra.mxu0 0
    %3342 = vmatprep.subr.bf16.mxu0 0
    %3343 = vmatpush1.bf16.msra.mxu0 0
    %3344 = vmatprep.subr.bf16.mxu0 0
    %3345 = vmatpush1.bf16.msra.mxu0 0
    %3346 = vmatprep.subr.bf16.mxu0 0
    %3347 = vmatpush1.bf16.msra.mxu0 0
    %3348 = vmatprep.mubr.bf16.mxu0 0
    %3349 = vmatmul.mubr.bf16.gmra.mrb[0].mxu0 %v3290
    %v3350 = vpop.f32.mrb[0].mxu0
    %v3351 = vadd.f32 0.0, %v3350
    %v3352 = vpop.f32.mrb[0].mxu0
    %v3353 = vpop.f32.mrb[0].mxu0
    %v3354 = vadd.f32 0.0, %v3353
    %v3355 = vpop.f32.mrb[0].mxu0
    %3356 = vmatprep.mubr.bf16.mxu0 0
    %3357 = vmatmul.mubr.bf16.gmra.mrb[0].mxu0 %v3293
    %v3358 = vpop.f32.mrb[0].mxu0
    %v3359 = vadd.f32 0.0, %v3358
    %v3360 = vpop.f32.mrb[0].mxu0
    %v3361 = vpop.f32.mrb[0].mxu0
    %v3362 = vadd.f32 0.0, %v3361
    %v3363 = vpop.f32.mrb[0].mxu0
    %3364 = vmatprep.mubr.bf16.mxu0 0
    %3365 = vmatmul.mubr.bf16.gmra.mrb[0].mxu0 %v3296
    %v3366 = vpop.f32.mrb[0].mxu0
    %v3367 = vadd.f32 0.0, %v3366
    %v3368 = vpop.f32.mrb[0].mxu0
    %v3369 = vpop.f32.mrb[0].mxu0
    %v3370 = vadd.f32 0.0, %v3369
    %v3371 = vpop.f32.mrb[0].mxu0
    %3372 = vmatprep.mubr.bf16.mxu0 0
    %3373 = vmatmul.mubr.bf16.gmra.mrb[0].mxu0 %v3299
    %v3374 = vpop.f32.mrb[0].mxu0
    %v3375 = vadd.f32 0.0, %v3374
    %v3376 = vpop.f32.mrb[0].mxu0
    %v3377 = vpop.f32.mrb[0].mxu0
    %v3378 = vadd.f32 0.0, %v3377
    %v3379 = vpop.f32.mrb[0].mxu0
    %3380 = vmatprep.mubr.bf16.mxu0 0
    %3381 = vmatmul.mubr.bf16.gmra.mrb[0].mxu0 %v3302
    %v3382 = vpop.f32.mrb[0].mxu0
    %v3383 = vadd.f32 0.0, %v3382
    %v3384 = vpop.f32.mrb[0].mxu0
    %v3385 = vpop.f32.mrb[0].mxu0
    %v3386 = vadd.f32 0.0, %v3385
    %v3387 = vpop.f32.mrb[0].mxu0
    %3388 = vmatprep.mubr.bf16.mxu0 0
    %3389 = vmatmul.mubr.bf16.gmra.mrb[0].mxu0 %v3305
    %v3390 = vpop.f32.mrb[0].mxu0
    %v3391 = vadd.f32 0.0, %v3390
    %v3392 = vpop.f32.mrb[0].mxu0
    %v3393 = vpop.f32.mrb[0].mxu0
    %v3394 = vadd.f32 0.0, %v3393
    %v3395 = vpop.f32.mrb[0].mxu0
    %3396 = vmatprep.mubr.bf16.mxu0 0
    %3397 = vmatmul.mubr.bf16.gmra.mrb[0].mxu0 %v3308
    %v3398 = vpop.f32.mrb[0].mxu0
    %v3399 = vadd.f32 0.0, %v3398
    %v3400 = vpop.f32.mrb[0].mxu0
    %v3401 = vpop.f32.mrb[0].mxu0
    %v3402 = vadd.f32 0.0, %v3401
    %v3403 = vpop.f32.mrb[0].mxu0
    %3404 = vmatprep.mubr.bf16.mxu0 0
    %3405 = vmatmul.mubr.bf16.gmra.mrb[0].mxu0 %v3311
    %v3406 = vpop.f32.mrb[0].mxu0
    %v3407 = vadd.f32 0.0, %v3406
    %v3408 = vpop.f32.mrb[0].mxu0
    %v3409 = vpop.f32.mrb[0].mxu0
    %v3410 = vadd.f32 0.0, %v3409
    %v3411 = vpop.f32.mrb[0].mxu0
    %3412 = vdwg.mxu0
    %v3413 = vadd.f32 %v2927, %v3351
    %v3414 = vadd.f32 %v2928, %v3354
    %v3415 = vadd.f32 %v2929, %v3359
    %v3416 = vadd.f32 %v2930, %v3362
    %v3417 = vadd.f32 %v2931, %v3367
    %v3418 = vadd.f32 %v2932, %v3370
    %v3419 = vadd.f32 %v2933, %v3375
    %v3420 = vadd.f32 %v2934, %v3378
    %v3421 = vadd.f32 %v2935, %v3383
    %v3422 = vadd.f32 %v2936, %v3386
    %v3423 = vadd.f32 %v2937, %v3391
    %v3424 = vadd.f32 %v2938, %v3394
    %v3425 = vadd.f32 %v2939, %v3399
    %v3426 = vadd.f32 %v2940, %v3402
    %v3427 = vadd.f32 %v2941, %v3407
    %v3428 = vadd.f32 %v2942, %v3410
    %v3429 = vld [vmem:[%s2744] sm:$0x1e]
    %v3430 = vld [vmem:[%s2744 + $0x8] sm:$0x1e]
    %v3431 = vld [vmem:[%s2744 + $0x10] sm:$0x1e]
    %v3432 = vld [vmem:[%s2744 + $0x18] sm:$0x1e]
    %v3433 = vld [vmem:[%s2744 + $0x20] sm:$0x1e]
    %v3434 = vld [vmem:[%s2744 + $0x28] sm:$0x1e]
    %v3435 = vld [vmem:[%s2744 + $0x30] sm:$0x1e]
    %v3436 = vld [vmem:[%s2744 + $0x38] sm:$0x1e]
    %v3437 = vld [vmem:[%s2744 + $0x50] sm:$0x1e]
    %v3438 = vld [vmem:[%s2744 + $0x58] sm:$0x1e]
    %v3439 = vld [vmem:[%s2744 + $0x60] sm:$0x1e]
    %v3440 = vld [vmem:[%s2744 + $0x68] sm:$0x1e]
    %v3441 = vld [vmem:[%s2744 + $0x70] sm:$0x1e]
    %v3442 = vld [vmem:[%s2744 + $0x78] sm:$0x1e]
    %v3443 = vld [vmem:[%s2744 + $0x80] sm:$0x1e]
    %v3444 = vld [vmem:[%s2744 + $0x88] sm:$0x1e]
    %v3461 = vunpack.c.l.b16 %v3429
    %v3462 = vunpack.c.h.b16 %v3429
    %v3463 = vunpack.c.l.b16 %v3430
    %v3464 = vunpack.c.h.b16 %v3430
    %v3465 = vunpack.c.l.b16 %v3431
    %v3466 = vunpack.c.h.b16 %v3431
    %v3467 = vunpack.c.l.b16 %v3432
    %v3468 = vunpack.c.h.b16 %v3432
    %v3469 = vunpack.c.l.b16 %v3433
    %v3470 = vunpack.c.h.b16 %v3433
    %v3471 = vunpack.c.l.b16 %v3434
    %v3472 = vunpack.c.h.b16 %v3434
    %v3473 = vunpack.c.l.b16 %v3435
    %v3474 = vunpack.c.h.b16 %v3435
    %v3475 = vunpack.c.l.b16 %v3436
    %v3476 = vunpack.c.h.b16 %v3436
    %v3477 = vunpack.c.l.b16 %v3437
    %v3478 = vunpack.c.h.b16 %v3437
    %v3479 = vunpack.c.l.b16 %v3438
    %v3480 = vunpack.c.h.b16 %v3438
    %v3481 = vunpack.c.l.b16 %v3439
    %v3482 = vunpack.c.h.b16 %v3439
    %v3483 = vunpack.c.l.b16 %v3440
    %v3484 = vunpack.c.h.b16 %v3440
    %v3485 = vunpack.c.l.b16 %v3441
    %v3486 = vunpack.c.h.b16 %v3441
    %v3487 = vunpack.c.l.b16 %v3442
    %v3488 = vunpack.c.h.b16 %v3442
    %v3489 = vunpack.c.l.b16 %v3443
    %v3490 = vunpack.c.h.b16 %v3443
    %v3491 = vunpack.c.l.b16 %v3444
    %v3492 = vunpack.c.h.b16 %v3444
    %v3493 = vpack.c.b16 %v3461, %v3461
    %v3494 = vpack.c.b16 %v3462, %v3462
    %v3495 = vpack.c.b16 %v3463, %v3463
    %v3496 = vpack.c.b16 %v3464, %v3464
    %v3497 = vpack.c.b16 %v3465, %v3465
    %v3498 = vpack.c.b16 %v3466, %v3466
    %v3499 = vpack.c.b16 %v3467, %v3467
    %v3500 = vpack.c.b16 %v3468, %v3468
    %v3501 = vpack.c.b16 %v3469, %v3469
    %v3502 = vpack.c.b16 %v3470, %v3470
    %v3503 = vpack.c.b16 %v3471, %v3471
    %v3504 = vpack.c.b16 %v3472, %v3472
    %v3505 = vpack.c.b16 %v3473, %v3473
    %v3506 = vpack.c.b16 %v3474, %v3474
    %v3507 = vpack.c.b16 %v3475, %v3475
    %v3508 = vpack.c.b16 %v3476, %v3476
    %v3509 = vpack.c.b16 %v3477, %v3477
    %v3510 = vpack.c.b16 %v3478, %v3478
    %v3511 = vpack.c.b16 %v3479, %v3479
    %v3512 = vpack.c.b16 %v3480, %v3480
    %v3513 = vpack.c.b16 %v3481, %v3481
    %v3514 = vpack.c.b16 %v3482, %v3482
    %v3515 = vpack.c.b16 %v3483, %v3483
    %v3516 = vpack.c.b16 %v3484, %v3484
    %v3517 = vpack.c.b16 %v3485, %v3485
    %v3518 = vpack.c.b16 %v3486, %v3486
    %v3519 = vpack.c.b16 %v3487, %v3487
    %v3520 = vpack.c.b16 %v3488, %v3488
    %v3521 = vpack.c.b16 %v3489, %v3489
    %v3522 = vpack.c.b16 %v3490, %v3490
    %v3523 = vpack.c.b16 %v3491, %v3491
    %v3524 = vpack.c.b16 %v3492, %v3492
    %v3525 = vrot.slane %v3493, 5
    %v3526 = vrot.slane %v3525, 4
    %v3527 = vrot.slane %v3494, 5
    %v3528 = vsel %vm1503, %v3526, %v3527
    %v3529 = vrot.slane %v3495, 5
    %v3530 = vrot.slane %v3529, 4
    %v3531 = vrot.slane %v3496, 5
    %v3532 = vsel %vm1503, %v3530, %v3531
    %v3533 = vrot.slane %v3497, 5
    %v3534 = vrot.slane %v3533, 4
    %v3535 = vrot.slane %v3498, 5
    %v3536 = vsel %vm1503, %v3534, %v3535
    %v3537 = vrot.slane %v3499, 5
    %v3538 = vrot.slane %v3537, 4
    %v3539 = vrot.slane %v3500, 5
    %v3540 = vsel %vm1503, %v3538, %v3539
    %v3541 = vrot.slane %v3501, 5
    %v3542 = vrot.slane %v3541, 4
    %v3543 = vrot.slane %v3502, 5
    %v3544 = vsel %vm1503, %v3542, %v3543
    %v3545 = vrot.slane %v3503, 5
    %v3546 = vrot.slane %v3545, 4
    %v3547 = vrot.slane %v3504, 5
    %v3548 = vsel %vm1503, %v3546, %v3547
    %v3549 = vrot.slane %v3505, 5
    %v3550 = vrot.slane %v3549, 4
    %v3551 = vrot.slane %v3506, 5
    %v3552 = vsel %vm1503, %v3550, %v3551
    %v3553 = vrot.slane %v3507, 5
    %v3554 = vrot.slane %v3553, 4
    %v3555 = vrot.slane %v3508, 5
    %v3556 = vsel %vm1503, %v3554, %v3555
    %v3557 = vrot.slane %v3509, 5
    %v3558 = vrot.slane %v3557, 4
    %v3559 = vrot.slane %v3510, 5
    %v3560 = vsel %vm1503, %v3558, %v3559
    %v3561 = vrot.slane %v3511, 5
    %v3562 = vrot.slane %v3561, 4
    %v3563 = vrot.slane %v3512, 5
    %v3564 = vsel %vm1503, %v3562, %v3563
    %v3565 = vrot.slane %v3513, 5
    %v3566 = vrot.slane %v3565, 4
    %v3567 = vrot.slane %v3514, 5
    %v3568 = vsel %vm1503, %v3566, %v3567
    %v3569 = vrot.slane %v3515, 5
    %v3570 = vrot.slane %v3569, 4
    %v3571 = vrot.slane %v3516, 5
    %v3572 = vsel %vm1503, %v3570, %v3571
    %v3573 = vrot.slane %v3517, 5
    %v3574 = vrot.slane %v3573, 4
    %v3575 = vrot.slane %v3518, 5
    %v3576 = vsel %vm1503, %v3574, %v3575
    %v3577 = vrot.slane %v3519, 5
    %v3578 = vrot.slane %v3577, 4
    %v3579 = vrot.slane %v3520, 5
    %v3580 = vsel %vm1503, %v3578, %v3579
    %v3581 = vrot.slane %v3521, 5
    %v3582 = vrot.slane %v3581, 4
    %v3583 = vrot.slane %v3522, 5
    %v3584 = vsel %vm1503, %v3582, %v3583
    %v3585 = vrot.slane %v3523, 5
    %v3586 = vrot.slane %v3585, 4
    %v3587 = vrot.slane %v3524, 5
    %v3588 = vsel %vm1503, %v3586, %v3587
    %s3589 = scalar_lea.vmem %s3, 16
    %v3590 = vld [vmem:[%s3589] sm:$0x3]
    %v3591 = vunpack.c.l.b16 %v3528
    %v3592 = vunpack.c.l.b16 %v3532
    %v3593 = vunpack.c.l.b16 %v3536
    %v3594 = vunpack.c.l.b16 %v3540
    %v3595 = vunpack.c.l.b16 %v3544
    %v3596 = vunpack.c.l.b16 %v3548
    %v3597 = vunpack.c.l.b16 %v3552
    %v3598 = vunpack.c.l.b16 %v3556
    %v3599 = vunpack.c.l.b16 %v3560
    %v3600 = vunpack.c.l.b16 %v3564
    %v3601 = vunpack.c.l.b16 %v3568
    %v3602 = vunpack.c.l.b16 %v3572
    %v3603 = vunpack.c.l.b16 %v3576
    %v3604 = vunpack.c.l.b16 %v3580
    %v3605 = vunpack.c.l.b16 %v3584
    %v3606 = vunpack.c.l.b16 %v3588
    %v3607 = vpack.c.b16 %v3592, %v3591
    %v3608 = vpack.c.b16 %v3594, %v3593
    %v3609 = vpack.c.b16 %v3596, %v3595
    %v3610 = vpack.c.b16 %v3598, %v3597
    %v3611 = vpack.c.b16 %v3600, %v3599
    %v3612 = vpack.c.b16 %v3602, %v3601
    %v3613 = vpack.c.b16 %v3604, %v3603
    %v3614 = vpack.c.b16 %v3606, %v3605
    %v3616 = vsel %vm167, %v3607, 0
    %v3619 = vsel %vm167, %v3608, 0
    %v3622 = vsel %vm167, %v3609, 0
    %v3625 = vsel %vm167, %v3610, 0
    %v3628 = vsel %vm167, %v3611, 0
    %v3631 = vsel %vm167, %v3612, 0
    %v3634 = vsel %vm167, %v3613, 0
    %v3637 = vsel %vm167, %v3614, 0
    %v3640 = vsel %vm1140, %v3590, 0
    %3642 = vmatprep.subr.bf16.mxu0 0
    %3643 = vmatpush1.bf16.msra.mxu0 %v3640
    %3644 = vmatprep.subr.bf16.mxu0 0
    %3645 = vmatpush1.bf16.msra.mxu0 0
    %3646 = vmatprep.subr.bf16.mxu0 0
    %3647 = vmatpush1.bf16.msra.mxu0 0
    %3648 = vmatprep.subr.bf16.mxu0 0
    %3649 = vmatpush1.bf16.msra.mxu0 0
    %3650 = vmatprep.subr.bf16.mxu0 0
    %3651 = vmatpush1.bf16.msra.mxu0 0
    %3652 = vmatprep.subr.bf16.mxu0 0
    %3653 = vmatpush1.bf16.msra.mxu0 0
    %3654 = vmatprep.subr.bf16.mxu0 0
    %3655 = vmatpush1.bf16.msra.mxu0 0
    %3656 = vmatprep.subr.bf16.mxu0 0
    %3657 = vmatpush1.bf16.msra.mxu0 0
    %3658 = vmatprep.subr.bf16.mxu0 0
    %3659 = vmatpush1.bf16.msra.mxu0 0
    %3660 = vmatprep.subr.bf16.mxu0 0
    %3661 = vmatpush1.bf16.msra.mxu0 0
    %3662 = vmatprep.subr.bf16.mxu0 0
    %3663 = vmatpush1.bf16.msra.mxu0 0
    %3664 = vmatprep.subr.bf16.mxu0 0
    %3665 = vmatpush1.bf16.msra.mxu0 0
    %3666 = vmatprep.subr.bf16.mxu0 0
    %3667 = vmatpush1.bf16.msra.mxu0 0
    %3668 = vmatprep.subr.bf16.mxu0 0
    %3669 = vmatpush1.bf16.msra.mxu0 0
    %3670 = vmatprep.subr.bf16.mxu0 0
    %3671 = vmatpush1.bf16.msra.mxu0 0
    %3672 = vmatprep.subr.bf16.mxu0 0
    %3673 = vmatpush1.bf16.msra.mxu0 0
    %3674 = vmatprep.mubr.bf16.mxu0 0
    %3675 = vmatmul.mubr.bf16.gmra.mrb[0].mxu0 %v3616
    %v3676 = vpop.f32.mrb[0].mxu0
    %v3677 = vadd.f32 0.0, %v3676
    %v3678 = vpop.f32.mrb[0].mxu0
    %v3679 = vpop.f32.mrb[0].mxu0
    %v3680 = vadd.f32 0.0, %v3679
    %v3681 = vpop.f32.mrb[0].mxu0
    %3682 = vmatprep.mubr.bf16.mxu0 0
    %3683 = vmatmul.mubr.bf16.gmra.mrb[0].mxu0 %v3619
    %v3684 = vpop.f32.mrb[0].mxu0
    %v3685 = vadd.f32 0.0, %v3684
    %v3686 = vpop.f32.mrb[0].mxu0
    %v3687 = vpop.f32.mrb[0].mxu0
    %v3688 = vadd.f32 0.0, %v3687
    %v3689 = vpop.f32.mrb[0].mxu0
    %3690 = vmatprep.mubr.bf16.mxu0 0
    %3691 = vmatmul.mubr.bf16.gmra.mrb[0].mxu0 %v3622
    %v3692 = vpop.f32.mrb[0].mxu0
    %v3693 = vadd.f32 0.0, %v3692
    %v3694 = vpop.f32.mrb[0].mxu0
    %v3695 = vpop.f32.mrb[0].mxu0
    %v3696 = vadd.f32 0.0, %v3695
    %v3697 = vpop.f32.mrb[0].mxu0
    %3698 = vmatprep.mubr.bf16.mxu0 0
    %3699 = vmatmul.mubr.bf16.gmra.mrb[0].mxu0 %v3625
    %v3700 = vpop.f32.mrb[0].mxu0
    %v3701 = vadd.f32 0.0, %v3700
    %v3702 = vpop.f32.mrb[0].mxu0
    %v3703 = vpop.f32.mrb[0].mxu0
    %v3704 = vadd.f32 0.0, %v3703
    %v3705 = vpop.f32.mrb[0].mxu0
    %3706 = vmatprep.mubr.bf16.mxu0 0
    %3707 = vmatmul.mubr.bf16.gmra.mrb[0].mxu0 %v3628
    %v3708 = vpop.f32.mrb[0].mxu0
    %v3709 = vadd.f32 0.0, %v3708
    %v3710 = vpop.f32.mrb[0].mxu0
    %v3711 = vpop.f32.mrb[0].mxu0
    %v3712 = vadd.f32 0.0, %v3711
    %v3713 = vpop.f32.mrb[0].mxu0
    %3714 = vmatprep.mubr.bf16.mxu0 0
    %3715 = vmatmul.mubr.bf16.gmra.mrb[0].mxu0 %v3631
    %v3716 = vpop.f32.mrb[0].mxu0
    %v3717 = vadd.f32 0.0, %v3716
    %v3718 = vpop.f32.mrb[0].mxu0
    %v3719 = vpop.f32.mrb[0].mxu0
    %v3720 = vadd.f32 0.0, %v3719
    %v3721 = vpop.f32.mrb[0].mxu0
    %3722 = vmatprep.mubr.bf16.mxu0 0
    %3723 = vmatmul.mubr.bf16.gmra.mrb[0].mxu0 %v3634
    %v3724 = vpop.f32.mrb[0].mxu0
    %v3725 = vadd.f32 0.0, %v3724
    %v3726 = vpop.f32.mrb[0].mxu0
    %v3727 = vpop.f32.mrb[0].mxu0
    %v3728 = vadd.f32 0.0, %v3727
    %v3729 = vpop.f32.mrb[0].mxu0
    %3730 = vmatprep.mubr.bf16.mxu0 0
    %3731 = vmatmul.mubr.bf16.gmra.mrb[0].mxu0 %v3637
    %v3732 = vpop.f32.mrb[0].mxu0
    %v3733 = vadd.f32 0.0, %v3732
    %v3734 = vpop.f32.mrb[0].mxu0
    %v3735 = vpop.f32.mrb[0].mxu0
    %v3736 = vadd.f32 0.0, %v3735
    %v3737 = vpop.f32.mrb[0].mxu0
    %3738 = vdwg.mxu0
    %v3739 = vadd.f32 %v3413, %v3677
    %v3740 = vadd.f32 %v3414, %v3680
    %v3741 = vadd.f32 %v3415, %v3685
    %v3742 = vadd.f32 %v3416, %v3688
    %v3743 = vadd.f32 %v3417, %v3693
    %v3744 = vadd.f32 %v3418, %v3696
    %v3745 = vadd.f32 %v3419, %v3701
    %v3746 = vadd.f32 %v3420, %v3704
    %v3747 = vadd.f32 %v3421, %v3709
    %v3748 = vadd.f32 %v3422, %v3712
    %v3749 = vadd.f32 %v3423, %v3717
    %v3750 = vadd.f32 %v3424, %v3720
    %v3751 = vadd.f32 %v3425, %v3725
    %v3752 = vadd.f32 %v3426, %v3728
    %v3753 = vadd.f32 %v3427, %v3733
    %v3754 = vadd.f32 %v3428, %v3736
    %v3756 = vlaneseq
    %v3757 = vshrl.u32 %v3756, 7
    %v3758 = vsub.s32 0, %v3757
    %v3759 = vrot.slane %v749, %v3758
    %v3761 = vadd.f32 %v3739, %v3759
    %v3762 = vadd.f32 %v3740, %v3759
    %v3763 = vadd.f32 %v3741, %v3759
    %v3764 = vadd.f32 %v3742, %v3759
    %v3765 = vadd.f32 %v3743, %v3759
    %v3766 = vadd.f32 %v3744, %v3759
    %v3767 = vadd.f32 %v3745, %v3759
    %v3768 = vadd.f32 %v3746, %v3759
    %v3769 = vadd.f32 %v3747, %v3759
    %v3770 = vadd.f32 %v3748, %v3759
    %v3771 = vadd.f32 %v3749, %v3759
    %v3772 = vadd.f32 %v3750, %v3759
    %v3773 = vadd.f32 %v3751, %v3759
    %v3774 = vadd.f32 %v3752, %v3759
    %v3775 = vadd.f32 %v3753, %v3759
    %v3776 = vadd.f32 %v3754, %v3759
    %vm3777 = vcmask 64512
    %3778 = vst.msk [vmem:[#allocation2] sm:$0xff] %vm3777, %v3761
    %3779 = vst.msk [vmem:[#allocation2 + $0x8] sm:$0xff] %vm3777, %v3762
    %3780 = vst.msk [vmem:[#allocation2 + $0x10] sm:$0xff] %vm3777, %v3763
    %3781 = vst.msk [vmem:[#allocation2 + $0x18] sm:$0xff] %vm3777, %v3764
    %3782 = vst.msk [vmem:[#allocation2 + $0x20] sm:$0xff] %vm3777, %v3765
    %3783 = vst.msk [vmem:[#allocation2 + $0x28] sm:$0xff] %vm3777, %v3766
    %3784 = vst.msk [vmem:[#allocation2 + $0x30] sm:$0xff] %vm3777, %v3767
    %3785 = vst.msk [vmem:[#allocation2 + $0x38] sm:$0xff] %vm3777, %v3768
    %3786 = vst.msk [vmem:[#allocation2 + $0x40] sm:$0xff] %vm3777, %v3769
    %3787 = vst.msk [vmem:[#allocation2 + $0x48] sm:$0xff] %vm3777, %v3770
    %3788 = vst.msk [vmem:[#allocation2 + $0x50] sm:$0xff] %vm3777, %v3771
    %3789 = vst.msk [vmem:[#allocation2 + $0x58] sm:$0xff] %vm3777, %v3772
    %3790 = vst.msk [vmem:[#allocation2 + $0x60] sm:$0xff] %vm3777, %v3773
    %3791 = vst.msk [vmem:[#allocation2 + $0x68] sm:$0xff] %vm3777, %v3774
    %3792 = vst.msk [vmem:[#allocation2 + $0x70] sm:$0xff] %vm3777, %v3775
    %3793 = vst.msk [vmem:[#allocation2 + $0x78] sm:$0xff] %vm3777, %v3776
  %v3794 = vld [vmem:[#allocation2] sm:$0xff]
  %v3795 = vld [vmem:[#allocation2 + $0x8] sm:$0xff]
  %v3796 = vld [vmem:[#allocation2 + $0x10] sm:$0xff]
  %v3797 = vld [vmem:[#allocation2 + $0x18] sm:$0xff]
  %v3798 = vld [vmem:[#allocation2 + $0x20] sm:$0xff]
  %v3799 = vld [vmem:[#allocation2 + $0x28] sm:$0xff]
  %v3800 = vld [vmem:[#allocation2 + $0x30] sm:$0xff]
  %v3801 = vld [vmem:[#allocation2 + $0x38] sm:$0xff]
  %v3802 = vld [vmem:[#allocation2 + $0x40] sm:$0xff]
  %v3803 = vld [vmem:[#allocation2 + $0x48] sm:$0xff]
  %v3804 = vld [vmem:[#allocation2 + $0x50] sm:$0xff]
  %v3805 = vld [vmem:[#allocation2 + $0x58] sm:$0xff]
  %v3806 = vld [vmem:[#allocation2 + $0x60] sm:$0xff]
  %v3807 = vld [vmem:[#allocation2 + $0x68] sm:$0xff]
  %v3808 = vld [vmem:[#allocation2 + $0x70] sm:$0xff]
  %v3809 = vld [vmem:[#allocation2 + $0x78] sm:$0xff]
  %vm3810 = vcmask 64512
  %v3811 = vsel %vm3810, %v3794, 0.0
  %v3812 = vsel %vm3810, %v3795, 0.0
  %v3813 = vadd.f32 %v3811, %v3812
  %v3814 = vsel %vm3810, %v3796, 0.0
  %v3815 = vadd.f32 %v3813, %v3814
  %v3816 = vsel %vm3810, %v3797, 0.0
  %v3817 = vadd.f32 %v3815, %v3816
  %v3818 = vsel %vm3810, %v3798, 0.0
  %v3819 = vadd.f32 %v3817, %v3818
  %v3820 = vsel %vm3810, %v3799, 0.0
  %v3821 = vadd.f32 %v3819, %v3820
  %v3822 = vsel %vm3810, %v3800, 0.0
  %v3823 = vadd.f32 %v3821, %v3822
  %v3824 = vsel %vm3810, %v3801, 0.0
  %v3825 = vadd.f32 %v3823, %v3824
  %v3826 = vsel %vm3810, %v3802, 0.0
  %v3827 = vadd.f32 %v3825, %v3826
  %v3828 = vsel %vm3810, %v3803, 0.0
  %v3829 = vadd.f32 %v3827, %v3828
  %v3830 = vsel %vm3810, %v3804, 0.0
  %v3831 = vadd.f32 %v3829, %v3830
  %v3832 = vsel %vm3810, %v3805, 0.0
  %v3833 = vadd.f32 %v3831, %v3832
  %v3834 = vsel %vm3810, %v3806, 0.0
  %v3835 = vadd.f32 %v3833, %v3834
  %v3836 = vsel %vm3810, %v3807, 0.0
  %v3837 = vadd.f32 %v3835, %v3836
  %v3838 = vsel %vm3810, %v3808, 0.0
  %v3839 = vadd.f32 %v3837, %v3838
  %v3840 = vsel %vm3810, %v3809, 0.0
  %v3841 = vadd.f32 %v3839, %v3840
  %v3842 = vrot.slane %v3841, 4
  %v3843 = vadd.f32 %v3841, %v3842
  %v3844 = vrot.slane %v3843, 2
  %v3845 = vadd.f32 %v3843, %v3844
  %v3846 = vrot.slane %v3845, 1
  %v3847 = vadd.f32 %v3845, %v3846
  %v3848 = vmul.f32 %v3847, 0.0078125
  %v3849 = vmul.f32 %v3794, %v3794
  %v3850 = vmul.f32 %v3795, %v3795
  %v3851 = vmul.f32 %v3796, %v3796
  %v3852 = vmul.f32 %v3797, %v3797
  %v3853 = vmul.f32 %v3798, %v3798
  %v3854 = vmul.f32 %v3799, %v3799
  %v3855 = vmul.f32 %v3800, %v3800
  %v3856 = vmul.f32 %v3801, %v3801
  %v3857 = vmul.f32 %v3802, %v3802
  %v3858 = vmul.f32 %v3803, %v3803
  %v3859 = vmul.f32 %v3804, %v3804
  %v3860 = vmul.f32 %v3805, %v3805
  %v3861 = vmul.f32 %v3806, %v3806
  %v3862 = vmul.f32 %v3807, %v3807
  %v3863 = vmul.f32 %v3808, %v3808
  %v3864 = vmul.f32 %v3809, %v3809
  %v3865 = vsel %vm3810, %v3849, 0.0
  %v3866 = vsel %vm3810, %v3850, 0.0
  %v3867 = vadd.f32 %v3865, %v3866
  %v3868 = vsel %vm3810, %v3851, 0.0
  %v3869 = vadd.f32 %v3867, %v3868
  %v3870 = vsel %vm3810, %v3852, 0.0
  %v3871 = vadd.f32 %v3869, %v3870
  %v3872 = vsel %vm3810, %v3853, 0.0
  %v3873 = vadd.f32 %v3871, %v3872
  %v3874 = vsel %vm3810, %v3854, 0.0
  %v3875 = vadd.f32 %v3873, %v3874
  %v3876 = vsel %vm3810, %v3855, 0.0
  %v3877 = vadd.f32 %v3875, %v3876
  %v3878 = vsel %vm3810, %v3856, 0.0
  %v3879 = vadd.f32 %v3877, %v3878
  %v3880 = vsel %vm3810, %v3857, 0.0
  %v3881 = vadd.f32 %v3879, %v3880
  %v3882 = vsel %vm3810, %v3858, 0.0
  %v3883 = vadd.f32 %v3881, %v3882
  %v3884 = vsel %vm3810, %v3859, 0.0
  %v3885 = vadd.f32 %v3883, %v3884
  %v3886 = vsel %vm3810, %v3860, 0.0
  %v3887 = vadd.f32 %v3885, %v3886
  %v3888 = vsel %vm3810, %v3861, 0.0
  %v3889 = vadd.f32 %v3887, %v3888
  %v3890 = vsel %vm3810, %v3862, 0.0
  %v3891 = vadd.f32 %v3889, %v3890
  %v3892 = vsel %vm3810, %v3863, 0.0
  %v3893 = vadd.f32 %v3891, %v3892
  %v3894 = vsel %vm3810, %v3864, 0.0
  %v3895 = vadd.f32 %v3893, %v3894
  %v3896 = vrot.slane %v3895, 4
  %v3897 = vadd.f32 %v3895, %v3896
  %v3898 = vrot.slane %v3897, 2
  %v3899 = vadd.f32 %v3897, %v3898
  %v3900 = vrot.slane %v3899, 1
  %v3901 = vadd.f32 %v3899, %v3900
  %v3902 = vmul.f32 %v3901, 0.0078125
  %v3903 = vmul.f32 %v3848, %v3848
  %v3904 = vsub.f32 %v3902, %v3903
  %v3905 = vsub.f32 %v3794, %v3848
  %v3906 = vsub.f32 %v3795, %v3848
  %v3907 = vsub.f32 %v3796, %v3848
  %v3908 = vsub.f32 %v3797, %v3848
  %v3909 = vsub.f32 %v3798, %v3848
  %v3910 = vsub.f32 %v3799, %v3848
  %v3911 = vsub.f32 %v3800, %v3848
  %v3912 = vsub.f32 %v3801, %v3848
  %v3913 = vsub.f32 %v3802, %v3848
  %v3914 = vsub.f32 %v3803, %v3848
  %v3915 = vsub.f32 %v3804, %v3848
  %v3916 = vsub.f32 %v3805, %v3848
  %v3917 = vsub.f32 %v3806, %v3848
  %v3918 = vsub.f32 %v3807, %v3848
  %v3919 = vsub.f32 %v3808, %v3848
  %v3920 = vsub.f32 %v3809, %v3848
  %v3921 = vadd.f32 %v3904, 1e-05
  %v3922 = vrsqrt.pop %v3921
  %v3923 = vmul.f32 %v3905, %v3922
  %v3924 = vmul.f32 %v3906, %v3922
  %v3925 = vmul.f32 %v3907, %v3922
  %v3926 = vmul.f32 %v3908, %v3922
  %v3927 = vmul.f32 %v3909, %v3922
  %v3928 = vmul.f32 %v3910, %v3922
  %v3929 = vmul.f32 %v3911, %v3922
  %v3930 = vmul.f32 %v3912, %v3922
  %v3931 = vmul.f32 %v3913, %v3922
  %v3932 = vmul.f32 %v3914, %v3922
  %v3933 = vmul.f32 %v3915, %v3922
  %v3934 = vmul.f32 %v3916, %v3922
  %v3935 = vmul.f32 %v3917, %v3922
  %v3936 = vmul.f32 %v3918, %v3922
  %v3937 = vmul.f32 %v3919, %v3922
  %v3938 = vmul.f32 %v3920, %v3922
  %v3939 = vld [vmem:[%s5] sm:$0x1]
  %v3941 = vlaneseq
  %v3942 = vshrl.u32 %v3941, 7
  %v3943 = vsub.s32 0, %v3942
  %v3944 = vrot.slane %v3939, %v3943
  %v3946 = vmul.f32 %v3923, %v3944
  %v3947 = vmul.f32 %v3924, %v3944
  %v3948 = vmul.f32 %v3925, %v3944
  %v3949 = vmul.f32 %v3926, %v3944
  %v3950 = vmul.f32 %v3927, %v3944
  %v3951 = vmul.f32 %v3928, %v3944
  %v3952 = vmul.f32 %v3929, %v3944
  %v3953 = vmul.f32 %v3930, %v3944
  %v3954 = vmul.f32 %v3931, %v3944
  %v3955 = vmul.f32 %v3932, %v3944
  %v3956 = vmul.f32 %v3933, %v3944
  %v3957 = vmul.f32 %v3934, %v3944
  %v3958 = vmul.f32 %v3935, %v3944
  %v3959 = vmul.f32 %v3936, %v3944
  %v3960 = vmul.f32 %v3937, %v3944
  %v3961 = vmul.f32 %v3938, %v3944
  %v3962 = vld [vmem:[%s6] sm:$0x1]
  %v3964 = vlaneseq
  %v3965 = vshrl.u32 %v3964, 7
  %v3966 = vsub.s32 0, %v3965
  %v3967 = vrot.slane %v3962, %v3966
  %v3969 = vadd.f32 %v3946, %v3967
  %v3970 = vadd.f32 %v3947, %v3967
  %v3971 = vadd.f32 %v3948, %v3967
  %v3972 = vadd.f32 %v3949, %v3967
  %v3973 = vadd.f32 %v3950, %v3967
  %v3974 = vadd.f32 %v3951, %v3967
  %v3975 = vadd.f32 %v3952, %v3967
  %v3976 = vadd.f32 %v3953, %v3967
  %v3977 = vadd.f32 %v3954, %v3967
  %v3978 = vadd.f32 %v3955, %v3967
  %v3979 = vadd.f32 %v3956, %v3967
  %v3980 = vadd.f32 %v3957, %v3967
  %v3981 = vadd.f32 %v3958, %v3967
  %v3982 = vadd.f32 %v3959, %v3967
  %v3983 = vadd.f32 %v3960, %v3967
  %v3984 = vadd.f32 %v3961, %v3967
  %v3985 = vmax.f32 %v3969, 0.0
  %v3986 = vmax.f32 %v3970, 0.0
  %v3987 = vmax.f32 %v3971, 0.0
  %v3988 = vmax.f32 %v3972, 0.0
  %v3989 = vmax.f32 %v3973, 0.0
  %v3990 = vmax.f32 %v3974, 0.0
  %v3991 = vmax.f32 %v3975, 0.0
  %v3992 = vmax.f32 %v3976, 0.0
  %v3993 = vmax.f32 %v3977, 0.0
  %v3994 = vmax.f32 %v3978, 0.0
  %v3995 = vmax.f32 %v3979, 0.0
  %v3996 = vmax.f32 %v3980, 0.0
  %v3997 = vmax.f32 %v3981, 0.0
  %v3998 = vmax.f32 %v3982, 0.0
  %v3999 = vmax.f32 %v3983, 0.0
  %v4000 = vmax.f32 %v3984, 0.0
  $region47: #{tpu_custom_call.1} parent=0
    #allocation4 [shape = 'u8[81920]{0}', space=vmem, size = 0x14000, scoped, tag = 'scoped memory for tpu_custom_call.1']
    %vm4001 = vcmask 97280
    %4002 = vst.msk [vmem:[#allocation4] sm:$0xff] %vm4001, 0
    %4003 = vst.msk [vmem:[#allocation4 + $0x50] sm:$0xff] %vm4001, 0
    %s4004 = scalar_lea.vmem [#allocation4], 72
    %4005 = vst.msk [vmem:[%s4004] sm:$0xff] %vm4001, 0
    %4006 = vst.msk [vmem:[%s4004 + $0x50] sm:$0xff] %vm4001, 0
    %vm4007 = vcmask 90112
    %vm4008 = vsmask.f32 256
    %vm4009 = vmand %vm4007, %vm4008
    %v4010 = vld [vmem:[#allocation4] sm:$0x1]
    %v4011 = vsel %vm4009, 0, %v4010
    %4012 = vst [vmem:[#allocation4] sm:$0x1] %v4011
    %v4013 = vld [vmem:[#allocation4 + $0x8] sm:$0x1]
    %v4014 = vsel %vm4009, 0, %v4013
    %4015 = vst [vmem:[#allocation4 + $0x8] sm:$0x1] %v4014
    %v4016 = vld [vmem:[#allocation4 + $0x10] sm:$0x1]
    %v4017 = vsel %vm4009, 0, %v4016
    %4018 = vst [vmem:[#allocation4 + $0x10] sm:$0x1] %v4017
    %v4019 = vld [vmem:[#allocation4 + $0x18] sm:$0x1]
    %v4020 = vsel %vm4009, 0, %v4019
    %4021 = vst [vmem:[#allocation4 + $0x18] sm:$0x1] %v4020
    %v4022 = vld [vmem:[#allocation4 + $0x20] sm:$0x1]
    %v4023 = vsel %vm4009, 0, %v4022
    %4024 = vst [vmem:[#allocation4 + $0x20] sm:$0x1] %v4023
    %v4025 = vld [vmem:[#allocation4 + $0x28] sm:$0x1]
    %v4026 = vsel %vm4009, 0, %v4025
    %4027 = vst [vmem:[#allocation4 + $0x28] sm:$0x1] %v4026
    %v4028 = vld [vmem:[#allocation4 + $0x30] sm:$0x1]
    %v4029 = vsel %vm4009, 0, %v4028
    %4030 = vst [vmem:[#allocation4 + $0x30] sm:$0x1] %v4029
    %v4031 = vld [vmem:[#allocation4 + $0x38] sm:$0x1]
    %v4032 = vsel %vm4009, 0, %v4031
    %4033 = vst [vmem:[#allocation4 + $0x38] sm:$0x1] %v4032
    %v4034 = vld [vmem:[#allocation4 + $0x40] sm:$0x1]
    %v4035 = vsel %vm4009, 0, %v4034
    %4036 = vst [vmem:[#allocation4 + $0x40] sm:$0x1] %v4035
    %v4037 = vld [vmem:[#allocation4 + $0x48] sm:$0x1]
    %v4038 = vsel %vm4009, 0, %v4037
    %4039 = vst [vmem:[#allocation4 + $0x48] sm:$0x1] %v4038
    %v4040 = vld [vmem:[#allocation4 + $0x50] sm:$0x1]
    %v4041 = vsel %vm4009, 0, %v4040
    %4042 = vst [vmem:[#allocation4 + $0x50] sm:$0x1] %v4041
    %v4043 = vld [vmem:[#allocation4 + $0x58] sm:$0x1]
    %v4044 = vsel %vm4009, 0, %v4043
    %4045 = vst [vmem:[#allocation4 + $0x58] sm:$0x1] %v4044
    %v4046 = vld [vmem:[#allocation4 + $0x60] sm:$0x1]
    %v4047 = vsel %vm4009, 0, %v4046
    %4048 = vst [vmem:[#allocation4 + $0x60] sm:$0x1] %v4047
    %v4049 = vld [vmem:[#allocation4 + $0x68] sm:$0x1]
    %v4050 = vsel %vm4009, 0, %v4049
    %4051 = vst [vmem:[#allocation4 + $0x68] sm:$0x1] %v4050
    %v4052 = vld [vmem:[#allocation4 + $0x70] sm:$0x1]
    %v4053 = vsel %vm4009, 0, %v4052
    %4054 = vst [vmem:[#allocation4 + $0x70] sm:$0x1] %v4053
    %v4055 = vld [vmem:[#allocation4 + $0x78] sm:$0x1]
    %v4056 = vsel %vm4009, 0, %v4055
    %4057 = vst [vmem:[#allocation4 + $0x78] sm:$0x1] %v4056
    %v4058 = vld [vmem:[#allocation4 + $0x80] sm:$0x1]
    %v4059 = vsel %vm4009, 0, %v4058
    %4060 = vst [vmem:[#allocation4 + $0x80] sm:$0x1] %v4059
    %v4061 = vld [vmem:[#allocation4 + $0x88] sm:$0x1]
    %v4062 = vsel %vm4009, 0, %v4061
    %4063 = vst [vmem:[#allocation4 + $0x88] sm:$0x1] %v4062
    %v4064 = vld [vmem:[#allocation4 + $0x90] sm:$0x1]
    %v4065 = vsel %vm4009, 0, %v4064
    %4066 = vst [vmem:[#allocation4 + $0x90] sm:$0x1] %v4065
    %v4067 = vld [vmem:[#allocation4 + $0x98] sm:$0x1]
    %v4068 = vsel %vm4009, 0, %v4067
    %4069 = vst [vmem:[#allocation4 + $0x98] sm:$0x1] %v4068
    %vm4070 = vcmask 97284
    %vm4071 = vsmask.f32 7954
    %vm4072 = vmand %vm4070, %vm4071
    %v4073 = vld [vmem:[#allocation4] sm:$0xf0]
    %v4074 = vsel %vm4072, 0, %v4073
    %4075 = vst [vmem:[#allocation4] sm:$0xf0] %v4074
    %v4076 = vld [vmem:[#allocation4 + $0x8] sm:$0xf0]
    %v4077 = vsel %vm4072, 0, %v4076
    %4078 = vst [vmem:[#allocation4 + $0x8] sm:$0xf0] %v4077
    %v4079 = vld [vmem:[#allocation4 + $0x10] sm:$0xf0]
    %v4080 = vsel %vm4072, 0, %v4079
    %4081 = vst [vmem:[#allocation4 + $0x10] sm:$0xf0] %v4080
    %v4082 = vld [vmem:[#allocation4 + $0x18] sm:$0xf0]
    %v4083 = vsel %vm4072, 0, %v4082
    %4084 = vst [vmem:[#allocation4 + $0x18] sm:$0xf0] %v4083
    %v4085 = vld [vmem:[#allocation4 + $0x20] sm:$0xf0]
    %v4086 = vsel %vm4072, 0, %v4085
    %4087 = vst [vmem:[#allocation4 + $0x20] sm:$0xf0] %v4086
    %v4088 = vld [vmem:[#allocation4 + $0x28] sm:$0xf0]
    %v4089 = vsel %vm4072, 0, %v4088
    %4090 = vst [vmem:[#allocation4 + $0x28] sm:$0xf0] %v4089
    %v4091 = vld [vmem:[#allocation4 + $0x30] sm:$0xf0]
    %v4092 = vsel %vm4072, 0, %v4091
    %4093 = vst [vmem:[#allocation4 + $0x30] sm:$0xf0] %v4092
    %v4094 = vld [vmem:[#allocation4 + $0x38] sm:$0xf0]
    %v4095 = vsel %vm4072, 0, %v4094
    %4096 = vst [vmem:[#allocation4 + $0x38] sm:$0xf0] %v4095
    %v4097 = vld [vmem:[#allocation4 + $0x40] sm:$0xf0]
    %v4098 = vsel %vm4072, 0, %v4097
    %4099 = vst [vmem:[#allocation4 + $0x40] sm:$0xf0] %v4098
    %v4100 = vld [vmem:[#allocation4 + $0x48] sm:$0xf0]
    %v4101 = vsel %vm4072, 0, %v4100
    %4102 = vst [vmem:[#allocation4 + $0x48] sm:$0xf0] %v4101
    %v4103 = vld [vmem:[#allocation4 + $0x50] sm:$0xf0]
    %v4104 = vsel %vm4072, 0, %v4103
    %4105 = vst [vmem:[#allocation4 + $0x50] sm:$0xf0] %v4104
    %v4106 = vld [vmem:[#allocation4 + $0x58] sm:$0xf0]
    %v4107 = vsel %vm4072, 0, %v4106
    %4108 = vst [vmem:[#allocation4 + $0x58] sm:$0xf0] %v4107
    %v4109 = vld [vmem:[#allocation4 + $0x60] sm:$0xf0]
    %v4110 = vsel %vm4072, 0, %v4109
    %4111 = vst [vmem:[#allocation4 + $0x60] sm:$0xf0] %v4110
    %v4112 = vld [vmem:[#allocation4 + $0x68] sm:$0xf0]
    %v4113 = vsel %vm4072, 0, %v4112
    %4114 = vst [vmem:[#allocation4 + $0x68] sm:$0xf0] %v4113
    %v4115 = vld [vmem:[#allocation4 + $0x70] sm:$0xf0]
    %v4116 = vsel %vm4072, 0, %v4115
    %4117 = vst [vmem:[#allocation4 + $0x70] sm:$0xf0] %v4116
    %v4118 = vld [vmem:[#allocation4 + $0x78] sm:$0xf0]
    %v4119 = vsel %vm4072, 0, %v4118
    %4120 = vst [vmem:[#allocation4 + $0x78] sm:$0xf0] %v4119
    %v4121 = vld [vmem:[#allocation4 + $0x80] sm:$0xf0]
    %v4122 = vsel %vm4072, 0, %v4121
    %4123 = vst [vmem:[#allocation4 + $0x80] sm:$0xf0] %v4122
    %v4124 = vld [vmem:[#allocation4 + $0x88] sm:$0xf0]
    %v4125 = vsel %vm4072, 0, %v4124
    %4126 = vst [vmem:[#allocation4 + $0x88] sm:$0xf0] %v4125
    %v4127 = vld [vmem:[#allocation4 + $0x90] sm:$0xf0]
    %v4128 = vsel %vm4072, 0, %v4127
    %4129 = vst [vmem:[#allocation4 + $0x90] sm:$0xf0] %v4128
    %v4130 = vld [vmem:[#allocation4 + $0x98] sm:$0xf0]
    %v4131 = vsel %vm4072, 0, %v4130
    %4132 = vst [vmem:[#allocation4 + $0x98] sm:$0xf0] %v4131
    %v4133 = vpack.c.bf16 %v3985, %v3985
    %v4134 = vpack.c.bf16 %v3986, %v3986
    %v4135 = vpack.c.bf16 %v3987, %v3987
    %v4136 = vpack.c.bf16 %v3988, %v3988
    %v4137 = vpack.c.bf16 %v3989, %v3989
    %v4138 = vpack.c.bf16 %v3990, %v3990
    %v4139 = vpack.c.bf16 %v3991, %v3991
    %v4140 = vpack.c.bf16 %v3992, %v3992
    %v4141 = vpack.c.bf16 %v3993, %v3993
    %v4142 = vpack.c.bf16 %v3994, %v3994
    %v4143 = vpack.c.bf16 %v3995, %v3995
    %v4144 = vpack.c.bf16 %v3996, %v3996
    %v4145 = vpack.c.bf16 %v3997, %v3997
    %v4146 = vpack.c.bf16 %v3998, %v3998
    %v4147 = vpack.c.bf16 %v3999, %v3999
    %v4148 = vpack.c.bf16 %v4000, %v4000
    %v4150 = vshrl.u32 %v4133, 16
    %v4152 = vrot.slane %v4150, 7
    %v4153 = vshll.u32 %v4133, 16
    %v4155 = vor.u32 %v4152, %v4153
    %v4157 = vshrl.u32 %v4134, 16
    %v4159 = vrot.slane %v4157, 7
    %v4160 = vshll.u32 %v4134, 16
    %v4162 = vor.u32 %v4159, %v4160
    %v4164 = vshrl.u32 %v4135, 16
    %v4166 = vrot.slane %v4164, 7
    %v4167 = vshll.u32 %v4135, 16
    %v4169 = vor.u32 %v4166, %v4167
    %v4171 = vshrl.u32 %v4136, 16
    %v4173 = vrot.slane %v4171, 7
    %v4174 = vshll.u32 %v4136, 16
    %v4176 = vor.u32 %v4173, %v4174
    %v4178 = vshrl.u32 %v4137, 16
    %v4180 = vrot.slane %v4178, 7
    %v4181 = vshll.u32 %v4137, 16
    %v4183 = vor.u32 %v4180, %v4181
    %v4185 = vshrl.u32 %v4138, 16
    %v4187 = vrot.slane %v4185, 7
    %v4188 = vshll.u32 %v4138, 16
    %v4190 = vor.u32 %v4187, %v4188
    %v4192 = vshrl.u32 %v4139, 16
    %v4194 = vrot.slane %v4192, 7
    %v4195 = vshll.u32 %v4139, 16
    %v4197 = vor.u32 %v4194, %v4195
    %v4199 = vshrl.u32 %v4140, 16
    %v4201 = vrot.slane %v4199, 7
    %v4202 = vshll.u32 %v4140, 16
    %v4204 = vor.u32 %v4201, %v4202
    %v4206 = vshrl.u32 %v4141, 16
    %v4208 = vrot.slane %v4206, 7
    %v4209 = vshll.u32 %v4141, 16
    %v4211 = vor.u32 %v4208, %v4209
    %v4213 = vshrl.u32 %v4142, 16
    %v4215 = vrot.slane %v4213, 7
    %v4216 = vshll.u32 %v4142, 16
    %v4218 = vor.u32 %v4215, %v4216
    %v4220 = vshrl.u32 %v4143, 16
    %v4222 = vrot.slane %v4220, 7
    %v4223 = vshll.u32 %v4143, 16
    %v4225 = vor.u32 %v4222, %v4223
    %v4227 = vshrl.u32 %v4144, 16
    %v4229 = vrot.slane %v4227, 7
    %v4230 = vshll.u32 %v4144, 16
    %v4232 = vor.u32 %v4229, %v4230
    %v4234 = vshrl.u32 %v4145, 16
    %v4236 = vrot.slane %v4234, 7
    %v4237 = vshll.u32 %v4145, 16
    %v4239 = vor.u32 %v4236, %v4237
    %v4241 = vshrl.u32 %v4146, 16
    %v4243 = vrot.slane %v4241, 7
    %v4244 = vshll.u32 %v4146, 16
    %v4246 = vor.u32 %v4243, %v4244
    %v4248 = vshrl.u32 %v4147, 16
    %v4250 = vrot.slane %v4248, 7
    %v4251 = vshll.u32 %v4147, 16
    %v4253 = vor.u32 %v4250, %v4251
    %v4255 = vshrl.u32 %v4148, 16
    %v4257 = vrot.slane %v4255, 7
    %v4258 = vshll.u32 %v4148, 16
    %v4260 = vor.u32 %v4257, %v4258
    %s4277 = scalar_lea.vmem [#allocation4], 8
    %vm4278 = vcmask 61440
    %vm4279 = vsmask.f32 4354
    %vm4280 = vmand %vm4278, %vm4279
    %v4281 = vld [vmem:[%s4277] sm:$0x1f]
    %v4282 = vsel %vm4280, %v4155, %v4281
    %4283 = vst [vmem:[%s4277] sm:$0x1f] %v4282
    %v4284 = vld [vmem:[%s4277 + $0x8] sm:$0x1f]
    %v4285 = vsel %vm4280, %v4162, %v4284
    %4286 = vst [vmem:[%s4277 + $0x8] sm:$0x1f] %v4285
    %v4287 = vld [vmem:[%s4277 + $0x10] sm:$0x1f]
    %v4288 = vsel %vm4280, %v4169, %v4287
    %4289 = vst [vmem:[%s4277 + $0x10] sm:$0x1f] %v4288
    %v4290 = vld [vmem:[%s4277 + $0x18] sm:$0x1f]
    %v4291 = vsel %vm4280, %v4176, %v4290
    %4292 = vst [vmem:[%s4277 + $0x18] sm:$0x1f] %v4291
    %v4293 = vld [vmem:[%s4277 + $0x20] sm:$0x1f]
    %v4294 = vsel %vm4280, %v4183, %v4293
    %4295 = vst [vmem:[%s4277 + $0x20] sm:$0x1f] %v4294
    %v4296 = vld [vmem:[%s4277 + $0x28] sm:$0x1f]
    %v4297 = vsel %vm4280, %v4190, %v4296
    %4298 = vst [vmem:[%s4277 + $0x28] sm:$0x1f] %v4297
    %v4299 = vld [vmem:[%s4277 + $0x30] sm:$0x1f]
    %v4300 = vsel %vm4280, %v4197, %v4299
    %4301 = vst [vmem:[%s4277 + $0x30] sm:$0x1f] %v4300
    %v4302 = vld [vmem:[%s4277 + $0x38] sm:$0x1f]
    %v4303 = vsel %vm4280, %v4204, %v4302
    %4304 = vst [vmem:[%s4277 + $0x38] sm:$0x1f] %v4303
    %v4305 = vld [vmem:[%s4277 + $0x50] sm:$0x1f]
    %v4306 = vsel %vm4280, %v4211, %v4305
    %4307 = vst [vmem:[%s4277 + $0x50] sm:$0x1f] %v4306
    %v4308 = vld [vmem:[%s4277 + $0x58] sm:$0x1f]
    %v4309 = vsel %vm4280, %v4218, %v4308
    %4310 = vst [vmem:[%s4277 + $0x58] sm:$0x1f] %v4309
    %v4311 = vld [vmem:[%s4277 + $0x60] sm:$0x1f]
    %v4312 = vsel %vm4280, %v4225, %v4311
    %4313 = vst [vmem:[%s4277 + $0x60] sm:$0x1f] %v4312
    %v4314 = vld [vmem:[%s4277 + $0x68] sm:$0x1f]
    %v4315 = vsel %vm4280, %v4232, %v4314
    %4316 = vst [vmem:[%s4277 + $0x68] sm:$0x1f] %v4315
    %v4317 = vld [vmem:[%s4277 + $0x70] sm:$0x1f]
    %v4318 = vsel %vm4280, %v4239, %v4317
    %4319 = vst [vmem:[%s4277 + $0x70] sm:$0x1f] %v4318
    %v4320 = vld [vmem:[%s4277 + $0x78] sm:$0x1f]
    %v4321 = vsel %vm4280, %v4246, %v4320
    %4322 = vst [vmem:[%s4277 + $0x78] sm:$0x1f] %v4321
    %v4323 = vld [vmem:[%s4277 + $0x80] sm:$0x1f]
    %v4324 = vsel %vm4280, %v4253, %v4323
    %4325 = vst [vmem:[%s4277 + $0x80] sm:$0x1f] %v4324
    %v4326 = vld [vmem:[%s4277 + $0x88] sm:$0x1f]
    %v4327 = vsel %vm4280, %v4260, %v4326
    %4328 = vst [vmem:[%s4277 + $0x88] sm:$0x1f] %v4327
    %v4329 = vpack.c.bf16 %v406, %v406
    %v4330 = vpack.c.bf16 %v407, %v407
    %v4331 = vpack.c.bf16 %v408, %v408
    %v4332 = vpack.c.bf16 %v409, %v409
    %v4333 = vpack.c.bf16 %v410, %v410
    %v4334 = vpack.c.bf16 %v411, %v411
    %v4335 = vpack.c.bf16 %v412, %v412
    %v4336 = vpack.c.bf16 %v413, %v413
    %v4337 = vpack.c.bf16 %v414, %v414
    %v4338 = vpack.c.bf16 %v415, %v415
    %v4339 = vpack.c.bf16 %v416, %v416
    %v4340 = vpack.c.bf16 %v417, %v417
    %v4341 = vpack.c.bf16 %v418, %v418
    %v4342 = vpack.c.bf16 %v419, %v419
    %v4343 = vpack.c.bf16 %v420, %v420
    %v4344 = vpack.c.bf16 %v421, %v421
    %v4346 = vshrl.u32 %v4329, 16
    %v4348 = vrot.slane %v4346, 7
    %v4349 = vshll.u32 %v4329, 16
    %v4351 = vor.u32 %v4348, %v4349
    %v4353 = vshrl.u32 %v4330, 16
    %v4355 = vrot.slane %v4353, 7
    %v4356 = vshll.u32 %v4330, 16
    %v4358 = vor.u32 %v4355, %v4356
    %v4360 = vshrl.u32 %v4331, 16
    %v4362 = vrot.slane %v4360, 7
    %v4363 = vshll.u32 %v4331, 16
    %v4365 = vor.u32 %v4362, %v4363
    %v4367 = vshrl.u32 %v4332, 16
    %v4369 = vrot.slane %v4367, 7
    %v4370 = vshll.u32 %v4332, 16
    %v4372 = vor.u32 %v4369, %v4370
    %v4374 = vshrl.u32 %v4333, 16
    %v4376 = vrot.slane %v4374, 7
    %v4377 = vshll.u32 %v4333, 16
    %v4379 = vor.u32 %v4376, %v4377
    %v4381 = vshrl.u32 %v4334, 16
    %v4383 = vrot.slane %v4381, 7
    %v4384 = vshll.u32 %v4334, 16
    %v4386 = vor.u32 %v4383, %v4384
    %v4388 = vshrl.u32 %v4335, 16
    %v4390 = vrot.slane %v4388, 7
    %v4391 = vshll.u32 %v4335, 16
    %v4393 = vor.u32 %v4390, %v4391
    %v4395 = vshrl.u32 %v4336, 16
    %v4397 = vrot.slane %v4395, 7
    %v4398 = vshll.u32 %v4336, 16
    %v4400 = vor.u32 %v4397, %v4398
    %v4402 = vshrl.u32 %v4337, 16
    %v4404 = vrot.slane %v4402, 7
    %v4405 = vshll.u32 %v4337, 16
    %v4407 = vor.u32 %v4404, %v4405
    %v4409 = vshrl.u32 %v4338, 16
    %v4411 = vrot.slane %v4409, 7
    %v4412 = vshll.u32 %v4338, 16
    %v4414 = vor.u32 %v4411, %v4412
    %v4416 = vshrl.u32 %v4339, 16
    %v4418 = vrot.slane %v4416, 7
    %v4419 = vshll.u32 %v4339, 16
    %v4421 = vor.u32 %v4418, %v4419
    %v4423 = vshrl.u32 %v4340, 16
    %v4425 = vrot.slane %v4423, 7
    %v4426 = vshll.u32 %v4340, 16
    %v4428 = vor.u32 %v4425, %v4426
    %v4430 = vshrl.u32 %v4341, 16
    %v4432 = vrot.slane %v4430, 7
    %v4433 = vshll.u32 %v4341, 16
    %v4435 = vor.u32 %v4432, %v4433
    %v4437 = vshrl.u32 %v4342, 16
    %v4439 = vrot.slane %v4437, 7
    %v4440 = vshll.u32 %v4342, 16
    %v4442 = vor.u32 %v4439, %v4440
    %v4444 = vshrl.u32 %v4343, 16
    %v4446 = vrot.slane %v4444, 7
    %v4447 = vshll.u32 %v4343, 16
    %v4449 = vor.u32 %v4446, %v4447
    %v4451 = vshrl.u32 %v4344, 16
    %v4453 = vrot.slane %v4451, 7
    %v4454 = vshll.u32 %v4344, 16
    %v4456 = vor.u32 %v4453, %v4454
    %4457 = vrot.lane.b32.xlu0 %v4351, 8
    %v4458 = vpop.permute.xlu0 %4457
    %4459 = vrot.lane.b32.xlu0 %v4358, 8
    %v4460 = vpop.permute.xlu0 %4459
    %4461 = vrot.lane.b32.xlu0 %v4365, 8
    %v4462 = vpop.permute.xlu0 %4461
    %4463 = vrot.lane.b32.xlu0 %v4372, 8
    %v4464 = vpop.permute.xlu0 %4463
    %4465 = vrot.lane.b32.xlu0 %v4379, 8
    %v4466 = vpop.permute.xlu0 %4465
    %4467 = vrot.lane.b32.xlu0 %v4386, 8
    %v4468 = vpop.permute.xlu0 %4467
    %4469 = vrot.lane.b32.xlu0 %v4393, 8
    %v4470 = vpop.permute.xlu0 %4469
    %4471 = vrot.lane.b32.xlu0 %v4400, 8
    %v4472 = vpop.permute.xlu0 %4471
    %4473 = vrot.lane.b32.xlu0 %v4407, 8
    %v4474 = vpop.permute.xlu0 %4473
    %4475 = vrot.lane.b32.xlu0 %v4414, 8
    %v4476 = vpop.permute.xlu0 %4475
    %4477 = vrot.lane.b32.xlu0 %v4421, 8
    %v4478 = vpop.permute.xlu0 %4477
    %4479 = vrot.lane.b32.xlu0 %v4428, 8
    %v4480 = vpop.permute.xlu0 %4479
    %4481 = vrot.lane.b32.xlu0 %v4435, 8
    %v4482 = vpop.permute.xlu0 %4481
    %4483 = vrot.lane.b32.xlu0 %v4442, 8
    %v4484 = vpop.permute.xlu0 %4483
    %4485 = vrot.lane.b32.xlu0 %v4449, 8
    %v4486 = vpop.permute.xlu0 %4485
    %4487 = vrot.lane.b32.xlu0 %v4456, 8
    %v4488 = vpop.permute.xlu0 %4487
    %vm4505 = vcmask 94272
    %vm4506 = vmand %vm4505, %vm4279
    %v4507 = vld [vmem:[%s4277] sm:$0x1f]
    %v4508 = vsel %vm4506, %v4458, %v4507
    %4509 = vst [vmem:[%s4277] sm:$0x1f] %v4508
    %v4510 = vld [vmem:[%s4277 + $0x8] sm:$0x1f]
    %v4511 = vsel %vm4506, %v4460, %v4510
    %4512 = vst [vmem:[%s4277 + $0x8] sm:$0x1f] %v4511
    %v4513 = vld [vmem:[%s4277 + $0x10] sm:$0x1f]
    %v4514 = vsel %vm4506, %v4462, %v4513
    %4515 = vst [vmem:[%s4277 + $0x10] sm:$0x1f] %v4514
    %v4516 = vld [vmem:[%s4277 + $0x18] sm:$0x1f]
    %v4517 = vsel %vm4506, %v4464, %v4516
    %4518 = vst [vmem:[%s4277 + $0x18] sm:$0x1f] %v4517
    %v4519 = vld [vmem:[%s4277 + $0x20] sm:$0x1f]
    %v4520 = vsel %vm4506, %v4466, %v4519
    %4521 = vst [vmem:[%s4277 + $0x20] sm:$0x1f] %v4520
    %v4522 = vld [vmem:[%s4277 + $0x28] sm:$0x1f]
    %v4523 = vsel %vm4506, %v4468, %v4522
    %4524 = vst [vmem:[%s4277 + $0x28] sm:$0x1f] %v4523
    %v4525 = vld [vmem:[%s4277 + $0x30] sm:$0x1f]
    %v4526 = vsel %vm4506, %v4470, %v4525
    %4527 = vst [vmem:[%s4277 + $0x30] sm:$0x1f] %v4526
    %v4528 = vld [vmem:[%s4277 + $0x38] sm:$0x1f]
    %v4529 = vsel %vm4506, %v4472, %v4528
    %4530 = vst [vmem:[%s4277 + $0x38] sm:$0x1f] %v4529
    %v4531 = vld [vmem:[%s4277 + $0x50] sm:$0x1f]
    %v4532 = vsel %vm4506, %v4474, %v4531
    %4533 = vst [vmem:[%s4277 + $0x50] sm:$0x1f] %v4532
    %v4534 = vld [vmem:[%s4277 + $0x58] sm:$0x1f]
    %v4535 = vsel %vm4506, %v4476, %v4534
    %4536 = vst [vmem:[%s4277 + $0x58] sm:$0x1f] %v4535
    %v4537 = vld [vmem:[%s4277 + $0x60] sm:$0x1f]
    %v4538 = vsel %vm4506, %v4478, %v4537
    %4539 = vst [vmem:[%s4277 + $0x60] sm:$0x1f] %v4538
    %v4540 = vld [vmem:[%s4277 + $0x68] sm:$0x1f]
    %v4541 = vsel %vm4506, %v4480, %v4540
    %4542 = vst [vmem:[%s4277 + $0x68] sm:$0x1f] %v4541
    %v4543 = vld [vmem:[%s4277 + $0x70] sm:$0x1f]
    %v4544 = vsel %vm4506, %v4482, %v4543
    %4545 = vst [vmem:[%s4277 + $0x70] sm:$0x1f] %v4544
    %v4546 = vld [vmem:[%s4277 + $0x78] sm:$0x1f]
    %v4547 = vsel %vm4506, %v4484, %v4546
    %4548 = vst [vmem:[%s4277 + $0x78] sm:$0x1f] %v4547
    %v4549 = vld [vmem:[%s4277 + $0x80] sm:$0x1f]
    %v4550 = vsel %vm4506, %v4486, %v4549
    %4551 = vst [vmem:[%s4277 + $0x80] sm:$0x1f] %v4550
    %v4552 = vld [vmem:[%s4277 + $0x88] sm:$0x1f]
    %v4553 = vsel %vm4506, %v4488, %v4552
    %4554 = vst [vmem:[%s4277 + $0x88] sm:$0x1f] %v4553
    %v4555 = vld [vmem:[%s8] sm:$0x1]
    %v4556 = vld [vmem:[#allocation4] sm:$0xf]
    %v4557 = vld [vmem:[#allocation4 + $0x8] sm:$0xf]
    %v4558 = vld [vmem:[#allocation4 + $0x10] sm:$0xf]
    %v4559 = vld [vmem:[#allocation4 + $0x18] sm:$0xf]
    %v4560 = vld [vmem:[#allocation4 + $0x20] sm:$0xf]
    %v4561 = vld [vmem:[#allocation4 + $0x28] sm:$0xf]
    %v4562 = vld [vmem:[#allocation4 + $0x30] sm:$0xf]
    %v4563 = vld [vmem:[#allocation4 + $0x38] sm:$0xf]
    %v4564 = vld [vmem:[#allocation4 + $0x50] sm:$0xf]
    %v4565 = vld [vmem:[#allocation4 + $0x58] sm:$0xf]
    %v4566 = vld [vmem:[#allocation4 + $0x60] sm:$0xf]
    %v4567 = vld [vmem:[#allocation4 + $0x68] sm:$0xf]
    %v4568 = vld [vmem:[#allocation4 + $0x70] sm:$0xf]
    %v4569 = vld [vmem:[#allocation4 + $0x78] sm:$0xf]
    %v4570 = vld [vmem:[#allocation4 + $0x80] sm:$0xf]
    %v4571 = vld [vmem:[#allocation4 + $0x88] sm:$0xf]
    %v4572 = vld [vmem:[%s7] sm:$0xf]
    %v4573 = vld [vmem:[%s7 + $0x4] sm:$0x3]
    %v4574 = vld [vmem:[#allocation4] sm:$0x1f]
    %v4575 = vld [vmem:[#allocation4 + $0x8] sm:$0x1f]
    %v4576 = vld [vmem:[#allocation4 + $0x10] sm:$0x1f]
    %v4577 = vld [vmem:[#allocation4 + $0x18] sm:$0x1f]
    %v4578 = vld [vmem:[#allocation4 + $0x20] sm:$0x1f]
    %v4579 = vld [vmem:[#allocation4 + $0x28] sm:$0x1f]
    %v4580 = vld [vmem:[#allocation4 + $0x30] sm:$0x1f]
    %v4581 = vld [vmem:[#allocation4 + $0x38] sm:$0x1f]
    %v4582 = vld [vmem:[#allocation4 + $0x50] sm:$0x1f]
    %v4583 = vld [vmem:[#allocation4 + $0x58] sm:$0x1f]
    %v4584 = vld [vmem:[#allocation4 + $0x60] sm:$0x1f]
    %v4585 = vld [vmem:[#allocation4 + $0x68] sm:$0x1f]
    %v4586 = vld [vmem:[#allocation4 + $0x70] sm:$0x1f]
    %v4587 = vld [vmem:[#allocation4 + $0x78] sm:$0x1f]
    %v4588 = vld [vmem:[#allocation4 + $0x80] sm:$0x1f]
    %v4589 = vld [vmem:[#allocation4 + $0x88] sm:$0x1f]
    %v4606 = vunpack.c.l.b16 %v4574
    %v4607 = vunpack.c.h.b16 %v4574
    %v4608 = vunpack.c.l.b16 %v4575
    %v4609 = vunpack.c.h.b16 %v4575
    %v4610 = vunpack.c.l.b16 %v4576
    %v4611 = vunpack.c.h.b16 %v4576
    %v4612 = vunpack.c.l.b16 %v4577
    %v4613 = vunpack.c.h.b16 %v4577
    %v4614 = vunpack.c.l.b16 %v4578
    %v4615 = vunpack.c.h.b16 %v4578
    %v4616 = vunpack.c.l.b16 %v4579
    %v4617 = vunpack.c.h.b16 %v4579
    %v4618 = vunpack.c.l.b16 %v4580
    %v4619 = vunpack.c.h.b16 %v4580
    %v4620 = vunpack.c.l.b16 %v4581
    %v4621 = vunpack.c.h.b16 %v4581
    %v4622 = vunpack.c.l.b16 %v4582
    %v4623 = vunpack.c.h.b16 %v4582
    %v4624 = vunpack.c.l.b16 %v4583
    %v4625 = vunpack.c.h.b16 %v4583
    %v4626 = vunpack.c.l.b16 %v4584
    %v4627 = vunpack.c.h.b16 %v4584
    %v4628 = vunpack.c.l.b16 %v4585
    %v4629 = vunpack.c.h.b16 %v4585
    %v4630 = vunpack.c.l.b16 %v4586
    %v4631 = vunpack.c.h.b16 %v4586
    %v4632 = vunpack.c.l.b16 %v4587
    %v4633 = vunpack.c.h.b16 %v4587
    %v4634 = vunpack.c.l.b16 %v4588
    %v4635 = vunpack.c.h.b16 %v4588
    %v4636 = vunpack.c.l.b16 %v4589
    %v4637 = vunpack.c.h.b16 %v4589
    %v4638 = vpack.c.b16 %v4606, %v4606
    %v4639 = vpack.c.b16 %v4607, %v4607
    %v4640 = vpack.c.b16 %v4608, %v4608
    %v4641 = vpack.c.b16 %v4609, %v4609
    %v4642 = vpack.c.b16 %v4610, %v4610
    %v4643 = vpack.c.b16 %v4611, %v4611
    %v4644 = vpack.c.b16 %v4612, %v4612
    %v4645 = vpack.c.b16 %v4613, %v4613
    %v4646 = vpack.c.b16 %v4614, %v4614
    %v4647 = vpack.c.b16 %v4615, %v4615
    %v4648 = vpack.c.b16 %v4616, %v4616
    %v4649 = vpack.c.b16 %v4617, %v4617
    %v4650 = vpack.c.b16 %v4618, %v4618
    %v4651 = vpack.c.b16 %v4619, %v4619
    %v4652 = vpack.c.b16 %v4620, %v4620
    %v4653 = vpack.c.b16 %v4621, %v4621
    %v4654 = vpack.c.b16 %v4622, %v4622
    %v4655 = vpack.c.b16 %v4623, %v4623
    %v4656 = vpack.c.b16 %v4624, %v4624
    %v4657 = vpack.c.b16 %v4625, %v4625
    %v4658 = vpack.c.b16 %v4626, %v4626
    %v4659 = vpack.c.b16 %v4627, %v4627
    %v4660 = vpack.c.b16 %v4628, %v4628
    %v4661 = vpack.c.b16 %v4629, %v4629
    %v4662 = vpack.c.b16 %v4630, %v4630
    %v4663 = vpack.c.b16 %v4631, %v4631
    %v4664 = vpack.c.b16 %v4632, %v4632
    %v4665 = vpack.c.b16 %v4633, %v4633
    %v4666 = vpack.c.b16 %v4634, %v4634
    %v4667 = vpack.c.b16 %v4635, %v4635
    %v4668 = vpack.c.b16 %v4636, %v4636
    %v4669 = vpack.c.b16 %v4637, %v4637
    %vm4670 = vsmask.f32 3328
    %vm4671 = vsmask.f32 7440
    %vm4672 = vmor %vm4670, %vm4671
    %v4674 = vshrl.u32 %v4638, 16
    %v4676 = vrot.slane %v4674, 4
    %v4677 = vshll.u32 %v4638, 16
    %v4679 = vrot.slane %v4677, 5
    %v4680 = vor.u32 %v4676, %v4679
    %v4681 = vrot.slane %v4680, 4
    %v4683 = vshll.u32 %v4639, 16
    %v4685 = vrot.slane %v4683, 5
    %v4686 = vsel %vm4672, %v4681, %v4685
    %v4688 = vshrl.u32 %v4640, 16
    %v4690 = vrot.slane %v4688, 4
    %v4691 = vshll.u32 %v4640, 16
    %v4693 = vrot.slane %v4691, 5
    %v4694 = vor.u32 %v4690, %v4693
    %v4695 = vrot.slane %v4694, 4
    %v4697 = vshll.u32 %v4641, 16
    %v4699 = vrot.slane %v4697, 5
    %v4700 = vsel %vm4672, %v4695, %v4699
    %v4702 = vshrl.u32 %v4642, 16
    %v4704 = vrot.slane %v4702, 4
    %v4705 = vshll.u32 %v4642, 16
    %v4707 = vrot.slane %v4705, 5
    %v4708 = vor.u32 %v4704, %v4707
    %v4709 = vrot.slane %v4708, 4
    %v4711 = vshll.u32 %v4643, 16
    %v4713 = vrot.slane %v4711, 5
    %v4714 = vsel %vm4672, %v4709, %v4713
    %v4716 = vshrl.u32 %v4644, 16
    %v4718 = vrot.slane %v4716, 4
    %v4719 = vshll.u32 %v4644, 16
    %v4721 = vrot.slane %v4719, 5
    %v4722 = vor.u32 %v4718, %v4721
    %v4723 = vrot.slane %v4722, 4
    %v4725 = vshll.u32 %v4645, 16
    %v4727 = vrot.slane %v4725, 5
    %v4728 = vsel %vm4672, %v4723, %v4727
    %v4730 = vshrl.u32 %v4646, 16
    %v4732 = vrot.slane %v4730, 4
    %v4733 = vshll.u32 %v4646, 16
    %v4735 = vrot.slane %v4733, 5
    %v4736 = vor.u32 %v4732, %v4735
    %v4737 = vrot.slane %v4736, 4
    %v4739 = vshll.u32 %v4647, 16
    %v4741 = vrot.slane %v4739, 5
    %v4742 = vsel %vm4672, %v4737, %v4741
    %v4744 = vshrl.u32 %v4648, 16
    %v4746 = vrot.slane %v4744, 4
    %v4747 = vshll.u32 %v4648, 16
    %v4749 = vrot.slane %v4747, 5
    %v4750 = vor.u32 %v4746, %v4749
    %v4751 = vrot.slane %v4750, 4
    %v4753 = vshll.u32 %v4649, 16
    %v4755 = vrot.slane %v4753, 5
    %v4756 = vsel %vm4672, %v4751, %v4755
    %v4758 = vshrl.u32 %v4650, 16
    %v4760 = vrot.slane %v4758, 4
    %v4761 = vshll.u32 %v4650, 16
    %v4763 = vrot.slane %v4761, 5
    %v4764 = vor.u32 %v4760, %v4763
    %v4765 = vrot.slane %v4764, 4
    %v4767 = vshll.u32 %v4651, 16
    %v4769 = vrot.slane %v4767, 5
    %v4770 = vsel %vm4672, %v4765, %v4769
    %v4772 = vshrl.u32 %v4652, 16
    %v4774 = vrot.slane %v4772, 4
    %v4775 = vshll.u32 %v4652, 16
    %v4777 = vrot.slane %v4775, 5
    %v4778 = vor.u32 %v4774, %v4777
    %v4779 = vrot.slane %v4778, 4
    %v4781 = vshll.u32 %v4653, 16
    %v4783 = vrot.slane %v4781, 5
    %v4784 = vsel %vm4672, %v4779, %v4783
    %v4786 = vshrl.u32 %v4654, 16
    %v4788 = vrot.slane %v4786, 4
    %v4789 = vshll.u32 %v4654, 16
    %v4791 = vrot.slane %v4789, 5
    %v4792 = vor.u32 %v4788, %v4791
    %v4793 = vrot.slane %v4792, 4
    %v4795 = vshll.u32 %v4655, 16
    %v4797 = vrot.slane %v4795, 5
    %v4798 = vsel %vm4672, %v4793, %v4797
    %v4800 = vshrl.u32 %v4656, 16
    %v4802 = vrot.slane %v4800, 4
    %v4803 = vshll.u32 %v4656, 16
    %v4805 = vrot.slane %v4803, 5
    %v4806 = vor.u32 %v4802, %v4805
    %v4807 = vrot.slane %v4806, 4
    %v4809 = vshll.u32 %v4657, 16
    %v4811 = vrot.slane %v4809, 5
    %v4812 = vsel %vm4672, %v4807, %v4811
    %v4814 = vshrl.u32 %v4658, 16
    %v4816 = vrot.slane %v4814, 4
    %v4817 = vshll.u32 %v4658, 16
    %v4819 = vrot.slane %v4817, 5
    %v4820 = vor.u32 %v4816, %v4819
    %v4821 = vrot.slane %v4820, 4
    %v4823 = vshll.u32 %v4659, 16
    %v4825 = vrot.slane %v4823, 5
    %v4826 = vsel %vm4672, %v4821, %v4825
    %v4828 = vshrl.u32 %v4660, 16
    %v4830 = vrot.slane %v4828, 4
    %v4831 = vshll.u32 %v4660, 16
    %v4833 = vrot.slane %v4831, 5
    %v4834 = vor.u32 %v4830, %v4833
    %v4835 = vrot.slane %v4834, 4
    %v4837 = vshll.u32 %v4661, 16
    %v4839 = vrot.slane %v4837, 5
    %v4840 = vsel %vm4672, %v4835, %v4839
    %v4842 = vshrl.u32 %v4662, 16
    %v4844 = vrot.slane %v4842, 4
    %v4845 = vshll.u32 %v4662, 16
    %v4847 = vrot.slane %v4845, 5
    %v4848 = vor.u32 %v4844, %v4847
    %v4849 = vrot.slane %v4848, 4
    %v4851 = vshll.u32 %v4663, 16
    %v4853 = vrot.slane %v4851, 5
    %v4854 = vsel %vm4672, %v4849, %v4853
    %v4856 = vshrl.u32 %v4664, 16
    %v4858 = vrot.slane %v4856, 4
    %v4859 = vshll.u32 %v4664, 16
    %v4861 = vrot.slane %v4859, 5
    %v4862 = vor.u32 %v4858, %v4861
    %v4863 = vrot.slane %v4862, 4
    %v4865 = vshll.u32 %v4665, 16
    %v4867 = vrot.slane %v4865, 5
    %v4868 = vsel %vm4672, %v4863, %v4867
    %v4870 = vshrl.u32 %v4666, 16
    %v4872 = vrot.slane %v4870, 4
    %v4873 = vshll.u32 %v4666, 16
    %v4875 = vrot.slane %v4873, 5
    %v4876 = vor.u32 %v4872, %v4875
    %v4877 = vrot.slane %v4876, 4
    %v4879 = vshll.u32 %v4667, 16
    %v4881 = vrot.slane %v4879, 5
    %v4882 = vsel %vm4672, %v4877, %v4881
    %v4884 = vshrl.u32 %v4668, 16
    %v4886 = vrot.slane %v4884, 4
    %v4887 = vshll.u32 %v4668, 16
    %v4889 = vrot.slane %v4887, 5
    %v4890 = vor.u32 %v4886, %v4889
    %v4891 = vrot.slane %v4890, 4
    %v4893 = vshll.u32 %v4669, 16
    %v4895 = vrot.slane %v4893, 5
    %v4896 = vsel %vm4672, %v4891, %v4895
    %s4897 = scalar_lea.vmem %s7, 8
    %v4898 = vld [vmem:[%s4897] sm:$0xf]
    %v4899 = vld [vmem:[%s4897 + $0x4] sm:$0x3]
    %v4900 = vunpack.c.l.b16 %v4686
    %v4901 = vunpack.c.l.b16 %v4700
    %v4902 = vunpack.c.l.b16 %v4714
    %v4903 = vunpack.c.l.b16 %v4728
    %v4904 = vunpack.c.l.b16 %v4742
    %v4905 = vunpack.c.l.b16 %v4756
    %v4906 = vunpack.c.l.b16 %v4770
    %v4907 = vunpack.c.l.b16 %v4784
    %v4908 = vunpack.c.l.b16 %v4798
    %v4909 = vunpack.c.l.b16 %v4812
    %v4910 = vunpack.c.l.b16 %v4826
    %v4911 = vunpack.c.l.b16 %v4840
    %v4912 = vunpack.c.l.b16 %v4854
    %v4913 = vunpack.c.l.b16 %v4868
    %v4914 = vunpack.c.l.b16 %v4882
    %v4915 = vunpack.c.l.b16 %v4896
    %v4916 = vpack.c.b16 %v4901, %v4900
    %v4917 = vpack.c.b16 %v4903, %v4902
    %v4918 = vpack.c.b16 %v4905, %v4904
    %v4919 = vpack.c.b16 %v4907, %v4906
    %v4920 = vpack.c.b16 %v4909, %v4908
    %v4921 = vpack.c.b16 %v4911, %v4910
    %v4922 = vpack.c.b16 %v4913, %v4912
    %v4923 = vpack.c.b16 %v4915, %v4914
    %v4926 = vunpack.c.l.b16 %v4898
    %v4927 = vunpack.c.l.b16 %v4899
    %v4928 = vpack.c.b16 %v4927, %v4926
    %v4930 = vsel %vm4001, %v4916, 0
    %v4933 = vsel %vm4001, %v4917, 0
    %v4936 = vsel %vm4001, %v4918, 0
    %v4939 = vsel %vm4001, %v4919, 0
    %v4942 = vsel %vm4001, %v4920, 0
    %v4945 = vsel %vm4001, %v4921, 0
    %v4948 = vsel %vm4001, %v4922, 0
    %v4951 = vsel %vm4001, %v4923, 0
    %vm4953 = vcmask 1045504
    %v4955 = vsel %vm4953, %v4928, 0
    %4957 = vmatprep.subr.bf16.mxu0 0
    %4958 = vmatpush1.bf16.msra.mxu0 %v4955
    %4959 = vmatprep.subr.bf16.mxu0 0
    %4960 = vmatpush1.bf16.msra.mxu0 0
    %4961 = vmatprep.subr.bf16.mxu0 0
    %4962 = vmatpush1.bf16.msra.mxu0 0
    %4963 = vmatprep.subr.bf16.mxu0 0
    %4964 = vmatpush1.bf16.msra.mxu0 0
    %4965 = vmatprep.subr.bf16.mxu0 0
    %4966 = vmatpush1.bf16.msra.mxu0 0
    %4967 = vmatprep.subr.bf16.mxu0 0
    %4968 = vmatpush1.bf16.msra.mxu0 0
    %4969 = vmatprep.subr.bf16.mxu0 0
    %4970 = vmatpush1.bf16.msra.mxu0 0
    %4971 = vmatprep.subr.bf16.mxu0 0
    %4972 = vmatpush1.bf16.msra.mxu0 0
    %4973 = vmatprep.subr.bf16.mxu0 0
    %4974 = vmatpush1.bf16.msra.mxu0 0
    %4975 = vmatprep.subr.bf16.mxu0 0
    %4976 = vmatpush1.bf16.msra.mxu0 0
    %4977 = vmatprep.subr.bf16.mxu0 0
    %4978 = vmatpush1.bf16.msra.mxu0 0
    %4979 = vmatprep.subr.bf16.mxu0 0
    %4980 = vmatpush1.bf16.msra.mxu0 0
    %4981 = vmatprep.subr.bf16.mxu0 0
    %4982 = vmatpush1.bf16.msra.mxu0 0
    %4983 = vmatprep.subr.bf16.mxu0 0
    %4984 = vmatpush1.bf16.msra.mxu0 0
    %4985 = vmatprep.subr.bf16.mxu0 0
    %4986 = vmatpush1.bf16.msra.mxu0 0
    %4987 = vmatprep.subr.bf16.mxu0 0
    %4988 = vmatpush1.bf16.msra.mxu0 0
    %4989 = vmatprep.mubr.bf16.mxu0 0
    %4990 = vmatmul.mubr.bf16.gmra.mrb[0].mxu0 %v4930
    %v4991 = vpop.f32.mrb[0].mxu0
    %v4992 = vadd.f32 0.0, %v4991
    %v4993 = vpop.f32.mrb[0].mxu0
    %v4994 = vpop.f32.mrb[0].mxu0
    %v4995 = vadd.f32 0.0, %v4994
    %v4996 = vpop.f32.mrb[0].mxu0
    %4997 = vmatprep.mubr.bf16.mxu0 0
    %4998 = vmatmul.mubr.bf16.gmra.mrb[0].mxu0 %v4933
    %v4999 = vpop.f32.mrb[0].mxu0
    %v5000 = vadd.f32 0.0, %v4999
    %v5001 = vpop.f32.mrb[0].mxu0
    %v5002 = vpop.f32.mrb[0].mxu0
    %v5003 = vadd.f32 0.0, %v5002
    %v5004 = vpop.f32.mrb[0].mxu0
    %5005 = vmatprep.mubr.bf16.mxu0 0
    %5006 = vmatmul.mubr.bf16.gmra.mrb[0].mxu0 %v4936
    %v5007 = vpop.f32.mrb[0].mxu0
    %v5008 = vadd.f32 0.0, %v5007
    %v5009 = vpop.f32.mrb[0].mxu0
    %v5010 = vpop.f32.mrb[0].mxu0
    %v5011 = vadd.f32 0.0, %v5010
    %v5012 = vpop.f32.mrb[0].mxu0
    %5013 = vmatprep.mubr.bf16.mxu0 0
    %5014 = vmatmul.mubr.bf16.gmra.mrb[0].mxu0 %v4939
    %v5015 = vpop.f32.mrb[0].mxu0
    %v5016 = vadd.f32 0.0, %v5015
    %v5017 = vpop.f32.mrb[0].mxu0
    %v5018 = vpop.f32.mrb[0].mxu0
    %v5019 = vadd.f32 0.0, %v5018
    %v5020 = vpop.f32.mrb[0].mxu0
    %5021 = vmatprep.mubr.bf16.mxu0 0
    %5022 = vmatmul.mubr.bf16.gmra.mrb[0].mxu0 %v4942
    %v5023 = vpop.f32.mrb[0].mxu0
    %v5024 = vadd.f32 0.0, %v5023
    %v5025 = vpop.f32.mrb[0].mxu0
    %v5026 = vpop.f32.mrb[0].mxu0
    %v5027 = vadd.f32 0.0, %v5026
    %v5028 = vpop.f32.mrb[0].mxu0
    %5029 = vmatprep.mubr.bf16.mxu0 0
    %5030 = vmatmul.mubr.bf16.gmra.mrb[0].mxu0 %v4945
    %v5031 = vpop.f32.mrb[0].mxu0
    %v5032 = vadd.f32 0.0, %v5031
    %v5033 = vpop.f32.mrb[0].mxu0
    %v5034 = vpop.f32.mrb[0].mxu0
    %v5035 = vadd.f32 0.0, %v5034
    %v5036 = vpop.f32.mrb[0].mxu0
    %5037 = vmatprep.mubr.bf16.mxu0 0
    %5038 = vmatmul.mubr.bf16.gmra.mrb[0].mxu0 %v4948
    %v5039 = vpop.f32.mrb[0].mxu0
    %v5040 = vadd.f32 0.0, %v5039
    %v5041 = vpop.f32.mrb[0].mxu0
    %v5042 = vpop.f32.mrb[0].mxu0
    %v5043 = vadd.f32 0.0, %v5042
    %v5044 = vpop.f32.mrb[0].mxu0
    %5045 = vmatprep.mubr.bf16.mxu0 0
    %5046 = vmatmul.mubr.bf16.gmra.mrb[0].mxu0 %v4951
    %v5047 = vpop.f32.mrb[0].mxu0
    %v5048 = vadd.f32 0.0, %v5047
    %v5049 = vpop.f32.mrb[0].mxu0
    %v5050 = vpop.f32.mrb[0].mxu0
    %v5051 = vadd.f32 0.0, %v5050
    %v5052 = vpop.f32.mrb[0].mxu0
    %5053 = vdwg.mxu0
    %v5070 = vunpack.c.l.b16 %v4556
    %v5071 = vunpack.c.l.b16 %v4557
    %v5072 = vunpack.c.l.b16 %v4558
    %v5073 = vunpack.c.l.b16 %v4559
    %v5074 = vunpack.c.l.b16 %v4560
    %v5075 = vunpack.c.l.b16 %v4561
    %v5076 = vunpack.c.l.b16 %v4562
    %v5077 = vunpack.c.l.b16 %v4563
    %v5078 = vunpack.c.l.b16 %v4564
    %v5079 = vunpack.c.l.b16 %v4565
    %v5080 = vunpack.c.l.b16 %v4566
    %v5081 = vunpack.c.l.b16 %v4567
    %v5082 = vunpack.c.l.b16 %v4568
    %v5083 = vunpack.c.l.b16 %v4569
    %v5084 = vunpack.c.l.b16 %v4570
    %v5085 = vunpack.c.l.b16 %v4571
    %v5086 = vpack.c.b16 %v5071, %v5070
    %v5087 = vpack.c.b16 %v5073, %v5072
    %v5088 = vpack.c.b16 %v5075, %v5074
    %v5089 = vpack.c.b16 %v5077, %v5076
    %v5090 = vpack.c.b16 %v5079, %v5078
    %v5091 = vpack.c.b16 %v5081, %v5080
    %v5092 = vpack.c.b16 %v5083, %v5082
    %v5093 = vpack.c.b16 %v5085, %v5084
    %v5096 = vunpack.c.l.b16 %v4572
    %v5097 = vunpack.c.l.b16 %v4573
    %v5098 = vpack.c.b16 %v5097, %v5096
    %v5100 = vsel %vm4001, %v5086, 0
    %v5103 = vsel %vm4001, %v5087, 0
    %v5106 = vsel %vm4001, %v5088, 0
    %v5109 = vsel %vm4001, %v5089, 0
    %v5112 = vsel %vm4001, %v5090, 0
    %v5115 = vsel %vm4001, %v5091, 0
    %v5118 = vsel %vm4001, %v5092, 0
    %v5121 = vsel %vm4001, %v5093, 0
    %v5124 = vsel %vm4953, %v5098, 0
    %5126 = vmatprep.subr.bf16.mxu0 0
    %5127 = vmatpush1.bf16.msra.mxu0 %v5124
    %5128 = vmatprep.subr.bf16.mxu0 0
    %5129 = vmatpush1.bf16.msra.mxu0 0
    %5130 = vmatprep.subr.bf16.mxu0 0
    %5131 = vmatpush1.bf16.msra.mxu0 0
    %5132 = vmatprep.subr.bf16.mxu0 0
    %5133 = vmatpush1.bf16.msra.mxu0 0
    %5134 = vmatprep.subr.bf16.mxu0 0
    %5135 = vmatpush1.bf16.msra.mxu0 0
    %5136 = vmatprep.subr.bf16.mxu0 0
    %5137 = vmatpush1.bf16.msra.mxu0 0
    %5138 = vmatprep.subr.bf16.mxu0 0
    %5139 = vmatpush1.bf16.msra.mxu0 0
    %5140 = vmatprep.subr.bf16.mxu0 0
    %5141 = vmatpush1.bf16.msra.mxu0 0
    %5142 = vmatprep.subr.bf16.mxu0 0
    %5143 = vmatpush1.bf16.msra.mxu0 0
    %5144 = vmatprep.subr.bf16.mxu0 0
    %5145 = vmatpush1.bf16.msra.mxu0 0
    %5146 = vmatprep.subr.bf16.mxu0 0
    %5147 = vmatpush1.bf16.msra.mxu0 0
    %5148 = vmatprep.subr.bf16.mxu0 0
    %5149 = vmatpush1.bf16.msra.mxu0 0
    %5150 = vmatprep.subr.bf16.mxu0 0
    %5151 = vmatpush1.bf16.msra.mxu0 0
    %5152 = vmatprep.subr.bf16.mxu0 0
    %5153 = vmatpush1.bf16.msra.mxu0 0
    %5154 = vmatprep.subr.bf16.mxu0 0
    %5155 = vmatpush1.bf16.msra.mxu0 0
    %5156 = vmatprep.subr.bf16.mxu0 0
    %5157 = vmatpush1.bf16.msra.mxu0 0
    %5158 = vmatprep.mubr.bf16.mxu0 0
    %5159 = vmatmul.mubr.bf16.gmra.mrb[0].mxu0 %v5100
    %v5160 = vpop.f32.mrb[0].mxu0
    %v5161 = vadd.f32 %v4992, %v5160
    %v5162 = vpop.f32.mrb[0].mxu0
    %v5163 = vpop.f32.mrb[0].mxu0
    %v5164 = vadd.f32 %v4995, %v5163
    %v5165 = vpop.f32.mrb[0].mxu0
    %5166 = vmatprep.mubr.bf16.mxu0 0
    %5167 = vmatmul.mubr.bf16.gmra.mrb[0].mxu0 %v5103
    %v5168 = vpop.f32.mrb[0].mxu0
    %v5169 = vadd.f32 %v5000, %v5168
    %v5170 = vpop.f32.mrb[0].mxu0
    %v5171 = vpop.f32.mrb[0].mxu0
    %v5172 = vadd.f32 %v5003, %v5171
    %v5173 = vpop.f32.mrb[0].mxu0
    %5174 = vmatprep.mubr.bf16.mxu0 0
    %5175 = vmatmul.mubr.bf16.gmra.mrb[0].mxu0 %v5106
    %v5176 = vpop.f32.mrb[0].mxu0
    %v5177 = vadd.f32 %v5008, %v5176
    %v5178 = vpop.f32.mrb[0].mxu0
    %v5179 = vpop.f32.mrb[0].mxu0
    %v5180 = vadd.f32 %v5011, %v5179
    %v5181 = vpop.f32.mrb[0].mxu0
    %5182 = vmatprep.mubr.bf16.mxu0 0
    %5183 = vmatmul.mubr.bf16.gmra.mrb[0].mxu0 %v5109
    %v5184 = vpop.f32.mrb[0].mxu0
    %v5185 = vadd.f32 %v5016, %v5184
    %v5186 = vpop.f32.mrb[0].mxu0
    %v5187 = vpop.f32.mrb[0].mxu0
    %v5188 = vadd.f32 %v5019, %v5187
    %v5189 = vpop.f32.mrb[0].mxu0
    %5190 = vmatprep.mubr.bf16.mxu0 0
    %5191 = vmatmul.mubr.bf16.gmra.mrb[0].mxu0 %v5112
    %v5192 = vpop.f32.mrb[0].mxu0
    %v5193 = vadd.f32 %v5024, %v5192
    %v5194 = vpop.f32.mrb[0].mxu0
    %v5195 = vpop.f32.mrb[0].mxu0
    %v5196 = vadd.f32 %v5027, %v5195
    %v5197 = vpop.f32.mrb[0].mxu0
    %5198 = vmatprep.mubr.bf16.mxu0 0
    %5199 = vmatmul.mubr.bf16.gmra.mrb[0].mxu0 %v5115
    %v5200 = vpop.f32.mrb[0].mxu0
    %v5201 = vadd.f32 %v5032, %v5200
    %v5202 = vpop.f32.mrb[0].mxu0
    %v5203 = vpop.f32.mrb[0].mxu0
    %v5204 = vadd.f32 %v5035, %v5203
    %v5205 = vpop.f32.mrb[0].mxu0
    %5206 = vmatprep.mubr.bf16.mxu0 0
    %5207 = vmatmul.mubr.bf16.gmra.mrb[0].mxu0 %v5118
    %v5208 = vpop.f32.mrb[0].mxu0
    %v5209 = vadd.f32 %v5040, %v5208
    %v5210 = vpop.f32.mrb[0].mxu0
    %v5211 = vpop.f32.mrb[0].mxu0
    %v5212 = vadd.f32 %v5043, %v5211
    %v5213 = vpop.f32.mrb[0].mxu0
    %5214 = vmatprep.mubr.bf16.mxu0 0
    %5215 = vmatmul.mubr.bf16.gmra.mrb[0].mxu0 %v5121
    %v5216 = vpop.f32.mrb[0].mxu0
    %v5217 = vadd.f32 %v5048, %v5216
    %v5218 = vpop.f32.mrb[0].mxu0
    %v5219 = vpop.f32.mrb[0].mxu0
    %v5220 = vadd.f32 %v5051, %v5219
    %v5221 = vpop.f32.mrb[0].mxu0
    %5222 = vdwg.mxu0
    %v5223 = vld [vmem:[#allocation4] sm:$0x1e]
    %v5224 = vld [vmem:[#allocation4 + $0x8] sm:$0x1e]
    %v5225 = vld [vmem:[#allocation4 + $0x10] sm:$0x1e]
    %v5226 = vld [vmem:[#allocation4 + $0x18] sm:$0x1e]
    %v5227 = vld [vmem:[#allocation4 + $0x20] sm:$0x1e]
    %v5228 = vld [vmem:[#allocation4 + $0x28] sm:$0x1e]
    %v5229 = vld [vmem:[#allocation4 + $0x30] sm:$0x1e]
    %v5230 = vld [vmem:[#allocation4 + $0x38] sm:$0x1e]
    %v5231 = vld [vmem:[#allocation4 + $0x50] sm:$0x1e]
    %v5232 = vld [vmem:[#allocation4 + $0x58] sm:$0x1e]
    %v5233 = vld [vmem:[#allocation4 + $0x60] sm:$0x1e]
    %v5234 = vld [vmem:[#allocation4 + $0x68] sm:$0x1e]
    %v5235 = vld [vmem:[#allocation4 + $0x70] sm:$0x1e]
    %v5236 = vld [vmem:[#allocation4 + $0x78] sm:$0x1e]
    %v5237 = vld [vmem:[#allocation4 + $0x80] sm:$0x1e]
    %v5238 = vld [vmem:[#allocation4 + $0x88] sm:$0x1e]
    %v5255 = vunpack.c.l.b16 %v5223
    %v5256 = vunpack.c.h.b16 %v5223
    %v5257 = vunpack.c.l.b16 %v5224
    %v5258 = vunpack.c.h.b16 %v5224
    %v5259 = vunpack.c.l.b16 %v5225
    %v5260 = vunpack.c.h.b16 %v5225
    %v5261 = vunpack.c.l.b16 %v5226
    %v5262 = vunpack.c.h.b16 %v5226
    %v5263 = vunpack.c.l.b16 %v5227
    %v5264 = vunpack.c.h.b16 %v5227
    %v5265 = vunpack.c.l.b16 %v5228
    %v5266 = vunpack.c.h.b16 %v5228
    %v5267 = vunpack.c.l.b16 %v5229
    %v5268 = vunpack.c.h.b16 %v5229
    %v5269 = vunpack.c.l.b16 %v5230
    %v5270 = vunpack.c.h.b16 %v5230
    %v5271 = vunpack.c.l.b16 %v5231
    %v5272 = vunpack.c.h.b16 %v5231
    %v5273 = vunpack.c.l.b16 %v5232
    %v5274 = vunpack.c.h.b16 %v5232
    %v5275 = vunpack.c.l.b16 %v5233
    %v5276 = vunpack.c.h.b16 %v5233
    %v5277 = vunpack.c.l.b16 %v5234
    %v5278 = vunpack.c.h.b16 %v5234
    %v5279 = vunpack.c.l.b16 %v5235
    %v5280 = vunpack.c.h.b16 %v5235
    %v5281 = vunpack.c.l.b16 %v5236
    %v5282 = vunpack.c.h.b16 %v5236
    %v5283 = vunpack.c.l.b16 %v5237
    %v5284 = vunpack.c.h.b16 %v5237
    %v5285 = vunpack.c.l.b16 %v5238
    %v5286 = vunpack.c.h.b16 %v5238
    %v5287 = vpack.c.b16 %v5255, %v5255
    %v5288 = vpack.c.b16 %v5256, %v5256
    %v5289 = vpack.c.b16 %v5257, %v5257
    %v5290 = vpack.c.b16 %v5258, %v5258
    %v5291 = vpack.c.b16 %v5259, %v5259
    %v5292 = vpack.c.b16 %v5260, %v5260
    %v5293 = vpack.c.b16 %v5261, %v5261
    %v5294 = vpack.c.b16 %v5262, %v5262
    %v5295 = vpack.c.b16 %v5263, %v5263
    %v5296 = vpack.c.b16 %v5264, %v5264
    %v5297 = vpack.c.b16 %v5265, %v5265
    %v5298 = vpack.c.b16 %v5266, %v5266
    %v5299 = vpack.c.b16 %v5267, %v5267
    %v5300 = vpack.c.b16 %v5268, %v5268
    %v5301 = vpack.c.b16 %v5269, %v5269
    %v5302 = vpack.c.b16 %v5270, %v5270
    %v5303 = vpack.c.b16 %v5271, %v5271
    %v5304 = vpack.c.b16 %v5272, %v5272
    %v5305 = vpack.c.b16 %v5273, %v5273
    %v5306 = vpack.c.b16 %v5274, %v5274
    %v5307 = vpack.c.b16 %v5275, %v5275
    %v5308 = vpack.c.b16 %v5276, %v5276
    %v5309 = vpack.c.b16 %v5277, %v5277
    %v5310 = vpack.c.b16 %v5278, %v5278
    %v5311 = vpack.c.b16 %v5279, %v5279
    %v5312 = vpack.c.b16 %v5280, %v5280
    %v5313 = vpack.c.b16 %v5281, %v5281
    %v5314 = vpack.c.b16 %v5282, %v5282
    %v5315 = vpack.c.b16 %v5283, %v5283
    %v5316 = vpack.c.b16 %v5284, %v5284
    %v5317 = vpack.c.b16 %v5285, %v5285
    %v5318 = vpack.c.b16 %v5286, %v5286
    %vm5319 = vcmask 1042432
    %vm5320 = vcmask 1046532
    %vm5321 = vmor %vm5319, %vm5320
    %v5322 = vrot.slane %v5287, 5
    %v5323 = vrot.slane %v5322, 4
    %v5324 = vrot.slane %v5288, 5
    %v5325 = vsel %vm5321, %v5323, %v5324
    %v5326 = vrot.slane %v5289, 5
    %v5327 = vrot.slane %v5326, 4
    %v5328 = vrot.slane %v5290, 5
    %v5329 = vsel %vm5321, %v5327, %v5328
    %v5330 = vrot.slane %v5291, 5
    %v5331 = vrot.slane %v5330, 4
    %v5332 = vrot.slane %v5292, 5
    %v5333 = vsel %vm5321, %v5331, %v5332
    %v5334 = vrot.slane %v5293, 5
    %v5335 = vrot.slane %v5334, 4
    %v5336 = vrot.slane %v5294, 5
    %v5337 = vsel %vm5321, %v5335, %v5336
    %v5338 = vrot.slane %v5295, 5
    %v5339 = vrot.slane %v5338, 4
    %v5340 = vrot.slane %v5296, 5
    %v5341 = vsel %vm5321, %v5339, %v5340
    %v5342 = vrot.slane %v5297, 5
    %v5343 = vrot.slane %v5342, 4
    %v5344 = vrot.slane %v5298, 5
    %v5345 = vsel %vm5321, %v5343, %v5344
    %v5346 = vrot.slane %v5299, 5
    %v5347 = vrot.slane %v5346, 4
    %v5348 = vrot.slane %v5300, 5
    %v5349 = vsel %vm5321, %v5347, %v5348
    %v5350 = vrot.slane %v5301, 5
    %v5351 = vrot.slane %v5350, 4
    %v5352 = vrot.slane %v5302, 5
    %v5353 = vsel %vm5321, %v5351, %v5352
    %v5354 = vrot.slane %v5303, 5
    %v5355 = vrot.slane %v5354, 4
    %v5356 = vrot.slane %v5304, 5
    %v5357 = vsel %vm5321, %v5355, %v5356
    %v5358 = vrot.slane %v5305, 5
    %v5359 = vrot.slane %v5358, 4
    %v5360 = vrot.slane %v5306, 5
    %v5361 = vsel %vm5321, %v5359, %v5360
    %v5362 = vrot.slane %v5307, 5
    %v5363 = vrot.slane %v5362, 4
    %v5364 = vrot.slane %v5308, 5
    %v5365 = vsel %vm5321, %v5363, %v5364
    %v5366 = vrot.slane %v5309, 5
    %v5367 = vrot.slane %v5366, 4
    %v5368 = vrot.slane %v5310, 5
    %v5369 = vsel %vm5321, %v5367, %v5368
    %v5370 = vrot.slane %v5311, 5
    %v5371 = vrot.slane %v5370, 4
    %v5372 = vrot.slane %v5312, 5
    %v5373 = vsel %vm5321, %v5371, %v5372
    %v5374 = vrot.slane %v5313, 5
    %v5375 = vrot.slane %v5374, 4
    %v5376 = vrot.slane %v5314, 5
    %v5377 = vsel %vm5321, %v5375, %v5376
    %v5378 = vrot.slane %v5315, 5
    %v5379 = vrot.slane %v5378, 4
    %v5380 = vrot.slane %v5316, 5
    %v5381 = vsel %vm5321, %v5379, %v5380
    %v5382 = vrot.slane %v5317, 5
    %v5383 = vrot.slane %v5382, 4
    %v5384 = vrot.slane %v5318, 5
    %v5385 = vsel %vm5321, %v5383, %v5384
    %s5386 = scalar_lea.vmem %s7, 16
    %v5387 = vld [vmem:[%s5386] sm:$0xf]
    %v5388 = vld [vmem:[%s5386 + $0x4] sm:$0x3]
    %v5389 = vunpack.c.l.b16 %v5325
    %v5390 = vunpack.c.l.b16 %v5329
    %v5391 = vunpack.c.l.b16 %v5333
    %v5392 = vunpack.c.l.b16 %v5337
    %v5393 = vunpack.c.l.b16 %v5341
    %v5394 = vunpack.c.l.b16 %v5345
    %v5395 = vunpack.c.l.b16 %v5349
    %v5396 = vunpack.c.l.b16 %v5353
    %v5397 = vunpack.c.l.b16 %v5357
    %v5398 = vunpack.c.l.b16 %v5361
    %v5399 = vunpack.c.l.b16 %v5365
    %v5400 = vunpack.c.l.b16 %v5369
    %v5401 = vunpack.c.l.b16 %v5373
    %v5402 = vunpack.c.l.b16 %v5377
    %v5403 = vunpack.c.l.b16 %v5381
    %v5404 = vunpack.c.l.b16 %v5385
    %v5405 = vpack.c.b16 %v5390, %v5389
    %v5406 = vpack.c.b16 %v5392, %v5391
    %v5407 = vpack.c.b16 %v5394, %v5393
    %v5408 = vpack.c.b16 %v5396, %v5395
    %v5409 = vpack.c.b16 %v5398, %v5397
    %v5410 = vpack.c.b16 %v5400, %v5399
    %v5411 = vpack.c.b16 %v5402, %v5401
    %v5412 = vpack.c.b16 %v5404, %v5403
    %v5415 = vunpack.c.l.b16 %v5387
    %v5416 = vunpack.c.l.b16 %v5388
    %v5417 = vpack.c.b16 %v5416, %v5415
    %v5419 = vsel %vm4001, %v5405, 0
    %v5422 = vsel %vm4001, %v5406, 0
    %v5425 = vsel %vm4001, %v5407, 0
    %v5428 = vsel %vm4001, %v5408, 0
    %v5431 = vsel %vm4001, %v5409, 0
    %v5434 = vsel %vm4001, %v5410, 0
    %v5437 = vsel %vm4001, %v5411, 0
    %v5440 = vsel %vm4001, %v5412, 0
    %v5443 = vsel %vm4953, %v5417, 0
    %5445 = vmatprep.subr.bf16.mxu0 0
    %5446 = vmatpush1.bf16.msra.mxu0 %v5443
    %5447 = vmatprep.subr.bf16.mxu0 0
    %5448 = vmatpush1.bf16.msra.mxu0 0
    %5449 = vmatprep.subr.bf16.mxu0 0
    %5450 = vmatpush1.bf16.msra.mxu0 0
    %5451 = vmatprep.subr.bf16.mxu0 0
    %5452 = vmatpush1.bf16.msra.mxu0 0
    %5453 = vmatprep.subr.bf16.mxu0 0
    %5454 = vmatpush1.bf16.msra.mxu0 0
    %5455 = vmatprep.subr.bf16.mxu0 0
    %5456 = vmatpush1.bf16.msra.mxu0 0
    %5457 = vmatprep.subr.bf16.mxu0 0
    %5458 = vmatpush1.bf16.msra.mxu0 0
    %5459 = vmatprep.subr.bf16.mxu0 0
    %5460 = vmatpush1.bf16.msra.mxu0 0
    %5461 = vmatprep.subr.bf16.mxu0 0
    %5462 = vmatpush1.bf16.msra.mxu0 0
    %5463 = vmatprep.subr.bf16.mxu0 0
    %5464 = vmatpush1.bf16.msra.mxu0 0
    %5465 = vmatprep.subr.bf16.mxu0 0
    %5466 = vmatpush1.bf16.msra.mxu0 0
    %5467 = vmatprep.subr.bf16.mxu0 0
    %5468 = vmatpush1.bf16.msra.mxu0 0
    %5469 = vmatprep.subr.bf16.mxu0 0
    %5470 = vmatpush1.bf16.msra.mxu0 0
    %5471 = vmatprep.subr.bf16.mxu0 0
    %5472 = vmatpush1.bf16.msra.mxu0 0
    %5473 = vmatprep.subr.bf16.mxu0 0
    %5474 = vmatpush1.bf16.msra.mxu0 0
    %5475 = vmatprep.subr.bf16.mxu0 0
    %5476 = vmatpush1.bf16.msra.mxu0 0
    %5477 = vmatprep.mubr.bf16.mxu0 0
    %5478 = vmatmul.mubr.bf16.gmra.mrb[0].mxu0 %v5419
    %v5479 = vpop.f32.mrb[0].mxu0
    %v5480 = vadd.f32 0.0, %v5479
    %v5481 = vpop.f32.mrb[0].mxu0
    %v5482 = vpop.f32.mrb[0].mxu0
    %v5483 = vadd.f32 0.0, %v5482
    %v5484 = vpop.f32.mrb[0].mxu0
    %5485 = vmatprep.mubr.bf16.mxu0 0
    %5486 = vmatmul.mubr.bf16.gmra.mrb[0].mxu0 %v5422
    %v5487 = vpop.f32.mrb[0].mxu0
    %v5488 = vadd.f32 0.0, %v5487
    %v5489 = vpop.f32.mrb[0].mxu0
    %v5490 = vpop.f32.mrb[0].mxu0
    %v5491 = vadd.f32 0.0, %v5490
    %v5492 = vpop.f32.mrb[0].mxu0
    %5493 = vmatprep.mubr.bf16.mxu0 0
    %5494 = vmatmul.mubr.bf16.gmra.mrb[0].mxu0 %v5425
    %v5495 = vpop.f32.mrb[0].mxu0
    %v5496 = vadd.f32 0.0, %v5495
    %v5497 = vpop.f32.mrb[0].mxu0
    %v5498 = vpop.f32.mrb[0].mxu0
    %v5499 = vadd.f32 0.0, %v5498
    %v5500 = vpop.f32.mrb[0].mxu0
    %5501 = vmatprep.mubr.bf16.mxu0 0
    %5502 = vmatmul.mubr.bf16.gmra.mrb[0].mxu0 %v5428
    %v5503 = vpop.f32.mrb[0].mxu0
    %v5504 = vadd.f32 0.0, %v5503
    %v5505 = vpop.f32.mrb[0].mxu0
    %v5506 = vpop.f32.mrb[0].mxu0
    %v5507 = vadd.f32 0.0, %v5506
    %v5508 = vpop.f32.mrb[0].mxu0
    %5509 = vmatprep.mubr.bf16.mxu0 0
    %5510 = vmatmul.mubr.bf16.gmra.mrb[0].mxu0 %v5431
    %v5511 = vpop.f32.mrb[0].mxu0
    %v5512 = vadd.f32 0.0, %v5511
    %v5513 = vpop.f32.mrb[0].mxu0
    %v5514 = vpop.f32.mrb[0].mxu0
    %v5515 = vadd.f32 0.0, %v5514
    %v5516 = vpop.f32.mrb[0].mxu0
    %5517 = vmatprep.mubr.bf16.mxu0 0
    %5518 = vmatmul.mubr.bf16.gmra.mrb[0].mxu0 %v5434
    %v5519 = vpop.f32.mrb[0].mxu0
    %v5520 = vadd.f32 0.0, %v5519
    %v5521 = vpop.f32.mrb[0].mxu0
    %v5522 = vpop.f32.mrb[0].mxu0
    %v5523 = vadd.f32 0.0, %v5522
    %v5524 = vpop.f32.mrb[0].mxu0
    %5525 = vmatprep.mubr.bf16.mxu0 0
    %5526 = vmatmul.mubr.bf16.gmra.mrb[0].mxu0 %v5437
    %v5527 = vpop.f32.mrb[0].mxu0
    %v5528 = vadd.f32 0.0, %v5527
    %v5529 = vpop.f32.mrb[0].mxu0
    %v5530 = vpop.f32.mrb[0].mxu0
    %v5531 = vadd.f32 0.0, %v5530
    %v5532 = vpop.f32.mrb[0].mxu0
    %5533 = vmatprep.mubr.bf16.mxu0 0
    %5534 = vmatmul.mubr.bf16.gmra.mrb[0].mxu0 %v5440
    %v5535 = vpop.f32.mrb[0].mxu0
    %v5536 = vadd.f32 0.0, %v5535
    %v5537 = vpop.f32.mrb[0].mxu0
    %v5538 = vpop.f32.mrb[0].mxu0
    %v5539 = vadd.f32 0.0, %v5538
    %v5540 = vpop.f32.mrb[0].mxu0
    %5541 = vdwg.mxu0
    %v5542 = vadd.f32 %v5161, %v5480
    %v5543 = vadd.f32 %v5164, %v5483
    %v5544 = vadd.f32 %v5169, %v5488
    %v5545 = vadd.f32 %v5172, %v5491
    %v5546 = vadd.f32 %v5177, %v5496
    %v5547 = vadd.f32 %v5180, %v5499
    %v5548 = vadd.f32 %v5185, %v5504
    %v5549 = vadd.f32 %v5188, %v5507
    %v5550 = vadd.f32 %v5193, %v5512
    %v5551 = vadd.f32 %v5196, %v5515
    %v5552 = vadd.f32 %v5201, %v5520
    %v5553 = vadd.f32 %v5204, %v5523
    %v5554 = vadd.f32 %v5209, %v5528
    %v5555 = vadd.f32 %v5212, %v5531
    %v5556 = vadd.f32 %v5217, %v5536
    %v5557 = vadd.f32 %v5220, %v5539
    %v5558 = vld [vmem:[%s4277] sm:$0xf]
    %v5559 = vld [vmem:[%s4277 + $0x8] sm:$0xf]
    %v5560 = vld [vmem:[%s4277 + $0x10] sm:$0xf]
    %v5561 = vld [vmem:[%s4277 + $0x18] sm:$0xf]
    %v5562 = vld [vmem:[%s4277 + $0x20] sm:$0xf]
    %v5563 = vld [vmem:[%s4277 + $0x28] sm:$0xf]
    %v5564 = vld [vmem:[%s4277 + $0x30] sm:$0xf]
    %v5565 = vld [vmem:[%s4277 + $0x38] sm:$0xf]
    %v5566 = vld [vmem:[%s4277 + $0x50] sm:$0xf]
    %v5567 = vld [vmem:[%s4277 + $0x58] sm:$0xf]
    %v5568 = vld [vmem:[%s4277 + $0x60] sm:$0xf]
    %v5569 = vld [vmem:[%s4277 + $0x68] sm:$0xf]
    %v5570 = vld [vmem:[%s4277 + $0x70] sm:$0xf]
    %v5571 = vld [vmem:[%s4277 + $0x78] sm:$0xf]
    %v5572 = vld [vmem:[%s4277 + $0x80] sm:$0xf]
    %v5573 = vld [vmem:[%s4277 + $0x88] sm:$0xf]
    %s5574 = scalar_lea.vmem %s7, 24
    %v5575 = vld [vmem:[%s5574] sm:$0xf]
    %v5576 = vld [vmem:[%s5574 + $0x4] sm:$0x3]
    %v5593 = vunpack.c.l.b16 %v5558
    %v5594 = vunpack.c.l.b16 %v5559
    %v5595 = vunpack.c.l.b16 %v5560
    %v5596 = vunpack.c.l.b16 %v5561
    %v5597 = vunpack.c.l.b16 %v5562
    %v5598 = vunpack.c.l.b16 %v5563
    %v5599 = vunpack.c.l.b16 %v5564
    %v5600 = vunpack.c.l.b16 %v5565
    %v5601 = vunpack.c.l.b16 %v5566
    %v5602 = vunpack.c.l.b16 %v5567
    %v5603 = vunpack.c.l.b16 %v5568
    %v5604 = vunpack.c.l.b16 %v5569
    %v5605 = vunpack.c.l.b16 %v5570
    %v5606 = vunpack.c.l.b16 %v5571
    %v5607 = vunpack.c.l.b16 %v5572
    %v5608 = vunpack.c.l.b16 %v5573
    %v5609 = vpack.c.b16 %v5594, %v5593
    %v5610 = vpack.c.b16 %v5596, %v5595
    %v5611 = vpack.c.b16 %v5598, %v5597
    %v5612 = vpack.c.b16 %v5600, %v5599
    %v5613 = vpack.c.b16 %v5602, %v5601
    %v5614 = vpack.c.b16 %v5604, %v5603
    %v5615 = vpack.c.b16 %v5606, %v5605
    %v5616 = vpack.c.b16 %v5608, %v5607
    %v5619 = vunpack.c.l.b16 %v5575
    %v5620 = vunpack.c.l.b16 %v5576
    %v5621 = vpack.c.b16 %v5620, %v5619
    %v5623 = vsel %vm4001, %v5609, 0
    %v5626 = vsel %vm4001, %v5610, 0
    %v5629 = vsel %vm4001, %v5611, 0
    %v5632 = vsel %vm4001, %v5612, 0
    %v5635 = vsel %vm4001, %v5613, 0
    %v5638 = vsel %vm4001, %v5614, 0
    %v5641 = vsel %vm4001, %v5615, 0
    %v5644 = vsel %vm4001, %v5616, 0
    %v5647 = vsel %vm4953, %v5621, 0
    %5649 = vmatprep.subr.bf16.mxu0 0
    %5650 = vmatpush1.bf16.msra.mxu0 %v5647
    %5651 = vmatprep.subr.bf16.mxu0 0
    %5652 = vmatpush1.bf16.msra.mxu0 0
    %5653 = vmatprep.subr.bf16.mxu0 0
    %5654 = vmatpush1.bf16.msra.mxu0 0
    %5655 = vmatprep.subr.bf16.mxu0 0
    %5656 = vmatpush1.bf16.msra.mxu0 0
    %5657 = vmatprep.subr.bf16.mxu0 0
    %5658 = vmatpush1.bf16.msra.mxu0 0
    %5659 = vmatprep.subr.bf16.mxu0 0
    %5660 = vmatpush1.bf16.msra.mxu0 0
    %5661 = vmatprep.subr.bf16.mxu0 0
    %5662 = vmatpush1.bf16.msra.mxu0 0
    %5663 = vmatprep.subr.bf16.mxu0 0
    %5664 = vmatpush1.bf16.msra.mxu0 0
    %5665 = vmatprep.subr.bf16.mxu0 0
    %5666 = vmatpush1.bf16.msra.mxu0 0
    %5667 = vmatprep.subr.bf16.mxu0 0
    %5668 = vmatpush1.bf16.msra.mxu0 0
    %5669 = vmatprep.subr.bf16.mxu0 0
    %5670 = vmatpush1.bf16.msra.mxu0 0
    %5671 = vmatprep.subr.bf16.mxu0 0
    %5672 = vmatpush1.bf16.msra.mxu0 0
    %5673 = vmatprep.subr.bf16.mxu0 0
    %5674 = vmatpush1.bf16.msra.mxu0 0
    %5675 = vmatprep.subr.bf16.mxu0 0
    %5676 = vmatpush1.bf16.msra.mxu0 0
    %5677 = vmatprep.subr.bf16.mxu0 0
    %5678 = vmatpush1.bf16.msra.mxu0 0
    %5679 = vmatprep.subr.bf16.mxu0 0
    %5680 = vmatpush1.bf16.msra.mxu0 0
    %5681 = vmatprep.mubr.bf16.mxu0 0
    %5682 = vmatmul.mubr.bf16.gmra.mrb[0].mxu0 %v5623
    %v5683 = vpop.f32.mrb[0].mxu0
    %v5684 = vadd.f32 0.0, %v5683
    %v5685 = vpop.f32.mrb[0].mxu0
    %v5686 = vpop.f32.mrb[0].mxu0
    %v5687 = vadd.f32 0.0, %v5686
    %v5688 = vpop.f32.mrb[0].mxu0
    %5689 = vmatprep.mubr.bf16.mxu0 0
    %5690 = vmatmul.mubr.bf16.gmra.mrb[0].mxu0 %v5626
    %v5691 = vpop.f32.mrb[0].mxu0
    %v5692 = vadd.f32 0.0, %v5691
    %v5693 = vpop.f32.mrb[0].mxu0
    %v5694 = vpop.f32.mrb[0].mxu0
    %v5695 = vadd.f32 0.0, %v5694
    %v5696 = vpop.f32.mrb[0].mxu0
    %5697 = vmatprep.mubr.bf16.mxu0 0
    %5698 = vmatmul.mubr.bf16.gmra.mrb[0].mxu0 %v5629
    %v5699 = vpop.f32.mrb[0].mxu0
    %v5700 = vadd.f32 0.0, %v5699
    %v5701 = vpop.f32.mrb[0].mxu0
    %v5702 = vpop.f32.mrb[0].mxu0
    %v5703 = vadd.f32 0.0, %v5702
    %v5704 = vpop.f32.mrb[0].mxu0
    %5705 = vmatprep.mubr.bf16.mxu0 0
    %5706 = vmatmul.mubr.bf16.gmra.mrb[0].mxu0 %v5632
    %v5707 = vpop.f32.mrb[0].mxu0
    %v5708 = vadd.f32 0.0, %v5707
    %v5709 = vpop.f32.mrb[0].mxu0
    %v5710 = vpop.f32.mrb[0].mxu0
    %v5711 = vadd.f32 0.0, %v5710
    %v5712 = vpop.f32.mrb[0].mxu0
    %5713 = vmatprep.mubr.bf16.mxu0 0
    %5714 = vmatmul.mubr.bf16.gmra.mrb[0].mxu0 %v5635
    %v5715 = vpop.f32.mrb[0].mxu0
    %v5716 = vadd.f32 0.0, %v5715
    %v5717 = vpop.f32.mrb[0].mxu0
    %v5718 = vpop.f32.mrb[0].mxu0
    %v5719 = vadd.f32 0.0, %v5718
    %v5720 = vpop.f32.mrb[0].mxu0
    %5721 = vmatprep.mubr.bf16.mxu0 0
    %5722 = vmatmul.mubr.bf16.gmra.mrb[0].mxu0 %v5638
    %v5723 = vpop.f32.mrb[0].mxu0
    %v5724 = vadd.f32 0.0, %v5723
    %v5725 = vpop.f32.mrb[0].mxu0
    %v5726 = vpop.f32.mrb[0].mxu0
    %v5727 = vadd.f32 0.0, %v5726
    %v5728 = vpop.f32.mrb[0].mxu0
    %5729 = vmatprep.mubr.bf16.mxu0 0
    %5730 = vmatmul.mubr.bf16.gmra.mrb[0].mxu0 %v5641
    %v5731 = vpop.f32.mrb[0].mxu0
    %v5732 = vadd.f32 0.0, %v5731
    %v5733 = vpop.f32.mrb[0].mxu0
    %v5734 = vpop.f32.mrb[0].mxu0
    %v5735 = vadd.f32 0.0, %v5734
    %v5736 = vpop.f32.mrb[0].mxu0
    %5737 = vmatprep.mubr.bf16.mxu0 0
    %5738 = vmatmul.mubr.bf16.gmra.mrb[0].mxu0 %v5644
    %v5739 = vpop.f32.mrb[0].mxu0
    %v5740 = vadd.f32 0.0, %v5739
    %v5741 = vpop.f32.mrb[0].mxu0
    %v5742 = vpop.f32.mrb[0].mxu0
    %v5743 = vadd.f32 0.0, %v5742
    %v5744 = vpop.f32.mrb[0].mxu0
    %5745 = vdwg.mxu0
    %v5746 = vadd.f32 %v5542, %v5684
    %v5747 = vadd.f32 %v5543, %v5687
    %v5748 = vadd.f32 %v5544, %v5692
    %v5749 = vadd.f32 %v5545, %v5695
    %v5750 = vadd.f32 %v5546, %v5700
    %v5751 = vadd.f32 %v5547, %v5703
    %v5752 = vadd.f32 %v5548, %v5708
    %v5753 = vadd.f32 %v5549, %v5711
    %v5754 = vadd.f32 %v5550, %v5716
    %v5755 = vadd.f32 %v5551, %v5719
    %v5756 = vadd.f32 %v5552, %v5724
    %v5757 = vadd.f32 %v5553, %v5727
    %v5758 = vadd.f32 %v5554, %v5732
    %v5759 = vadd.f32 %v5555, %v5735
    %v5760 = vadd.f32 %v5556, %v5740
    %v5761 = vadd.f32 %v5557, %v5743
    %v5762 = vld [vmem:[%s4277] sm:$0x1f]
    %v5763 = vld [vmem:[%s4277 + $0x8] sm:$0x1f]
    %v5764 = vld [vmem:[%s4277 + $0x10] sm:$0x1f]
    %v5765 = vld [vmem:[%s4277 + $0x18] sm:$0x1f]
    %v5766 = vld [vmem:[%s4277 + $0x20] sm:$0x1f]
    %v5767 = vld [vmem:[%s4277 + $0x28] sm:$0x1f]
    %v5768 = vld [vmem:[%s4277 + $0x30] sm:$0x1f]
    %v5769 = vld [vmem:[%s4277 + $0x38] sm:$0x1f]
    %v5770 = vld [vmem:[%s4277 + $0x50] sm:$0x1f]
    %v5771 = vld [vmem:[%s4277 + $0x58] sm:$0x1f]
    %v5772 = vld [vmem:[%s4277 + $0x60] sm:$0x1f]
    %v5773 = vld [vmem:[%s4277 + $0x68] sm:$0x1f]
    %v5774 = vld [vmem:[%s4277 + $0x70] sm:$0x1f]
    %v5775 = vld [vmem:[%s4277 + $0x78] sm:$0x1f]
    %v5776 = vld [vmem:[%s4277 + $0x80] sm:$0x1f]
    %v5777 = vld [vmem:[%s4277 + $0x88] sm:$0x1f]
    %v5794 = vunpack.c.l.b16 %v5762
    %v5795 = vunpack.c.h.b16 %v5762
    %v5796 = vunpack.c.l.b16 %v5763
    %v5797 = vunpack.c.h.b16 %v5763
    %v5798 = vunpack.c.l.b16 %v5764
    %v5799 = vunpack.c.h.b16 %v5764
    %v5800 = vunpack.c.l.b16 %v5765
    %v5801 = vunpack.c.h.b16 %v5765
    %v5802 = vunpack.c.l.b16 %v5766
    %v5803 = vunpack.c.h.b16 %v5766
    %v5804 = vunpack.c.l.b16 %v5767
    %v5805 = vunpack.c.h.b16 %v5767
    %v5806 = vunpack.c.l.b16 %v5768
    %v5807 = vunpack.c.h.b16 %v5768
    %v5808 = vunpack.c.l.b16 %v5769
    %v5809 = vunpack.c.h.b16 %v5769
    %v5810 = vunpack.c.l.b16 %v5770
    %v5811 = vunpack.c.h.b16 %v5770
    %v5812 = vunpack.c.l.b16 %v5771
    %v5813 = vunpack.c.h.b16 %v5771
    %v5814 = vunpack.c.l.b16 %v5772
    %v5815 = vunpack.c.h.b16 %v5772
    %v5816 = vunpack.c.l.b16 %v5773
    %v5817 = vunpack.c.h.b16 %v5773
    %v5818 = vunpack.c.l.b16 %v5774
    %v5819 = vunpack.c.h.b16 %v5774
    %v5820 = vunpack.c.l.b16 %v5775
    %v5821 = vunpack.c.h.b16 %v5775
    %v5822 = vunpack.c.l.b16 %v5776
    %v5823 = vunpack.c.h.b16 %v5776
    %v5824 = vunpack.c.l.b16 %v5777
    %v5825 = vunpack.c.h.b16 %v5777
    %v5826 = vpack.c.b16 %v5794, %v5794
    %v5827 = vpack.c.b16 %v5795, %v5795
    %v5828 = vpack.c.b16 %v5796, %v5796
    %v5829 = vpack.c.b16 %v5797, %v5797
    %v5830 = vpack.c.b16 %v5798, %v5798
    %v5831 = vpack.c.b16 %v5799, %v5799
    %v5832 = vpack.c.b16 %v5800, %v5800
    %v5833 = vpack.c.b16 %v5801, %v5801
    %v5834 = vpack.c.b16 %v5802, %v5802
    %v5835 = vpack.c.b16 %v5803, %v5803
    %v5836 = vpack.c.b16 %v5804, %v5804
    %v5837 = vpack.c.b16 %v5805, %v5805
    %v5838 = vpack.c.b16 %v5806, %v5806
    %v5839 = vpack.c.b16 %v5807, %v5807
    %v5840 = vpack.c.b16 %v5808, %v5808
    %v5841 = vpack.c.b16 %v5809, %v5809
    %v5842 = vpack.c.b16 %v5810, %v5810
    %v5843 = vpack.c.b16 %v5811, %v5811
    %v5844 = vpack.c.b16 %v5812, %v5812
    %v5845 = vpack.c.b16 %v5813, %v5813
    %v5846 = vpack.c.b16 %v5814, %v5814
    %v5847 = vpack.c.b16 %v5815, %v5815
    %v5848 = vpack.c.b16 %v5816, %v5816
    %v5849 = vpack.c.b16 %v5817, %v5817
    %v5850 = vpack.c.b16 %v5818, %v5818
    %v5851 = vpack.c.b16 %v5819, %v5819
    %v5852 = vpack.c.b16 %v5820, %v5820
    %v5853 = vpack.c.b16 %v5821, %v5821
    %v5854 = vpack.c.b16 %v5822, %v5822
    %v5855 = vpack.c.b16 %v5823, %v5823
    %v5856 = vpack.c.b16 %v5824, %v5824
    %v5857 = vpack.c.b16 %v5825, %v5825
    %v5859 = vshrl.u32 %v5826, 16
    %v5861 = vrot.slane %v5859, 4
    %v5862 = vshll.u32 %v5826, 16
    %v5864 = vrot.slane %v5862, 5
    %v5865 = vor.u32 %v5861, %v5864
    %v5866 = vrot.slane %v5865, 4
    %v5868 = vshll.u32 %v5827, 16
    %v5870 = vrot.slane %v5868, 5
    %v5871 = vsel %vm4672, %v5866, %v5870
    %v5873 = vshrl.u32 %v5828, 16
    %v5875 = vrot.slane %v5873, 4
    %v5876 = vshll.u32 %v5828, 16
    %v5878 = vrot.slane %v5876, 5
    %v5879 = vor.u32 %v5875, %v5878
    %v5880 = vrot.slane %v5879, 4
    %v5882 = vshll.u32 %v5829, 16
    %v5884 = vrot.slane %v5882, 5
    %v5885 = vsel %vm4672, %v5880, %v5884
    %v5887 = vshrl.u32 %v5830, 16
    %v5889 = vrot.slane %v5887, 4
    %v5890 = vshll.u32 %v5830, 16
    %v5892 = vrot.slane %v5890, 5
    %v5893 = vor.u32 %v5889, %v5892
    %v5894 = vrot.slane %v5893, 4
    %v5896 = vshll.u32 %v5831, 16
    %v5898 = vrot.slane %v5896, 5
    %v5899 = vsel %vm4672, %v5894, %v5898
    %v5901 = vshrl.u32 %v5832, 16
    %v5903 = vrot.slane %v5901, 4
    %v5904 = vshll.u32 %v5832, 16
    %v5906 = vrot.slane %v5904, 5
    %v5907 = vor.u32 %v5903, %v5906
    %v5908 = vrot.slane %v5907, 4
    %v5910 = vshll.u32 %v5833, 16
    %v5912 = vrot.slane %v5910, 5
    %v5913 = vsel %vm4672, %v5908, %v5912
    %v5915 = vshrl.u32 %v5834, 16
    %v5917 = vrot.slane %v5915, 4
    %v5918 = vshll.u32 %v5834, 16
    %v5920 = vrot.slane %v5918, 5
    %v5921 = vor.u32 %v5917, %v5920
    %v5922 = vrot.slane %v5921, 4
    %v5924 = vshll.u32 %v5835, 16
    %v5926 = vrot.slane %v5924, 5
    %v5927 = vsel %vm4672, %v5922, %v5926
    %v5929 = vshrl.u32 %v5836, 16
    %v5931 = vrot.slane %v5929, 4
    %v5932 = vshll.u32 %v5836, 16
    %v5934 = vrot.slane %v5932, 5
    %v5935 = vor.u32 %v5931, %v5934
    %v5936 = vrot.slane %v5935, 4
    %v5938 = vshll.u32 %v5837, 16
    %v5940 = vrot.slane %v5938, 5
    %v5941 = vsel %vm4672, %v5936, %v5940
    %v5943 = vshrl.u32 %v5838, 16
    %v5945 = vrot.slane %v5943, 4
    %v5946 = vshll.u32 %v5838, 16
    %v5948 = vrot.slane %v5946, 5
    %v5949 = vor.u32 %v5945, %v5948
    %v5950 = vrot.slane %v5949, 4
    %v5952 = vshll.u32 %v5839, 16
    %v5954 = vrot.slane %v5952, 5
    %v5955 = vsel %vm4672, %v5950, %v5954
    %v5957 = vshrl.u32 %v5840, 16
    %v5959 = vrot.slane %v5957, 4
    %v5960 = vshll.u32 %v5840, 16
    %v5962 = vrot.slane %v5960, 5
    %v5963 = vor.u32 %v5959, %v5962
    %v5964 = vrot.slane %v5963, 4
    %v5966 = vshll.u32 %v5841, 16
    %v5968 = vrot.slane %v5966, 5
    %v5969 = vsel %vm4672, %v5964, %v5968
    %v5971 = vshrl.u32 %v5842, 16
    %v5973 = vrot.slane %v5971, 4
    %v5974 = vshll.u32 %v5842, 16
    %v5976 = vrot.slane %v5974, 5
    %v5977 = vor.u32 %v5973, %v5976
    %v5978 = vrot.slane %v5977, 4
    %v5980 = vshll.u32 %v5843, 16
    %v5982 = vrot.slane %v5980, 5
    %v5983 = vsel %vm4672, %v5978, %v5982
    %v5985 = vshrl.u32 %v5844, 16
    %v5987 = vrot.slane %v5985, 4
    %v5988 = vshll.u32 %v5844, 16
    %v5990 = vrot.slane %v5988, 5
    %v5991 = vor.u32 %v5987, %v5990
    %v5992 = vrot.slane %v5991, 4
    %v5994 = vshll.u32 %v5845, 16
    %v5996 = vrot.slane %v5994, 5
    %v5997 = vsel %vm4672, %v5992, %v5996
    %v5999 = vshrl.u32 %v5846, 16
    %v6001 = vrot.slane %v5999, 4
    %v6002 = vshll.u32 %v5846, 16
    %v6004 = vrot.slane %v6002, 5
    %v6005 = vor.u32 %v6001, %v6004
    %v6006 = vrot.slane %v6005, 4
    %v6008 = vshll.u32 %v5847, 16
    %v6010 = vrot.slane %v6008, 5
    %v6011 = vsel %vm4672, %v6006, %v6010
    %v6013 = vshrl.u32 %v5848, 16
    %v6015 = vrot.slane %v6013, 4
    %v6016 = vshll.u32 %v5848, 16
    %v6018 = vrot.slane %v6016, 5
    %v6019 = vor.u32 %v6015, %v6018
    %v6020 = vrot.slane %v6019, 4
    %v6022 = vshll.u32 %v5849, 16
    %v6024 = vrot.slane %v6022, 5
    %v6025 = vsel %vm4672, %v6020, %v6024
    %v6027 = vshrl.u32 %v5850, 16
    %v6029 = vrot.slane %v6027, 4
    %v6030 = vshll.u32 %v5850, 16
    %v6032 = vrot.slane %v6030, 5
    %v6033 = vor.u32 %v6029, %v6032
    %v6034 = vrot.slane %v6033, 4
    %v6036 = vshll.u32 %v5851, 16
    %v6038 = vrot.slane %v6036, 5
    %v6039 = vsel %vm4672, %v6034, %v6038
    %v6041 = vshrl.u32 %v5852, 16
    %v6043 = vrot.slane %v6041, 4
    %v6044 = vshll.u32 %v5852, 16
    %v6046 = vrot.slane %v6044, 5
    %v6047 = vor.u32 %v6043, %v6046
    %v6048 = vrot.slane %v6047, 4
    %v6050 = vshll.u32 %v5853, 16
    %v6052 = vrot.slane %v6050, 5
    %v6053 = vsel %vm4672, %v6048, %v6052
    %v6055 = vshrl.u32 %v5854, 16
    %v6057 = vrot.slane %v6055, 4
    %v6058 = vshll.u32 %v5854, 16
    %v6060 = vrot.slane %v6058, 5
    %v6061 = vor.u32 %v6057, %v6060
    %v6062 = vrot.slane %v6061, 4
    %v6064 = vshll.u32 %v5855, 16
    %v6066 = vrot.slane %v6064, 5
    %v6067 = vsel %vm4672, %v6062, %v6066
    %v6069 = vshrl.u32 %v5856, 16
    %v6071 = vrot.slane %v6069, 4
    %v6072 = vshll.u32 %v5856, 16
    %v6074 = vrot.slane %v6072, 5
    %v6075 = vor.u32 %v6071, %v6074
    %v6076 = vrot.slane %v6075, 4
    %v6078 = vshll.u32 %v5857, 16
    %v6080 = vrot.slane %v6078, 5
    %v6081 = vsel %vm4672, %v6076, %v6080
    %s6082 = scalar_lea.vmem %s7, 32
    %v6083 = vld [vmem:[%s6082] sm:$0xf]
    %v6084 = vld [vmem:[%s6082 + $0x4] sm:$0x3]
    %v6085 = vunpack.c.l.b16 %v5871
    %v6086 = vunpack.c.l.b16 %v5885
    %v6087 = vunpack.c.l.b16 %v5899
    %v6088 = vunpack.c.l.b16 %v5913
    %v6089 = vunpack.c.l.b16 %v5927
    %v6090 = vunpack.c.l.b16 %v5941
    %v6091 = vunpack.c.l.b16 %v5955
    %v6092 = vunpack.c.l.b16 %v5969
    %v6093 = vunpack.c.l.b16 %v5983
    %v6094 = vunpack.c.l.b16 %v5997
    %v6095 = vunpack.c.l.b16 %v6011
    %v6096 = vunpack.c.l.b16 %v6025
    %v6097 = vunpack.c.l.b16 %v6039
    %v6098 = vunpack.c.l.b16 %v6053
    %v6099 = vunpack.c.l.b16 %v6067
    %v6100 = vunpack.c.l.b16 %v6081
    %v6101 = vpack.c.b16 %v6086, %v6085
    %v6102 = vpack.c.b16 %v6088, %v6087
    %v6103 = vpack.c.b16 %v6090, %v6089
    %v6104 = vpack.c.b16 %v6092, %v6091
    %v6105 = vpack.c.b16 %v6094, %v6093
    %v6106 = vpack.c.b16 %v6096, %v6095
    %v6107 = vpack.c.b16 %v6098, %v6097
    %v6108 = vpack.c.b16 %v6100, %v6099
    %v6111 = vunpack.c.l.b16 %v6083
    %v6112 = vunpack.c.l.b16 %v6084
    %v6113 = vpack.c.b16 %v6112, %v6111
    %v6115 = vsel %vm4001, %v6101, 0
    %v6118 = vsel %vm4001, %v6102, 0
    %v6121 = vsel %vm4001, %v6103, 0
    %v6124 = vsel %vm4001, %v6104, 0
    %v6127 = vsel %vm4001, %v6105, 0
    %v6130 = vsel %vm4001, %v6106, 0
    %v6133 = vsel %vm4001, %v6107, 0
    %v6136 = vsel %vm4001, %v6108, 0
    %v6139 = vsel %vm4953, %v6113, 0
    %6141 = vmatprep.subr.bf16.mxu0 0
    %6142 = vmatpush1.bf16.msra.mxu0 %v6139
    %6143 = vmatprep.subr.bf16.mxu0 0
    %6144 = vmatpush1.bf16.msra.mxu0 0
    %6145 = vmatprep.subr.bf16.mxu0 0
    %6146 = vmatpush1.bf16.msra.mxu0 0
    %6147 = vmatprep.subr.bf16.mxu0 0
    %6148 = vmatpush1.bf16.msra.mxu0 0
    %6149 = vmatprep.subr.bf16.mxu0 0
    %6150 = vmatpush1.bf16.msra.mxu0 0
    %6151 = vmatprep.subr.bf16.mxu0 0
    %6152 = vmatpush1.bf16.msra.mxu0 0
    %6153 = vmatprep.subr.bf16.mxu0 0
    %6154 = vmatpush1.bf16.msra.mxu0 0
    %6155 = vmatprep.subr.bf16.mxu0 0
    %6156 = vmatpush1.bf16.msra.mxu0 0
    %6157 = vmatprep.subr.bf16.mxu0 0
    %6158 = vmatpush1.bf16.msra.mxu0 0
    %6159 = vmatprep.subr.bf16.mxu0 0
    %6160 = vmatpush1.bf16.msra.mxu0 0
    %6161 = vmatprep.subr.bf16.mxu0 0
    %6162 = vmatpush1.bf16.msra.mxu0 0
    %6163 = vmatprep.subr.bf16.mxu0 0
    %6164 = vmatpush1.bf16.msra.mxu0 0
    %6165 = vmatprep.subr.bf16.mxu0 0
    %6166 = vmatpush1.bf16.msra.mxu0 0
    %6167 = vmatprep.subr.bf16.mxu0 0
    %6168 = vmatpush1.bf16.msra.mxu0 0
    %6169 = vmatprep.subr.bf16.mxu0 0
    %6170 = vmatpush1.bf16.msra.mxu0 0
    %6171 = vmatprep.subr.bf16.mxu0 0
    %6172 = vmatpush1.bf16.msra.mxu0 0
    %6173 = vmatprep.mubr.bf16.mxu0 0
    %6174 = vmatmul.mubr.bf16.gmra.mrb[0].mxu0 %v6115
    %v6175 = vpop.f32.mrb[0].mxu0
    %v6176 = vadd.f32 0.0, %v6175
    %v6177 = vpop.f32.mrb[0].mxu0
    %v6178 = vpop.f32.mrb[0].mxu0
    %v6179 = vadd.f32 0.0, %v6178
    %v6180 = vpop.f32.mrb[0].mxu0
    %6181 = vmatprep.mubr.bf16.mxu0 0
    %6182 = vmatmul.mubr.bf16.gmra.mrb[0].mxu0 %v6118
    %v6183 = vpop.f32.mrb[0].mxu0
    %v6184 = vadd.f32 0.0, %v6183
    %v6185 = vpop.f32.mrb[0].mxu0
    %v6186 = vpop.f32.mrb[0].mxu0
    %v6187 = vadd.f32 0.0, %v6186
    %v6188 = vpop.f32.mrb[0].mxu0
    %6189 = vmatprep.mubr.bf16.mxu0 0
    %6190 = vmatmul.mubr.bf16.gmra.mrb[0].mxu0 %v6121
    %v6191 = vpop.f32.mrb[0].mxu0
    %v6192 = vadd.f32 0.0, %v6191
    %v6193 = vpop.f32.mrb[0].mxu0
    %v6194 = vpop.f32.mrb[0].mxu0
    %v6195 = vadd.f32 0.0, %v6194
    %v6196 = vpop.f32.mrb[0].mxu0
    %6197 = vmatprep.mubr.bf16.mxu0 0
    %6198 = vmatmul.mubr.bf16.gmra.mrb[0].mxu0 %v6124
    %v6199 = vpop.f32.mrb[0].mxu0
    %v6200 = vadd.f32 0.0, %v6199
    %v6201 = vpop.f32.mrb[0].mxu0
    %v6202 = vpop.f32.mrb[0].mxu0
    %v6203 = vadd.f32 0.0, %v6202
    %v6204 = vpop.f32.mrb[0].mxu0
    %6205 = vmatprep.mubr.bf16.mxu0 0
    %6206 = vmatmul.mubr.bf16.gmra.mrb[0].mxu0 %v6127
    %v6207 = vpop.f32.mrb[0].mxu0
    %v6208 = vadd.f32 0.0, %v6207
    %v6209 = vpop.f32.mrb[0].mxu0
    %v6210 = vpop.f32.mrb[0].mxu0
    %v6211 = vadd.f32 0.0, %v6210
    %v6212 = vpop.f32.mrb[0].mxu0
    %6213 = vmatprep.mubr.bf16.mxu0 0
    %6214 = vmatmul.mubr.bf16.gmra.mrb[0].mxu0 %v6130
    %v6215 = vpop.f32.mrb[0].mxu0
    %v6216 = vadd.f32 0.0, %v6215
    %v6217 = vpop.f32.mrb[0].mxu0
    %v6218 = vpop.f32.mrb[0].mxu0
    %v6219 = vadd.f32 0.0, %v6218
    %v6220 = vpop.f32.mrb[0].mxu0
    %6221 = vmatprep.mubr.bf16.mxu0 0
    %6222 = vmatmul.mubr.bf16.gmra.mrb[0].mxu0 %v6133
    %v6223 = vpop.f32.mrb[0].mxu0
    %v6224 = vadd.f32 0.0, %v6223
    %v6225 = vpop.f32.mrb[0].mxu0
    %v6226 = vpop.f32.mrb[0].mxu0
    %v6227 = vadd.f32 0.0, %v6226
    %v6228 = vpop.f32.mrb[0].mxu0
    %6229 = vmatprep.mubr.bf16.mxu0 0
    %6230 = vmatmul.mubr.bf16.gmra.mrb[0].mxu0 %v6136
    %v6231 = vpop.f32.mrb[0].mxu0
    %v6232 = vadd.f32 0.0, %v6231
    %v6233 = vpop.f32.mrb[0].mxu0
    %v6234 = vpop.f32.mrb[0].mxu0
    %v6235 = vadd.f32 0.0, %v6234
    %v6236 = vpop.f32.mrb[0].mxu0
    %6237 = vdwg.mxu0
    %v6238 = vadd.f32 %v5746, %v6176
    %v6239 = vadd.f32 %v5747, %v6179
    %v6240 = vadd.f32 %v5748, %v6184
    %v6241 = vadd.f32 %v5749, %v6187
    %v6242 = vadd.f32 %v5750, %v6192
    %v6243 = vadd.f32 %v5751, %v6195
    %v6244 = vadd.f32 %v5752, %v6200
    %v6245 = vadd.f32 %v5753, %v6203
    %v6246 = vadd.f32 %v5754, %v6208
    %v6247 = vadd.f32 %v5755, %v6211
    %v6248 = vadd.f32 %v5756, %v6216
    %v6249 = vadd.f32 %v5757, %v6219
    %v6250 = vadd.f32 %v5758, %v6224
    %v6251 = vadd.f32 %v5759, %v6227
    %v6252 = vadd.f32 %v5760, %v6232
    %v6253 = vadd.f32 %v5761, %v6235
    %v6254 = vld [vmem:[%s4277] sm:$0x1e]
    %v6255 = vld [vmem:[%s4277 + $0x8] sm:$0x1e]
    %v6256 = vld [vmem:[%s4277 + $0x10] sm:$0x1e]
    %v6257 = vld [vmem:[%s4277 + $0x18] sm:$0x1e]
    %v6258 = vld [vmem:[%s4277 + $0x20] sm:$0x1e]
    %v6259 = vld [vmem:[%s4277 + $0x28] sm:$0x1e]
    %v6260 = vld [vmem:[%s4277 + $0x30] sm:$0x1e]
    %v6261 = vld [vmem:[%s4277 + $0x38] sm:$0x1e]
    %v6262 = vld [vmem:[%s4277 + $0x50] sm:$0x1e]
    %v6263 = vld [vmem:[%s4277 + $0x58] sm:$0x1e]
    %v6264 = vld [vmem:[%s4277 + $0x60] sm:$0x1e]
    %v6265 = vld [vmem:[%s4277 + $0x68] sm:$0x1e]
    %v6266 = vld [vmem:[%s4277 + $0x70] sm:$0x1e]
    %v6267 = vld [vmem:[%s4277 + $0x78] sm:$0x1e]
    %v6268 = vld [vmem:[%s4277 + $0x80] sm:$0x1e]
    %v6269 = vld [vmem:[%s4277 + $0x88] sm:$0x1e]
    %v6286 = vunpack.c.l.b16 %v6254
    %v6287 = vunpack.c.h.b16 %v6254
    %v6288 = vunpack.c.l.b16 %v6255
    %v6289 = vunpack.c.h.b16 %v6255
    %v6290 = vunpack.c.l.b16 %v6256
    %v6291 = vunpack.c.h.b16 %v6256
    %v6292 = vunpack.c.l.b16 %v6257
    %v6293 = vunpack.c.h.b16 %v6257
    %v6294 = vunpack.c.l.b16 %v6258
    %v6295 = vunpack.c.h.b16 %v6258
    %v6296 = vunpack.c.l.b16 %v6259
    %v6297 = vunpack.c.h.b16 %v6259
    %v6298 = vunpack.c.l.b16 %v6260
    %v6299 = vunpack.c.h.b16 %v6260
    %v6300 = vunpack.c.l.b16 %v6261
    %v6301 = vunpack.c.h.b16 %v6261
    %v6302 = vunpack.c.l.b16 %v6262
    %v6303 = vunpack.c.h.b16 %v6262
    %v6304 = vunpack.c.l.b16 %v6263
    %v6305 = vunpack.c.h.b16 %v6263
    %v6306 = vunpack.c.l.b16 %v6264
    %v6307 = vunpack.c.h.b16 %v6264
    %v6308 = vunpack.c.l.b16 %v6265
    %v6309 = vunpack.c.h.b16 %v6265
    %v6310 = vunpack.c.l.b16 %v6266
    %v6311 = vunpack.c.h.b16 %v6266
    %v6312 = vunpack.c.l.b16 %v6267
    %v6313 = vunpack.c.h.b16 %v6267
    %v6314 = vunpack.c.l.b16 %v6268
    %v6315 = vunpack.c.h.b16 %v6268
    %v6316 = vunpack.c.l.b16 %v6269
    %v6317 = vunpack.c.h.b16 %v6269
    %v6318 = vpack.c.b16 %v6286, %v6286
    %v6319 = vpack.c.b16 %v6287, %v6287
    %v6320 = vpack.c.b16 %v6288, %v6288
    %v6321 = vpack.c.b16 %v6289, %v6289
    %v6322 = vpack.c.b16 %v6290, %v6290
    %v6323 = vpack.c.b16 %v6291, %v6291
    %v6324 = vpack.c.b16 %v6292, %v6292
    %v6325 = vpack.c.b16 %v6293, %v6293
    %v6326 = vpack.c.b16 %v6294, %v6294
    %v6327 = vpack.c.b16 %v6295, %v6295
    %v6328 = vpack.c.b16 %v6296, %v6296
    %v6329 = vpack.c.b16 %v6297, %v6297
    %v6330 = vpack.c.b16 %v6298, %v6298
    %v6331 = vpack.c.b16 %v6299, %v6299
    %v6332 = vpack.c.b16 %v6300, %v6300
    %v6333 = vpack.c.b16 %v6301, %v6301
    %v6334 = vpack.c.b16 %v6302, %v6302
    %v6335 = vpack.c.b16 %v6303, %v6303
    %v6336 = vpack.c.b16 %v6304, %v6304
    %v6337 = vpack.c.b16 %v6305, %v6305
    %v6338 = vpack.c.b16 %v6306, %v6306
    %v6339 = vpack.c.b16 %v6307, %v6307
    %v6340 = vpack.c.b16 %v6308, %v6308
    %v6341 = vpack.c.b16 %v6309, %v6309
    %v6342 = vpack.c.b16 %v6310, %v6310
    %v6343 = vpack.c.b16 %v6311, %v6311
    %v6344 = vpack.c.b16 %v6312, %v6312
    %v6345 = vpack.c.b16 %v6313, %v6313
    %v6346 = vpack.c.b16 %v6314, %v6314
    %v6347 = vpack.c.b16 %v6315, %v6315
    %v6348 = vpack.c.b16 %v6316, %v6316
    %v6349 = vpack.c.b16 %v6317, %v6317
    %v6350 = vrot.slane %v6318, 5
    %v6351 = vrot.slane %v6350, 4
    %v6352 = vrot.slane %v6319, 5
    %v6353 = vsel %vm5321, %v6351, %v6352
    %v6354 = vrot.slane %v6320, 5
    %v6355 = vrot.slane %v6354, 4
    %v6356 = vrot.slane %v6321, 5
    %v6357 = vsel %vm5321, %v6355, %v6356
    %v6358 = vrot.slane %v6322, 5
    %v6359 = vrot.slane %v6358, 4
    %v6360 = vrot.slane %v6323, 5
    %v6361 = vsel %vm5321, %v6359, %v6360
    %v6362 = vrot.slane %v6324, 5
    %v6363 = vrot.slane %v6362, 4
    %v6364 = vrot.slane %v6325, 5
    %v6365 = vsel %vm5321, %v6363, %v6364
    %v6366 = vrot.slane %v6326, 5
    %v6367 = vrot.slane %v6366, 4
    %v6368 = vrot.slane %v6327, 5
    %v6369 = vsel %vm5321, %v6367, %v6368
    %v6370 = vrot.slane %v6328, 5
    %v6371 = vrot.slane %v6370, 4
    %v6372 = vrot.slane %v6329, 5
    %v6373 = vsel %vm5321, %v6371, %v6372
    %v6374 = vrot.slane %v6330, 5
    %v6375 = vrot.slane %v6374, 4
    %v6376 = vrot.slane %v6331, 5
    %v6377 = vsel %vm5321, %v6375, %v6376
    %v6378 = vrot.slane %v6332, 5
    %v6379 = vrot.slane %v6378, 4
    %v6380 = vrot.slane %v6333, 5
    %v6381 = vsel %vm5321, %v6379, %v6380
    %v6382 = vrot.slane %v6334, 5
    %v6383 = vrot.slane %v6382, 4
    %v6384 = vrot.slane %v6335, 5
    %v6385 = vsel %vm5321, %v6383, %v6384
    %v6386 = vrot.slane %v6336, 5
    %v6387 = vrot.slane %v6386, 4
    %v6388 = vrot.slane %v6337, 5
    %v6389 = vsel %vm5321, %v6387, %v6388
    %v6390 = vrot.slane %v6338, 5
    %v6391 = vrot.slane %v6390, 4
    %v6392 = vrot.slane %v6339, 5
    %v6393 = vsel %vm5321, %v6391, %v6392
    %v6394 = vrot.slane %v6340, 5
    %v6395 = vrot.slane %v6394, 4
    %v6396 = vrot.slane %v6341, 5
    %v6397 = vsel %vm5321, %v6395, %v6396
    %v6398 = vrot.slane %v6342, 5
    %v6399 = vrot.slane %v6398, 4
    %v6400 = vrot.slane %v6343, 5
    %v6401 = vsel %vm5321, %v6399, %v6400
    %v6402 = vrot.slane %v6344, 5
    %v6403 = vrot.slane %v6402, 4
    %v6404 = vrot.slane %v6345, 5
    %v6405 = vsel %vm5321, %v6403, %v6404
    %v6406 = vrot.slane %v6346, 5
    %v6407 = vrot.slane %v6406, 4
    %v6408 = vrot.slane %v6347, 5
    %v6409 = vsel %vm5321, %v6407, %v6408
    %v6410 = vrot.slane %v6348, 5
    %v6411 = vrot.slane %v6410, 4
    %v6412 = vrot.slane %v6349, 5
    %v6413 = vsel %vm5321, %v6411, %v6412
    %s6414 = scalar_lea.vmem %s7, 40
    %v6415 = vld [vmem:[%s6414] sm:$0xf]
    %v6416 = vld [vmem:[%s6414 + $0x4] sm:$0x3]
    %v6417 = vunpack.c.l.b16 %v6353
    %v6418 = vunpack.c.l.b16 %v6357
    %v6419 = vunpack.c.l.b16 %v6361
    %v6420 = vunpack.c.l.b16 %v6365
    %v6421 = vunpack.c.l.b16 %v6369
    %v6422 = vunpack.c.l.b16 %v6373
    %v6423 = vunpack.c.l.b16 %v6377
    %v6424 = vunpack.c.l.b16 %v6381
    %v6425 = vunpack.c.l.b16 %v6385
    %v6426 = vunpack.c.l.b16 %v6389
    %v6427 = vunpack.c.l.b16 %v6393
    %v6428 = vunpack.c.l.b16 %v6397
    %v6429 = vunpack.c.l.b16 %v6401
    %v6430 = vunpack.c.l.b16 %v6405
    %v6431 = vunpack.c.l.b16 %v6409
    %v6432 = vunpack.c.l.b16 %v6413
    %v6433 = vpack.c.b16 %v6418, %v6417
    %v6434 = vpack.c.b16 %v6420, %v6419
    %v6435 = vpack.c.b16 %v6422, %v6421
    %v6436 = vpack.c.b16 %v6424, %v6423
    %v6437 = vpack.c.b16 %v6426, %v6425
    %v6438 = vpack.c.b16 %v6428, %v6427
    %v6439 = vpack.c.b16 %v6430, %v6429
    %v6440 = vpack.c.b16 %v6432, %v6431
    %v6443 = vunpack.c.l.b16 %v6415
    %v6444 = vunpack.c.l.b16 %v6416
    %v6445 = vpack.c.b16 %v6444, %v6443
    %v6447 = vsel %vm4001, %v6433, 0
    %v6450 = vsel %vm4001, %v6434, 0
    %v6453 = vsel %vm4001, %v6435, 0
    %v6456 = vsel %vm4001, %v6436, 0
    %v6459 = vsel %vm4001, %v6437, 0
    %v6462 = vsel %vm4001, %v6438, 0
    %v6465 = vsel %vm4001, %v6439, 0
    %v6468 = vsel %vm4001, %v6440, 0
    %v6471 = vsel %vm4953, %v6445, 0
    %6473 = vmatprep.subr.bf16.mxu0 0
    %6474 = vmatpush1.bf16.msra.mxu0 %v6471
    %6475 = vmatprep.subr.bf16.mxu0 0
    %6476 = vmatpush1.bf16.msra.mxu0 0
    %6477 = vmatprep.subr.bf16.mxu0 0
    %6478 = vmatpush1.bf16.msra.mxu0 0
    %6479 = vmatprep.subr.bf16.mxu0 0
    %6480 = vmatpush1.bf16.msra.mxu0 0
    %6481 = vmatprep.subr.bf16.mxu0 0
    %6482 = vmatpush1.bf16.msra.mxu0 0
    %6483 = vmatprep.subr.bf16.mxu0 0
    %6484 = vmatpush1.bf16.msra.mxu0 0
    %6485 = vmatprep.subr.bf16.mxu0 0
    %6486 = vmatpush1.bf16.msra.mxu0 0
    %6487 = vmatprep.subr.bf16.mxu0 0
    %6488 = vmatpush1.bf16.msra.mxu0 0
    %6489 = vmatprep.subr.bf16.mxu0 0
    %6490 = vmatpush1.bf16.msra.mxu0 0
    %6491 = vmatprep.subr.bf16.mxu0 0
    %6492 = vmatpush1.bf16.msra.mxu0 0
    %6493 = vmatprep.subr.bf16.mxu0 0
    %6494 = vmatpush1.bf16.msra.mxu0 0
    %6495 = vmatprep.subr.bf16.mxu0 0
    %6496 = vmatpush1.bf16.msra.mxu0 0
    %6497 = vmatprep.subr.bf16.mxu0 0
    %6498 = vmatpush1.bf16.msra.mxu0 0
    %6499 = vmatprep.subr.bf16.mxu0 0
    %6500 = vmatpush1.bf16.msra.mxu0 0
    %6501 = vmatprep.subr.bf16.mxu0 0
    %6502 = vmatpush1.bf16.msra.mxu0 0
    %6503 = vmatprep.subr.bf16.mxu0 0
    %6504 = vmatpush1.bf16.msra.mxu0 0
    %6505 = vmatprep.mubr.bf16.mxu0 0
    %6506 = vmatmul.mubr.bf16.gmra.mrb[0].mxu0 %v6447
    %v6507 = vpop.f32.mrb[0].mxu0
    %v6508 = vadd.f32 0.0, %v6507
    %v6509 = vpop.f32.mrb[0].mxu0
    %v6510 = vpop.f32.mrb[0].mxu0
    %v6511 = vadd.f32 0.0, %v6510
    %v6512 = vpop.f32.mrb[0].mxu0
    %6513 = vmatprep.mubr.bf16.mxu0 0
    %6514 = vmatmul.mubr.bf16.gmra.mrb[0].mxu0 %v6450
    %v6515 = vpop.f32.mrb[0].mxu0
    %v6516 = vadd.f32 0.0, %v6515
    %v6517 = vpop.f32.mrb[0].mxu0
    %v6518 = vpop.f32.mrb[0].mxu0
    %v6519 = vadd.f32 0.0, %v6518
    %v6520 = vpop.f32.mrb[0].mxu0
    %6521 = vmatprep.mubr.bf16.mxu0 0
    %6522 = vmatmul.mubr.bf16.gmra.mrb[0].mxu0 %v6453
    %v6523 = vpop.f32.mrb[0].mxu0
    %v6524 = vadd.f32 0.0, %v6523
    %v6525 = vpop.f32.mrb[0].mxu0
    %v6526 = vpop.f32.mrb[0].mxu0
    %v6527 = vadd.f32 0.0, %v6526
    %v6528 = vpop.f32.mrb[0].mxu0
    %6529 = vmatprep.mubr.bf16.mxu0 0
    %6530 = vmatmul.mubr.bf16.gmra.mrb[0].mxu0 %v6456
    %v6531 = vpop.f32.mrb[0].mxu0
    %v6532 = vadd.f32 0.0, %v6531
    %v6533 = vpop.f32.mrb[0].mxu0
    %v6534 = vpop.f32.mrb[0].mxu0
    %v6535 = vadd.f32 0.0, %v6534
    %v6536 = vpop.f32.mrb[0].mxu0
    %6537 = vmatprep.mubr.bf16.mxu0 0
    %6538 = vmatmul.mubr.bf16.gmra.mrb[0].mxu0 %v6459
    %v6539 = vpop.f32.mrb[0].mxu0
    %v6540 = vadd.f32 0.0, %v6539
    %v6541 = vpop.f32.mrb[0].mxu0
    %v6542 = vpop.f32.mrb[0].mxu0
    %v6543 = vadd.f32 0.0, %v6542
    %v6544 = vpop.f32.mrb[0].mxu0
    %6545 = vmatprep.mubr.bf16.mxu0 0
    %6546 = vmatmul.mubr.bf16.gmra.mrb[0].mxu0 %v6462
    %v6547 = vpop.f32.mrb[0].mxu0
    %v6548 = vadd.f32 0.0, %v6547
    %v6549 = vpop.f32.mrb[0].mxu0
    %v6550 = vpop.f32.mrb[0].mxu0
    %v6551 = vadd.f32 0.0, %v6550
    %v6552 = vpop.f32.mrb[0].mxu0
    %6553 = vmatprep.mubr.bf16.mxu0 0
    %6554 = vmatmul.mubr.bf16.gmra.mrb[0].mxu0 %v6465
    %v6555 = vpop.f32.mrb[0].mxu0
    %v6556 = vadd.f32 0.0, %v6555
    %v6557 = vpop.f32.mrb[0].mxu0
    %v6558 = vpop.f32.mrb[0].mxu0
    %v6559 = vadd.f32 0.0, %v6558
    %v6560 = vpop.f32.mrb[0].mxu0
    %6561 = vmatprep.mubr.bf16.mxu0 0
    %6562 = vmatmul.mubr.bf16.gmra.mrb[0].mxu0 %v6468
    %v6563 = vpop.f32.mrb[0].mxu0
    %v6564 = vadd.f32 0.0, %v6563
    %v6565 = vpop.f32.mrb[0].mxu0
    %v6566 = vpop.f32.mrb[0].mxu0
    %v6567 = vadd.f32 0.0, %v6566
    %v6568 = vpop.f32.mrb[0].mxu0
    %6569 = vdwg.mxu0
    %v6570 = vadd.f32 %v6238, %v6508
    %v6571 = vadd.f32 %v6239, %v6511
    %v6572 = vadd.f32 %v6240, %v6516
    %v6573 = vadd.f32 %v6241, %v6519
    %v6574 = vadd.f32 %v6242, %v6524
    %v6575 = vadd.f32 %v6243, %v6527
    %v6576 = vadd.f32 %v6244, %v6532
    %v6577 = vadd.f32 %v6245, %v6535
    %v6578 = vadd.f32 %v6246, %v6540
    %v6579 = vadd.f32 %v6247, %v6543
    %v6580 = vadd.f32 %v6248, %v6548
    %v6581 = vadd.f32 %v6249, %v6551
    %v6582 = vadd.f32 %v6250, %v6556
    %v6583 = vadd.f32 %v6251, %v6559
    %v6584 = vadd.f32 %v6252, %v6564
    %v6585 = vadd.f32 %v6253, %v6567
    %s6586 = scalar_lea.vmem [#allocation4], 16
    %v6587 = vld [vmem:[%s6586] sm:$0xf]
    %v6588 = vld [vmem:[%s6586 + $0x8] sm:$0xf]
    %v6589 = vld [vmem:[%s6586 + $0x10] sm:$0xf]
    %v6590 = vld [vmem:[%s6586 + $0x18] sm:$0xf]
    %v6591 = vld [vmem:[%s6586 + $0x20] sm:$0xf]
    %v6592 = vld [vmem:[%s6586 + $0x28] sm:$0xf]
    %v6593 = vld [vmem:[%s6586 + $0x30] sm:$0xf]
    %v6594 = vld [vmem:[%s6586 + $0x38] sm:$0xf]
    %v6595 = vld [vmem:[%s6586 + $0x50] sm:$0xf]
    %v6596 = vld [vmem:[%s6586 + $0x58] sm:$0xf]
    %v6597 = vld [vmem:[%s6586 + $0x60] sm:$0xf]
    %v6598 = vld [vmem:[%s6586 + $0x68] sm:$0xf]
    %v6599 = vld [vmem:[%s6586 + $0x70] sm:$0xf]
    %v6600 = vld [vmem:[%s6586 + $0x78] sm:$0xf]
    %v6601 = vld [vmem:[%s6586 + $0x80] sm:$0xf]
    %v6602 = vld [vmem:[%s6586 + $0x88] sm:$0xf]
    %s6603 = scalar_lea.vmem %s7, 48
    %v6604 = vld [vmem:[%s6603] sm:$0xf]
    %v6605 = vld [vmem:[%s6603 + $0x4] sm:$0x3]
    %v6622 = vunpack.c.l.b16 %v6587
    %v6623 = vunpack.c.l.b16 %v6588
    %v6624 = vunpack.c.l.b16 %v6589
    %v6625 = vunpack.c.l.b16 %v6590
    %v6626 = vunpack.c.l.b16 %v6591
    %v6627 = vunpack.c.l.b16 %v6592
    %v6628 = vunpack.c.l.b16 %v6593
    %v6629 = vunpack.c.l.b16 %v6594
    %v6630 = vunpack.c.l.b16 %v6595
    %v6631 = vunpack.c.l.b16 %v6596
    %v6632 = vunpack.c.l.b16 %v6597
    %v6633 = vunpack.c.l.b16 %v6598
    %v6634 = vunpack.c.l.b16 %v6599
    %v6635 = vunpack.c.l.b16 %v6600
    %v6636 = vunpack.c.l.b16 %v6601
    %v6637 = vunpack.c.l.b16 %v6602
    %v6638 = vpack.c.b16 %v6623, %v6622
    %v6639 = vpack.c.b16 %v6625, %v6624
    %v6640 = vpack.c.b16 %v6627, %v6626
    %v6641 = vpack.c.b16 %v6629, %v6628
    %v6642 = vpack.c.b16 %v6631, %v6630
    %v6643 = vpack.c.b16 %v6633, %v6632
    %v6644 = vpack.c.b16 %v6635, %v6634
    %v6645 = vpack.c.b16 %v6637, %v6636
    %v6648 = vunpack.c.l.b16 %v6604
    %v6649 = vunpack.c.l.b16 %v6605
    %v6650 = vpack.c.b16 %v6649, %v6648
    %v6652 = vsel %vm4001, %v6638, 0
    %v6655 = vsel %vm4001, %v6639, 0
    %v6658 = vsel %vm4001, %v6640, 0
    %v6661 = vsel %vm4001, %v6641, 0
    %v6664 = vsel %vm4001, %v6642, 0
    %v6667 = vsel %vm4001, %v6643, 0
    %v6670 = vsel %vm4001, %v6644, 0
    %v6673 = vsel %vm4001, %v6645, 0
    %v6676 = vsel %vm4953, %v6650, 0
    %6678 = vmatprep.subr.bf16.mxu0 0
    %6679 = vmatpush1.bf16.msra.mxu0 %v6676
    %6680 = vmatprep.subr.bf16.mxu0 0
    %6681 = vmatpush1.bf16.msra.mxu0 0
    %6682 = vmatprep.subr.bf16.mxu0 0
    %6683 = vmatpush1.bf16.msra.mxu0 0
    %6684 = vmatprep.subr.bf16.mxu0 0
    %6685 = vmatpush1.bf16.msra.mxu0 0
    %6686 = vmatprep.subr.bf16.mxu0 0
    %6687 = vmatpush1.bf16.msra.mxu0 0
    %6688 = vmatprep.subr.bf16.mxu0 0
    %6689 = vmatpush1.bf16.msra.mxu0 0
    %6690 = vmatprep.subr.bf16.mxu0 0
    %6691 = vmatpush1.bf16.msra.mxu0 0
    %6692 = vmatprep.subr.bf16.mxu0 0
    %6693 = vmatpush1.bf16.msra.mxu0 0
    %6694 = vmatprep.subr.bf16.mxu0 0
    %6695 = vmatpush1.bf16.msra.mxu0 0
    %6696 = vmatprep.subr.bf16.mxu0 0
    %6697 = vmatpush1.bf16.msra.mxu0 0
    %6698 = vmatprep.subr.bf16.mxu0 0
    %6699 = vmatpush1.bf16.msra.mxu0 0
    %6700 = vmatprep.subr.bf16.mxu0 0
    %6701 = vmatpush1.bf16.msra.mxu0 0
    %6702 = vmatprep.subr.bf16.mxu0 0
    %6703 = vmatpush1.bf16.msra.mxu0 0
    %6704 = vmatprep.subr.bf16.mxu0 0
    %6705 = vmatpush1.bf16.msra.mxu0 0
    %6706 = vmatprep.subr.bf16.mxu0 0
    %6707 = vmatpush1.bf16.msra.mxu0 0
    %6708 = vmatprep.subr.bf16.mxu0 0
    %6709 = vmatpush1.bf16.msra.mxu0 0
    %6710 = vmatprep.mubr.bf16.mxu0 0
    %6711 = vmatmul.mubr.bf16.gmra.mrb[0].mxu0 %v6652
    %v6712 = vpop.f32.mrb[0].mxu0
    %v6713 = vadd.f32 0.0, %v6712
    %v6714 = vpop.f32.mrb[0].mxu0
    %v6715 = vpop.f32.mrb[0].mxu0
    %v6716 = vadd.f32 0.0, %v6715
    %v6717 = vpop.f32.mrb[0].mxu0
    %6718 = vmatprep.mubr.bf16.mxu0 0
    %6719 = vmatmul.mubr.bf16.gmra.mrb[0].mxu0 %v6655
    %v6720 = vpop.f32.mrb[0].mxu0
    %v6721 = vadd.f32 0.0, %v6720
    %v6722 = vpop.f32.mrb[0].mxu0
    %v6723 = vpop.f32.mrb[0].mxu0
    %v6724 = vadd.f32 0.0, %v6723
    %v6725 = vpop.f32.mrb[0].mxu0
    %6726 = vmatprep.mubr.bf16.mxu0 0
    %6727 = vmatmul.mubr.bf16.gmra.mrb[0].mxu0 %v6658
    %v6728 = vpop.f32.mrb[0].mxu0
    %v6729 = vadd.f32 0.0, %v6728
    %v6730 = vpop.f32.mrb[0].mxu0
    %v6731 = vpop.f32.mrb[0].mxu0
    %v6732 = vadd.f32 0.0, %v6731
    %v6733 = vpop.f32.mrb[0].mxu0
    %6734 = vmatprep.mubr.bf16.mxu0 0
    %6735 = vmatmul.mubr.bf16.gmra.mrb[0].mxu0 %v6661
    %v6736 = vpop.f32.mrb[0].mxu0
    %v6737 = vadd.f32 0.0, %v6736
    %v6738 = vpop.f32.mrb[0].mxu0
    %v6739 = vpop.f32.mrb[0].mxu0
    %v6740 = vadd.f32 0.0, %v6739
    %v6741 = vpop.f32.mrb[0].mxu0
    %6742 = vmatprep.mubr.bf16.mxu0 0
    %6743 = vmatmul.mubr.bf16.gmra.mrb[0].mxu0 %v6664
    %v6744 = vpop.f32.mrb[0].mxu0
    %v6745 = vadd.f32 0.0, %v6744
    %v6746 = vpop.f32.mrb[0].mxu0
    %v6747 = vpop.f32.mrb[0].mxu0
    %v6748 = vadd.f32 0.0, %v6747
    %v6749 = vpop.f32.mrb[0].mxu0
    %6750 = vmatprep.mubr.bf16.mxu0 0
    %6751 = vmatmul.mubr.bf16.gmra.mrb[0].mxu0 %v6667
    %v6752 = vpop.f32.mrb[0].mxu0
    %v6753 = vadd.f32 0.0, %v6752
    %v6754 = vpop.f32.mrb[0].mxu0
    %v6755 = vpop.f32.mrb[0].mxu0
    %v6756 = vadd.f32 0.0, %v6755
    %v6757 = vpop.f32.mrb[0].mxu0
    %6758 = vmatprep.mubr.bf16.mxu0 0
    %6759 = vmatmul.mubr.bf16.gmra.mrb[0].mxu0 %v6670
    %v6760 = vpop.f32.mrb[0].mxu0
    %v6761 = vadd.f32 0.0, %v6760
    %v6762 = vpop.f32.mrb[0].mxu0
    %v6763 = vpop.f32.mrb[0].mxu0
    %v6764 = vadd.f32 0.0, %v6763
    %v6765 = vpop.f32.mrb[0].mxu0
    %6766 = vmatprep.mubr.bf16.mxu0 0
    %6767 = vmatmul.mubr.bf16.gmra.mrb[0].mxu0 %v6673
    %v6768 = vpop.f32.mrb[0].mxu0
    %v6769 = vadd.f32 0.0, %v6768
    %v6770 = vpop.f32.mrb[0].mxu0
    %v6771 = vpop.f32.mrb[0].mxu0
    %v6772 = vadd.f32 0.0, %v6771
    %v6773 = vpop.f32.mrb[0].mxu0
    %6774 = vdwg.mxu0
    %v6775 = vadd.f32 %v6570, %v6713
    %v6776 = vadd.f32 %v6571, %v6716
    %v6777 = vadd.f32 %v6572, %v6721
    %v6778 = vadd.f32 %v6573, %v6724
    %v6779 = vadd.f32 %v6574, %v6729
    %v6780 = vadd.f32 %v6575, %v6732
    %v6781 = vadd.f32 %v6576, %v6737
    %v6782 = vadd.f32 %v6577, %v6740
    %v6783 = vadd.f32 %v6578, %v6745
    %v6784 = vadd.f32 %v6579, %v6748
    %v6785 = vadd.f32 %v6580, %v6753
    %v6786 = vadd.f32 %v6581, %v6756
    %v6787 = vadd.f32 %v6582, %v6761
    %v6788 = vadd.f32 %v6583, %v6764
    %v6789 = vadd.f32 %v6584, %v6769
    %v6790 = vadd.f32 %v6585, %v6772
    %v6791 = vld [vmem:[%s6586] sm:$0x1f]
    %v6792 = vld [vmem:[%s6586 + $0x8] sm:$0x1f]
    %v6793 = vld [vmem:[%s6586 + $0x10] sm:$0x1f]
    %v6794 = vld [vmem:[%s6586 + $0x18] sm:$0x1f]
    %v6795 = vld [vmem:[%s6586 + $0x20] sm:$0x1f]
    %v6796 = vld [vmem:[%s6586 + $0x28] sm:$0x1f]
    %v6797 = vld [vmem:[%s6586 + $0x30] sm:$0x1f]
    %v6798 = vld [vmem:[%s6586 + $0x38] sm:$0x1f]
    %v6799 = vld [vmem:[%s6586 + $0x50] sm:$0x1f]
    %v6800 = vld [vmem:[%s6586 + $0x58] sm:$0x1f]
    %v6801 = vld [vmem:[%s6586 + $0x60] sm:$0x1f]
    %v6802 = vld [vmem:[%s6586 + $0x68] sm:$0x1f]
    %v6803 = vld [vmem:[%s6586 + $0x70] sm:$0x1f]
    %v6804 = vld [vmem:[%s6586 + $0x78] sm:$0x1f]
    %v6805 = vld [vmem:[%s6586 + $0x80] sm:$0x1f]
    %v6806 = vld [vmem:[%s6586 + $0x88] sm:$0x1f]
    %v6823 = vunpack.c.l.b16 %v6791
    %v6824 = vunpack.c.h.b16 %v6791
    %v6825 = vunpack.c.l.b16 %v6792
    %v6826 = vunpack.c.h.b16 %v6792
    %v6827 = vunpack.c.l.b16 %v6793
    %v6828 = vunpack.c.h.b16 %v6793
    %v6829 = vunpack.c.l.b16 %v6794
    %v6830 = vunpack.c.h.b16 %v6794
    %v6831 = vunpack.c.l.b16 %v6795
    %v6832 = vunpack.c.h.b16 %v6795
    %v6833 = vunpack.c.l.b16 %v6796
    %v6834 = vunpack.c.h.b16 %v6796
    %v6835 = vunpack.c.l.b16 %v6797
    %v6836 = vunpack.c.h.b16 %v6797
    %v6837 = vunpack.c.l.b16 %v6798
    %v6838 = vunpack.c.h.b16 %v6798
    %v6839 = vunpack.c.l.b16 %v6799
    %v6840 = vunpack.c.h.b16 %v6799
    %v6841 = vunpack.c.l.b16 %v6800
    %v6842 = vunpack.c.h.b16 %v6800
    %v6843 = vunpack.c.l.b16 %v6801
    %v6844 = vunpack.c.h.b16 %v6801
    %v6845 = vunpack.c.l.b16 %v6802
    %v6846 = vunpack.c.h.b16 %v6802
    %v6847 = vunpack.c.l.b16 %v6803
    %v6848 = vunpack.c.h.b16 %v6803
    %v6849 = vunpack.c.l.b16 %v6804
    %v6850 = vunpack.c.h.b16 %v6804
    %v6851 = vunpack.c.l.b16 %v6805
    %v6852 = vunpack.c.h.b16 %v6805
    %v6853 = vunpack.c.l.b16 %v6806
    %v6854 = vunpack.c.h.b16 %v6806
    %v6855 = vpack.c.b16 %v6823, %v6823
    %v6856 = vpack.c.b16 %v6824, %v6824
    %v6857 = vpack.c.b16 %v6825, %v6825
    %v6858 = vpack.c.b16 %v6826, %v6826
    %v6859 = vpack.c.b16 %v6827, %v6827
    %v6860 = vpack.c.b16 %v6828, %v6828
    %v6861 = vpack.c.b16 %v6829, %v6829
    %v6862 = vpack.c.b16 %v6830, %v6830
    %v6863 = vpack.c.b16 %v6831, %v6831
    %v6864 = vpack.c.b16 %v6832, %v6832
    %v6865 = vpack.c.b16 %v6833, %v6833
    %v6866 = vpack.c.b16 %v6834, %v6834
    %v6867 = vpack.c.b16 %v6835, %v6835
    %v6868 = vpack.c.b16 %v6836, %v6836
    %v6869 = vpack.c.b16 %v6837, %v6837
    %v6870 = vpack.c.b16 %v6838, %v6838
    %v6871 = vpack.c.b16 %v6839, %v6839
    %v6872 = vpack.c.b16 %v6840, %v6840
    %v6873 = vpack.c.b16 %v6841, %v6841
    %v6874 = vpack.c.b16 %v6842, %v6842
    %v6875 = vpack.c.b16 %v6843, %v6843
    %v6876 = vpack.c.b16 %v6844, %v6844
    %v6877 = vpack.c.b16 %v6845, %v6845
    %v6878 = vpack.c.b16 %v6846, %v6846
    %v6879 = vpack.c.b16 %v6847, %v6847
    %v6880 = vpack.c.b16 %v6848, %v6848
    %v6881 = vpack.c.b16 %v6849, %v6849
    %v6882 = vpack.c.b16 %v6850, %v6850
    %v6883 = vpack.c.b16 %v6851, %v6851
    %v6884 = vpack.c.b16 %v6852, %v6852
    %v6885 = vpack.c.b16 %v6853, %v6853
    %v6886 = vpack.c.b16 %v6854, %v6854
    %v6888 = vshrl.u32 %v6855, 16
    %v6890 = vrot.slane %v6888, 4
    %v6891 = vshll.u32 %v6855, 16
    %v6893 = vrot.slane %v6891, 5
    %v6894 = vor.u32 %v6890, %v6893
    %v6895 = vrot.slane %v6894, 4
    %v6897 = vshll.u32 %v6856, 16
    %v6899 = vrot.slane %v6897, 5
    %v6900 = vsel %vm4672, %v6895, %v6899
    %v6902 = vshrl.u32 %v6857, 16
    %v6904 = vrot.slane %v6902, 4
    %v6905 = vshll.u32 %v6857, 16
    %v6907 = vrot.slane %v6905, 5
    %v6908 = vor.u32 %v6904, %v6907
    %v6909 = vrot.slane %v6908, 4
    %v6911 = vshll.u32 %v6858, 16
    %v6913 = vrot.slane %v6911, 5
    %v6914 = vsel %vm4672, %v6909, %v6913
    %v6916 = vshrl.u32 %v6859, 16
    %v6918 = vrot.slane %v6916, 4
    %v6919 = vshll.u32 %v6859, 16
    %v6921 = vrot.slane %v6919, 5
    %v6922 = vor.u32 %v6918, %v6921
    %v6923 = vrot.slane %v6922, 4
    %v6925 = vshll.u32 %v6860, 16
    %v6927 = vrot.slane %v6925, 5
    %v6928 = vsel %vm4672, %v6923, %v6927
    %v6930 = vshrl.u32 %v6861, 16
    %v6932 = vrot.slane %v6930, 4
    %v6933 = vshll.u32 %v6861, 16
    %v6935 = vrot.slane %v6933, 5
    %v6936 = vor.u32 %v6932, %v6935
    %v6937 = vrot.slane %v6936, 4
    %v6939 = vshll.u32 %v6862, 16
    %v6941 = vrot.slane %v6939, 5
    %v6942 = vsel %vm4672, %v6937, %v6941
    %v6944 = vshrl.u32 %v6863, 16
    %v6946 = vrot.slane %v6944, 4
    %v6947 = vshll.u32 %v6863, 16
    %v6949 = vrot.slane %v6947, 5
    %v6950 = vor.u32 %v6946, %v6949
    %v6951 = vrot.slane %v6950, 4
    %v6953 = vshll.u32 %v6864, 16
    %v6955 = vrot.slane %v6953, 5
    %v6956 = vsel %vm4672, %v6951, %v6955
    %v6958 = vshrl.u32 %v6865, 16
    %v6960 = vrot.slane %v6958, 4
    %v6961 = vshll.u32 %v6865, 16
    %v6963 = vrot.slane %v6961, 5
    %v6964 = vor.u32 %v6960, %v6963
    %v6965 = vrot.slane %v6964, 4
    %v6967 = vshll.u32 %v6866, 16
    %v6969 = vrot.slane %v6967, 5
    %v6970 = vsel %vm4672, %v6965, %v6969
    %v6972 = vshrl.u32 %v6867, 16
    %v6974 = vrot.slane %v6972, 4
    %v6975 = vshll.u32 %v6867, 16
    %v6977 = vrot.slane %v6975, 5
    %v6978 = vor.u32 %v6974, %v6977
    %v6979 = vrot.slane %v6978, 4
    %v6981 = vshll.u32 %v6868, 16
    %v6983 = vrot.slane %v6981, 5
    %v6984 = vsel %vm4672, %v6979, %v6983
    %v6986 = vshrl.u32 %v6869, 16
    %v6988 = vrot.slane %v6986, 4
    %v6989 = vshll.u32 %v6869, 16
    %v6991 = vrot.slane %v6989, 5
    %v6992 = vor.u32 %v6988, %v6991
    %v6993 = vrot.slane %v6992, 4
    %v6995 = vshll.u32 %v6870, 16
    %v6997 = vrot.slane %v6995, 5
    %v6998 = vsel %vm4672, %v6993, %v6997
    %v7000 = vshrl.u32 %v6871, 16
    %v7002 = vrot.slane %v7000, 4
    %v7003 = vshll.u32 %v6871, 16
    %v7005 = vrot.slane %v7003, 5
    %v7006 = vor.u32 %v7002, %v7005
    %v7007 = vrot.slane %v7006, 4
    %v7009 = vshll.u32 %v6872, 16
    %v7011 = vrot.slane %v7009, 5
    %v7012 = vsel %vm4672, %v7007, %v7011
    %v7014 = vshrl.u32 %v6873, 16
    %v7016 = vrot.slane %v7014, 4
    %v7017 = vshll.u32 %v6873, 16
    %v7019 = vrot.slane %v7017, 5
    %v7020 = vor.u32 %v7016, %v7019
    %v7021 = vrot.slane %v7020, 4
    %v7023 = vshll.u32 %v6874, 16
    %v7025 = vrot.slane %v7023, 5
    %v7026 = vsel %vm4672, %v7021, %v7025
    %v7028 = vshrl.u32 %v6875, 16
    %v7030 = vrot.slane %v7028, 4
    %v7031 = vshll.u32 %v6875, 16
    %v7033 = vrot.slane %v7031, 5
    %v7034 = vor.u32 %v7030, %v7033
    %v7035 = vrot.slane %v7034, 4
    %v7037 = vshll.u32 %v6876, 16
    %v7039 = vrot.slane %v7037, 5
    %v7040 = vsel %vm4672, %v7035, %v7039
    %v7042 = vshrl.u32 %v6877, 16
    %v7044 = vrot.slane %v7042, 4
    %v7045 = vshll.u32 %v6877, 16
    %v7047 = vrot.slane %v7045, 5
    %v7048 = vor.u32 %v7044, %v7047
    %v7049 = vrot.slane %v7048, 4
    %v7051 = vshll.u32 %v6878, 16
    %v7053 = vrot.slane %v7051, 5
    %v7054 = vsel %vm4672, %v7049, %v7053
    %v7056 = vshrl.u32 %v6879, 16
    %v7058 = vrot.slane %v7056, 4
    %v7059 = vshll.u32 %v6879, 16
    %v7061 = vrot.slane %v7059, 5
    %v7062 = vor.u32 %v7058, %v7061
    %v7063 = vrot.slane %v7062, 4
    %v7065 = vshll.u32 %v6880, 16
    %v7067 = vrot.slane %v7065, 5
    %v7068 = vsel %vm4672, %v7063, %v7067
    %v7070 = vshrl.u32 %v6881, 16
    %v7072 = vrot.slane %v7070, 4
    %v7073 = vshll.u32 %v6881, 16
    %v7075 = vrot.slane %v7073, 5
    %v7076 = vor.u32 %v7072, %v7075
    %v7077 = vrot.slane %v7076, 4
    %v7079 = vshll.u32 %v6882, 16
    %v7081 = vrot.slane %v7079, 5
    %v7082 = vsel %vm4672, %v7077, %v7081
    %v7084 = vshrl.u32 %v6883, 16
    %v7086 = vrot.slane %v7084, 4
    %v7087 = vshll.u32 %v6883, 16
    %v7089 = vrot.slane %v7087, 5
    %v7090 = vor.u32 %v7086, %v7089
    %v7091 = vrot.slane %v7090, 4
    %v7093 = vshll.u32 %v6884, 16
    %v7095 = vrot.slane %v7093, 5
    %v7096 = vsel %vm4672, %v7091, %v7095
    %v7098 = vshrl.u32 %v6885, 16
    %v7100 = vrot.slane %v7098, 4
    %v7101 = vshll.u32 %v6885, 16
    %v7103 = vrot.slane %v7101, 5
    %v7104 = vor.u32 %v7100, %v7103
    %v7105 = vrot.slane %v7104, 4
    %v7107 = vshll.u32 %v6886, 16
    %v7109 = vrot.slane %v7107, 5
    %v7110 = vsel %vm4672, %v7105, %v7109
    %s7111 = scalar_lea.vmem %s7, 56
    %v7112 = vld [vmem:[%s7111] sm:$0xf]
    %v7113 = vld [vmem:[%s7111 + $0x4] sm:$0x3]
    %v7114 = vunpack.c.l.b16 %v6900
    %v7115 = vunpack.c.l.b16 %v6914
    %v7116 = vunpack.c.l.b16 %v6928
    %v7117 = vunpack.c.l.b16 %v6942
    %v7118 = vunpack.c.l.b16 %v6956
    %v7119 = vunpack.c.l.b16 %v6970
    %v7120 = vunpack.c.l.b16 %v6984
    %v7121 = vunpack.c.l.b16 %v6998
    %v7122 = vunpack.c.l.b16 %v7012
    %v7123 = vunpack.c.l.b16 %v7026
    %v7124 = vunpack.c.l.b16 %v7040
    %v7125 = vunpack.c.l.b16 %v7054
    %v7126 = vunpack.c.l.b16 %v7068
    %v7127 = vunpack.c.l.b16 %v7082
    %v7128 = vunpack.c.l.b16 %v7096
    %v7129 = vunpack.c.l.b16 %v7110
    %v7130 = vpack.c.b16 %v7115, %v7114
    %v7131 = vpack.c.b16 %v7117, %v7116
    %v7132 = vpack.c.b16 %v7119, %v7118
    %v7133 = vpack.c.b16 %v7121, %v7120
    %v7134 = vpack.c.b16 %v7123, %v7122
    %v7135 = vpack.c.b16 %v7125, %v7124
    %v7136 = vpack.c.b16 %v7127, %v7126
    %v7137 = vpack.c.b16 %v7129, %v7128
    %v7140 = vunpack.c.l.b16 %v7112
    %v7141 = vunpack.c.l.b16 %v7113
    %v7142 = vpack.c.b16 %v7141, %v7140
    %v7144 = vsel %vm4001, %v7130, 0
    %v7147 = vsel %vm4001, %v7131, 0
    %v7150 = vsel %vm4001, %v7132, 0
    %v7153 = vsel %vm4001, %v7133, 0
    %v7156 = vsel %vm4001, %v7134, 0
    %v7159 = vsel %vm4001, %v7135, 0
    %v7162 = vsel %vm4001, %v7136, 0
    %v7165 = vsel %vm4001, %v7137, 0
    %v7168 = vsel %vm4953, %v7142, 0
    %7170 = vmatprep.subr.bf16.mxu0 0
    %7171 = vmatpush1.bf16.msra.mxu0 %v7168
    %7172 = vmatprep.subr.bf16.mxu0 0
    %7173 = vmatpush1.bf16.msra.mxu0 0
    %7174 = vmatprep.subr.bf16.mxu0 0
    %7175 = vmatpush1.bf16.msra.mxu0 0
    %7176 = vmatprep.subr.bf16.mxu0 0
    %7177 = vmatpush1.bf16.msra.mxu0 0
    %7178 = vmatprep.subr.bf16.mxu0 0
    %7179 = vmatpush1.bf16.msra.mxu0 0
    %7180 = vmatprep.subr.bf16.mxu0 0
    %7181 = vmatpush1.bf16.msra.mxu0 0
    %7182 = vmatprep.subr.bf16.mxu0 0
    %7183 = vmatpush1.bf16.msra.mxu0 0
    %7184 = vmatprep.subr.bf16.mxu0 0
    %7185 = vmatpush1.bf16.msra.mxu0 0
    %7186 = vmatprep.subr.bf16.mxu0 0
    %7187 = vmatpush1.bf16.msra.mxu0 0
    %7188 = vmatprep.subr.bf16.mxu0 0
    %7189 = vmatpush1.bf16.msra.mxu0 0
    %7190 = vmatprep.subr.bf16.mxu0 0
    %7191 = vmatpush1.bf16.msra.mxu0 0
    %7192 = vmatprep.subr.bf16.mxu0 0
    %7193 = vmatpush1.bf16.msra.mxu0 0
    %7194 = vmatprep.subr.bf16.mxu0 0
    %7195 = vmatpush1.bf16.msra.mxu0 0
    %7196 = vmatprep.subr.bf16.mxu0 0
    %7197 = vmatpush1.bf16.msra.mxu0 0
    %7198 = vmatprep.subr.bf16.mxu0 0
    %7199 = vmatpush1.bf16.msra.mxu0 0
    %7200 = vmatprep.subr.bf16.mxu0 0
    %7201 = vmatpush1.bf16.msra.mxu0 0
    %7202 = vmatprep.mubr.bf16.mxu0 0
    %7203 = vmatmul.mubr.bf16.gmra.mrb[0].mxu0 %v7144
    %v7204 = vpop.f32.mrb[0].mxu0
    %v7205 = vadd.f32 0.0, %v7204
    %v7206 = vpop.f32.mrb[0].mxu0
    %v7207 = vpop.f32.mrb[0].mxu0
    %v7208 = vadd.f32 0.0, %v7207
    %v7209 = vpop.f32.mrb[0].mxu0
    %7210 = vmatprep.mubr.bf16.mxu0 0
    %7211 = vmatmul.mubr.bf16.gmra.mrb[0].mxu0 %v7147
    %v7212 = vpop.f32.mrb[0].mxu0
    %v7213 = vadd.f32 0.0, %v7212
    %v7214 = vpop.f32.mrb[0].mxu0
    %v7215 = vpop.f32.mrb[0].mxu0
    %v7216 = vadd.f32 0.0, %v7215
    %v7217 = vpop.f32.mrb[0].mxu0
    %7218 = vmatprep.mubr.bf16.mxu0 0
    %7219 = vmatmul.mubr.bf16.gmra.mrb[0].mxu0 %v7150
    %v7220 = vpop.f32.mrb[0].mxu0
    %v7221 = vadd.f32 0.0, %v7220
    %v7222 = vpop.f32.mrb[0].mxu0
    %v7223 = vpop.f32.mrb[0].mxu0
    %v7224 = vadd.f32 0.0, %v7223
    %v7225 = vpop.f32.mrb[0].mxu0
    %7226 = vmatprep.mubr.bf16.mxu0 0
    %7227 = vmatmul.mubr.bf16.gmra.mrb[0].mxu0 %v7153
    %v7228 = vpop.f32.mrb[0].mxu0
    %v7229 = vadd.f32 0.0, %v7228
    %v7230 = vpop.f32.mrb[0].mxu0
    %v7231 = vpop.f32.mrb[0].mxu0
    %v7232 = vadd.f32 0.0, %v7231
    %v7233 = vpop.f32.mrb[0].mxu0
    %7234 = vmatprep.mubr.bf16.mxu0 0
    %7235 = vmatmul.mubr.bf16.gmra.mrb[0].mxu0 %v7156
    %v7236 = vpop.f32.mrb[0].mxu0
    %v7237 = vadd.f32 0.0, %v7236
    %v7238 = vpop.f32.mrb[0].mxu0
    %v7239 = vpop.f32.mrb[0].mxu0
    %v7240 = vadd.f32 0.0, %v7239
    %v7241 = vpop.f32.mrb[0].mxu0
    %7242 = vmatprep.mubr.bf16.mxu0 0
    %7243 = vmatmul.mubr.bf16.gmra.mrb[0].mxu0 %v7159
    %v7244 = vpop.f32.mrb[0].mxu0
    %v7245 = vadd.f32 0.0, %v7244
    %v7246 = vpop.f32.mrb[0].mxu0
    %v7247 = vpop.f32.mrb[0].mxu0
    %v7248 = vadd.f32 0.0, %v7247
    %v7249 = vpop.f32.mrb[0].mxu0
    %7250 = vmatprep.mubr.bf16.mxu0 0
    %7251 = vmatmul.mubr.bf16.gmra.mrb[0].mxu0 %v7162
    %v7252 = vpop.f32.mrb[0].mxu0
    %v7253 = vadd.f32 0.0, %v7252
    %v7254 = vpop.f32.mrb[0].mxu0
    %v7255 = vpop.f32.mrb[0].mxu0
    %v7256 = vadd.f32 0.0, %v7255
    %v7257 = vpop.f32.mrb[0].mxu0
    %7258 = vmatprep.mubr.bf16.mxu0 0
    %7259 = vmatmul.mubr.bf16.gmra.mrb[0].mxu0 %v7165
    %v7260 = vpop.f32.mrb[0].mxu0
    %v7261 = vadd.f32 0.0, %v7260
    %v7262 = vpop.f32.mrb[0].mxu0
    %v7263 = vpop.f32.mrb[0].mxu0
    %v7264 = vadd.f32 0.0, %v7263
    %v7265 = vpop.f32.mrb[0].mxu0
    %7266 = vdwg.mxu0
    %v7267 = vadd.f32 %v6775, %v7205
    %v7268 = vadd.f32 %v6776, %v7208
    %v7269 = vadd.f32 %v6777, %v7213
    %v7270 = vadd.f32 %v6778, %v7216
    %v7271 = vadd.f32 %v6779, %v7221
    %v7272 = vadd.f32 %v6780, %v7224
    %v7273 = vadd.f32 %v6781, %v7229
    %v7274 = vadd.f32 %v6782, %v7232
    %v7275 = vadd.f32 %v6783, %v7237
    %v7276 = vadd.f32 %v6784, %v7240
    %v7277 = vadd.f32 %v6785, %v7245
    %v7278 = vadd.f32 %v6786, %v7248
    %v7279 = vadd.f32 %v6787, %v7253
    %v7280 = vadd.f32 %v6788, %v7256
    %v7281 = vadd.f32 %v6789, %v7261
    %v7282 = vadd.f32 %v6790, %v7264
    %v7283 = vld [vmem:[%s6586] sm:$0x1e]
    %v7284 = vld [vmem:[%s6586 + $0x8] sm:$0x1e]
    %v7285 = vld [vmem:[%s6586 + $0x10] sm:$0x1e]
    %v7286 = vld [vmem:[%s6586 + $0x18] sm:$0x1e]
    %v7287 = vld [vmem:[%s6586 + $0x20] sm:$0x1e]
    %v7288 = vld [vmem:[%s6586 + $0x28] sm:$0x1e]
    %v7289 = vld [vmem:[%s6586 + $0x30] sm:$0x1e]
    %v7290 = vld [vmem:[%s6586 + $0x38] sm:$0x1e]
    %v7291 = vld [vmem:[%s6586 + $0x50] sm:$0x1e]
    %v7292 = vld [vmem:[%s6586 + $0x58] sm:$0x1e]
    %v7293 = vld [vmem:[%s6586 + $0x60] sm:$0x1e]
    %v7294 = vld [vmem:[%s6586 + $0x68] sm:$0x1e]
    %v7295 = vld [vmem:[%s6586 + $0x70] sm:$0x1e]
    %v7296 = vld [vmem:[%s6586 + $0x78] sm:$0x1e]
    %v7297 = vld [vmem:[%s6586 + $0x80] sm:$0x1e]
    %v7298 = vld [vmem:[%s6586 + $0x88] sm:$0x1e]
    %v7315 = vunpack.c.l.b16 %v7283
    %v7316 = vunpack.c.h.b16 %v7283
    %v7317 = vunpack.c.l.b16 %v7284
    %v7318 = vunpack.c.h.b16 %v7284
    %v7319 = vunpack.c.l.b16 %v7285
    %v7320 = vunpack.c.h.b16 %v7285
    %v7321 = vunpack.c.l.b16 %v7286
    %v7322 = vunpack.c.h.b16 %v7286
    %v7323 = vunpack.c.l.b16 %v7287
    %v7324 = vunpack.c.h.b16 %v7287
    %v7325 = vunpack.c.l.b16 %v7288
    %v7326 = vunpack.c.h.b16 %v7288
    %v7327 = vunpack.c.l.b16 %v7289
    %v7328 = vunpack.c.h.b16 %v7289
    %v7329 = vunpack.c.l.b16 %v7290
    %v7330 = vunpack.c.h.b16 %v7290
    %v7331 = vunpack.c.l.b16 %v7291
    %v7332 = vunpack.c.h.b16 %v7291
    %v7333 = vunpack.c.l.b16 %v7292
    %v7334 = vunpack.c.h.b16 %v7292
    %v7335 = vunpack.c.l.b16 %v7293
    %v7336 = vunpack.c.h.b16 %v7293
    %v7337 = vunpack.c.l.b16 %v7294
    %v7338 = vunpack.c.h.b16 %v7294
    %v7339 = vunpack.c.l.b16 %v7295
    %v7340 = vunpack.c.h.b16 %v7295
    %v7341 = vunpack.c.l.b16 %v7296
    %v7342 = vunpack.c.h.b16 %v7296
    %v7343 = vunpack.c.l.b16 %v7297
    %v7344 = vunpack.c.h.b16 %v7297
    %v7345 = vunpack.c.l.b16 %v7298
    %v7346 = vunpack.c.h.b16 %v7298
    %v7347 = vpack.c.b16 %v7315, %v7315
    %v7348 = vpack.c.b16 %v7316, %v7316
    %v7349 = vpack.c.b16 %v7317, %v7317
    %v7350 = vpack.c.b16 %v7318, %v7318
    %v7351 = vpack.c.b16 %v7319, %v7319
    %v7352 = vpack.c.b16 %v7320, %v7320
    %v7353 = vpack.c.b16 %v7321, %v7321
    %v7354 = vpack.c.b16 %v7322, %v7322
    %v7355 = vpack.c.b16 %v7323, %v7323
    %v7356 = vpack.c.b16 %v7324, %v7324
    %v7357 = vpack.c.b16 %v7325, %v7325
    %v7358 = vpack.c.b16 %v7326, %v7326
    %v7359 = vpack.c.b16 %v7327, %v7327
    %v7360 = vpack.c.b16 %v7328, %v7328
    %v7361 = vpack.c.b16 %v7329, %v7329
    %v7362 = vpack.c.b16 %v7330, %v7330
    %v7363 = vpack.c.b16 %v7331, %v7331
    %v7364 = vpack.c.b16 %v7332, %v7332
    %v7365 = vpack.c.b16 %v7333, %v7333
    %v7366 = vpack.c.b16 %v7334, %v7334
    %v7367 = vpack.c.b16 %v7335, %v7335
    %v7368 = vpack.c.b16 %v7336, %v7336
    %v7369 = vpack.c.b16 %v7337, %v7337
    %v7370 = vpack.c.b16 %v7338, %v7338
    %v7371 = vpack.c.b16 %v7339, %v7339
    %v7372 = vpack.c.b16 %v7340, %v7340
    %v7373 = vpack.c.b16 %v7341, %v7341
    %v7374 = vpack.c.b16 %v7342, %v7342
    %v7375 = vpack.c.b16 %v7343, %v7343
    %v7376 = vpack.c.b16 %v7344, %v7344
    %v7377 = vpack.c.b16 %v7345, %v7345
    %v7378 = vpack.c.b16 %v7346, %v7346
    %v7379 = vrot.slane %v7347, 5
    %v7380 = vrot.slane %v7379, 4
    %v7381 = vrot.slane %v7348, 5
    %v7382 = vsel %vm5321, %v7380, %v7381
    %v7383 = vrot.slane %v7349, 5
    %v7384 = vrot.slane %v7383, 4
    %v7385 = vrot.slane %v7350, 5
    %v7386 = vsel %vm5321, %v7384, %v7385
    %v7387 = vrot.slane %v7351, 5
    %v7388 = vrot.slane %v7387, 4
    %v7389 = vrot.slane %v7352, 5
    %v7390 = vsel %vm5321, %v7388, %v7389
    %v7391 = vrot.slane %v7353, 5
    %v7392 = vrot.slane %v7391, 4
    %v7393 = vrot.slane %v7354, 5
    %v7394 = vsel %vm5321, %v7392, %v7393
    %v7395 = vrot.slane %v7355, 5
    %v7396 = vrot.slane %v7395, 4
    %v7397 = vrot.slane %v7356, 5
    %v7398 = vsel %vm5321, %v7396, %v7397
    %v7399 = vrot.slane %v7357, 5
    %v7400 = vrot.slane %v7399, 4
    %v7401 = vrot.slane %v7358, 5
    %v7402 = vsel %vm5321, %v7400, %v7401
    %v7403 = vrot.slane %v7359, 5
    %v7404 = vrot.slane %v7403, 4
    %v7405 = vrot.slane %v7360, 5
    %v7406 = vsel %vm5321, %v7404, %v7405
    %v7407 = vrot.slane %v7361, 5
    %v7408 = vrot.slane %v7407, 4
    %v7409 = vrot.slane %v7362, 5
    %v7410 = vsel %vm5321, %v7408, %v7409
    %v7411 = vrot.slane %v7363, 5
    %v7412 = vrot.slane %v7411, 4
    %v7413 = vrot.slane %v7364, 5
    %v7414 = vsel %vm5321, %v7412, %v7413
    %v7415 = vrot.slane %v7365, 5
    %v7416 = vrot.slane %v7415, 4
    %v7417 = vrot.slane %v7366, 5
    %v7418 = vsel %vm5321, %v7416, %v7417
    %v7419 = vrot.slane %v7367, 5
    %v7420 = vrot.slane %v7419, 4
    %v7421 = vrot.slane %v7368, 5
    %v7422 = vsel %vm5321, %v7420, %v7421
    %v7423 = vrot.slane %v7369, 5
    %v7424 = vrot.slane %v7423, 4
    %v7425 = vrot.slane %v7370, 5
    %v7426 = vsel %vm5321, %v7424, %v7425
    %v7427 = vrot.slane %v7371, 5
    %v7428 = vrot.slane %v7427, 4
    %v7429 = vrot.slane %v7372, 5
    %v7430 = vsel %vm5321, %v7428, %v7429
    %v7431 = vrot.slane %v7373, 5
    %v7432 = vrot.slane %v7431, 4
    %v7433 = vrot.slane %v7374, 5
    %v7434 = vsel %vm5321, %v7432, %v7433
    %v7435 = vrot.slane %v7375, 5
    %v7436 = vrot.slane %v7435, 4
    %v7437 = vrot.slane %v7376, 5
    %v7438 = vsel %vm5321, %v7436, %v7437
    %v7439 = vrot.slane %v7377, 5
    %v7440 = vrot.slane %v7439, 4
    %v7441 = vrot.slane %v7378, 5
    %v7442 = vsel %vm5321, %v7440, %v7441
    %s7443 = scalar_lea.vmem %s7, 64
    %v7444 = vld [vmem:[%s7443] sm:$0xf]
    %v7445 = vld [vmem:[%s7443 + $0x4] sm:$0x3]
    %v7446 = vunpack.c.l.b16 %v7382
    %v7447 = vunpack.c.l.b16 %v7386
    %v7448 = vunpack.c.l.b16 %v7390
    %v7449 = vunpack.c.l.b16 %v7394
    %v7450 = vunpack.c.l.b16 %v7398
    %v7451 = vunpack.c.l.b16 %v7402
    %v7452 = vunpack.c.l.b16 %v7406
    %v7453 = vunpack.c.l.b16 %v7410
    %v7454 = vunpack.c.l.b16 %v7414
    %v7455 = vunpack.c.l.b16 %v7418
    %v7456 = vunpack.c.l.b16 %v7422
    %v7457 = vunpack.c.l.b16 %v7426
    %v7458 = vunpack.c.l.b16 %v7430
    %v7459 = vunpack.c.l.b16 %v7434
    %v7460 = vunpack.c.l.b16 %v7438
    %v7461 = vunpack.c.l.b16 %v7442
    %v7462 = vpack.c.b16 %v7447, %v7446
    %v7463 = vpack.c.b16 %v7449, %v7448
    %v7464 = vpack.c.b16 %v7451, %v7450
    %v7465 = vpack.c.b16 %v7453, %v7452
    %v7466 = vpack.c.b16 %v7455, %v7454
    %v7467 = vpack.c.b16 %v7457, %v7456
    %v7468 = vpack.c.b16 %v7459, %v7458
    %v7469 = vpack.c.b16 %v7461, %v7460
    %v7472 = vunpack.c.l.b16 %v7444
    %v7473 = vunpack.c.l.b16 %v7445
    %v7474 = vpack.c.b16 %v7473, %v7472
    %v7476 = vsel %vm4001, %v7462, 0
    %v7479 = vsel %vm4001, %v7463, 0
    %v7482 = vsel %vm4001, %v7464, 0
    %v7485 = vsel %vm4001, %v7465, 0
    %v7488 = vsel %vm4001, %v7466, 0
    %v7491 = vsel %vm4001, %v7467, 0
    %v7494 = vsel %vm4001, %v7468, 0
    %v7497 = vsel %vm4001, %v7469, 0
    %v7500 = vsel %vm4953, %v7474, 0
    %7502 = vmatprep.subr.bf16.mxu0 0
    %7503 = vmatpush1.bf16.msra.mxu0 %v7500
    %7504 = vmatprep.subr.bf16.mxu0 0
    %7505 = vmatpush1.bf16.msra.mxu0 0
    %7506 = vmatprep.subr.bf16.mxu0 0
    %7507 = vmatpush1.bf16.msra.mxu0 0
    %7508 = vmatprep.subr.bf16.mxu0 0
    %7509 = vmatpush1.bf16.msra.mxu0 0
    %7510 = vmatprep.subr.bf16.mxu0 0
    %7511 = vmatpush1.bf16.msra.mxu0 0
    %7512 = vmatprep.subr.bf16.mxu0 0
    %7513 = vmatpush1.bf16.msra.mxu0 0
    %7514 = vmatprep.subr.bf16.mxu0 0
    %7515 = vmatpush1.bf16.msra.mxu0 0
    %7516 = vmatprep.subr.bf16.mxu0 0
    %7517 = vmatpush1.bf16.msra.mxu0 0
    %7518 = vmatprep.subr.bf16.mxu0 0
    %7519 = vmatpush1.bf16.msra.mxu0 0
    %7520 = vmatprep.subr.bf16.mxu0 0
    %7521 = vmatpush1.bf16.msra.mxu0 0
    %7522 = vmatprep.subr.bf16.mxu0 0
    %7523 = vmatpush1.bf16.msra.mxu0 0
    %7524 = vmatprep.subr.bf16.mxu0 0
    %7525 = vmatpush1.bf16.msra.mxu0 0
    %7526 = vmatprep.subr.bf16.mxu0 0
    %7527 = vmatpush1.bf16.msra.mxu0 0
    %7528 = vmatprep.subr.bf16.mxu0 0
    %7529 = vmatpush1.bf16.msra.mxu0 0
    %7530 = vmatprep.subr.bf16.mxu0 0
    %7531 = vmatpush1.bf16.msra.mxu0 0
    %7532 = vmatprep.subr.bf16.mxu0 0
    %7533 = vmatpush1.bf16.msra.mxu0 0
    %7534 = vmatprep.mubr.bf16.mxu0 0
    %7535 = vmatmul.mubr.bf16.gmra.mrb[0].mxu0 %v7476
    %v7536 = vpop.f32.mrb[0].mxu0
    %v7537 = vadd.f32 0.0, %v7536
    %v7538 = vpop.f32.mrb[0].mxu0
    %v7539 = vpop.f32.mrb[0].mxu0
    %v7540 = vadd.f32 0.0, %v7539
    %v7541 = vpop.f32.mrb[0].mxu0
    %7542 = vmatprep.mubr.bf16.mxu0 0
    %7543 = vmatmul.mubr.bf16.gmra.mrb[0].mxu0 %v7479
    %v7544 = vpop.f32.mrb[0].mxu0
    %v7545 = vadd.f32 0.0, %v7544
    %v7546 = vpop.f32.mrb[0].mxu0
    %v7547 = vpop.f32.mrb[0].mxu0
    %v7548 = vadd.f32 0.0, %v7547
    %v7549 = vpop.f32.mrb[0].mxu0
    %7550 = vmatprep.mubr.bf16.mxu0 0
    %7551 = vmatmul.mubr.bf16.gmra.mrb[0].mxu0 %v7482
    %v7552 = vpop.f32.mrb[0].mxu0
    %v7553 = vadd.f32 0.0, %v7552
    %v7554 = vpop.f32.mrb[0].mxu0
    %v7555 = vpop.f32.mrb[0].mxu0
    %v7556 = vadd.f32 0.0, %v7555
    %v7557 = vpop.f32.mrb[0].mxu0
    %7558 = vmatprep.mubr.bf16.mxu0 0
    %7559 = vmatmul.mubr.bf16.gmra.mrb[0].mxu0 %v7485
    %v7560 = vpop.f32.mrb[0].mxu0
    %v7561 = vadd.f32 0.0, %v7560
    %v7562 = vpop.f32.mrb[0].mxu0
    %v7563 = vpop.f32.mrb[0].mxu0
    %v7564 = vadd.f32 0.0, %v7563
    %v7565 = vpop.f32.mrb[0].mxu0
    %7566 = vmatprep.mubr.bf16.mxu0 0
    %7567 = vmatmul.mubr.bf16.gmra.mrb[0].mxu0 %v7488
    %v7568 = vpop.f32.mrb[0].mxu0
    %v7569 = vadd.f32 0.0, %v7568
    %v7570 = vpop.f32.mrb[0].mxu0
    %v7571 = vpop.f32.mrb[0].mxu0
    %v7572 = vadd.f32 0.0, %v7571
    %v7573 = vpop.f32.mrb[0].mxu0
    %7574 = vmatprep.mubr.bf16.mxu0 0
    %7575 = vmatmul.mubr.bf16.gmra.mrb[0].mxu0 %v7491
    %v7576 = vpop.f32.mrb[0].mxu0
    %v7577 = vadd.f32 0.0, %v7576
    %v7578 = vpop.f32.mrb[0].mxu0
    %v7579 = vpop.f32.mrb[0].mxu0
    %v7580 = vadd.f32 0.0, %v7579
    %v7581 = vpop.f32.mrb[0].mxu0
    %7582 = vmatprep.mubr.bf16.mxu0 0
    %7583 = vmatmul.mubr.bf16.gmra.mrb[0].mxu0 %v7494
    %v7584 = vpop.f32.mrb[0].mxu0
    %v7585 = vadd.f32 0.0, %v7584
    %v7586 = vpop.f32.mrb[0].mxu0
    %v7587 = vpop.f32.mrb[0].mxu0
    %v7588 = vadd.f32 0.0, %v7587
    %v7589 = vpop.f32.mrb[0].mxu0
    %7590 = vmatprep.mubr.bf16.mxu0 0
    %7591 = vmatmul.mubr.bf16.gmra.mrb[0].mxu0 %v7497
    %v7592 = vpop.f32.mrb[0].mxu0
    %v7593 = vadd.f32 0.0, %v7592
    %v7594 = vpop.f32.mrb[0].mxu0
    %v7595 = vpop.f32.mrb[0].mxu0
    %v7596 = vadd.f32 0.0, %v7595
    %v7597 = vpop.f32.mrb[0].mxu0
    %7598 = vdwg.mxu0
    %v7599 = vadd.f32 %v7267, %v7537
    %v7600 = vadd.f32 %v7268, %v7540
    %v7601 = vadd.f32 %v7269, %v7545
    %v7602 = vadd.f32 %v7270, %v7548
    %v7603 = vadd.f32 %v7271, %v7553
    %v7604 = vadd.f32 %v7272, %v7556
    %v7605 = vadd.f32 %v7273, %v7561
    %v7606 = vadd.f32 %v7274, %v7564
    %v7607 = vadd.f32 %v7275, %v7569
    %v7608 = vadd.f32 %v7276, %v7572
    %v7609 = vadd.f32 %v7277, %v7577
    %v7610 = vadd.f32 %v7278, %v7580
    %v7611 = vadd.f32 %v7279, %v7585
    %v7612 = vadd.f32 %v7280, %v7588
    %v7613 = vadd.f32 %v7281, %v7593
    %v7614 = vadd.f32 %v7282, %v7596
    %v7616 = vlaneseq
    %v7617 = vshrl.u32 %v7616, 7
    %v7618 = vsub.s32 0, %v7617
    %v7619 = vrot.slane %v4555, %v7618
    %v7621 = vadd.f32 %v7599, %v7619
    %v7622 = vadd.f32 %v7600, %v7619
    %v7623 = vadd.f32 %v7601, %v7619
    %v7624 = vadd.f32 %v7602, %v7619
    %v7625 = vadd.f32 %v7603, %v7619
    %v7626 = vadd.f32 %v7604, %v7619
    %v7627 = vadd.f32 %v7605, %v7619
    %v7628 = vadd.f32 %v7606, %v7619
    %v7629 = vadd.f32 %v7607, %v7619
    %v7630 = vadd.f32 %v7608, %v7619
    %v7631 = vadd.f32 %v7609, %v7619
    %v7632 = vadd.f32 %v7610, %v7619
    %v7633 = vadd.f32 %v7611, %v7619
    %v7634 = vadd.f32 %v7612, %v7619
    %v7635 = vadd.f32 %v7613, %v7619
    %v7636 = vadd.f32 %v7614, %v7619
    %7637 = vst.msk [vmem:[%s11] sm:$0xff] %vm3810, %v7621
    %7638 = vst.msk [vmem:[%s11 + $0x8] sm:$0xff] %vm3810, %v7622
    %7639 = vst.msk [vmem:[%s11 + $0x10] sm:$0xff] %vm3810, %v7623
    %7640 = vst.msk [vmem:[%s11 + $0x18] sm:$0xff] %vm3810, %v7624
    %7641 = vst.msk [vmem:[%s11 + $0x20] sm:$0xff] %vm3810, %v7625
    %7642 = vst.msk [vmem:[%s11 + $0x28] sm:$0xff] %vm3810, %v7626
    %7643 = vst.msk [vmem:[%s11 + $0x30] sm:$0xff] %vm3810, %v7627
    %7644 = vst.msk [vmem:[%s11 + $0x38] sm:$0xff] %vm3810, %v7628
    %7645 = vst.msk [vmem:[%s11 + $0x40] sm:$0xff] %vm3810, %v7629
    %7646 = vst.msk [vmem:[%s11 + $0x48] sm:$0xff] %vm3810, %v7630
    %7647 = vst.msk [vmem:[%s11 + $0x50] sm:$0xff] %vm3810, %v7631
    %7648 = vst.msk [vmem:[%s11 + $0x58] sm:$0xff] %vm3810, %v7632
    %7649 = vst.msk [vmem:[%s11 + $0x60] sm:$0xff] %vm3810, %v7633
    %7650 = vst.msk [vmem:[%s11 + $0x68] sm:$0xff] %vm3810, %v7634
    %7651 = vst.msk [vmem:[%s11 + $0x70] sm:$0xff] %vm3810, %v7635
    %7652 = vst.msk [vmem:[%s11 + $0x78] sm:$0xff] %vm3810, %v7636
  // Predicated region
  $region48: #{tpu_custom_call.1} parent=0 // pred_check
    _
  $region49: #{tpu_custom_call.1} parent=0 // pred_check_branch
    %7654 = sbr.rel (0) target = $region51
  $region50: #{tpu_custom_call.1} parent=0 // pred_region
    _
  $region51: #{tpu_custom_call.1} parent=0 // pred_fallthru
    _
  // Predicated region
  $region52: #{tpu_custom_call.1} parent=0 // pred_check
    _
  $region53: #{tpu_custom_call.1} parent=0 // pred_check_branch
    %7656 = sbr.rel (0) target = $region55
  $region54: #{tpu_custom_call.1} parent=0 // pred_region
    _
  $region55: #{tpu_custom_call.1} parent=0 // pred_fallthru
    _

</llo_original>
